<compile_context>
chip_gen: v7x
topology: tpu7x:2x2x1
jax: 0.10.0
libtpu: 0.0.40
codegen_flags: <defaults>
</compile_context>

<pallas_src>
import functools

import jax
import jax.numpy as jnp
from jax.experimental import pallas as pl
from jax.experimental.pallas import tpu as pltpu


LATENT = 32        # latent_dim in Policy.__init__
N_ACTIONS = 4      # discrete controller head (continuous=False)


# ----------------------------------------------------------------------------
# Pallas kernels
# ----------------------------------------------------------------------------
def _conv_mm_kernel(cols_ref, w_ref, b_ref, o_ref):
    """One stride-2 conv layer as im2col matmul: o = relu(cols @ w + b)."""
    acc = jnp.dot(cols_ref[...], w_ref[...], preferred_element_type=jnp.float32)
    acc = acc + b_ref[...]
    o_ref[...] = jnp.maximum(acc, 0.0).astype(o_ref.dtype)


def conv_mm(cols, w, b, *, tm=None):
    """relu(cols @ w + b).  Default: one grid step (everything fits VMEM);
    the row-tile axis stays available for megacore splitting if M grows."""
    M, K = cols.shape
    K2, N = w.shape
    assert K == K2
    if tm is None or M % tm != 0:
        tm = M
    grid = (M // tm,)
    return pl.pallas_call(
        _conv_mm_kernel,
        out_shape=jax.ShapeDtypeStruct((M, N), jnp.float32),
        grid=grid,
        in_specs=[
            pl.BlockSpec((tm, K), lambda i: (i, 0)),
            pl.BlockSpec((K, N), lambda i: (0, 0)),
            pl.BlockSpec((1, N), lambda i: (0, 0)),
        ],
        out_specs=pl.BlockSpec((tm, N), lambda i: (i, 0)),
        compiler_params=pltpu.CompilerParams(dimension_semantics=("parallel",)),
    )(cols, w, b.reshape(1, N))


def _head_kernel(x_ref, w_ref, b_ref, eps_ref, cw_ref, cb_ref,
                 logits_ref, mu_ref, logvar_ref):
    """Fused VAE head.

    Pool + NCHW-flatten are pre-folded into w_ref, so:
      ml      = x @ w + b          (B, 2*LATENT)  -> mu | logvar
      z       = mu + eps * exp(0.5*logvar)
      logits  = z @ c_w + c_b
    """
    ml = jnp.dot(x_ref[...], w_ref[...], preferred_element_type=jnp.float32)
    ml = ml + b_ref[...]
    mu = ml[:, :LATENT]
    logvar = ml[:, LATENT:]
    z = mu + eps_ref[...] * jnp.exp(0.5 * logvar)
    logits = jnp.dot(z, cw_ref[...], preferred_element_type=jnp.float32)
    logits = logits + cb_ref[...]
    mu_ref[...] = mu
    logvar_ref[...] = logvar
    logits_ref[...] = logits


def fused_head(flat3, w_head, b_head, eps, c_w, c_b):
    B, F = flat3.shape
    return pl.pallas_call(
        _head_kernel,
        out_shape=(jax.ShapeDtypeStruct((B, N_ACTIONS), jnp.float32),
                   jax.ShapeDtypeStruct((B, LATENT), jnp.float32),
                   jax.ShapeDtypeStruct((B, LATENT), jnp.float32)),
        in_specs=[
            pl.BlockSpec((B, F), lambda: (0, 0)),
            pl.BlockSpec((F, 2 * LATENT), lambda: (0, 0)),
            pl.BlockSpec((1, 2 * LATENT), lambda: (0, 0)),
            pl.BlockSpec((B, LATENT), lambda: (0, 0)),
            pl.BlockSpec((LATENT, N_ACTIONS), lambda: (0, 0)),
            pl.BlockSpec((1, N_ACTIONS), lambda: (0, 0)),
        ],
        out_specs=(pl.BlockSpec((B, N_ACTIONS), lambda: (0, 0)),
                   pl.BlockSpec((B, LATENT), lambda: (0, 0)),
                   pl.BlockSpec((B, LATENT), lambda: (0, 0))),
    )(flat3, w_head, b_head.reshape(1, -1), eps, c_w, c_b.reshape(1, -1))


# ----------------------------------------------------------------------------
# Glue: im2col patch extraction (cheap reshapes/slices, fused by XLA under jit)
# ----------------------------------------------------------------------------
def im2col(x_nhwc, ksize=3, stride=2, pad=1):
    N, H, W, C = x_nhwc.shape
    xp = jnp.pad(x_nhwc, ((0, 0), (pad, pad), (pad, pad), (0, 0)))
    Ho = (H + 2 * pad - ksize) // stride + 1
    Wo = (W + 2 * pad - ksize) // stride + 1
    patches = []
    for kh in range(ksize):
        for kw in range(ksize):
            patches.append(
                xp[:, kh:kh + stride * Ho:stride, kw:kw + stride * Wo:stride, :]
            )
    cols = jnp.stack(patches, axis=3)                # (N, Ho, Wo, KH*KW, C)
    cols = cols.reshape(N * Ho * Wo, ksize * ksize * C)
    return cols, (N, Ho, Wo)


# ----------------------------------------------------------------------------
# Parameter init + one-time head-weight folding
# ----------------------------------------------------------------------------
def _init_linear(key, fan_in, fan_out):
    k1, k2 = jax.random.split(key)
    bound = 1.0 / float(fan_in) ** 0.5
    w = jax.random.uniform(k1, (fan_in, fan_out), jnp.float32, -bound, bound)
    b = jax.random.uniform(k2, (fan_out,), jnp.float32, -bound, bound)
    return w, b


def init_params(key):
    ks = jax.random.split(key, 6)
    p = {}
    p["conv1_w"], p["conv1_b"] = _init_linear(ks[0], 3 * 3 * 3, 16)    # (27,16)
    p["conv2_w"], p["conv2_b"] = _init_linear(ks[1], 3 * 3 * 16, 32)   # (144,32)
    p["conv3_w"], p["conv3_b"] = _init_linear(ks[2], 3 * 3 * 32, 64)   # (288,64)
    p["mu_w"], p["mu_b"] = _init_linear(ks[3], 1024, LATENT)
    p["logvar_w"], p["logvar_b"] = _init_linear(ks[4], 1024, LATENT)
    p["c_w"], p["c_b"] = _init_linear(ks[5], LATENT, N_ACTIONS)
    return p


def fold_head_params(params):
    """Fold AdaptiveAvgPool2d((4,4)) (here a 2x2 mean over the 8x8 conv3 map),
    the post-pool ReLU (a no-op on the non-negative conv3 output), and the
    NCHW reshape(B,1024) permutation into a single (4096, 64) mu|logvar weight.

    NHWC-flat feature index j = Y*512 + X*64 + c  maps to the torch feature
    index k = c*16 + (Y//2)*4 + (X//2), scaled by the pool factor 1/4.
    """
    Y = jnp.arange(8)[:, None, None]
    X = jnp.arange(8)[None, :, None]
    C = jnp.arange(64)[None, None, :]
    k = (C * 16 + (Y // 2) * 4 + (X // 2)).reshape(-1)          # (4096,)
    w_mu = 0.25 * params["mu_w"][k, :]                          # (4096, 32)
    w_lv = 0.25 * params["logvar_w"][k, :]                      # (4096, 32)
    prepared = dict(params)
    prepared["head_w"] = jnp.concatenate([w_mu, w_lv], axis=1)  # (4096, 64)
    prepared["head_b"] = jnp.concatenate([params["mu_b"], params["logvar_b"]])
    return prepared


# ----------------------------------------------------------------------------
# Policy.act forward pass (VAE.encode -> reparameterise -> controller)
# ----------------------------------------------------------------------------
@jax.jit
def policy_act(x_nchw, params, eps_key):
    """x_nchw: (B, 3, H, W) float32, PyTorch NCHW layout (H = W = 64)."""
    B = x_nchw.shape[0]
    x = jnp.transpose(x_nchw, (0, 2, 3, 1)).astype(jnp.float32)  # NHWC

    # conv1/conv2/conv3: 3x3, stride 2, pad 1, + ReLU (im2col glue + MXU kernel)
    cols, (_, H1, W1) = im2col(x)
    h = conv_mm(cols, params["conv1_w"], params["conv1_b"]).reshape(B, H1, W1, 16)

    cols, (_, H2, W2) = im2col(h)
    h = conv_mm(cols, params["conv2_w"], params["conv2_b"]).reshape(B, H2, W2, 32)

    cols, (_, H3, W3) = im2col(h)
    h3 = conv_mm(cols, params["conv3_w"], params["conv3_b"])     # (B*H3*W3, 64)

    # Fused head: pool(2x2) + ReLU + NCHW flatten are folded into head_w,
    # so the kernel only needs the NHWC-flat conv3 activations.
    assert H3 == 8 and W3 == 8, "head weight folding assumes a 64x64 input"
    flat3 = h3.reshape(B, H3 * W3 * 64)                          # (B, 4096)

    eps = jax.random.normal(eps_key, (B, LATENT), jnp.float32)
    logits, mu, logvar = fused_head(flat3, params["head_w"], params["head_b"],
                                    eps, params["c_w"], params["c_b"])
    return logits, mu, logvar


# ----------------------------------------------------------------------------
if __name__ == "__main__":
    key = jax.random.PRNGKey(0)
    kx, kp, keps = jax.random.split(key, 3)

    # NCHW input consistent with VAE.encode: 3 channels, 64x64 spatial
    # (conv stack -> 8x8 -> adaptive pool 4x4 -> 1024 features).
    x = jax.random.uniform(kx, (2, 3, 64, 64), jnp.float32)
    params = fold_head_params(init_params(kp))

    logits, mu, logvar = policy_act(x, params, keps)
    actions = jnp.argmax(logits, axis=-1) + 1        # Policy.act discrete branch
    jax.block_until_ready((logits, mu, logvar, actions))

    assert logits.shape == (2, 4)
    assert mu.shape == (2, LATENT) and logvar.shape == (2, LATENT)
    print("KERNEL_OK")
</pallas_src>

<mosaic_0001>
module attributes {stable_mosaic.version = 11 : i64} {
  func.func @_conv_mm_kernel(%arg0: i32, %arg1: memref<2048x27xf32, #tpu.memory_space<vmem>>, %arg2: memref<27x16xf32, #tpu.memory_space<vmem>>, %arg3: memref<1x16xf32, #tpu.memory_space<vmem>>, %arg4: memref<2048x16xf32, #tpu.memory_space<vmem>>) attributes {dimension_semantics = [#tpu.dimension_semantics<parallel>], iteration_bounds = array<i64: 1>, scalar_prefetch = 0 : i64, scratch_operands = 0 : i64, tpu.core_type = #tpu.core_type<tc>, window_params = [{transform_indices = @transform_0, window_bounds = array<i64: 2048, 27>}, {pipeline_mode = #tpu.pipeline_mode<synchronous>, transform_indices = @transform_1, window_bounds = array<i64: 27, 16>}, {pipeline_mode = #tpu.pipeline_mode<synchronous>, transform_indices = @transform_2, window_bounds = array<i64: 1, 16>}, {transform_indices = @transform_3, window_bounds = array<i64: 2048, 16>}]} {
    %c0 = arith.constant 0 : index
    %c0_0 = arith.constant 0 : index
    %0 = vector.load %arg1[%c0, %c0_0] : memref<2048x27xf32, #tpu.memory_space<vmem>>, vector<2048x27xf32>
    %c0_1 = arith.constant 0 : index
    %c0_2 = arith.constant 0 : index
    %1 = vector.load %arg2[%c0_1, %c0_2] : memref<27x16xf32, #tpu.memory_space<vmem>>, vector<27x16xf32>
    %cst = arith.constant dense<0.000000e+00> : vector<2048x16xf32>
    %2 = tpu.matmul %0, %1, %cst {dimension_numbers = #tpu.dot_dimension_numbers<[1], [0], [0], [1], [0, 0, 1, 1], [], []>} : vector<2048x27xf32>, vector<27x16xf32>, vector<2048x16xf32> -> vector<2048x16xf32>
    %c0_3 = arith.constant 0 : index
    %c0_4 = arith.constant 0 : index
    %3 = vector.load %arg3[%c0_3, %c0_4] : memref<1x16xf32, #tpu.memory_space<vmem>>, vector<1x16xf32>
    %4 = vector.broadcast %3 : vector<1x16xf32> to vector<2048x16xf32>
    %5 = arith.addf %2, %4 : vector<2048x16xf32>
    %cst_5 = arith.constant 0.000000e+00 : f32
    %6 = vector.broadcast %cst_5 : f32 to vector<2048x16xf32>
    %7 = arith.maximumf %5, %6 : vector<2048x16xf32>
    %c0_6 = arith.constant 0 : index
    %c0_7 = arith.constant 0 : index
    %8 = vector.load %arg4[%c0_6, %c0_7] : memref<2048x16xf32, #tpu.memory_space<vmem>>, vector<2048x16xf32>
    tpu.vector_store %arg4[%c0_6, %c0_7], %7 {strides = array<i32>} : memref<2048x16xf32, #tpu.memory_space<vmem>>, vector<2048x16xf32>,
    return
  }
  func.func @transform_0(%arg0: i32) -> (i32, i32) {
    %c0_i32 = arith.constant 0 : i32
    %c0_i32_0 = arith.constant 0 : i32
    return %arg0, %c0_i32 : i32, i32
  }
  func.func @transform_1(%arg0: i32) -> (i32, i32) {
    %c0_i32 = arith.constant 0 : i32
    %c0_i32_0 = arith.constant 0 : i32
    %c0_i32_1 = arith.constant 0 : i32
    return %c0_i32, %c0_i32_0 : i32, i32
  }
  func.func @transform_2(%arg0: i32) -> (i32, i32) {
    %c0_i32 = arith.constant 0 : i32
    %c0_i32_0 = arith.constant 0 : i32
    %c0_i32_1 = arith.constant 0 : i32
    return %c0_i32, %c0_i32_0 : i32, i32
  }
  func.func @transform_3(%arg0: i32) -> (i32, i32) {
    %c0_i32 = arith.constant 0 : i32
    %c0_i32_0 = arith.constant 0 : i32
    return %arg0, %c0_i32 : i32, i32
  }
}

module attributes {stable_mosaic.version = 11 : i64} {
  func.func @_conv_mm_kernel(%arg0: i32, %arg1: memref<512x144xf32, #tpu.memory_space<vmem>>, %arg2: memref<144x32xf32, #tpu.memory_space<vmem>>, %arg3: memref<1x32xf32, #tpu.memory_space<vmem>>, %arg4: memref<512x32xf32, #tpu.memory_space<vmem>>) attributes {dimension_semantics = [#tpu.dimension_semantics<parallel>], iteration_bounds = array<i64: 1>, scalar_prefetch = 0 : i64, scratch_operands = 0 : i64, tpu.core_type = #tpu.core_type<tc>, window_params = [{transform_indices = @transform_0, window_bounds = array<i64: 512, 144>}, {pipeline_mode = #tpu.pipeline_mode<synchronous>, transform_indices = @transform_1, window_bounds = array<i64: 144, 32>}, {pipeline_mode = #tpu.pipeline_mode<synchronous>, transform_indices = @transform_2, window_bounds = array<i64: 1, 32>}, {transform_indices = @transform_3, window_bounds = array<i64: 512, 32>}]} {
    %c0 = arith.constant 0 : index
    %c0_0 = arith.constant 0 : index
    %0 = vector.load %arg1[%c0, %c0_0] : memref<512x144xf32, #tpu.memory_space<vmem>>, vector<512x144xf32>
    %c0_1 = arith.constant 0 : index
    %c0_2 = arith.constant 0 : index
    %1 = vector.load %arg2[%c0_1, %c0_2] : memref<144x32xf32, #tpu.memory_space<vmem>>, vector<144x32xf32>
    %cst = arith.constant dense<0.000000e+00> : vector<512x32xf32>
    %2 = tpu.matmul %0, %1, %cst {dimension_numbers = #tpu.dot_dimension_numbers<[1], [0], [0], [1], [0, 0, 1, 1], [], []>} : vector<512x144xf32>, vector<144x32xf32>, vector<512x32xf32> -> vector<512x32xf32>
    %c0_3 = arith.constant 0 : index
    %c0_4 = arith.constant 0 : index
    %3 = vector.load %arg3[%c0_3, %c0_4] : memref<1x32xf32, #tpu.memory_space<vmem>>, vector<1x32xf32>
    %4 = vector.broadcast %3 : vector<1x32xf32> to vector<512x32xf32>
    %5 = arith.addf %2, %4 : vector<512x32xf32>
    %cst_5 = arith.constant 0.000000e+00 : f32
    %6 = vector.broadcast %cst_5 : f32 to vector<512x32xf32>
    %7 = arith.maximumf %5, %6 : vector<512x32xf32>
    %c0_6 = arith.constant 0 : index
    %c0_7 = arith.constant 0 : index
    %8 = vector.load %arg4[%c0_6, %c0_7] : memref<512x32xf32, #tpu.memory_space<vmem>>, vector<512x32xf32>
    tpu.vector_store %arg4[%c0_6, %c0_7], %7 {strides = array<i32>} : memref<512x32xf32, #tpu.memory_space<vmem>>, vector<512x32xf32>,
    return
  }
  func.func @transform_0(%arg0: i32) -> (i32, i32) {
    %c0_i32 = arith.constant 0 : i32
    %c0_i32_0 = arith.constant 0 : i32
    return %arg0, %c0_i32 : i32, i32
  }
  func.func @transform_1(%arg0: i32) -> (i32, i32) {
    %c0_i32 = arith.constant 0 : i32
    %c0_i32_0 = arith.constant 0 : i32
    %c0_i32_1 = arith.constant 0 : i32
    return %c0_i32, %c0_i32_0 : i32, i32
  }
  func.func @transform_2(%arg0: i32) -> (i32, i32) {
    %c0_i32 = arith.constant 0 : i32
    %c0_i32_0 = arith.constant 0 : i32
    %c0_i32_1 = arith.constant 0 : i32
    return %c0_i32, %c0_i32_0 : i32, i32
  }
  func.func @transform_3(%arg0: i32) -> (i32, i32) {
    %c0_i32 = arith.constant 0 : i32
    %c0_i32_0 = arith.constant 0 : i32
    return %arg0, %c0_i32 : i32, i32
  }
}

module attributes {stable_mosaic.version = 11 : i64} {
  func.func @_conv_mm_kernel(%arg0: i32, %arg1: memref<128x288xf32, #tpu.memory_space<vmem>>, %arg2: memref<288x64xf32, #tpu.memory_space<vmem>>, %arg3: memref<1x64xf32, #tpu.memory_space<vmem>>, %arg4: memref<128x64xf32, #tpu.memory_space<vmem>>) attributes {dimension_semantics = [#tpu.dimension_semantics<parallel>], iteration_bounds = array<i64: 1>, scalar_prefetch = 0 : i64, scratch_operands = 0 : i64, tpu.core_type = #tpu.core_type<tc>, window_params = [{transform_indices = @transform_0, window_bounds = array<i64: 128, 288>}, {pipeline_mode = #tpu.pipeline_mode<synchronous>, transform_indices = @transform_1, window_bounds = array<i64: 288, 64>}, {pipeline_mode = #tpu.pipeline_mode<synchronous>, transform_indices = @transform_2, window_bounds = array<i64: 1, 64>}, {transform_indices = @transform_3, window_bounds = array<i64: 128, 64>}]} {
    %c0 = arith.constant 0 : index
    %c0_0 = arith.constant 0 : index
    %0 = vector.load %arg1[%c0, %c0_0] : memref<128x288xf32, #tpu.memory_space<vmem>>, vector<128x288xf32>
    %c0_1 = arith.constant 0 : index
    %c0_2 = arith.constant 0 : index
    %1 = vector.load %arg2[%c0_1, %c0_2] : memref<288x64xf32, #tpu.memory_space<vmem>>, vector<288x64xf32>
    %cst = arith.constant dense<0.000000e+00> : vector<128x64xf32>
    %2 = tpu.matmul %0, %1, %cst {dimension_numbers = #tpu.dot_dimension_numbers<[1], [0], [0], [1], [0, 0, 1, 1], [], []>} : vector<128x288xf32>, vector<288x64xf32>, vector<128x64xf32> -> vector<128x64xf32>
    %c0_3 = arith.constant 0 : index
    %c0_4 = arith.constant 0 : index
    %3 = vector.load %arg3[%c0_3, %c0_4] : memref<1x64xf32, #tpu.memory_space<vmem>>, vector<1x64xf32>
    %4 = vector.broadcast %3 : vector<1x64xf32> to vector<128x64xf32>
    %5 = arith.addf %2, %4 : vector<128x64xf32>
    %cst_5 = arith.constant 0.000000e+00 : f32
    %6 = vector.broadcast %cst_5 : f32 to vector<128x64xf32>
    %7 = arith.maximumf %5, %6 : vector<128x64xf32>
    %c0_6 = arith.constant 0 : index
    %c0_7 = arith.constant 0 : index
    %8 = vector.load %arg4[%c0_6, %c0_7] : memref<128x64xf32, #tpu.memory_space<vmem>>, vector<128x64xf32>
    tpu.vector_store %arg4[%c0_6, %c0_7], %7 {strides = array<i32>} : memref<128x64xf32, #tpu.memory_space<vmem>>, vector<128x64xf32>,
    return
  }
  func.func @transform_0(%arg0: i32) -> (i32, i32) {
    %c0_i32 = arith.constant 0 : i32
    %c0_i32_0 = arith.constant 0 : i32
    return %arg0, %c0_i32 : i32, i32
  }
  func.func @transform_1(%arg0: i32) -> (i32, i32) {
    %c0_i32 = arith.constant 0 : i32
    %c0_i32_0 = arith.constant 0 : i32
    %c0_i32_1 = arith.constant 0 : i32
    return %c0_i32, %c0_i32_0 : i32, i32
  }
  func.func @transform_2(%arg0: i32) -> (i32, i32) {
    %c0_i32 = arith.constant 0 : i32
    %c0_i32_0 = arith.constant 0 : i32
    %c0_i32_1 = arith.constant 0 : i32
    return %c0_i32, %c0_i32_0 : i32, i32
  }
  func.func @transform_3(%arg0: i32) -> (i32, i32) {
    %c0_i32 = arith.constant 0 : i32
    %c0_i32_0 = arith.constant 0 : i32
    return %arg0, %c0_i32 : i32, i32
  }
}

module attributes {stable_mosaic.version = 11 : i64} {
  func.func @_head_kernel(%arg0: memref<2x4096xf32, #tpu.memory_space<vmem>>, %arg1: memref<4096x64xf32, #tpu.memory_space<vmem>>, %arg2: memref<1x64xf32, #tpu.memory_space<vmem>>, %arg3: memref<2x32xf32, #tpu.memory_space<vmem>>, %arg4: memref<32x4xf32, #tpu.memory_space<vmem>>, %arg5: memref<1x4xf32, #tpu.memory_space<vmem>>, %arg6: memref<2x4xf32, #tpu.memory_space<vmem>>, %arg7: memref<2x32xf32, #tpu.memory_space<vmem>>, %arg8: memref<2x32xf32, #tpu.memory_space<vmem>>) attributes {dimension_semantics = [], scalar_prefetch = 0 : i64, scratch_operands = 0 : i64, tpu.core_type = #tpu.core_type<tc>} {
    %c0 = arith.constant 0 : index
    %c0_0 = arith.constant 0 : index
    %0 = vector.load %arg0[%c0, %c0_0] : memref<2x4096xf32, #tpu.memory_space<vmem>>, vector<2x4096xf32>
    %c0_1 = arith.constant 0 : index
    %c0_2 = arith.constant 0 : index
    %1 = vector.load %arg1[%c0_1, %c0_2] : memref<4096x64xf32, #tpu.memory_space<vmem>>, vector<4096x64xf32>
    %cst = arith.constant dense<0.000000e+00> : vector<2x64xf32>
    %2 = tpu.matmul %0, %1, %cst {dimension_numbers = #tpu.dot_dimension_numbers<[1], [0], [0], [1], [0, 0, 1, 1], [], []>} : vector<2x4096xf32>, vector<4096x64xf32>, vector<2x64xf32> -> vector<2x64xf32>
    %c0_3 = arith.constant 0 : index
    %c0_4 = arith.constant 0 : index
    %3 = vector.load %arg2[%c0_3, %c0_4] : memref<1x64xf32, #tpu.memory_space<vmem>>, vector<1x64xf32>
    %4 = vector.broadcast %3 : vector<1x64xf32> to vector<2x64xf32>
    %5 = arith.addf %2, %4 : vector<2x64xf32>
    %6 = vector.extract_strided_slice %5 {offsets = [0, 0], sizes = [2, 32], strides = [1, 1]} : vector<2x64xf32> to vector<2x32xf32>
    %7 = vector.extract_strided_slice %5 {offsets = [0, 32], sizes = [2, 32], strides = [1, 1]} : vector<2x64xf32> to vector<2x32xf32>
    %c0_5 = arith.constant 0 : index
    %c0_6 = arith.constant 0 : index
    %8 = vector.load %arg3[%c0_5, %c0_6] : memref<2x32xf32, #tpu.memory_space<vmem>>, vector<2x32xf32>
    %cst_7 = arith.constant 5.000000e-01 : f32
    %9 = vector.broadcast %cst_7 : f32 to vector<2x32xf32>
    %10 = arith.mulf %9, %7 : vector<2x32xf32>
    %11 = math.exp %10 : vector<2x32xf32>
    %12 = arith.mulf %8, %11 : vector<2x32xf32>
    %13 = arith.addf %6, %12 : vector<2x32xf32>
    %c0_8 = arith.constant 0 : index
    %c0_9 = arith.constant 0 : index
    %14 = vector.load %arg4[%c0_8, %c0_9] : memref<32x4xf32, #tpu.memory_space<vmem>>, vector<32x4xf32>
    %cst_10 = arith.constant dense<0.000000e+00> : vector<2x4xf32>
    %15 = tpu.matmul %13, %14, %cst_10 {dimension_numbers = #tpu.dot_dimension_numbers<[1], [0], [0], [1], [0, 0, 1, 1], [], []>} : vector<2x32xf32>, vector<32x4xf32>, vector<2x4xf32> -> vector<2x4xf32>
    %c0_11 = arith.constant 0 : index
    %c0_12 = arith.constant 0 : index
    %16 = vector.load %arg5[%c0_11, %c0_12] : memref<1x4xf32, #tpu.memory_space<vmem>>, vector<1x4xf32>
    %17 = vector.broadcast %16 : vector<1x4xf32> to vector<2x4xf32>
    %18 = arith.addf %15, %17 : vector<2x4xf32>
    %c0_13 = arith.constant 0 : index
    %c0_14 = arith.constant 0 : index
    %19 = vector.load %arg7[%c0_13, %c0_14] : memref<2x32xf32, #tpu.memory_space<vmem>>, vector<2x32xf32>
    tpu.vector_store %arg7[%c0_13, %c0_14], %6 {strides = array<i32>} : memref<2x32xf32, #tpu.memory_space<vmem>>, vector<2x32xf32>,
    %c0_15 = arith.constant 0 : index
    %c0_16 = arith.constant 0 : index
    %20 = vector.load %arg8[%c0_15, %c0_16] : memref<2x32xf32, #tpu.memory_space<vmem>>, vector<2x32xf32>
    tpu.vector_store %arg8[%c0_15, %c0_16], %7 {strides = array<i32>} : memref<2x32xf32, #tpu.memory_space<vmem>>, vector<2x32xf32>,
    %c0_17 = arith.constant 0 : index
    %c0_18 = arith.constant 0 : index
    %21 = vector.load %arg6[%c0_17, %c0_18] : memref<2x4xf32, #tpu.memory_space<vmem>>, vector<2x4xf32>
    tpu.vector_store %arg6[%c0_17, %c0_18], %18 {strides = array<i32>} : memref<2x4xf32, #tpu.memory_space<vmem>>, vector<2x4xf32>,
    return
  }
}

</mosaic_0001>

<llo_original>
// kernel: policy_act.4
$region0: #{policy_act.4}
  #allocation0 [shape = 'u32[]', space=smem, size = 0x4, offset = 0x4, fixed_abs, tag = 'smem constant byte address 0x4 - core index']
  #allocation1 [shape = 'u32[144,128]{1,0:T(1,128)}', space=vmem, size = 0x12000, scoped, tag = 'internal scratch']
  %s0 = inlined_call_operand.vmem [shape: f32[2048,27], index: 0, kind: input, shape index: {}]
  %s1 = inlined_call_operand.vmem [shape: f32[27,16], index: 1, kind: input, shape index: {}]
  %s2 = inlined_call_operand.vmem [shape: f32[1,16], index: 2, kind: input, shape index: {}]
  %s3 = inlined_call_operand.vmem [shape: f32[2048,16], index: 3, kind: output, shape index: {}]
  %s4 = sld [smem:[#allocation0]]
  $region22: #{policy_act.4} parent=0
    _
  %s6 = ssub.s32 1, %s4
  %s7 = scalar_select 0, %s6, %s4
  // Predicated region
  $region2: #{policy_act.4} parent=0 // pred_check
    _
  $region3: #{policy_act.4} parent=0 // pred_check_branch
    %9 = sbr.rel (0) target = $region5
  $region4: #{policy_act.4} parent=0 // pred_region
    _
  $region5: #{policy_act.4} parent=0 // pred_fallthru
    _
  // Predicated region
  $region6: #{policy_act.4} parent=0 // pred_check
    _
  $region7: #{policy_act.4} parent=0 // pred_check_branch
    %11 = sbr.rel (0) target = $region9
  $region8: #{policy_act.4} parent=0 // pred_region
    _
  $region9: #{policy_act.4} parent=0 // pred_fallthru
    _
  // Predicated region
  $region10: #{policy_act.4} parent=0 // pred_check
    _
  $region11: #{policy_act.4} parent=0 // pred_check_branch
    %13 = sbr.rel (0) target = $region13
  $region12: #{policy_act.4} parent=0 // pred_region
    _
  $region13: #{policy_act.4} parent=0 // pred_fallthru
    _
  %v14 = vld [vmem:[%s0] sm:$0xff]
  %v15 = vld [vmem:[%s0 + $0x8] sm:$0xff]
  %v16 = vld [vmem:[%s0 + $0x10] sm:$0xff]
  %v17 = vld [vmem:[%s0 + $0x18] sm:$0xff]
  %v18 = vld [vmem:[%s0 + $0x20] sm:$0xff]
  %v19 = vld [vmem:[%s0 + $0x28] sm:$0xff]
  %v20 = vld [vmem:[%s0 + $0x30] sm:$0xff]
  %v21 = vld [vmem:[%s0 + $0x38] sm:$0xff]
  %v22 = vld [vmem:[%s0 + $0x40] sm:$0xff]
  %v23 = vld [vmem:[%s0 + $0x48] sm:$0xff]
  %v24 = vld [vmem:[%s0 + $0x50] sm:$0xff]
  %v25 = vld [vmem:[%s0 + $0x58] sm:$0xff]
  %v26 = vld [vmem:[%s0 + $0x60] sm:$0xff]
  %v27 = vld [vmem:[%s0 + $0x68] sm:$0xff]
  %v28 = vld [vmem:[%s0 + $0x70] sm:$0xff]
  %v29 = vld [vmem:[%s0 + $0x78] sm:$0xff]
  %v30 = vld [vmem:[%s0 + $0x80] sm:$0xff]
  %v31 = vld [vmem:[%s0 + $0x88] sm:$0xff]
  %v32 = vld [vmem:[%s0 + $0x90] sm:$0xff]
  %v33 = vld [vmem:[%s0 + $0x98] sm:$0xff]
  %v34 = vld [vmem:[%s0 + $0xa0] sm:$0xff]
  %v35 = vld [vmem:[%s0 + $0xa8] sm:$0xff]
  %v36 = vld [vmem:[%s0 + $0xb0] sm:$0xff]
  %v37 = vld [vmem:[%s0 + $0xb8] sm:$0xff]
  %v38 = vld [vmem:[%s0 + $0xc0] sm:$0xff]
  %v39 = vld [vmem:[%s0 + $0xc8] sm:$0xff]
  %v40 = vld [vmem:[%s0 + $0xd0] sm:$0xff]
  %v41 = vld [vmem:[%s0 + $0xd8] sm:$0xff]
  %v42 = vld [vmem:[%s0 + $0xe0] sm:$0xff]
  %v43 = vld [vmem:[%s0 + $0xe8] sm:$0xff]
  %v44 = vld [vmem:[%s0 + $0xf0] sm:$0xff]
  %v45 = vld [vmem:[%s0 + $0xf8] sm:$0xff]
  %v46 = vld [vmem:[%s0 + $0x100] sm:$0xff]
  %v47 = vld [vmem:[%s0 + $0x108] sm:$0xff]
  %v48 = vld [vmem:[%s0 + $0x110] sm:$0xff]
  %v49 = vld [vmem:[%s0 + $0x118] sm:$0xff]
  %v50 = vld [vmem:[%s0 + $0x120] sm:$0xff]
  %v51 = vld [vmem:[%s0 + $0x128] sm:$0xff]
  %v52 = vld [vmem:[%s0 + $0x130] sm:$0xff]
  %v53 = vld [vmem:[%s0 + $0x138] sm:$0xff]
  %v54 = vld [vmem:[%s0 + $0x140] sm:$0xff]
  %v55 = vld [vmem:[%s0 + $0x148] sm:$0xff]
  %v56 = vld [vmem:[%s0 + $0x150] sm:$0xff]
  %v57 = vld [vmem:[%s0 + $0x158] sm:$0xff]
  %v58 = vld [vmem:[%s0 + $0x160] sm:$0xff]
  %v59 = vld [vmem:[%s0 + $0x168] sm:$0xff]
  %v60 = vld [vmem:[%s0 + $0x170] sm:$0xff]
  %v61 = vld [vmem:[%s0 + $0x178] sm:$0xff]
  %v62 = vld [vmem:[%s0 + $0x180] sm:$0xff]
  %v63 = vld [vmem:[%s0 + $0x188] sm:$0xff]
  %v64 = vld [vmem:[%s0 + $0x190] sm:$0xff]
  %v65 = vld [vmem:[%s0 + $0x198] sm:$0xff]
  %v66 = vld [vmem:[%s0 + $0x1a0] sm:$0xff]
  %v67 = vld [vmem:[%s0 + $0x1a8] sm:$0xff]
  %v68 = vld [vmem:[%s0 + $0x1b0] sm:$0xff]
  %v69 = vld [vmem:[%s0 + $0x1b8] sm:$0xff]
  %v70 = vld [vmem:[%s0 + $0x1c0] sm:$0xff]
  %v71 = vld [vmem:[%s0 + $0x1c8] sm:$0xff]
  %v72 = vld [vmem:[%s0 + $0x1d0] sm:$0xff]
  %v73 = vld [vmem:[%s0 + $0x1d8] sm:$0xff]
  %v74 = vld [vmem:[%s0 + $0x1e0] sm:$0xff]
  %v75 = vld [vmem:[%s0 + $0x1e8] sm:$0xff]
  %v76 = vld [vmem:[%s0 + $0x1f0] sm:$0xff]
  %v77 = vld [vmem:[%s0 + $0x1f8] sm:$0xff]
  %v78 = vld [vmem:[%s0 + $0x200] sm:$0xff]
  %v79 = vld [vmem:[%s0 + $0x208] sm:$0xff]
  %v80 = vld [vmem:[%s0 + $0x210] sm:$0xff]
  %v81 = vld [vmem:[%s0 + $0x218] sm:$0xff]
  %v82 = vld [vmem:[%s0 + $0x220] sm:$0xff]
  %v83 = vld [vmem:[%s0 + $0x228] sm:$0xff]
  %v84 = vld [vmem:[%s0 + $0x230] sm:$0xff]
  %v85 = vld [vmem:[%s0 + $0x238] sm:$0xff]
  %v86 = vld [vmem:[%s0 + $0x240] sm:$0xff]
  %v87 = vld [vmem:[%s0 + $0x248] sm:$0xff]
  %v88 = vld [vmem:[%s0 + $0x250] sm:$0xff]
  %v89 = vld [vmem:[%s0 + $0x258] sm:$0xff]
  %v90 = vld [vmem:[%s0 + $0x260] sm:$0xff]
  %v91 = vld [vmem:[%s0 + $0x268] sm:$0xff]
  %v92 = vld [vmem:[%s0 + $0x270] sm:$0xff]
  %v93 = vld [vmem:[%s0 + $0x278] sm:$0xff]
  %v94 = vld [vmem:[%s0 + $0x280] sm:$0xff]
  %v95 = vld [vmem:[%s0 + $0x288] sm:$0xff]
  %v96 = vld [vmem:[%s0 + $0x290] sm:$0xff]
  %v97 = vld [vmem:[%s0 + $0x298] sm:$0xff]
  %v98 = vld [vmem:[%s0 + $0x2a0] sm:$0xff]
  %v99 = vld [vmem:[%s0 + $0x2a8] sm:$0xff]
  %v100 = vld [vmem:[%s0 + $0x2b0] sm:$0xff]
  %v101 = vld [vmem:[%s0 + $0x2b8] sm:$0xff]
  %v102 = vld [vmem:[%s0 + $0x2c0] sm:$0xff]
  %v103 = vld [vmem:[%s0 + $0x2c8] sm:$0xff]
  %v104 = vld [vmem:[%s0 + $0x2d0] sm:$0xff]
  %v105 = vld [vmem:[%s0 + $0x2d8] sm:$0xff]
  %v106 = vld [vmem:[%s0 + $0x2e0] sm:$0xff]
  %v107 = vld [vmem:[%s0 + $0x2e8] sm:$0xff]
  %v108 = vld [vmem:[%s0 + $0x2f0] sm:$0xff]
  %v109 = vld [vmem:[%s0 + $0x2f8] sm:$0xff]
  %v110 = vld [vmem:[%s0 + $0x300] sm:$0xff]
  %v111 = vld [vmem:[%s0 + $0x308] sm:$0xff]
  %v112 = vld [vmem:[%s0 + $0x310] sm:$0xff]
  %v113 = vld [vmem:[%s0 + $0x318] sm:$0xff]
  %v114 = vld [vmem:[%s0 + $0x320] sm:$0xff]
  %v115 = vld [vmem:[%s0 + $0x328] sm:$0xff]
  %v116 = vld [vmem:[%s0 + $0x330] sm:$0xff]
  %v117 = vld [vmem:[%s0 + $0x338] sm:$0xff]
  %v118 = vld [vmem:[%s0 + $0x340] sm:$0xff]
  %v119 = vld [vmem:[%s0 + $0x348] sm:$0xff]
  %v120 = vld [vmem:[%s0 + $0x350] sm:$0xff]
  %v121 = vld [vmem:[%s0 + $0x358] sm:$0xff]
  %v122 = vld [vmem:[%s0 + $0x360] sm:$0xff]
  %v123 = vld [vmem:[%s0 + $0x368] sm:$0xff]
  %v124 = vld [vmem:[%s0 + $0x370] sm:$0xff]
  %v125 = vld [vmem:[%s0 + $0x378] sm:$0xff]
  %v126 = vld [vmem:[%s0 + $0x380] sm:$0xff]
  %v127 = vld [vmem:[%s0 + $0x388] sm:$0xff]
  %v128 = vld [vmem:[%s0 + $0x390] sm:$0xff]
  %v129 = vld [vmem:[%s0 + $0x398] sm:$0xff]
  %v130 = vld [vmem:[%s0 + $0x3a0] sm:$0xff]
  %v131 = vld [vmem:[%s0 + $0x3a8] sm:$0xff]
  %v132 = vld [vmem:[%s0 + $0x3b0] sm:$0xff]
  %v133 = vld [vmem:[%s0 + $0x3b8] sm:$0xff]
  %v134 = vld [vmem:[%s0 + $0x3c0] sm:$0xff]
  %v135 = vld [vmem:[%s0 + $0x3c8] sm:$0xff]
  %v136 = vld [vmem:[%s0 + $0x3d0] sm:$0xff]
  %v137 = vld [vmem:[%s0 + $0x3d8] sm:$0xff]
  %v138 = vld [vmem:[%s0 + $0x3e0] sm:$0xff]
  %v139 = vld [vmem:[%s0 + $0x3e8] sm:$0xff]
  %v140 = vld [vmem:[%s0 + $0x3f0] sm:$0xff]
  %v141 = vld [vmem:[%s0 + $0x3f8] sm:$0xff]
  %v142 = vld [vmem:[%s0 + $0x400] sm:$0xff]
  %v143 = vld [vmem:[%s0 + $0x408] sm:$0xff]
  %v144 = vld [vmem:[%s0 + $0x410] sm:$0xff]
  %v145 = vld [vmem:[%s0 + $0x418] sm:$0xff]
  %v146 = vld [vmem:[%s0 + $0x420] sm:$0xff]
  %v147 = vld [vmem:[%s0 + $0x428] sm:$0xff]
  %v148 = vld [vmem:[%s0 + $0x430] sm:$0xff]
  %v149 = vld [vmem:[%s0 + $0x438] sm:$0xff]
  %v150 = vld [vmem:[%s0 + $0x440] sm:$0xff]
  %v151 = vld [vmem:[%s0 + $0x448] sm:$0xff]
  %v152 = vld [vmem:[%s0 + $0x450] sm:$0xff]
  %v153 = vld [vmem:[%s0 + $0x458] sm:$0xff]
  %v154 = vld [vmem:[%s0 + $0x460] sm:$0xff]
  %v155 = vld [vmem:[%s0 + $0x468] sm:$0xff]
  %v156 = vld [vmem:[%s0 + $0x470] sm:$0xff]
  %v157 = vld [vmem:[%s0 + $0x478] sm:$0xff]
  %v158 = vld [vmem:[%s0 + $0x480] sm:$0xff]
  %v159 = vld [vmem:[%s0 + $0x488] sm:$0xff]
  %v160 = vld [vmem:[%s0 + $0x490] sm:$0xff]
  %v161 = vld [vmem:[%s0 + $0x498] sm:$0xff]
  %v162 = vld [vmem:[%s0 + $0x4a0] sm:$0xff]
  %v163 = vld [vmem:[%s0 + $0x4a8] sm:$0xff]
  %v164 = vld [vmem:[%s0 + $0x4b0] sm:$0xff]
  %v165 = vld [vmem:[%s0 + $0x4b8] sm:$0xff]
  %v166 = vld [vmem:[%s0 + $0x4c0] sm:$0xff]
  %v167 = vld [vmem:[%s0 + $0x4c8] sm:$0xff]
  %v168 = vld [vmem:[%s0 + $0x4d0] sm:$0xff]
  %v169 = vld [vmem:[%s0 + $0x4d8] sm:$0xff]
  %v170 = vld [vmem:[%s0 + $0x4e0] sm:$0xff]
  %v171 = vld [vmem:[%s0 + $0x4e8] sm:$0xff]
  %v172 = vld [vmem:[%s0 + $0x4f0] sm:$0xff]
  %v173 = vld [vmem:[%s0 + $0x4f8] sm:$0xff]
  %v174 = vld [vmem:[%s0 + $0x500] sm:$0xff]
  %v175 = vld [vmem:[%s0 + $0x508] sm:$0xff]
  %v176 = vld [vmem:[%s0 + $0x510] sm:$0xff]
  %v177 = vld [vmem:[%s0 + $0x518] sm:$0xff]
  %v178 = vld [vmem:[%s0 + $0x520] sm:$0xff]
  %v179 = vld [vmem:[%s0 + $0x528] sm:$0xff]
  %v180 = vld [vmem:[%s0 + $0x530] sm:$0xff]
  %v181 = vld [vmem:[%s0 + $0x538] sm:$0xff]
  %v182 = vld [vmem:[%s0 + $0x540] sm:$0xff]
  %v183 = vld [vmem:[%s0 + $0x548] sm:$0xff]
  %v184 = vld [vmem:[%s0 + $0x550] sm:$0xff]
  %v185 = vld [vmem:[%s0 + $0x558] sm:$0xff]
  %v186 = vld [vmem:[%s0 + $0x560] sm:$0xff]
  %v187 = vld [vmem:[%s0 + $0x568] sm:$0xff]
  %v188 = vld [vmem:[%s0 + $0x570] sm:$0xff]
  %v189 = vld [vmem:[%s0 + $0x578] sm:$0xff]
  %v190 = vld [vmem:[%s0 + $0x580] sm:$0xff]
  %v191 = vld [vmem:[%s0 + $0x588] sm:$0xff]
  %v192 = vld [vmem:[%s0 + $0x590] sm:$0xff]
  %v193 = vld [vmem:[%s0 + $0x598] sm:$0xff]
  %v194 = vld [vmem:[%s0 + $0x5a0] sm:$0xff]
  %v195 = vld [vmem:[%s0 + $0x5a8] sm:$0xff]
  %v196 = vld [vmem:[%s0 + $0x5b0] sm:$0xff]
  %v197 = vld [vmem:[%s0 + $0x5b8] sm:$0xff]
  %v198 = vld [vmem:[%s0 + $0x5c0] sm:$0xff]
  %v199 = vld [vmem:[%s0 + $0x5c8] sm:$0xff]
  %v200 = vld [vmem:[%s0 + $0x5d0] sm:$0xff]
  %v201 = vld [vmem:[%s0 + $0x5d8] sm:$0xff]
  %v202 = vld [vmem:[%s0 + $0x5e0] sm:$0xff]
  %v203 = vld [vmem:[%s0 + $0x5e8] sm:$0xff]
  %v204 = vld [vmem:[%s0 + $0x5f0] sm:$0xff]
  %v205 = vld [vmem:[%s0 + $0x5f8] sm:$0xff]
  %v206 = vld [vmem:[%s0 + $0x600] sm:$0xff]
  %v207 = vld [vmem:[%s0 + $0x608] sm:$0xff]
  %v208 = vld [vmem:[%s0 + $0x610] sm:$0xff]
  %v209 = vld [vmem:[%s0 + $0x618] sm:$0xff]
  %v210 = vld [vmem:[%s0 + $0x620] sm:$0xff]
  %v211 = vld [vmem:[%s0 + $0x628] sm:$0xff]
  %v212 = vld [vmem:[%s0 + $0x630] sm:$0xff]
  %v213 = vld [vmem:[%s0 + $0x638] sm:$0xff]
  %v214 = vld [vmem:[%s0 + $0x640] sm:$0xff]
  %v215 = vld [vmem:[%s0 + $0x648] sm:$0xff]
  %v216 = vld [vmem:[%s0 + $0x650] sm:$0xff]
  %v217 = vld [vmem:[%s0 + $0x658] sm:$0xff]
  %v218 = vld [vmem:[%s0 + $0x660] sm:$0xff]
  %v219 = vld [vmem:[%s0 + $0x668] sm:$0xff]
  %v220 = vld [vmem:[%s0 + $0x670] sm:$0xff]
  %v221 = vld [vmem:[%s0 + $0x678] sm:$0xff]
  %v222 = vld [vmem:[%s0 + $0x680] sm:$0xff]
  %v223 = vld [vmem:[%s0 + $0x688] sm:$0xff]
  %v224 = vld [vmem:[%s0 + $0x690] sm:$0xff]
  %v225 = vld [vmem:[%s0 + $0x698] sm:$0xff]
  %v226 = vld [vmem:[%s0 + $0x6a0] sm:$0xff]
  %v227 = vld [vmem:[%s0 + $0x6a8] sm:$0xff]
  %v228 = vld [vmem:[%s0 + $0x6b0] sm:$0xff]
  %v229 = vld [vmem:[%s0 + $0x6b8] sm:$0xff]
  %v230 = vld [vmem:[%s0 + $0x6c0] sm:$0xff]
  %v231 = vld [vmem:[%s0 + $0x6c8] sm:$0xff]
  %v232 = vld [vmem:[%s0 + $0x6d0] sm:$0xff]
  %v233 = vld [vmem:[%s0 + $0x6d8] sm:$0xff]
  %v234 = vld [vmem:[%s0 + $0x6e0] sm:$0xff]
  %v235 = vld [vmem:[%s0 + $0x6e8] sm:$0xff]
  %v236 = vld [vmem:[%s0 + $0x6f0] sm:$0xff]
  %v237 = vld [vmem:[%s0 + $0x6f8] sm:$0xff]
  %v238 = vld [vmem:[%s0 + $0x700] sm:$0xff]
  %v239 = vld [vmem:[%s0 + $0x708] sm:$0xff]
  %v240 = vld [vmem:[%s0 + $0x710] sm:$0xff]
  %v241 = vld [vmem:[%s0 + $0x718] sm:$0xff]
  %v242 = vld [vmem:[%s0 + $0x720] sm:$0xff]
  %v243 = vld [vmem:[%s0 + $0x728] sm:$0xff]
  %v244 = vld [vmem:[%s0 + $0x730] sm:$0xff]
  %v245 = vld [vmem:[%s0 + $0x738] sm:$0xff]
  %v246 = vld [vmem:[%s0 + $0x740] sm:$0xff]
  %v247 = vld [vmem:[%s0 + $0x748] sm:$0xff]
  %v248 = vld [vmem:[%s0 + $0x750] sm:$0xff]
  %v249 = vld [vmem:[%s0 + $0x758] sm:$0xff]
  %v250 = vld [vmem:[%s0 + $0x760] sm:$0xff]
  %v251 = vld [vmem:[%s0 + $0x768] sm:$0xff]
  %v252 = vld [vmem:[%s0 + $0x770] sm:$0xff]
  %v253 = vld [vmem:[%s0 + $0x778] sm:$0xff]
  %v254 = vld [vmem:[%s0 + $0x780] sm:$0xff]
  %v255 = vld [vmem:[%s0 + $0x788] sm:$0xff]
  %v256 = vld [vmem:[%s0 + $0x790] sm:$0xff]
  %v257 = vld [vmem:[%s0 + $0x798] sm:$0xff]
  %v258 = vld [vmem:[%s0 + $0x7a0] sm:$0xff]
  %v259 = vld [vmem:[%s0 + $0x7a8] sm:$0xff]
  %v260 = vld [vmem:[%s0 + $0x7b0] sm:$0xff]
  %v261 = vld [vmem:[%s0 + $0x7b8] sm:$0xff]
  %v262 = vld [vmem:[%s0 + $0x7c0] sm:$0xff]
  %v263 = vld [vmem:[%s0 + $0x7c8] sm:$0xff]
  %v264 = vld [vmem:[%s0 + $0x7d0] sm:$0xff]
  %v265 = vld [vmem:[%s0 + $0x7d8] sm:$0xff]
  %v266 = vld [vmem:[%s0 + $0x7e0] sm:$0xff]
  %v267 = vld [vmem:[%s0 + $0x7e8] sm:$0xff]
  %v268 = vld [vmem:[%s0 + $0x7f0] sm:$0xff]
  %v269 = vld [vmem:[%s0 + $0x7f8] sm:$0xff]
  %v270 = vld [vmem:[%s1] sm:$0xff]
  %v271 = vld [vmem:[%s1 + $0x8] sm:$0xff]
  %v272 = vld [vmem:[%s1 + $0x10] sm:$0xff]
  %v273 = vld [vmem:[%s1 + $0x18] sm:$0x7]
  %v274 = vld [vmem:[%s2] sm:$0x1]
  %v276 = vlaneseq
  %v277 = vshrl.u32 %v276, 7
  %v278 = vsub.s32 0, %v277
  %v279 = vrot.slane %v274, %v278
  %vm281 = vcmask 220160
  %v283 = vsel %vm281, %v14, 0
  %v286 = vsel %vm281, %v15, 0
  %v289 = vsel %vm281, %v16, 0
  %v292 = vsel %vm281, %v17, 0
  %v295 = vsel %vm281, %v18, 0
  %v298 = vsel %vm281, %v19, 0
  %v301 = vsel %vm281, %v20, 0
  %v304 = vsel %vm281, %v21, 0
  %v307 = vsel %vm281, %v22, 0
  %v310 = vsel %vm281, %v23, 0
  %v313 = vsel %vm281, %v24, 0
  %v316 = vsel %vm281, %v25, 0
  %v319 = vsel %vm281, %v26, 0
  %v322 = vsel %vm281, %v27, 0
  %v325 = vsel %vm281, %v28, 0
  %v328 = vsel %vm281, %v29, 0
  %v331 = vsel %vm281, %v30, 0
  %v334 = vsel %vm281, %v31, 0
  %v337 = vsel %vm281, %v32, 0
  %v340 = vsel %vm281, %v33, 0
  %v343 = vsel %vm281, %v34, 0
  %v346 = vsel %vm281, %v35, 0
  %v349 = vsel %vm281, %v36, 0
  %v352 = vsel %vm281, %v37, 0
  %v355 = vsel %vm281, %v38, 0
  %v358 = vsel %vm281, %v39, 0
  %v361 = vsel %vm281, %v40, 0
  %v364 = vsel %vm281, %v41, 0
  %v367 = vsel %vm281, %v42, 0
  %v370 = vsel %vm281, %v43, 0
  %v373 = vsel %vm281, %v44, 0
  %v376 = vsel %vm281, %v45, 0
  %v379 = vsel %vm281, %v46, 0
  %v382 = vsel %vm281, %v47, 0
  %v385 = vsel %vm281, %v48, 0
  %v388 = vsel %vm281, %v49, 0
  %v391 = vsel %vm281, %v50, 0
  %v394 = vsel %vm281, %v51, 0
  %v397 = vsel %vm281, %v52, 0
  %v400 = vsel %vm281, %v53, 0
  %v403 = vsel %vm281, %v54, 0
  %v406 = vsel %vm281, %v55, 0
  %v409 = vsel %vm281, %v56, 0
  %v412 = vsel %vm281, %v57, 0
  %v415 = vsel %vm281, %v58, 0
  %v418 = vsel %vm281, %v59, 0
  %v421 = vsel %vm281, %v60, 0
  %v424 = vsel %vm281, %v61, 0
  %v427 = vsel %vm281, %v62, 0
  %v430 = vsel %vm281, %v63, 0
  %v433 = vsel %vm281, %v64, 0
  %v436 = vsel %vm281, %v65, 0
  %v439 = vsel %vm281, %v66, 0
  %v442 = vsel %vm281, %v67, 0
  %v445 = vsel %vm281, %v68, 0
  %v448 = vsel %vm281, %v69, 0
  %v451 = vsel %vm281, %v70, 0
  %v454 = vsel %vm281, %v71, 0
  %v457 = vsel %vm281, %v72, 0
  %v460 = vsel %vm281, %v73, 0
  %v463 = vsel %vm281, %v74, 0
  %v466 = vsel %vm281, %v75, 0
  %v469 = vsel %vm281, %v76, 0
  %v472 = vsel %vm281, %v77, 0
  %v475 = vsel %vm281, %v78, 0
  %v478 = vsel %vm281, %v79, 0
  %v481 = vsel %vm281, %v80, 0
  %v484 = vsel %vm281, %v81, 0
  %v487 = vsel %vm281, %v82, 0
  %v490 = vsel %vm281, %v83, 0
  %v493 = vsel %vm281, %v84, 0
  %v496 = vsel %vm281, %v85, 0
  %v499 = vsel %vm281, %v86, 0
  %v502 = vsel %vm281, %v87, 0
  %v505 = vsel %vm281, %v88, 0
  %v508 = vsel %vm281, %v89, 0
  %v511 = vsel %vm281, %v90, 0
  %v514 = vsel %vm281, %v91, 0
  %v517 = vsel %vm281, %v92, 0
  %v520 = vsel %vm281, %v93, 0
  %v523 = vsel %vm281, %v94, 0
  %v526 = vsel %vm281, %v95, 0
  %v529 = vsel %vm281, %v96, 0
  %v532 = vsel %vm281, %v97, 0
  %v535 = vsel %vm281, %v98, 0
  %v538 = vsel %vm281, %v99, 0
  %v541 = vsel %vm281, %v100, 0
  %v544 = vsel %vm281, %v101, 0
  %v547 = vsel %vm281, %v102, 0
  %v550 = vsel %vm281, %v103, 0
  %v553 = vsel %vm281, %v104, 0
  %v556 = vsel %vm281, %v105, 0
  %v559 = vsel %vm281, %v106, 0
  %v562 = vsel %vm281, %v107, 0
  %v565 = vsel %vm281, %v108, 0
  %v568 = vsel %vm281, %v109, 0
  %v571 = vsel %vm281, %v110, 0
  %v574 = vsel %vm281, %v111, 0
  %v577 = vsel %vm281, %v112, 0
  %v580 = vsel %vm281, %v113, 0
  %v583 = vsel %vm281, %v114, 0
  %v586 = vsel %vm281, %v115, 0
  %v589 = vsel %vm281, %v116, 0
  %v592 = vsel %vm281, %v117, 0
  %v595 = vsel %vm281, %v118, 0
  %v598 = vsel %vm281, %v119, 0
  %v601 = vsel %vm281, %v120, 0
  %v604 = vsel %vm281, %v121, 0
  %v607 = vsel %vm281, %v122, 0
  %v610 = vsel %vm281, %v123, 0
  %v613 = vsel %vm281, %v124, 0
  %v616 = vsel %vm281, %v125, 0
  %v619 = vsel %vm281, %v126, 0
  %v622 = vsel %vm281, %v127, 0
  %v625 = vsel %vm281, %v128, 0
  %v628 = vsel %vm281, %v129, 0
  %v631 = vsel %vm281, %v130, 0
  %v634 = vsel %vm281, %v131, 0
  %v637 = vsel %vm281, %v132, 0
  %v640 = vsel %vm281, %v133, 0
  %v643 = vsel %vm281, %v134, 0
  %v646 = vsel %vm281, %v135, 0
  %v649 = vsel %vm281, %v136, 0
  %v652 = vsel %vm281, %v137, 0
  %v655 = vsel %vm281, %v138, 0
  %v658 = vsel %vm281, %v139, 0
  %v661 = vsel %vm281, %v140, 0
  %v664 = vsel %vm281, %v141, 0
  %v667 = vsel %vm281, %v142, 0
  %v670 = vsel %vm281, %v143, 0
  %v673 = vsel %vm281, %v144, 0
  %v676 = vsel %vm281, %v145, 0
  %v679 = vsel %vm281, %v146, 0
  %v682 = vsel %vm281, %v147, 0
  %v685 = vsel %vm281, %v148, 0
  %v688 = vsel %vm281, %v149, 0
  %v691 = vsel %vm281, %v150, 0
  %v694 = vsel %vm281, %v151, 0
  %v697 = vsel %vm281, %v152, 0
  %v700 = vsel %vm281, %v153, 0
  %v703 = vsel %vm281, %v154, 0
  %v706 = vsel %vm281, %v155, 0
  %v709 = vsel %vm281, %v156, 0
  %v712 = vsel %vm281, %v157, 0
  %v715 = vsel %vm281, %v158, 0
  %v718 = vsel %vm281, %v159, 0
  %v721 = vsel %vm281, %v160, 0
  %v724 = vsel %vm281, %v161, 0
  %v727 = vsel %vm281, %v162, 0
  %v730 = vsel %vm281, %v163, 0
  %v733 = vsel %vm281, %v164, 0
  %v736 = vsel %vm281, %v165, 0
  %v739 = vsel %vm281, %v166, 0
  %v742 = vsel %vm281, %v167, 0
  %v745 = vsel %vm281, %v168, 0
  %v748 = vsel %vm281, %v169, 0
  %v751 = vsel %vm281, %v170, 0
  %v754 = vsel %vm281, %v171, 0
  %v757 = vsel %vm281, %v172, 0
  %v760 = vsel %vm281, %v173, 0
  %v763 = vsel %vm281, %v174, 0
  %v766 = vsel %vm281, %v175, 0
  %v769 = vsel %vm281, %v176, 0
  %v772 = vsel %vm281, %v177, 0
  %v775 = vsel %vm281, %v178, 0
  %v778 = vsel %vm281, %v179, 0
  %v781 = vsel %vm281, %v180, 0
  %v784 = vsel %vm281, %v181, 0
  %v787 = vsel %vm281, %v182, 0
  %v790 = vsel %vm281, %v183, 0
  %v793 = vsel %vm281, %v184, 0
  %v796 = vsel %vm281, %v185, 0
  %v799 = vsel %vm281, %v186, 0
  %v802 = vsel %vm281, %v187, 0
  %v805 = vsel %vm281, %v188, 0
  %v808 = vsel %vm281, %v189, 0
  %v811 = vsel %vm281, %v190, 0
  %v814 = vsel %vm281, %v191, 0
  %v817 = vsel %vm281, %v192, 0
  %v820 = vsel %vm281, %v193, 0
  %v823 = vsel %vm281, %v194, 0
  %v826 = vsel %vm281, %v195, 0
  %v829 = vsel %vm281, %v196, 0
  %v832 = vsel %vm281, %v197, 0
  %v835 = vsel %vm281, %v198, 0
  %v838 = vsel %vm281, %v199, 0
  %v841 = vsel %vm281, %v200, 0
  %v844 = vsel %vm281, %v201, 0
  %v847 = vsel %vm281, %v202, 0
  %v850 = vsel %vm281, %v203, 0
  %v853 = vsel %vm281, %v204, 0
  %v856 = vsel %vm281, %v205, 0
  %v859 = vsel %vm281, %v206, 0
  %v862 = vsel %vm281, %v207, 0
  %v865 = vsel %vm281, %v208, 0
  %v868 = vsel %vm281, %v209, 0
  %v871 = vsel %vm281, %v210, 0
  %v874 = vsel %vm281, %v211, 0
  %v877 = vsel %vm281, %v212, 0
  %v880 = vsel %vm281, %v213, 0
  %v883 = vsel %vm281, %v214, 0
  %v886 = vsel %vm281, %v215, 0
  %v889 = vsel %vm281, %v216, 0
  %v892 = vsel %vm281, %v217, 0
  %v895 = vsel %vm281, %v218, 0
  %v898 = vsel %vm281, %v219, 0
  %v901 = vsel %vm281, %v220, 0
  %v904 = vsel %vm281, %v221, 0
  %v907 = vsel %vm281, %v222, 0
  %v910 = vsel %vm281, %v223, 0
  %v913 = vsel %vm281, %v224, 0
  %v916 = vsel %vm281, %v225, 0
  %v919 = vsel %vm281, %v226, 0
  %v922 = vsel %vm281, %v227, 0
  %v925 = vsel %vm281, %v228, 0
  %v928 = vsel %vm281, %v229, 0
  %v931 = vsel %vm281, %v230, 0
  %v934 = vsel %vm281, %v231, 0
  %v937 = vsel %vm281, %v232, 0
  %v940 = vsel %vm281, %v233, 0
  %v943 = vsel %vm281, %v234, 0
  %v946 = vsel %vm281, %v235, 0
  %v949 = vsel %vm281, %v236, 0
  %v952 = vsel %vm281, %v237, 0
  %v955 = vsel %vm281, %v238, 0
  %v958 = vsel %vm281, %v239, 0
  %v961 = vsel %vm281, %v240, 0
  %v964 = vsel %vm281, %v241, 0
  %v967 = vsel %vm281, %v242, 0
  %v970 = vsel %vm281, %v243, 0
  %v973 = vsel %vm281, %v244, 0
  %v976 = vsel %vm281, %v245, 0
  %v979 = vsel %vm281, %v246, 0
  %v982 = vsel %vm281, %v247, 0
  %v985 = vsel %vm281, %v248, 0
  %v988 = vsel %vm281, %v249, 0
  %v991 = vsel %vm281, %v250, 0
  %v994 = vsel %vm281, %v251, 0
  %v997 = vsel %vm281, %v252, 0
  %v1000 = vsel %vm281, %v253, 0
  %v1003 = vsel %vm281, %v254, 0
  %v1006 = vsel %vm281, %v255, 0
  %v1009 = vsel %vm281, %v256, 0
  %v1012 = vsel %vm281, %v257, 0
  %v1015 = vsel %vm281, %v258, 0
  %v1018 = vsel %vm281, %v259, 0
  %v1021 = vsel %vm281, %v260, 0
  %v1024 = vsel %vm281, %v261, 0
  %v1027 = vsel %vm281, %v262, 0
  %v1030 = vsel %vm281, %v263, 0
  %v1033 = vsel %vm281, %v264, 0
  %v1036 = vsel %vm281, %v265, 0
  %v1039 = vsel %vm281, %v266, 0
  %v1042 = vsel %vm281, %v267, 0
  %v1045 = vsel %vm281, %v268, 0
  %v1048 = vsel %vm281, %v269, 0
  %vm1050 = vcmask 1042432
  %v1052 = vsel %vm1050, %v273, 0
  %1054 = vmatprep.subr.mxu0 0.0
  %1055 = vmatpush1.msra.mxu0 %v270
  %1056 = vmatprep.subr.mxu0 0.0
  %1057 = vmatpush1.msra.mxu0 %v271
  %1058 = vmatprep.subr.mxu0 0.0
  %1059 = vmatpush1.msra.mxu0 %v272
  %1060 = vmatprep.subr.mxu0 0.0
  %1061 = vmatpush1.msra.mxu0 %v1052
  %1062 = vmatprep.subr.mxu0 0.0
  %1063 = vmatpush1.msra.mxu0 0.0
  %1064 = vmatprep.subr.mxu0 0.0
  %1065 = vmatpush1.msra.mxu0 0.0
  %1066 = vmatprep.subr.mxu0 0.0
  %1067 = vmatpush1.msra.mxu0 0.0
  %1068 = vmatprep.subr.mxu0 0.0
  %1069 = vmatpush1.msra.mxu0 0.0
  %1070 = vmatprep.subr.mxu0 0.0
  %1071 = vmatpush1.msra.mxu0 0.0
  %1072 = vmatprep.subr.mxu0 0.0
  %1073 = vmatpush1.msra.mxu0 0.0
  %1074 = vmatprep.subr.mxu0 0.0
  %1075 = vmatpush1.msra.mxu0 0.0
  %1076 = vmatprep.subr.mxu0 0.0
  %1077 = vmatpush1.msra.mxu0 0.0
  %1078 = vmatprep.subr.mxu0 0.0
  %1079 = vmatpush1.msra.mxu0 0.0
  %1080 = vmatprep.subr.mxu0 0.0
  %1081 = vmatpush1.msra.mxu0 0.0
  %1082 = vmatprep.subr.mxu0 0.0
  %1083 = vmatpush1.msra.mxu0 0.0
  %1084 = vmatprep.subr.mxu0 0.0
  %1085 = vmatpush1.msra.mxu0 0.0
  %1086 = vmatprep.subr.mxu0 0.0
  %1087 = vmatpush1.msra.mxu0 0.0
  %1088 = vmatprep.subr.mxu0 0.0
  %1089 = vmatpush1.msra.mxu0 0.0
  %1090 = vmatprep.subr.mxu0 0.0
  %1091 = vmatpush1.msra.mxu0 0.0
  %1092 = vmatprep.subr.mxu0 0.0
  %1093 = vmatpush1.msra.mxu0 0.0
  %1094 = vmatprep.subr.mxu0 0.0
  %1095 = vmatpush1.msra.mxu0 0.0
  %1096 = vmatprep.subr.mxu0 0.0
  %1097 = vmatpush1.msra.mxu0 0.0
  %1098 = vmatprep.subr.mxu0 0.0
  %1099 = vmatpush1.msra.mxu0 0.0
  %1100 = vmatprep.subr.mxu0 0.0
  %1101 = vmatpush1.msra.mxu0 0.0
  %1102 = vmatprep.subr.mxu0 0.0
  %1103 = vmatpush1.msra.mxu0 0.0
  %1104 = vmatprep.subr.mxu0 0.0
  %1105 = vmatpush1.msra.mxu0 0.0
  %1106 = vmatprep.subr.mxu0 0.0
  %1107 = vmatpush1.msra.mxu0 0.0
  %1108 = vmatprep.subr.mxu0 0.0
  %1109 = vmatpush1.msra.mxu0 0.0
  %1110 = vmatprep.subr.mxu0 0.0
  %1111 = vmatpush1.msra.mxu0 0.0
  %1112 = vmatprep.subr.mxu0 0.0
  %1113 = vmatpush1.msra.mxu0 0.0
  %1114 = vmatprep.subr.mxu0 0.0
  %1115 = vmatpush1.msra.mxu0 0.0
  %1116 = vmatprep.subr.mxu0 0.0
  %1117 = vmatpush1.msra.mxu0 0.0
  %1118 = vmatprep.mubr.f32.mxu0 0.0
  %1119 = vmatmul.mubr.f32.gmra.mrb[0].mxu0 %v283
  %v1120 = vpop.f32.mrb[0].mxu0
  %v1121 = vadd.f32 %v279, %v1120
  %v1122 = vpop.f32.mrb[0].mxu0
  %1123 = vmatprep.mubr.f32.mxu0 0.0
  %1124 = vmatmul.mubr.f32.gmra.mrb[0].mxu0 %v286
  %v1125 = vpop.f32.mrb[0].mxu0
  %v1126 = vadd.f32 %v279, %v1125
  %v1127 = vpop.f32.mrb[0].mxu0
  %1128 = vmatprep.mubr.f32.mxu0 0.0
  %1129 = vmatmul.mubr.f32.gmra.mrb[0].mxu0 %v289
  %v1130 = vpop.f32.mrb[0].mxu0
  %v1131 = vadd.f32 %v279, %v1130
  %v1132 = vpop.f32.mrb[0].mxu0
  %1133 = vmatprep.mubr.f32.mxu0 0.0
  %1134 = vmatmul.mubr.f32.gmra.mrb[0].mxu0 %v292
  %v1135 = vpop.f32.mrb[0].mxu0
  %v1136 = vadd.f32 %v279, %v1135
  %v1137 = vpop.f32.mrb[0].mxu0
  %1138 = vmatprep.mubr.f32.mxu0 0.0
  %1139 = vmatmul.mubr.f32.gmra.mrb[0].mxu0 %v295
  %v1140 = vpop.f32.mrb[0].mxu0
  %v1141 = vadd.f32 %v279, %v1140
  %v1142 = vpop.f32.mrb[0].mxu0
  %1143 = vmatprep.mubr.f32.mxu0 0.0
  %1144 = vmatmul.mubr.f32.gmra.mrb[0].mxu0 %v298
  %v1145 = vpop.f32.mrb[0].mxu0
  %v1146 = vadd.f32 %v279, %v1145
  %v1147 = vpop.f32.mrb[0].mxu0
  %1148 = vmatprep.mubr.f32.mxu0 0.0
  %1149 = vmatmul.mubr.f32.gmra.mrb[0].mxu0 %v301
  %v1150 = vpop.f32.mrb[0].mxu0
  %v1151 = vadd.f32 %v279, %v1150
  %v1152 = vpop.f32.mrb[0].mxu0
  %1153 = vmatprep.mubr.f32.mxu0 0.0
  %1154 = vmatmul.mubr.f32.gmra.mrb[0].mxu0 %v304
  %v1155 = vpop.f32.mrb[0].mxu0
  %v1156 = vadd.f32 %v279, %v1155
  %v1157 = vpop.f32.mrb[0].mxu0
  %1158 = vmatprep.mubr.f32.mxu0 0.0
  %1159 = vmatmul.mubr.f32.gmra.mrb[0].mxu0 %v307
  %v1160 = vpop.f32.mrb[0].mxu0
  %v1161 = vadd.f32 %v279, %v1160
  %v1162 = vpop.f32.mrb[0].mxu0
  %1163 = vmatprep.mubr.f32.mxu0 0.0
  %1164 = vmatmul.mubr.f32.gmra.mrb[0].mxu0 %v310
  %v1165 = vpop.f32.mrb[0].mxu0
  %v1166 = vadd.f32 %v279, %v1165
  %v1167 = vpop.f32.mrb[0].mxu0
  %1168 = vmatprep.mubr.f32.mxu0 0.0
  %1169 = vmatmul.mubr.f32.gmra.mrb[0].mxu0 %v313
  %v1170 = vpop.f32.mrb[0].mxu0
  %v1171 = vadd.f32 %v279, %v1170
  %v1172 = vpop.f32.mrb[0].mxu0
  %1173 = vmatprep.mubr.f32.mxu0 0.0
  %1174 = vmatmul.mubr.f32.gmra.mrb[0].mxu0 %v316
  %v1175 = vpop.f32.mrb[0].mxu0
  %v1176 = vadd.f32 %v279, %v1175
  %v1177 = vpop.f32.mrb[0].mxu0
  %1178 = vmatprep.mubr.f32.mxu0 0.0
  %1179 = vmatmul.mubr.f32.gmra.mrb[0].mxu0 %v319
  %v1180 = vpop.f32.mrb[0].mxu0
  %v1181 = vadd.f32 %v279, %v1180
  %v1182 = vpop.f32.mrb[0].mxu0
  %1183 = vmatprep.mubr.f32.mxu0 0.0
  %1184 = vmatmul.mubr.f32.gmra.mrb[0].mxu0 %v322
  %v1185 = vpop.f32.mrb[0].mxu0
  %v1186 = vadd.f32 %v279, %v1185
  %v1187 = vpop.f32.mrb[0].mxu0
  %1188 = vmatprep.mubr.f32.mxu0 0.0
  %1189 = vmatmul.mubr.f32.gmra.mrb[0].mxu0 %v325
  %v1190 = vpop.f32.mrb[0].mxu0
  %v1191 = vadd.f32 %v279, %v1190
  %v1192 = vpop.f32.mrb[0].mxu0
  %1193 = vmatprep.mubr.f32.mxu0 0.0
  %1194 = vmatmul.mubr.f32.gmra.mrb[0].mxu0 %v328
  %v1195 = vpop.f32.mrb[0].mxu0
  %v1196 = vadd.f32 %v279, %v1195
  %v1197 = vpop.f32.mrb[0].mxu0
  %1198 = vmatprep.mubr.f32.mxu0 0.0
  %1199 = vmatmul.mubr.f32.gmra.mrb[0].mxu0 %v331
  %v1200 = vpop.f32.mrb[0].mxu0
  %v1201 = vadd.f32 %v279, %v1200
  %v1202 = vpop.f32.mrb[0].mxu0
  %1203 = vmatprep.mubr.f32.mxu0 0.0
  %1204 = vmatmul.mubr.f32.gmra.mrb[0].mxu0 %v334
  %v1205 = vpop.f32.mrb[0].mxu0
  %v1206 = vadd.f32 %v279, %v1205
  %v1207 = vpop.f32.mrb[0].mxu0
  %1208 = vmatprep.mubr.f32.mxu0 0.0
  %1209 = vmatmul.mubr.f32.gmra.mrb[0].mxu0 %v337
  %v1210 = vpop.f32.mrb[0].mxu0
  %v1211 = vadd.f32 %v279, %v1210
  %v1212 = vpop.f32.mrb[0].mxu0
  %1213 = vmatprep.mubr.f32.mxu0 0.0
  %1214 = vmatmul.mubr.f32.gmra.mrb[0].mxu0 %v340
  %v1215 = vpop.f32.mrb[0].mxu0
  %v1216 = vadd.f32 %v279, %v1215
  %v1217 = vpop.f32.mrb[0].mxu0
  %1218 = vmatprep.mubr.f32.mxu0 0.0
  %1219 = vmatmul.mubr.f32.gmra.mrb[0].mxu0 %v343
  %v1220 = vpop.f32.mrb[0].mxu0
  %v1221 = vadd.f32 %v279, %v1220
  %v1222 = vpop.f32.mrb[0].mxu0
  %1223 = vmatprep.mubr.f32.mxu0 0.0
  %1224 = vmatmul.mubr.f32.gmra.mrb[0].mxu0 %v346
  %v1225 = vpop.f32.mrb[0].mxu0
  %v1226 = vadd.f32 %v279, %v1225
  %v1227 = vpop.f32.mrb[0].mxu0
  %1228 = vmatprep.mubr.f32.mxu0 0.0
  %1229 = vmatmul.mubr.f32.gmra.mrb[0].mxu0 %v349
  %v1230 = vpop.f32.mrb[0].mxu0
  %v1231 = vadd.f32 %v279, %v1230
  %v1232 = vpop.f32.mrb[0].mxu0
  %1233 = vmatprep.mubr.f32.mxu0 0.0
  %1234 = vmatmul.mubr.f32.gmra.mrb[0].mxu0 %v352
  %v1235 = vpop.f32.mrb[0].mxu0
  %v1236 = vadd.f32 %v279, %v1235
  %v1237 = vpop.f32.mrb[0].mxu0
  %1238 = vmatprep.mubr.f32.mxu0 0.0
  %1239 = vmatmul.mubr.f32.gmra.mrb[0].mxu0 %v355
  %v1240 = vpop.f32.mrb[0].mxu0
  %v1241 = vadd.f32 %v279, %v1240
  %v1242 = vpop.f32.mrb[0].mxu0
  %1243 = vmatprep.mubr.f32.mxu0 0.0
  %1244 = vmatmul.mubr.f32.gmra.mrb[0].mxu0 %v358
  %v1245 = vpop.f32.mrb[0].mxu0
  %v1246 = vadd.f32 %v279, %v1245
  %v1247 = vpop.f32.mrb[0].mxu0
  %1248 = vmatprep.mubr.f32.mxu0 0.0
  %1249 = vmatmul.mubr.f32.gmra.mrb[0].mxu0 %v361
  %v1250 = vpop.f32.mrb[0].mxu0
  %v1251 = vadd.f32 %v279, %v1250
  %v1252 = vpop.f32.mrb[0].mxu0
  %1253 = vmatprep.mubr.f32.mxu0 0.0
  %1254 = vmatmul.mubr.f32.gmra.mrb[0].mxu0 %v364
  %v1255 = vpop.f32.mrb[0].mxu0
  %v1256 = vadd.f32 %v279, %v1255
  %v1257 = vpop.f32.mrb[0].mxu0
  %1258 = vmatprep.mubr.f32.mxu0 0.0
  %1259 = vmatmul.mubr.f32.gmra.mrb[0].mxu0 %v367
  %v1260 = vpop.f32.mrb[0].mxu0
  %v1261 = vadd.f32 %v279, %v1260
  %v1262 = vpop.f32.mrb[0].mxu0
  %1263 = vmatprep.mubr.f32.mxu0 0.0
  %1264 = vmatmul.mubr.f32.gmra.mrb[0].mxu0 %v370
  %v1265 = vpop.f32.mrb[0].mxu0
  %v1266 = vadd.f32 %v279, %v1265
  %v1267 = vpop.f32.mrb[0].mxu0
  %1268 = vmatprep.mubr.f32.mxu0 0.0
  %1269 = vmatmul.mubr.f32.gmra.mrb[0].mxu0 %v373
  %v1270 = vpop.f32.mrb[0].mxu0
  %v1271 = vadd.f32 %v279, %v1270
  %v1272 = vpop.f32.mrb[0].mxu0
  %1273 = vmatprep.mubr.f32.mxu0 0.0
  %1274 = vmatmul.mubr.f32.gmra.mrb[0].mxu0 %v376
  %v1275 = vpop.f32.mrb[0].mxu0
  %v1276 = vadd.f32 %v279, %v1275
  %v1277 = vpop.f32.mrb[0].mxu0
  %1278 = vmatprep.mubr.f32.mxu0 0.0
  %1279 = vmatmul.mubr.f32.gmra.mrb[0].mxu0 %v379
  %v1280 = vpop.f32.mrb[0].mxu0
  %v1281 = vadd.f32 %v279, %v1280
  %v1282 = vpop.f32.mrb[0].mxu0
  %1283 = vmatprep.mubr.f32.mxu0 0.0
  %1284 = vmatmul.mubr.f32.gmra.mrb[0].mxu0 %v382
  %v1285 = vpop.f32.mrb[0].mxu0
  %v1286 = vadd.f32 %v279, %v1285
  %v1287 = vpop.f32.mrb[0].mxu0
  %1288 = vmatprep.mubr.f32.mxu0 0.0
  %1289 = vmatmul.mubr.f32.gmra.mrb[0].mxu0 %v385
  %v1290 = vpop.f32.mrb[0].mxu0
  %v1291 = vadd.f32 %v279, %v1290
  %v1292 = vpop.f32.mrb[0].mxu0
  %1293 = vmatprep.mubr.f32.mxu0 0.0
  %1294 = vmatmul.mubr.f32.gmra.mrb[0].mxu0 %v388
  %v1295 = vpop.f32.mrb[0].mxu0
  %v1296 = vadd.f32 %v279, %v1295
  %v1297 = vpop.f32.mrb[0].mxu0
  %1298 = vmatprep.mubr.f32.mxu0 0.0
  %1299 = vmatmul.mubr.f32.gmra.mrb[0].mxu0 %v391
  %v1300 = vpop.f32.mrb[0].mxu0
  %v1301 = vadd.f32 %v279, %v1300
  %v1302 = vpop.f32.mrb[0].mxu0
  %1303 = vmatprep.mubr.f32.mxu0 0.0
  %1304 = vmatmul.mubr.f32.gmra.mrb[0].mxu0 %v394
  %v1305 = vpop.f32.mrb[0].mxu0
  %v1306 = vadd.f32 %v279, %v1305
  %v1307 = vpop.f32.mrb[0].mxu0
  %1308 = vmatprep.mubr.f32.mxu0 0.0
  %1309 = vmatmul.mubr.f32.gmra.mrb[0].mxu0 %v397
  %v1310 = vpop.f32.mrb[0].mxu0
  %v1311 = vadd.f32 %v279, %v1310
  %v1312 = vpop.f32.mrb[0].mxu0
  %1313 = vmatprep.mubr.f32.mxu0 0.0
  %1314 = vmatmul.mubr.f32.gmra.mrb[0].mxu0 %v400
  %v1315 = vpop.f32.mrb[0].mxu0
  %v1316 = vadd.f32 %v279, %v1315
  %v1317 = vpop.f32.mrb[0].mxu0
  %1318 = vmatprep.mubr.f32.mxu0 0.0
  %1319 = vmatmul.mubr.f32.gmra.mrb[0].mxu0 %v403
  %v1320 = vpop.f32.mrb[0].mxu0
  %v1321 = vadd.f32 %v279, %v1320
  %v1322 = vpop.f32.mrb[0].mxu0
  %1323 = vmatprep.mubr.f32.mxu0 0.0
  %1324 = vmatmul.mubr.f32.gmra.mrb[0].mxu0 %v406
  %v1325 = vpop.f32.mrb[0].mxu0
  %v1326 = vadd.f32 %v279, %v1325
  %v1327 = vpop.f32.mrb[0].mxu0
  %1328 = vmatprep.mubr.f32.mxu0 0.0
  %1329 = vmatmul.mubr.f32.gmra.mrb[0].mxu0 %v409
  %v1330 = vpop.f32.mrb[0].mxu0
  %v1331 = vadd.f32 %v279, %v1330
  %v1332 = vpop.f32.mrb[0].mxu0
  %1333 = vmatprep.mubr.f32.mxu0 0.0
  %1334 = vmatmul.mubr.f32.gmra.mrb[0].mxu0 %v412
  %v1335 = vpop.f32.mrb[0].mxu0
  %v1336 = vadd.f32 %v279, %v1335
  %v1337 = vpop.f32.mrb[0].mxu0
  %1338 = vmatprep.mubr.f32.mxu0 0.0
  %1339 = vmatmul.mubr.f32.gmra.mrb[0].mxu0 %v415
  %v1340 = vpop.f32.mrb[0].mxu0
  %v1341 = vadd.f32 %v279, %v1340
  %v1342 = vpop.f32.mrb[0].mxu0
  %1343 = vmatprep.mubr.f32.mxu0 0.0
  %1344 = vmatmul.mubr.f32.gmra.mrb[0].mxu0 %v418
  %v1345 = vpop.f32.mrb[0].mxu0
  %v1346 = vadd.f32 %v279, %v1345
  %v1347 = vpop.f32.mrb[0].mxu0
  %1348 = vmatprep.mubr.f32.mxu0 0.0
  %1349 = vmatmul.mubr.f32.gmra.mrb[0].mxu0 %v421
  %v1350 = vpop.f32.mrb[0].mxu0
  %v1351 = vadd.f32 %v279, %v1350
  %v1352 = vpop.f32.mrb[0].mxu0
  %1353 = vmatprep.mubr.f32.mxu0 0.0
  %1354 = vmatmul.mubr.f32.gmra.mrb[0].mxu0 %v424
  %v1355 = vpop.f32.mrb[0].mxu0
  %v1356 = vadd.f32 %v279, %v1355
  %v1357 = vpop.f32.mrb[0].mxu0
  %1358 = vmatprep.mubr.f32.mxu0 0.0
  %1359 = vmatmul.mubr.f32.gmra.mrb[0].mxu0 %v427
  %v1360 = vpop.f32.mrb[0].mxu0
  %v1361 = vadd.f32 %v279, %v1360
  %v1362 = vpop.f32.mrb[0].mxu0
  %1363 = vmatprep.mubr.f32.mxu0 0.0
  %1364 = vmatmul.mubr.f32.gmra.mrb[0].mxu0 %v430
  %v1365 = vpop.f32.mrb[0].mxu0
  %v1366 = vadd.f32 %v279, %v1365
  %v1367 = vpop.f32.mrb[0].mxu0
  %1368 = vmatprep.mubr.f32.mxu0 0.0
  %1369 = vmatmul.mubr.f32.gmra.mrb[0].mxu0 %v433
  %v1370 = vpop.f32.mrb[0].mxu0
  %v1371 = vadd.f32 %v279, %v1370
  %v1372 = vpop.f32.mrb[0].mxu0
  %1373 = vmatprep.mubr.f32.mxu0 0.0
  %1374 = vmatmul.mubr.f32.gmra.mrb[0].mxu0 %v436
  %v1375 = vpop.f32.mrb[0].mxu0
  %v1376 = vadd.f32 %v279, %v1375
  %v1377 = vpop.f32.mrb[0].mxu0
  %1378 = vmatprep.mubr.f32.mxu0 0.0
  %1379 = vmatmul.mubr.f32.gmra.mrb[0].mxu0 %v439
  %v1380 = vpop.f32.mrb[0].mxu0
  %v1381 = vadd.f32 %v279, %v1380
  %v1382 = vpop.f32.mrb[0].mxu0
  %1383 = vmatprep.mubr.f32.mxu0 0.0
  %1384 = vmatmul.mubr.f32.gmra.mrb[0].mxu0 %v442
  %v1385 = vpop.f32.mrb[0].mxu0
  %v1386 = vadd.f32 %v279, %v1385
  %v1387 = vpop.f32.mrb[0].mxu0
  %1388 = vmatprep.mubr.f32.mxu0 0.0
  %1389 = vmatmul.mubr.f32.gmra.mrb[0].mxu0 %v445
  %v1390 = vpop.f32.mrb[0].mxu0
  %v1391 = vadd.f32 %v279, %v1390
  %v1392 = vpop.f32.mrb[0].mxu0
  %1393 = vmatprep.mubr.f32.mxu0 0.0
  %1394 = vmatmul.mubr.f32.gmra.mrb[0].mxu0 %v448
  %v1395 = vpop.f32.mrb[0].mxu0
  %v1396 = vadd.f32 %v279, %v1395
  %v1397 = vpop.f32.mrb[0].mxu0
  %1398 = vmatprep.mubr.f32.mxu0 0.0
  %1399 = vmatmul.mubr.f32.gmra.mrb[0].mxu0 %v451
  %v1400 = vpop.f32.mrb[0].mxu0
  %v1401 = vadd.f32 %v279, %v1400
  %v1402 = vpop.f32.mrb[0].mxu0
  %1403 = vmatprep.mubr.f32.mxu0 0.0
  %1404 = vmatmul.mubr.f32.gmra.mrb[0].mxu0 %v454
  %v1405 = vpop.f32.mrb[0].mxu0
  %v1406 = vadd.f32 %v279, %v1405
  %v1407 = vpop.f32.mrb[0].mxu0
  %1408 = vmatprep.mubr.f32.mxu0 0.0
  %1409 = vmatmul.mubr.f32.gmra.mrb[0].mxu0 %v457
  %v1410 = vpop.f32.mrb[0].mxu0
  %v1411 = vadd.f32 %v279, %v1410
  %v1412 = vpop.f32.mrb[0].mxu0
  %1413 = vmatprep.mubr.f32.mxu0 0.0
  %1414 = vmatmul.mubr.f32.gmra.mrb[0].mxu0 %v460
  %v1415 = vpop.f32.mrb[0].mxu0
  %v1416 = vadd.f32 %v279, %v1415
  %v1417 = vpop.f32.mrb[0].mxu0
  %1418 = vmatprep.mubr.f32.mxu0 0.0
  %1419 = vmatmul.mubr.f32.gmra.mrb[0].mxu0 %v463
  %v1420 = vpop.f32.mrb[0].mxu0
  %v1421 = vadd.f32 %v279, %v1420
  %v1422 = vpop.f32.mrb[0].mxu0
  %1423 = vmatprep.mubr.f32.mxu0 0.0
  %1424 = vmatmul.mubr.f32.gmra.mrb[0].mxu0 %v466
  %v1425 = vpop.f32.mrb[0].mxu0
  %v1426 = vadd.f32 %v279, %v1425
  %v1427 = vpop.f32.mrb[0].mxu0
  %1428 = vmatprep.mubr.f32.mxu0 0.0
  %1429 = vmatmul.mubr.f32.gmra.mrb[0].mxu0 %v469
  %v1430 = vpop.f32.mrb[0].mxu0
  %v1431 = vadd.f32 %v279, %v1430
  %v1432 = vpop.f32.mrb[0].mxu0
  %1433 = vmatprep.mubr.f32.mxu0 0.0
  %1434 = vmatmul.mubr.f32.gmra.mrb[0].mxu0 %v472
  %v1435 = vpop.f32.mrb[0].mxu0
  %v1436 = vadd.f32 %v279, %v1435
  %v1437 = vpop.f32.mrb[0].mxu0
  %1438 = vmatprep.mubr.f32.mxu0 0.0
  %1439 = vmatmul.mubr.f32.gmra.mrb[0].mxu0 %v475
  %v1440 = vpop.f32.mrb[0].mxu0
  %v1441 = vadd.f32 %v279, %v1440
  %v1442 = vpop.f32.mrb[0].mxu0
  %1443 = vmatprep.mubr.f32.mxu0 0.0
  %1444 = vmatmul.mubr.f32.gmra.mrb[0].mxu0 %v478
  %v1445 = vpop.f32.mrb[0].mxu0
  %v1446 = vadd.f32 %v279, %v1445
  %v1447 = vpop.f32.mrb[0].mxu0
  %1448 = vmatprep.mubr.f32.mxu0 0.0
  %1449 = vmatmul.mubr.f32.gmra.mrb[0].mxu0 %v481
  %v1450 = vpop.f32.mrb[0].mxu0
  %v1451 = vadd.f32 %v279, %v1450
  %v1452 = vpop.f32.mrb[0].mxu0
  %1453 = vmatprep.mubr.f32.mxu0 0.0
  %1454 = vmatmul.mubr.f32.gmra.mrb[0].mxu0 %v484
  %v1455 = vpop.f32.mrb[0].mxu0
  %v1456 = vadd.f32 %v279, %v1455
  %v1457 = vpop.f32.mrb[0].mxu0
  %1458 = vmatprep.mubr.f32.mxu0 0.0
  %1459 = vmatmul.mubr.f32.gmra.mrb[0].mxu0 %v487
  %v1460 = vpop.f32.mrb[0].mxu0
  %v1461 = vadd.f32 %v279, %v1460
  %v1462 = vpop.f32.mrb[0].mxu0
  %1463 = vmatprep.mubr.f32.mxu0 0.0
  %1464 = vmatmul.mubr.f32.gmra.mrb[0].mxu0 %v490
  %v1465 = vpop.f32.mrb[0].mxu0
  %v1466 = vadd.f32 %v279, %v1465
  %v1467 = vpop.f32.mrb[0].mxu0
  %1468 = vmatprep.mubr.f32.mxu0 0.0
  %1469 = vmatmul.mubr.f32.gmra.mrb[0].mxu0 %v493
  %v1470 = vpop.f32.mrb[0].mxu0
  %v1471 = vadd.f32 %v279, %v1470
  %v1472 = vpop.f32.mrb[0].mxu0
  %1473 = vmatprep.mubr.f32.mxu0 0.0
  %1474 = vmatmul.mubr.f32.gmra.mrb[0].mxu0 %v496
  %v1475 = vpop.f32.mrb[0].mxu0
  %v1476 = vadd.f32 %v279, %v1475
  %v1477 = vpop.f32.mrb[0].mxu0
  %1478 = vmatprep.mubr.f32.mxu0 0.0
  %1479 = vmatmul.mubr.f32.gmra.mrb[0].mxu0 %v499
  %v1480 = vpop.f32.mrb[0].mxu0
  %v1481 = vadd.f32 %v279, %v1480
  %v1482 = vpop.f32.mrb[0].mxu0
  %1483 = vmatprep.mubr.f32.mxu0 0.0
  %1484 = vmatmul.mubr.f32.gmra.mrb[0].mxu0 %v502
  %v1485 = vpop.f32.mrb[0].mxu0
  %v1486 = vadd.f32 %v279, %v1485
  %v1487 = vpop.f32.mrb[0].mxu0
  %1488 = vmatprep.mubr.f32.mxu0 0.0
  %1489 = vmatmul.mubr.f32.gmra.mrb[0].mxu0 %v505
  %v1490 = vpop.f32.mrb[0].mxu0
  %v1491 = vadd.f32 %v279, %v1490
  %v1492 = vpop.f32.mrb[0].mxu0
  %1493 = vmatprep.mubr.f32.mxu0 0.0
  %1494 = vmatmul.mubr.f32.gmra.mrb[0].mxu0 %v508
  %v1495 = vpop.f32.mrb[0].mxu0
  %v1496 = vadd.f32 %v279, %v1495
  %v1497 = vpop.f32.mrb[0].mxu0
  %1498 = vmatprep.mubr.f32.mxu0 0.0
  %1499 = vmatmul.mubr.f32.gmra.mrb[0].mxu0 %v511
  %v1500 = vpop.f32.mrb[0].mxu0
  %v1501 = vadd.f32 %v279, %v1500
  %v1502 = vpop.f32.mrb[0].mxu0
  %1503 = vmatprep.mubr.f32.mxu0 0.0
  %1504 = vmatmul.mubr.f32.gmra.mrb[0].mxu0 %v514
  %v1505 = vpop.f32.mrb[0].mxu0
  %v1506 = vadd.f32 %v279, %v1505
  %v1507 = vpop.f32.mrb[0].mxu0
  %1508 = vmatprep.mubr.f32.mxu0 0.0
  %1509 = vmatmul.mubr.f32.gmra.mrb[0].mxu0 %v517
  %v1510 = vpop.f32.mrb[0].mxu0
  %v1511 = vadd.f32 %v279, %v1510
  %v1512 = vpop.f32.mrb[0].mxu0
  %1513 = vmatprep.mubr.f32.mxu0 0.0
  %1514 = vmatmul.mubr.f32.gmra.mrb[0].mxu0 %v520
  %v1515 = vpop.f32.mrb[0].mxu0
  %v1516 = vadd.f32 %v279, %v1515
  %v1517 = vpop.f32.mrb[0].mxu0
  %1518 = vmatprep.mubr.f32.mxu0 0.0
  %1519 = vmatmul.mubr.f32.gmra.mrb[0].mxu0 %v523
  %v1520 = vpop.f32.mrb[0].mxu0
  %v1521 = vadd.f32 %v279, %v1520
  %v1522 = vpop.f32.mrb[0].mxu0
  %1523 = vmatprep.mubr.f32.mxu0 0.0
  %1524 = vmatmul.mubr.f32.gmra.mrb[0].mxu0 %v526
  %v1525 = vpop.f32.mrb[0].mxu0
  %v1526 = vadd.f32 %v279, %v1525
  %v1527 = vpop.f32.mrb[0].mxu0
  %1528 = vmatprep.mubr.f32.mxu0 0.0
  %1529 = vmatmul.mubr.f32.gmra.mrb[0].mxu0 %v529
  %v1530 = vpop.f32.mrb[0].mxu0
  %v1531 = vadd.f32 %v279, %v1530
  %v1532 = vpop.f32.mrb[0].mxu0
  %1533 = vmatprep.mubr.f32.mxu0 0.0
  %1534 = vmatmul.mubr.f32.gmra.mrb[0].mxu0 %v532
  %v1535 = vpop.f32.mrb[0].mxu0
  %v1536 = vadd.f32 %v279, %v1535
  %v1537 = vpop.f32.mrb[0].mxu0
  %1538 = vmatprep.mubr.f32.mxu0 0.0
  %1539 = vmatmul.mubr.f32.gmra.mrb[0].mxu0 %v535
  %v1540 = vpop.f32.mrb[0].mxu0
  %v1541 = vadd.f32 %v279, %v1540
  %v1542 = vpop.f32.mrb[0].mxu0
  %1543 = vmatprep.mubr.f32.mxu0 0.0
  %1544 = vmatmul.mubr.f32.gmra.mrb[0].mxu0 %v538
  %v1545 = vpop.f32.mrb[0].mxu0
  %v1546 = vadd.f32 %v279, %v1545
  %v1547 = vpop.f32.mrb[0].mxu0
  %1548 = vmatprep.mubr.f32.mxu0 0.0
  %1549 = vmatmul.mubr.f32.gmra.mrb[0].mxu0 %v541
  %v1550 = vpop.f32.mrb[0].mxu0
  %v1551 = vadd.f32 %v279, %v1550
  %v1552 = vpop.f32.mrb[0].mxu0
  %1553 = vmatprep.mubr.f32.mxu0 0.0
  %1554 = vmatmul.mubr.f32.gmra.mrb[0].mxu0 %v544
  %v1555 = vpop.f32.mrb[0].mxu0
  %v1556 = vadd.f32 %v279, %v1555
  %v1557 = vpop.f32.mrb[0].mxu0
  %1558 = vmatprep.mubr.f32.mxu0 0.0
  %1559 = vmatmul.mubr.f32.gmra.mrb[0].mxu0 %v547
  %v1560 = vpop.f32.mrb[0].mxu0
  %v1561 = vadd.f32 %v279, %v1560
  %v1562 = vpop.f32.mrb[0].mxu0
  %1563 = vmatprep.mubr.f32.mxu0 0.0
  %1564 = vmatmul.mubr.f32.gmra.mrb[0].mxu0 %v550
  %v1565 = vpop.f32.mrb[0].mxu0
  %v1566 = vadd.f32 %v279, %v1565
  %v1567 = vpop.f32.mrb[0].mxu0
  %1568 = vmatprep.mubr.f32.mxu0 0.0
  %1569 = vmatmul.mubr.f32.gmra.mrb[0].mxu0 %v553
  %v1570 = vpop.f32.mrb[0].mxu0
  %v1571 = vadd.f32 %v279, %v1570
  %v1572 = vpop.f32.mrb[0].mxu0
  %1573 = vmatprep.mubr.f32.mxu0 0.0
  %1574 = vmatmul.mubr.f32.gmra.mrb[0].mxu0 %v556
  %v1575 = vpop.f32.mrb[0].mxu0
  %v1576 = vadd.f32 %v279, %v1575
  %v1577 = vpop.f32.mrb[0].mxu0
  %1578 = vmatprep.mubr.f32.mxu0 0.0
  %1579 = vmatmul.mubr.f32.gmra.mrb[0].mxu0 %v559
  %v1580 = vpop.f32.mrb[0].mxu0
  %v1581 = vadd.f32 %v279, %v1580
  %v1582 = vpop.f32.mrb[0].mxu0
  %1583 = vmatprep.mubr.f32.mxu0 0.0
  %1584 = vmatmul.mubr.f32.gmra.mrb[0].mxu0 %v562
  %v1585 = vpop.f32.mrb[0].mxu0
  %v1586 = vadd.f32 %v279, %v1585
  %v1587 = vpop.f32.mrb[0].mxu0
  %1588 = vmatprep.mubr.f32.mxu0 0.0
  %1589 = vmatmul.mubr.f32.gmra.mrb[0].mxu0 %v565
  %v1590 = vpop.f32.mrb[0].mxu0
  %v1591 = vadd.f32 %v279, %v1590
  %v1592 = vpop.f32.mrb[0].mxu0
  %1593 = vmatprep.mubr.f32.mxu0 0.0
  %1594 = vmatmul.mubr.f32.gmra.mrb[0].mxu0 %v568
  %v1595 = vpop.f32.mrb[0].mxu0
  %v1596 = vadd.f32 %v279, %v1595
  %v1597 = vpop.f32.mrb[0].mxu0
  %1598 = vmatprep.mubr.f32.mxu0 0.0
  %1599 = vmatmul.mubr.f32.gmra.mrb[0].mxu0 %v571
  %v1600 = vpop.f32.mrb[0].mxu0
  %v1601 = vadd.f32 %v279, %v1600
  %v1602 = vpop.f32.mrb[0].mxu0
  %1603 = vmatprep.mubr.f32.mxu0 0.0
  %1604 = vmatmul.mubr.f32.gmra.mrb[0].mxu0 %v574
  %v1605 = vpop.f32.mrb[0].mxu0
  %v1606 = vadd.f32 %v279, %v1605
  %v1607 = vpop.f32.mrb[0].mxu0
  %1608 = vmatprep.mubr.f32.mxu0 0.0
  %1609 = vmatmul.mubr.f32.gmra.mrb[0].mxu0 %v577
  %v1610 = vpop.f32.mrb[0].mxu0
  %v1611 = vadd.f32 %v279, %v1610
  %v1612 = vpop.f32.mrb[0].mxu0
  %1613 = vmatprep.mubr.f32.mxu0 0.0
  %1614 = vmatmul.mubr.f32.gmra.mrb[0].mxu0 %v580
  %v1615 = vpop.f32.mrb[0].mxu0
  %v1616 = vadd.f32 %v279, %v1615
  %v1617 = vpop.f32.mrb[0].mxu0
  %1618 = vmatprep.mubr.f32.mxu0 0.0
  %1619 = vmatmul.mubr.f32.gmra.mrb[0].mxu0 %v583
  %v1620 = vpop.f32.mrb[0].mxu0
  %v1621 = vadd.f32 %v279, %v1620
  %v1622 = vpop.f32.mrb[0].mxu0
  %1623 = vmatprep.mubr.f32.mxu0 0.0
  %1624 = vmatmul.mubr.f32.gmra.mrb[0].mxu0 %v586
  %v1625 = vpop.f32.mrb[0].mxu0
  %v1626 = vadd.f32 %v279, %v1625
  %v1627 = vpop.f32.mrb[0].mxu0
  %1628 = vmatprep.mubr.f32.mxu0 0.0
  %1629 = vmatmul.mubr.f32.gmra.mrb[0].mxu0 %v589
  %v1630 = vpop.f32.mrb[0].mxu0
  %v1631 = vadd.f32 %v279, %v1630
  %v1632 = vpop.f32.mrb[0].mxu0
  %1633 = vmatprep.mubr.f32.mxu0 0.0
  %1634 = vmatmul.mubr.f32.gmra.mrb[0].mxu0 %v592
  %v1635 = vpop.f32.mrb[0].mxu0
  %v1636 = vadd.f32 %v279, %v1635
  %v1637 = vpop.f32.mrb[0].mxu0
  %1638 = vmatprep.mubr.f32.mxu0 0.0
  %1639 = vmatmul.mubr.f32.gmra.mrb[0].mxu0 %v595
  %v1640 = vpop.f32.mrb[0].mxu0
  %v1641 = vadd.f32 %v279, %v1640
  %v1642 = vpop.f32.mrb[0].mxu0
  %1643 = vmatprep.mubr.f32.mxu0 0.0
  %1644 = vmatmul.mubr.f32.gmra.mrb[0].mxu0 %v598
  %v1645 = vpop.f32.mrb[0].mxu0
  %v1646 = vadd.f32 %v279, %v1645
  %v1647 = vpop.f32.mrb[0].mxu0
  %1648 = vmatprep.mubr.f32.mxu0 0.0
  %1649 = vmatmul.mubr.f32.gmra.mrb[0].mxu0 %v601
  %v1650 = vpop.f32.mrb[0].mxu0
  %v1651 = vadd.f32 %v279, %v1650
  %v1652 = vpop.f32.mrb[0].mxu0
  %1653 = vmatprep.mubr.f32.mxu0 0.0
  %1654 = vmatmul.mubr.f32.gmra.mrb[0].mxu0 %v604
  %v1655 = vpop.f32.mrb[0].mxu0
  %v1656 = vadd.f32 %v279, %v1655
  %v1657 = vpop.f32.mrb[0].mxu0
  %1658 = vmatprep.mubr.f32.mxu0 0.0
  %1659 = vmatmul.mubr.f32.gmra.mrb[0].mxu0 %v607
  %v1660 = vpop.f32.mrb[0].mxu0
  %v1661 = vadd.f32 %v279, %v1660
  %v1662 = vpop.f32.mrb[0].mxu0
  %1663 = vmatprep.mubr.f32.mxu0 0.0
  %1664 = vmatmul.mubr.f32.gmra.mrb[0].mxu0 %v610
  %v1665 = vpop.f32.mrb[0].mxu0
  %v1666 = vadd.f32 %v279, %v1665
  %v1667 = vpop.f32.mrb[0].mxu0
  %1668 = vmatprep.mubr.f32.mxu0 0.0
  %1669 = vmatmul.mubr.f32.gmra.mrb[0].mxu0 %v613
  %v1670 = vpop.f32.mrb[0].mxu0
  %v1671 = vadd.f32 %v279, %v1670
  %v1672 = vpop.f32.mrb[0].mxu0
  %1673 = vmatprep.mubr.f32.mxu0 0.0
  %1674 = vmatmul.mubr.f32.gmra.mrb[0].mxu0 %v616
  %v1675 = vpop.f32.mrb[0].mxu0
  %v1676 = vadd.f32 %v279, %v1675
  %v1677 = vpop.f32.mrb[0].mxu0
  %1678 = vmatprep.mubr.f32.mxu0 0.0
  %1679 = vmatmul.mubr.f32.gmra.mrb[0].mxu0 %v619
  %v1680 = vpop.f32.mrb[0].mxu0
  %v1681 = vadd.f32 %v279, %v1680
  %v1682 = vpop.f32.mrb[0].mxu0
  %1683 = vmatprep.mubr.f32.mxu0 0.0
  %1684 = vmatmul.mubr.f32.gmra.mrb[0].mxu0 %v622
  %v1685 = vpop.f32.mrb[0].mxu0
  %v1686 = vadd.f32 %v279, %v1685
  %v1687 = vpop.f32.mrb[0].mxu0
  %1688 = vmatprep.mubr.f32.mxu0 0.0
  %1689 = vmatmul.mubr.f32.gmra.mrb[0].mxu0 %v625
  %v1690 = vpop.f32.mrb[0].mxu0
  %v1691 = vadd.f32 %v279, %v1690
  %v1692 = vpop.f32.mrb[0].mxu0
  %1693 = vmatprep.mubr.f32.mxu0 0.0
  %1694 = vmatmul.mubr.f32.gmra.mrb[0].mxu0 %v628
  %v1695 = vpop.f32.mrb[0].mxu0
  %v1696 = vadd.f32 %v279, %v1695
  %v1697 = vpop.f32.mrb[0].mxu0
  %1698 = vmatprep.mubr.f32.mxu0 0.0
  %1699 = vmatmul.mubr.f32.gmra.mrb[0].mxu0 %v631
  %v1700 = vpop.f32.mrb[0].mxu0
  %v1701 = vadd.f32 %v279, %v1700
  %v1702 = vpop.f32.mrb[0].mxu0
  %1703 = vmatprep.mubr.f32.mxu0 0.0
  %1704 = vmatmul.mubr.f32.gmra.mrb[0].mxu0 %v634
  %v1705 = vpop.f32.mrb[0].mxu0
  %v1706 = vadd.f32 %v279, %v1705
  %v1707 = vpop.f32.mrb[0].mxu0
  %1708 = vmatprep.mubr.f32.mxu0 0.0
  %1709 = vmatmul.mubr.f32.gmra.mrb[0].mxu0 %v637
  %v1710 = vpop.f32.mrb[0].mxu0
  %v1711 = vadd.f32 %v279, %v1710
  %v1712 = vpop.f32.mrb[0].mxu0
  %1713 = vmatprep.mubr.f32.mxu0 0.0
  %1714 = vmatmul.mubr.f32.gmra.mrb[0].mxu0 %v640
  %v1715 = vpop.f32.mrb[0].mxu0
  %v1716 = vadd.f32 %v279, %v1715
  %v1717 = vpop.f32.mrb[0].mxu0
  %1718 = vmatprep.mubr.f32.mxu0 0.0
  %1719 = vmatmul.mubr.f32.gmra.mrb[0].mxu0 %v643
  %v1720 = vpop.f32.mrb[0].mxu0
  %v1721 = vadd.f32 %v279, %v1720
  %v1722 = vpop.f32.mrb[0].mxu0
  %1723 = vmatprep.mubr.f32.mxu0 0.0
  %1724 = vmatmul.mubr.f32.gmra.mrb[0].mxu0 %v646
  %v1725 = vpop.f32.mrb[0].mxu0
  %v1726 = vadd.f32 %v279, %v1725
  %v1727 = vpop.f32.mrb[0].mxu0
  %1728 = vmatprep.mubr.f32.mxu0 0.0
  %1729 = vmatmul.mubr.f32.gmra.mrb[0].mxu0 %v649
  %v1730 = vpop.f32.mrb[0].mxu0
  %v1731 = vadd.f32 %v279, %v1730
  %v1732 = vpop.f32.mrb[0].mxu0
  %1733 = vmatprep.mubr.f32.mxu0 0.0
  %1734 = vmatmul.mubr.f32.gmra.mrb[0].mxu0 %v652
  %v1735 = vpop.f32.mrb[0].mxu0
  %v1736 = vadd.f32 %v279, %v1735
  %v1737 = vpop.f32.mrb[0].mxu0
  %1738 = vmatprep.mubr.f32.mxu0 0.0
  %1739 = vmatmul.mubr.f32.gmra.mrb[0].mxu0 %v655
  %v1740 = vpop.f32.mrb[0].mxu0
  %v1741 = vadd.f32 %v279, %v1740
  %v1742 = vpop.f32.mrb[0].mxu0
  %1743 = vmatprep.mubr.f32.mxu0 0.0
  %1744 = vmatmul.mubr.f32.gmra.mrb[0].mxu0 %v658
  %v1745 = vpop.f32.mrb[0].mxu0
  %v1746 = vadd.f32 %v279, %v1745
  %v1747 = vpop.f32.mrb[0].mxu0
  %1748 = vmatprep.mubr.f32.mxu0 0.0
  %1749 = vmatmul.mubr.f32.gmra.mrb[0].mxu0 %v661
  %v1750 = vpop.f32.mrb[0].mxu0
  %v1751 = vadd.f32 %v279, %v1750
  %v1752 = vpop.f32.mrb[0].mxu0
  %1753 = vmatprep.mubr.f32.mxu0 0.0
  %1754 = vmatmul.mubr.f32.gmra.mrb[0].mxu0 %v664
  %v1755 = vpop.f32.mrb[0].mxu0
  %v1756 = vadd.f32 %v279, %v1755
  %v1757 = vpop.f32.mrb[0].mxu0
  %1758 = vmatprep.mubr.f32.mxu0 0.0
  %1759 = vmatmul.mubr.f32.gmra.mrb[0].mxu0 %v667
  %v1760 = vpop.f32.mrb[0].mxu0
  %v1761 = vadd.f32 %v279, %v1760
  %v1762 = vpop.f32.mrb[0].mxu0
  %1763 = vmatprep.mubr.f32.mxu0 0.0
  %1764 = vmatmul.mubr.f32.gmra.mrb[0].mxu0 %v670
  %v1765 = vpop.f32.mrb[0].mxu0
  %v1766 = vadd.f32 %v279, %v1765
  %v1767 = vpop.f32.mrb[0].mxu0
  %1768 = vmatprep.mubr.f32.mxu0 0.0
  %1769 = vmatmul.mubr.f32.gmra.mrb[0].mxu0 %v673
  %v1770 = vpop.f32.mrb[0].mxu0
  %v1771 = vadd.f32 %v279, %v1770
  %v1772 = vpop.f32.mrb[0].mxu0
  %1773 = vmatprep.mubr.f32.mxu0 0.0
  %1774 = vmatmul.mubr.f32.gmra.mrb[0].mxu0 %v676
  %v1775 = vpop.f32.mrb[0].mxu0
  %v1776 = vadd.f32 %v279, %v1775
  %v1777 = vpop.f32.mrb[0].mxu0
  %1778 = vmatprep.mubr.f32.mxu0 0.0
  %1779 = vmatmul.mubr.f32.gmra.mrb[0].mxu0 %v679
  %v1780 = vpop.f32.mrb[0].mxu0
  %v1781 = vadd.f32 %v279, %v1780
  %v1782 = vpop.f32.mrb[0].mxu0
  %1783 = vmatprep.mubr.f32.mxu0 0.0
  %1784 = vmatmul.mubr.f32.gmra.mrb[0].mxu0 %v682
  %v1785 = vpop.f32.mrb[0].mxu0
  %v1786 = vadd.f32 %v279, %v1785
  %v1787 = vpop.f32.mrb[0].mxu0
  %1788 = vmatprep.mubr.f32.mxu0 0.0
  %1789 = vmatmul.mubr.f32.gmra.mrb[0].mxu0 %v685
  %v1790 = vpop.f32.mrb[0].mxu0
  %v1791 = vadd.f32 %v279, %v1790
  %v1792 = vpop.f32.mrb[0].mxu0
  %1793 = vmatprep.mubr.f32.mxu0 0.0
  %1794 = vmatmul.mubr.f32.gmra.mrb[0].mxu0 %v688
  %v1795 = vpop.f32.mrb[0].mxu0
  %v1796 = vadd.f32 %v279, %v1795
  %v1797 = vpop.f32.mrb[0].mxu0
  %1798 = vmatprep.mubr.f32.mxu0 0.0
  %1799 = vmatmul.mubr.f32.gmra.mrb[0].mxu0 %v691
  %v1800 = vpop.f32.mrb[0].mxu0
  %v1801 = vadd.f32 %v279, %v1800
  %v1802 = vpop.f32.mrb[0].mxu0
  %1803 = vmatprep.mubr.f32.mxu0 0.0
  %1804 = vmatmul.mubr.f32.gmra.mrb[0].mxu0 %v694
  %v1805 = vpop.f32.mrb[0].mxu0
  %v1806 = vadd.f32 %v279, %v1805
  %v1807 = vpop.f32.mrb[0].mxu0
  %1808 = vmatprep.mubr.f32.mxu0 0.0
  %1809 = vmatmul.mubr.f32.gmra.mrb[0].mxu0 %v697
  %v1810 = vpop.f32.mrb[0].mxu0
  %v1811 = vadd.f32 %v279, %v1810
  %v1812 = vpop.f32.mrb[0].mxu0
  %1813 = vmatprep.mubr.f32.mxu0 0.0
  %1814 = vmatmul.mubr.f32.gmra.mrb[0].mxu0 %v700
  %v1815 = vpop.f32.mrb[0].mxu0
  %v1816 = vadd.f32 %v279, %v1815
  %v1817 = vpop.f32.mrb[0].mxu0
  %1818 = vmatprep.mubr.f32.mxu0 0.0
  %1819 = vmatmul.mubr.f32.gmra.mrb[0].mxu0 %v703
  %v1820 = vpop.f32.mrb[0].mxu0
  %v1821 = vadd.f32 %v279, %v1820
  %v1822 = vpop.f32.mrb[0].mxu0
  %1823 = vmatprep.mubr.f32.mxu0 0.0
  %1824 = vmatmul.mubr.f32.gmra.mrb[0].mxu0 %v706
  %v1825 = vpop.f32.mrb[0].mxu0
  %v1826 = vadd.f32 %v279, %v1825
  %v1827 = vpop.f32.mrb[0].mxu0
  %1828 = vmatprep.mubr.f32.mxu0 0.0
  %1829 = vmatmul.mubr.f32.gmra.mrb[0].mxu0 %v709
  %v1830 = vpop.f32.mrb[0].mxu0
  %v1831 = vadd.f32 %v279, %v1830
  %v1832 = vpop.f32.mrb[0].mxu0
  %1833 = vmatprep.mubr.f32.mxu0 0.0
  %1834 = vmatmul.mubr.f32.gmra.mrb[0].mxu0 %v712
  %v1835 = vpop.f32.mrb[0].mxu0
  %v1836 = vadd.f32 %v279, %v1835
  %v1837 = vpop.f32.mrb[0].mxu0
  %1838 = vmatprep.mubr.f32.mxu0 0.0
  %1839 = vmatmul.mubr.f32.gmra.mrb[0].mxu0 %v715
  %v1840 = vpop.f32.mrb[0].mxu0
  %v1841 = vadd.f32 %v279, %v1840
  %v1842 = vpop.f32.mrb[0].mxu0
  %1843 = vmatprep.mubr.f32.mxu0 0.0
  %1844 = vmatmul.mubr.f32.gmra.mrb[0].mxu0 %v718
  %v1845 = vpop.f32.mrb[0].mxu0
  %v1846 = vadd.f32 %v279, %v1845
  %v1847 = vpop.f32.mrb[0].mxu0
  %1848 = vmatprep.mubr.f32.mxu0 0.0
  %1849 = vmatmul.mubr.f32.gmra.mrb[0].mxu0 %v721
  %v1850 = vpop.f32.mrb[0].mxu0
  %v1851 = vadd.f32 %v279, %v1850
  %v1852 = vpop.f32.mrb[0].mxu0
  %1853 = vmatprep.mubr.f32.mxu0 0.0
  %1854 = vmatmul.mubr.f32.gmra.mrb[0].mxu0 %v724
  %v1855 = vpop.f32.mrb[0].mxu0
  %v1856 = vadd.f32 %v279, %v1855
  %v1857 = vpop.f32.mrb[0].mxu0
  %1858 = vmatprep.mubr.f32.mxu0 0.0
  %1859 = vmatmul.mubr.f32.gmra.mrb[0].mxu0 %v727
  %v1860 = vpop.f32.mrb[0].mxu0
  %v1861 = vadd.f32 %v279, %v1860
  %v1862 = vpop.f32.mrb[0].mxu0
  %1863 = vmatprep.mubr.f32.mxu0 0.0
  %1864 = vmatmul.mubr.f32.gmra.mrb[0].mxu0 %v730
  %v1865 = vpop.f32.mrb[0].mxu0
  %v1866 = vadd.f32 %v279, %v1865
  %v1867 = vpop.f32.mrb[0].mxu0
  %1868 = vmatprep.mubr.f32.mxu0 0.0
  %1869 = vmatmul.mubr.f32.gmra.mrb[0].mxu0 %v733
  %v1870 = vpop.f32.mrb[0].mxu0
  %v1871 = vadd.f32 %v279, %v1870
  %v1872 = vpop.f32.mrb[0].mxu0
  %1873 = vmatprep.mubr.f32.mxu0 0.0
  %1874 = vmatmul.mubr.f32.gmra.mrb[0].mxu0 %v736
  %v1875 = vpop.f32.mrb[0].mxu0
  %v1876 = vadd.f32 %v279, %v1875
  %v1877 = vpop.f32.mrb[0].mxu0
  %1878 = vmatprep.mubr.f32.mxu0 0.0
  %1879 = vmatmul.mubr.f32.gmra.mrb[0].mxu0 %v739
  %v1880 = vpop.f32.mrb[0].mxu0
  %v1881 = vadd.f32 %v279, %v1880
  %v1882 = vpop.f32.mrb[0].mxu0
  %1883 = vmatprep.mubr.f32.mxu0 0.0
  %1884 = vmatmul.mubr.f32.gmra.mrb[0].mxu0 %v742
  %v1885 = vpop.f32.mrb[0].mxu0
  %v1886 = vadd.f32 %v279, %v1885
  %v1887 = vpop.f32.mrb[0].mxu0
  %1888 = vmatprep.mubr.f32.mxu0 0.0
  %1889 = vmatmul.mubr.f32.gmra.mrb[0].mxu0 %v745
  %v1890 = vpop.f32.mrb[0].mxu0
  %v1891 = vadd.f32 %v279, %v1890
  %v1892 = vpop.f32.mrb[0].mxu0
  %1893 = vmatprep.mubr.f32.mxu0 0.0
  %1894 = vmatmul.mubr.f32.gmra.mrb[0].mxu0 %v748
  %v1895 = vpop.f32.mrb[0].mxu0
  %v1896 = vadd.f32 %v279, %v1895
  %v1897 = vpop.f32.mrb[0].mxu0
  %1898 = vmatprep.mubr.f32.mxu0 0.0
  %1899 = vmatmul.mubr.f32.gmra.mrb[0].mxu0 %v751
  %v1900 = vpop.f32.mrb[0].mxu0
  %v1901 = vadd.f32 %v279, %v1900
  %v1902 = vpop.f32.mrb[0].mxu0
  %1903 = vmatprep.mubr.f32.mxu0 0.0
  %1904 = vmatmul.mubr.f32.gmra.mrb[0].mxu0 %v754
  %v1905 = vpop.f32.mrb[0].mxu0
  %v1906 = vadd.f32 %v279, %v1905
  %v1907 = vpop.f32.mrb[0].mxu0
  %1908 = vmatprep.mubr.f32.mxu0 0.0
  %1909 = vmatmul.mubr.f32.gmra.mrb[0].mxu0 %v757
  %v1910 = vpop.f32.mrb[0].mxu0
  %v1911 = vadd.f32 %v279, %v1910
  %v1912 = vpop.f32.mrb[0].mxu0
  %1913 = vmatprep.mubr.f32.mxu0 0.0
  %1914 = vmatmul.mubr.f32.gmra.mrb[0].mxu0 %v760
  %v1915 = vpop.f32.mrb[0].mxu0
  %v1916 = vadd.f32 %v279, %v1915
  %v1917 = vpop.f32.mrb[0].mxu0
  %1918 = vmatprep.mubr.f32.mxu0 0.0
  %1919 = vmatmul.mubr.f32.gmra.mrb[0].mxu0 %v763
  %v1920 = vpop.f32.mrb[0].mxu0
  %v1921 = vadd.f32 %v279, %v1920
  %v1922 = vpop.f32.mrb[0].mxu0
  %1923 = vmatprep.mubr.f32.mxu0 0.0
  %1924 = vmatmul.mubr.f32.gmra.mrb[0].mxu0 %v766
  %v1925 = vpop.f32.mrb[0].mxu0
  %v1926 = vadd.f32 %v279, %v1925
  %v1927 = vpop.f32.mrb[0].mxu0
  %1928 = vmatprep.mubr.f32.mxu0 0.0
  %1929 = vmatmul.mubr.f32.gmra.mrb[0].mxu0 %v769
  %v1930 = vpop.f32.mrb[0].mxu0
  %v1931 = vadd.f32 %v279, %v1930
  %v1932 = vpop.f32.mrb[0].mxu0
  %1933 = vmatprep.mubr.f32.mxu0 0.0
  %1934 = vmatmul.mubr.f32.gmra.mrb[0].mxu0 %v772
  %v1935 = vpop.f32.mrb[0].mxu0
  %v1936 = vadd.f32 %v279, %v1935
  %v1937 = vpop.f32.mrb[0].mxu0
  %1938 = vmatprep.mubr.f32.mxu0 0.0
  %1939 = vmatmul.mubr.f32.gmra.mrb[0].mxu0 %v775
  %v1940 = vpop.f32.mrb[0].mxu0
  %v1941 = vadd.f32 %v279, %v1940
  %v1942 = vpop.f32.mrb[0].mxu0
  %1943 = vmatprep.mubr.f32.mxu0 0.0
  %1944 = vmatmul.mubr.f32.gmra.mrb[0].mxu0 %v778
  %v1945 = vpop.f32.mrb[0].mxu0
  %v1946 = vadd.f32 %v279, %v1945
  %v1947 = vpop.f32.mrb[0].mxu0
  %1948 = vmatprep.mubr.f32.mxu0 0.0
  %1949 = vmatmul.mubr.f32.gmra.mrb[0].mxu0 %v781
  %v1950 = vpop.f32.mrb[0].mxu0
  %v1951 = vadd.f32 %v279, %v1950
  %v1952 = vpop.f32.mrb[0].mxu0
  %1953 = vmatprep.mubr.f32.mxu0 0.0
  %1954 = vmatmul.mubr.f32.gmra.mrb[0].mxu0 %v784
  %v1955 = vpop.f32.mrb[0].mxu0
  %v1956 = vadd.f32 %v279, %v1955
  %v1957 = vpop.f32.mrb[0].mxu0
  %1958 = vmatprep.mubr.f32.mxu0 0.0
  %1959 = vmatmul.mubr.f32.gmra.mrb[0].mxu0 %v787
  %v1960 = vpop.f32.mrb[0].mxu0
  %v1961 = vadd.f32 %v279, %v1960
  %v1962 = vpop.f32.mrb[0].mxu0
  %1963 = vmatprep.mubr.f32.mxu0 0.0
  %1964 = vmatmul.mubr.f32.gmra.mrb[0].mxu0 %v790
  %v1965 = vpop.f32.mrb[0].mxu0
  %v1966 = vadd.f32 %v279, %v1965
  %v1967 = vpop.f32.mrb[0].mxu0
  %1968 = vmatprep.mubr.f32.mxu0 0.0
  %1969 = vmatmul.mubr.f32.gmra.mrb[0].mxu0 %v793
  %v1970 = vpop.f32.mrb[0].mxu0
  %v1971 = vadd.f32 %v279, %v1970
  %v1972 = vpop.f32.mrb[0].mxu0
  %1973 = vmatprep.mubr.f32.mxu0 0.0
  %1974 = vmatmul.mubr.f32.gmra.mrb[0].mxu0 %v796
  %v1975 = vpop.f32.mrb[0].mxu0
  %v1976 = vadd.f32 %v279, %v1975
  %v1977 = vpop.f32.mrb[0].mxu0
  %1978 = vmatprep.mubr.f32.mxu0 0.0
  %1979 = vmatmul.mubr.f32.gmra.mrb[0].mxu0 %v799
  %v1980 = vpop.f32.mrb[0].mxu0
  %v1981 = vadd.f32 %v279, %v1980
  %v1982 = vpop.f32.mrb[0].mxu0
  %1983 = vmatprep.mubr.f32.mxu0 0.0
  %1984 = vmatmul.mubr.f32.gmra.mrb[0].mxu0 %v802
  %v1985 = vpop.f32.mrb[0].mxu0
  %v1986 = vadd.f32 %v279, %v1985
  %v1987 = vpop.f32.mrb[0].mxu0
  %1988 = vmatprep.mubr.f32.mxu0 0.0
  %1989 = vmatmul.mubr.f32.gmra.mrb[0].mxu0 %v805
  %v1990 = vpop.f32.mrb[0].mxu0
  %v1991 = vadd.f32 %v279, %v1990
  %v1992 = vpop.f32.mrb[0].mxu0
  %1993 = vmatprep.mubr.f32.mxu0 0.0
  %1994 = vmatmul.mubr.f32.gmra.mrb[0].mxu0 %v808
  %v1995 = vpop.f32.mrb[0].mxu0
  %v1996 = vadd.f32 %v279, %v1995
  %v1997 = vpop.f32.mrb[0].mxu0
  %1998 = vmatprep.mubr.f32.mxu0 0.0
  %1999 = vmatmul.mubr.f32.gmra.mrb[0].mxu0 %v811
  %v2000 = vpop.f32.mrb[0].mxu0
  %v2001 = vadd.f32 %v279, %v2000
  %v2002 = vpop.f32.mrb[0].mxu0
  %2003 = vmatprep.mubr.f32.mxu0 0.0
  %2004 = vmatmul.mubr.f32.gmra.mrb[0].mxu0 %v814
  %v2005 = vpop.f32.mrb[0].mxu0
  %v2006 = vadd.f32 %v279, %v2005
  %v2007 = vpop.f32.mrb[0].mxu0
  %2008 = vmatprep.mubr.f32.mxu0 0.0
  %2009 = vmatmul.mubr.f32.gmra.mrb[0].mxu0 %v817
  %v2010 = vpop.f32.mrb[0].mxu0
  %v2011 = vadd.f32 %v279, %v2010
  %v2012 = vpop.f32.mrb[0].mxu0
  %2013 = vmatprep.mubr.f32.mxu0 0.0
  %2014 = vmatmul.mubr.f32.gmra.mrb[0].mxu0 %v820
  %v2015 = vpop.f32.mrb[0].mxu0
  %v2016 = vadd.f32 %v279, %v2015
  %v2017 = vpop.f32.mrb[0].mxu0
  %2018 = vmatprep.mubr.f32.mxu0 0.0
  %2019 = vmatmul.mubr.f32.gmra.mrb[0].mxu0 %v823
  %v2020 = vpop.f32.mrb[0].mxu0
  %v2021 = vadd.f32 %v279, %v2020
  %v2022 = vpop.f32.mrb[0].mxu0
  %2023 = vmatprep.mubr.f32.mxu0 0.0
  %2024 = vmatmul.mubr.f32.gmra.mrb[0].mxu0 %v826
  %v2025 = vpop.f32.mrb[0].mxu0
  %v2026 = vadd.f32 %v279, %v2025
  %v2027 = vpop.f32.mrb[0].mxu0
  %2028 = vmatprep.mubr.f32.mxu0 0.0
  %2029 = vmatmul.mubr.f32.gmra.mrb[0].mxu0 %v829
  %v2030 = vpop.f32.mrb[0].mxu0
  %v2031 = vadd.f32 %v279, %v2030
  %v2032 = vpop.f32.mrb[0].mxu0
  %2033 = vmatprep.mubr.f32.mxu0 0.0
  %2034 = vmatmul.mubr.f32.gmra.mrb[0].mxu0 %v832
  %v2035 = vpop.f32.mrb[0].mxu0
  %v2036 = vadd.f32 %v279, %v2035
  %v2037 = vpop.f32.mrb[0].mxu0
  %2038 = vmatprep.mubr.f32.mxu0 0.0
  %2039 = vmatmul.mubr.f32.gmra.mrb[0].mxu0 %v835
  %v2040 = vpop.f32.mrb[0].mxu0
  %v2041 = vadd.f32 %v279, %v2040
  %v2042 = vpop.f32.mrb[0].mxu0
  %2043 = vmatprep.mubr.f32.mxu0 0.0
  %2044 = vmatmul.mubr.f32.gmra.mrb[0].mxu0 %v838
  %v2045 = vpop.f32.mrb[0].mxu0
  %v2046 = vadd.f32 %v279, %v2045
  %v2047 = vpop.f32.mrb[0].mxu0
  %2048 = vmatprep.mubr.f32.mxu0 0.0
  %2049 = vmatmul.mubr.f32.gmra.mrb[0].mxu0 %v841
  %v2050 = vpop.f32.mrb[0].mxu0
  %v2051 = vadd.f32 %v279, %v2050
  %v2052 = vpop.f32.mrb[0].mxu0
  %2053 = vmatprep.mubr.f32.mxu0 0.0
  %2054 = vmatmul.mubr.f32.gmra.mrb[0].mxu0 %v844
  %v2055 = vpop.f32.mrb[0].mxu0
  %v2056 = vadd.f32 %v279, %v2055
  %v2057 = vpop.f32.mrb[0].mxu0
  %2058 = vmatprep.mubr.f32.mxu0 0.0
  %2059 = vmatmul.mubr.f32.gmra.mrb[0].mxu0 %v847
  %v2060 = vpop.f32.mrb[0].mxu0
  %v2061 = vadd.f32 %v279, %v2060
  %v2062 = vpop.f32.mrb[0].mxu0
  %2063 = vmatprep.mubr.f32.mxu0 0.0
  %2064 = vmatmul.mubr.f32.gmra.mrb[0].mxu0 %v850
  %v2065 = vpop.f32.mrb[0].mxu0
  %v2066 = vadd.f32 %v279, %v2065
  %v2067 = vpop.f32.mrb[0].mxu0
  %2068 = vmatprep.mubr.f32.mxu0 0.0
  %2069 = vmatmul.mubr.f32.gmra.mrb[0].mxu0 %v853
  %v2070 = vpop.f32.mrb[0].mxu0
  %v2071 = vadd.f32 %v279, %v2070
  %v2072 = vpop.f32.mrb[0].mxu0
  %2073 = vmatprep.mubr.f32.mxu0 0.0
  %2074 = vmatmul.mubr.f32.gmra.mrb[0].mxu0 %v856
  %v2075 = vpop.f32.mrb[0].mxu0
  %v2076 = vadd.f32 %v279, %v2075
  %v2077 = vpop.f32.mrb[0].mxu0
  %2078 = vmatprep.mubr.f32.mxu0 0.0
  %2079 = vmatmul.mubr.f32.gmra.mrb[0].mxu0 %v859
  %v2080 = vpop.f32.mrb[0].mxu0
  %v2081 = vadd.f32 %v279, %v2080
  %v2082 = vpop.f32.mrb[0].mxu0
  %2083 = vmatprep.mubr.f32.mxu0 0.0
  %2084 = vmatmul.mubr.f32.gmra.mrb[0].mxu0 %v862
  %v2085 = vpop.f32.mrb[0].mxu0
  %v2086 = vadd.f32 %v279, %v2085
  %v2087 = vpop.f32.mrb[0].mxu0
  %2088 = vmatprep.mubr.f32.mxu0 0.0
  %2089 = vmatmul.mubr.f32.gmra.mrb[0].mxu0 %v865
  %v2090 = vpop.f32.mrb[0].mxu0
  %v2091 = vadd.f32 %v279, %v2090
  %v2092 = vpop.f32.mrb[0].mxu0
  %2093 = vmatprep.mubr.f32.mxu0 0.0
  %2094 = vmatmul.mubr.f32.gmra.mrb[0].mxu0 %v868
  %v2095 = vpop.f32.mrb[0].mxu0
  %v2096 = vadd.f32 %v279, %v2095
  %v2097 = vpop.f32.mrb[0].mxu0
  %2098 = vmatprep.mubr.f32.mxu0 0.0
  %2099 = vmatmul.mubr.f32.gmra.mrb[0].mxu0 %v871
  %v2100 = vpop.f32.mrb[0].mxu0
  %v2101 = vadd.f32 %v279, %v2100
  %v2102 = vpop.f32.mrb[0].mxu0
  %2103 = vmatprep.mubr.f32.mxu0 0.0
  %2104 = vmatmul.mubr.f32.gmra.mrb[0].mxu0 %v874
  %v2105 = vpop.f32.mrb[0].mxu0
  %v2106 = vadd.f32 %v279, %v2105
  %v2107 = vpop.f32.mrb[0].mxu0
  %2108 = vmatprep.mubr.f32.mxu0 0.0
  %2109 = vmatmul.mubr.f32.gmra.mrb[0].mxu0 %v877
  %v2110 = vpop.f32.mrb[0].mxu0
  %v2111 = vadd.f32 %v279, %v2110
  %v2112 = vpop.f32.mrb[0].mxu0
  %2113 = vmatprep.mubr.f32.mxu0 0.0
  %2114 = vmatmul.mubr.f32.gmra.mrb[0].mxu0 %v880
  %v2115 = vpop.f32.mrb[0].mxu0
  %v2116 = vadd.f32 %v279, %v2115
  %v2117 = vpop.f32.mrb[0].mxu0
  %2118 = vmatprep.mubr.f32.mxu0 0.0
  %2119 = vmatmul.mubr.f32.gmra.mrb[0].mxu0 %v883
  %v2120 = vpop.f32.mrb[0].mxu0
  %v2121 = vadd.f32 %v279, %v2120
  %v2122 = vpop.f32.mrb[0].mxu0
  %2123 = vmatprep.mubr.f32.mxu0 0.0
  %2124 = vmatmul.mubr.f32.gmra.mrb[0].mxu0 %v886
  %v2125 = vpop.f32.mrb[0].mxu0
  %v2126 = vadd.f32 %v279, %v2125
  %v2127 = vpop.f32.mrb[0].mxu0
  %2128 = vmatprep.mubr.f32.mxu0 0.0
  %2129 = vmatmul.mubr.f32.gmra.mrb[0].mxu0 %v889
  %v2130 = vpop.f32.mrb[0].mxu0
  %v2131 = vadd.f32 %v279, %v2130
  %v2132 = vpop.f32.mrb[0].mxu0
  %2133 = vmatprep.mubr.f32.mxu0 0.0
  %2134 = vmatmul.mubr.f32.gmra.mrb[0].mxu0 %v892
  %v2135 = vpop.f32.mrb[0].mxu0
  %v2136 = vadd.f32 %v279, %v2135
  %v2137 = vpop.f32.mrb[0].mxu0
  %2138 = vmatprep.mubr.f32.mxu0 0.0
  %2139 = vmatmul.mubr.f32.gmra.mrb[0].mxu0 %v895
  %v2140 = vpop.f32.mrb[0].mxu0
  %v2141 = vadd.f32 %v279, %v2140
  %v2142 = vpop.f32.mrb[0].mxu0
  %2143 = vmatprep.mubr.f32.mxu0 0.0
  %2144 = vmatmul.mubr.f32.gmra.mrb[0].mxu0 %v898
  %v2145 = vpop.f32.mrb[0].mxu0
  %v2146 = vadd.f32 %v279, %v2145
  %v2147 = vpop.f32.mrb[0].mxu0
  %2148 = vmatprep.mubr.f32.mxu0 0.0
  %2149 = vmatmul.mubr.f32.gmra.mrb[0].mxu0 %v901
  %v2150 = vpop.f32.mrb[0].mxu0
  %v2151 = vadd.f32 %v279, %v2150
  %v2152 = vpop.f32.mrb[0].mxu0
  %2153 = vmatprep.mubr.f32.mxu0 0.0
  %2154 = vmatmul.mubr.f32.gmra.mrb[0].mxu0 %v904
  %v2155 = vpop.f32.mrb[0].mxu0
  %v2156 = vadd.f32 %v279, %v2155
  %v2157 = vpop.f32.mrb[0].mxu0
  %2158 = vmatprep.mubr.f32.mxu0 0.0
  %2159 = vmatmul.mubr.f32.gmra.mrb[0].mxu0 %v907
  %v2160 = vpop.f32.mrb[0].mxu0
  %v2161 = vadd.f32 %v279, %v2160
  %v2162 = vpop.f32.mrb[0].mxu0
  %2163 = vmatprep.mubr.f32.mxu0 0.0
  %2164 = vmatmul.mubr.f32.gmra.mrb[0].mxu0 %v910
  %v2165 = vpop.f32.mrb[0].mxu0
  %v2166 = vadd.f32 %v279, %v2165
  %v2167 = vpop.f32.mrb[0].mxu0
  %2168 = vmatprep.mubr.f32.mxu0 0.0
  %2169 = vmatmul.mubr.f32.gmra.mrb[0].mxu0 %v913
  %v2170 = vpop.f32.mrb[0].mxu0
  %v2171 = vadd.f32 %v279, %v2170
  %v2172 = vpop.f32.mrb[0].mxu0
  %2173 = vmatprep.mubr.f32.mxu0 0.0
  %2174 = vmatmul.mubr.f32.gmra.mrb[0].mxu0 %v916
  %v2175 = vpop.f32.mrb[0].mxu0
  %v2176 = vadd.f32 %v279, %v2175
  %v2177 = vpop.f32.mrb[0].mxu0
  %2178 = vmatprep.mubr.f32.mxu0 0.0
  %2179 = vmatmul.mubr.f32.gmra.mrb[0].mxu0 %v919
  %v2180 = vpop.f32.mrb[0].mxu0
  %v2181 = vadd.f32 %v279, %v2180
  %v2182 = vpop.f32.mrb[0].mxu0
  %2183 = vmatprep.mubr.f32.mxu0 0.0
  %2184 = vmatmul.mubr.f32.gmra.mrb[0].mxu0 %v922
  %v2185 = vpop.f32.mrb[0].mxu0
  %v2186 = vadd.f32 %v279, %v2185
  %v2187 = vpop.f32.mrb[0].mxu0
  %2188 = vmatprep.mubr.f32.mxu0 0.0
  %2189 = vmatmul.mubr.f32.gmra.mrb[0].mxu0 %v925
  %v2190 = vpop.f32.mrb[0].mxu0
  %v2191 = vadd.f32 %v279, %v2190
  %v2192 = vpop.f32.mrb[0].mxu0
  %2193 = vmatprep.mubr.f32.mxu0 0.0
  %2194 = vmatmul.mubr.f32.gmra.mrb[0].mxu0 %v928
  %v2195 = vpop.f32.mrb[0].mxu0
  %v2196 = vadd.f32 %v279, %v2195
  %v2197 = vpop.f32.mrb[0].mxu0
  %2198 = vmatprep.mubr.f32.mxu0 0.0
  %2199 = vmatmul.mubr.f32.gmra.mrb[0].mxu0 %v931
  %v2200 = vpop.f32.mrb[0].mxu0
  %v2201 = vadd.f32 %v279, %v2200
  %v2202 = vpop.f32.mrb[0].mxu0
  %2203 = vmatprep.mubr.f32.mxu0 0.0
  %2204 = vmatmul.mubr.f32.gmra.mrb[0].mxu0 %v934
  %v2205 = vpop.f32.mrb[0].mxu0
  %v2206 = vadd.f32 %v279, %v2205
  %v2207 = vpop.f32.mrb[0].mxu0
  %2208 = vmatprep.mubr.f32.mxu0 0.0
  %2209 = vmatmul.mubr.f32.gmra.mrb[0].mxu0 %v937
  %v2210 = vpop.f32.mrb[0].mxu0
  %v2211 = vadd.f32 %v279, %v2210
  %v2212 = vpop.f32.mrb[0].mxu0
  %2213 = vmatprep.mubr.f32.mxu0 0.0
  %2214 = vmatmul.mubr.f32.gmra.mrb[0].mxu0 %v940
  %v2215 = vpop.f32.mrb[0].mxu0
  %v2216 = vadd.f32 %v279, %v2215
  %v2217 = vpop.f32.mrb[0].mxu0
  %2218 = vmatprep.mubr.f32.mxu0 0.0
  %2219 = vmatmul.mubr.f32.gmra.mrb[0].mxu0 %v943
  %v2220 = vpop.f32.mrb[0].mxu0
  %v2221 = vadd.f32 %v279, %v2220
  %v2222 = vpop.f32.mrb[0].mxu0
  %2223 = vmatprep.mubr.f32.mxu0 0.0
  %2224 = vmatmul.mubr.f32.gmra.mrb[0].mxu0 %v946
  %v2225 = vpop.f32.mrb[0].mxu0
  %v2226 = vadd.f32 %v279, %v2225
  %v2227 = vpop.f32.mrb[0].mxu0
  %2228 = vmatprep.mubr.f32.mxu0 0.0
  %2229 = vmatmul.mubr.f32.gmra.mrb[0].mxu0 %v949
  %v2230 = vpop.f32.mrb[0].mxu0
  %v2231 = vadd.f32 %v279, %v2230
  %v2232 = vpop.f32.mrb[0].mxu0
  %2233 = vmatprep.mubr.f32.mxu0 0.0
  %2234 = vmatmul.mubr.f32.gmra.mrb[0].mxu0 %v952
  %v2235 = vpop.f32.mrb[0].mxu0
  %v2236 = vadd.f32 %v279, %v2235
  %v2237 = vpop.f32.mrb[0].mxu0
  %2238 = vmatprep.mubr.f32.mxu0 0.0
  %2239 = vmatmul.mubr.f32.gmra.mrb[0].mxu0 %v955
  %v2240 = vpop.f32.mrb[0].mxu0
  %v2241 = vadd.f32 %v279, %v2240
  %v2242 = vpop.f32.mrb[0].mxu0
  %2243 = vmatprep.mubr.f32.mxu0 0.0
  %2244 = vmatmul.mubr.f32.gmra.mrb[0].mxu0 %v958
  %v2245 = vpop.f32.mrb[0].mxu0
  %v2246 = vadd.f32 %v279, %v2245
  %v2247 = vpop.f32.mrb[0].mxu0
  %2248 = vmatprep.mubr.f32.mxu0 0.0
  %2249 = vmatmul.mubr.f32.gmra.mrb[0].mxu0 %v961
  %v2250 = vpop.f32.mrb[0].mxu0
  %v2251 = vadd.f32 %v279, %v2250
  %v2252 = vpop.f32.mrb[0].mxu0
  %2253 = vmatprep.mubr.f32.mxu0 0.0
  %2254 = vmatmul.mubr.f32.gmra.mrb[0].mxu0 %v964
  %v2255 = vpop.f32.mrb[0].mxu0
  %v2256 = vadd.f32 %v279, %v2255
  %v2257 = vpop.f32.mrb[0].mxu0
  %2258 = vmatprep.mubr.f32.mxu0 0.0
  %2259 = vmatmul.mubr.f32.gmra.mrb[0].mxu0 %v967
  %v2260 = vpop.f32.mrb[0].mxu0
  %v2261 = vadd.f32 %v279, %v2260
  %v2262 = vpop.f32.mrb[0].mxu0
  %2263 = vmatprep.mubr.f32.mxu0 0.0
  %2264 = vmatmul.mubr.f32.gmra.mrb[0].mxu0 %v970
  %v2265 = vpop.f32.mrb[0].mxu0
  %v2266 = vadd.f32 %v279, %v2265
  %v2267 = vpop.f32.mrb[0].mxu0
  %2268 = vmatprep.mubr.f32.mxu0 0.0
  %2269 = vmatmul.mubr.f32.gmra.mrb[0].mxu0 %v973
  %v2270 = vpop.f32.mrb[0].mxu0
  %v2271 = vadd.f32 %v279, %v2270
  %v2272 = vpop.f32.mrb[0].mxu0
  %2273 = vmatprep.mubr.f32.mxu0 0.0
  %2274 = vmatmul.mubr.f32.gmra.mrb[0].mxu0 %v976
  %v2275 = vpop.f32.mrb[0].mxu0
  %v2276 = vadd.f32 %v279, %v2275
  %v2277 = vpop.f32.mrb[0].mxu0
  %2278 = vmatprep.mubr.f32.mxu0 0.0
  %2279 = vmatmul.mubr.f32.gmra.mrb[0].mxu0 %v979
  %v2280 = vpop.f32.mrb[0].mxu0
  %v2281 = vadd.f32 %v279, %v2280
  %v2282 = vpop.f32.mrb[0].mxu0
  %2283 = vmatprep.mubr.f32.mxu0 0.0
  %2284 = vmatmul.mubr.f32.gmra.mrb[0].mxu0 %v982
  %v2285 = vpop.f32.mrb[0].mxu0
  %v2286 = vadd.f32 %v279, %v2285
  %v2287 = vpop.f32.mrb[0].mxu0
  %2288 = vmatprep.mubr.f32.mxu0 0.0
  %2289 = vmatmul.mubr.f32.gmra.mrb[0].mxu0 %v985
  %v2290 = vpop.f32.mrb[0].mxu0
  %v2291 = vadd.f32 %v279, %v2290
  %v2292 = vpop.f32.mrb[0].mxu0
  %2293 = vmatprep.mubr.f32.mxu0 0.0
  %2294 = vmatmul.mubr.f32.gmra.mrb[0].mxu0 %v988
  %v2295 = vpop.f32.mrb[0].mxu0
  %v2296 = vadd.f32 %v279, %v2295
  %v2297 = vpop.f32.mrb[0].mxu0
  %2298 = vmatprep.mubr.f32.mxu0 0.0
  %2299 = vmatmul.mubr.f32.gmra.mrb[0].mxu0 %v991
  %v2300 = vpop.f32.mrb[0].mxu0
  %v2301 = vadd.f32 %v279, %v2300
  %v2302 = vpop.f32.mrb[0].mxu0
  %2303 = vmatprep.mubr.f32.mxu0 0.0
  %2304 = vmatmul.mubr.f32.gmra.mrb[0].mxu0 %v994
  %v2305 = vpop.f32.mrb[0].mxu0
  %v2306 = vadd.f32 %v279, %v2305
  %v2307 = vpop.f32.mrb[0].mxu0
  %2308 = vmatprep.mubr.f32.mxu0 0.0
  %2309 = vmatmul.mubr.f32.gmra.mrb[0].mxu0 %v997
  %v2310 = vpop.f32.mrb[0].mxu0
  %v2311 = vadd.f32 %v279, %v2310
  %v2312 = vpop.f32.mrb[0].mxu0
  %2313 = vmatprep.mubr.f32.mxu0 0.0
  %2314 = vmatmul.mubr.f32.gmra.mrb[0].mxu0 %v1000
  %v2315 = vpop.f32.mrb[0].mxu0
  %v2316 = vadd.f32 %v279, %v2315
  %v2317 = vpop.f32.mrb[0].mxu0
  %2318 = vmatprep.mubr.f32.mxu0 0.0
  %2319 = vmatmul.mubr.f32.gmra.mrb[0].mxu0 %v1003
  %v2320 = vpop.f32.mrb[0].mxu0
  %v2321 = vadd.f32 %v279, %v2320
  %v2322 = vpop.f32.mrb[0].mxu0
  %2323 = vmatprep.mubr.f32.mxu0 0.0
  %2324 = vmatmul.mubr.f32.gmra.mrb[0].mxu0 %v1006
  %v2325 = vpop.f32.mrb[0].mxu0
  %v2326 = vadd.f32 %v279, %v2325
  %v2327 = vpop.f32.mrb[0].mxu0
  %2328 = vmatprep.mubr.f32.mxu0 0.0
  %2329 = vmatmul.mubr.f32.gmra.mrb[0].mxu0 %v1009
  %v2330 = vpop.f32.mrb[0].mxu0
  %v2331 = vadd.f32 %v279, %v2330
  %v2332 = vpop.f32.mrb[0].mxu0
  %2333 = vmatprep.mubr.f32.mxu0 0.0
  %2334 = vmatmul.mubr.f32.gmra.mrb[0].mxu0 %v1012
  %v2335 = vpop.f32.mrb[0].mxu0
  %v2336 = vadd.f32 %v279, %v2335
  %v2337 = vpop.f32.mrb[0].mxu0
  %2338 = vmatprep.mubr.f32.mxu0 0.0
  %2339 = vmatmul.mubr.f32.gmra.mrb[0].mxu0 %v1015
  %v2340 = vpop.f32.mrb[0].mxu0
  %v2341 = vadd.f32 %v279, %v2340
  %v2342 = vpop.f32.mrb[0].mxu0
  %2343 = vmatprep.mubr.f32.mxu0 0.0
  %2344 = vmatmul.mubr.f32.gmra.mrb[0].mxu0 %v1018
  %v2345 = vpop.f32.mrb[0].mxu0
  %v2346 = vadd.f32 %v279, %v2345
  %v2347 = vpop.f32.mrb[0].mxu0
  %2348 = vmatprep.mubr.f32.mxu0 0.0
  %2349 = vmatmul.mubr.f32.gmra.mrb[0].mxu0 %v1021
  %v2350 = vpop.f32.mrb[0].mxu0
  %v2351 = vadd.f32 %v279, %v2350
  %v2352 = vpop.f32.mrb[0].mxu0
  %2353 = vmatprep.mubr.f32.mxu0 0.0
  %2354 = vmatmul.mubr.f32.gmra.mrb[0].mxu0 %v1024
  %v2355 = vpop.f32.mrb[0].mxu0
  %v2356 = vadd.f32 %v279, %v2355
  %v2357 = vpop.f32.mrb[0].mxu0
  %2358 = vmatprep.mubr.f32.mxu0 0.0
  %2359 = vmatmul.mubr.f32.gmra.mrb[0].mxu0 %v1027
  %v2360 = vpop.f32.mrb[0].mxu0
  %v2361 = vadd.f32 %v279, %v2360
  %v2362 = vpop.f32.mrb[0].mxu0
  %2363 = vmatprep.mubr.f32.mxu0 0.0
  %2364 = vmatmul.mubr.f32.gmra.mrb[0].mxu0 %v1030
  %v2365 = vpop.f32.mrb[0].mxu0
  %v2366 = vadd.f32 %v279, %v2365
  %v2367 = vpop.f32.mrb[0].mxu0
  %2368 = vmatprep.mubr.f32.mxu0 0.0
  %2369 = vmatmul.mubr.f32.gmra.mrb[0].mxu0 %v1033
  %v2370 = vpop.f32.mrb[0].mxu0
  %v2371 = vadd.f32 %v279, %v2370
  %v2372 = vpop.f32.mrb[0].mxu0
  %2373 = vmatprep.mubr.f32.mxu0 0.0
  %2374 = vmatmul.mubr.f32.gmra.mrb[0].mxu0 %v1036
  %v2375 = vpop.f32.mrb[0].mxu0
  %v2376 = vadd.f32 %v279, %v2375
  %v2377 = vpop.f32.mrb[0].mxu0
  %2378 = vmatprep.mubr.f32.mxu0 0.0
  %2379 = vmatmul.mubr.f32.gmra.mrb[0].mxu0 %v1039
  %v2380 = vpop.f32.mrb[0].mxu0
  %v2381 = vadd.f32 %v279, %v2380
  %v2382 = vpop.f32.mrb[0].mxu0
  %2383 = vmatprep.mubr.f32.mxu0 0.0
  %2384 = vmatmul.mubr.f32.gmra.mrb[0].mxu0 %v1042
  %v2385 = vpop.f32.mrb[0].mxu0
  %v2386 = vadd.f32 %v279, %v2385
  %v2387 = vpop.f32.mrb[0].mxu0
  %2388 = vmatprep.mubr.f32.mxu0 0.0
  %2389 = vmatmul.mubr.f32.gmra.mrb[0].mxu0 %v1045
  %v2390 = vpop.f32.mrb[0].mxu0
  %v2391 = vadd.f32 %v279, %v2390
  %v2392 = vpop.f32.mrb[0].mxu0
  %2393 = vmatprep.mubr.f32.mxu0 0.0
  %2394 = vmatmul.mubr.f32.gmra.mrb[0].mxu0 %v1048
  %v2395 = vpop.f32.mrb[0].mxu0
  %v2396 = vadd.f32 %v279, %v2395
  %v2397 = vpop.f32.mrb[0].mxu0
  %2398 = vdwg.mxu0
  %v2399 = vmax.f32 %v1121, 0.0
  %v2400 = vmax.f32 %v1126, 0.0
  %v2401 = vmax.f32 %v1131, 0.0
  %v2402 = vmax.f32 %v1136, 0.0
  %v2403 = vmax.f32 %v1141, 0.0
  %v2404 = vmax.f32 %v1146, 0.0
  %v2405 = vmax.f32 %v1151, 0.0
  %v2406 = vmax.f32 %v1156, 0.0
  %v2407 = vmax.f32 %v1161, 0.0
  %v2408 = vmax.f32 %v1166, 0.0
  %v2409 = vmax.f32 %v1171, 0.0
  %v2410 = vmax.f32 %v1176, 0.0
  %v2411 = vmax.f32 %v1181, 0.0
  %v2412 = vmax.f32 %v1186, 0.0
  %v2413 = vmax.f32 %v1191, 0.0
  %v2414 = vmax.f32 %v1196, 0.0
  %v2415 = vmax.f32 %v1201, 0.0
  %v2416 = vmax.f32 %v1206, 0.0
  %v2417 = vmax.f32 %v1211, 0.0
  %v2418 = vmax.f32 %v1216, 0.0
  %v2419 = vmax.f32 %v1221, 0.0
  %v2420 = vmax.f32 %v1226, 0.0
  %v2421 = vmax.f32 %v1231, 0.0
  %v2422 = vmax.f32 %v1236, 0.0
  %v2423 = vmax.f32 %v1241, 0.0
  %v2424 = vmax.f32 %v1246, 0.0
  %v2425 = vmax.f32 %v1251, 0.0
  %v2426 = vmax.f32 %v1256, 0.0
  %v2427 = vmax.f32 %v1261, 0.0
  %v2428 = vmax.f32 %v1266, 0.0
  %v2429 = vmax.f32 %v1271, 0.0
  %v2430 = vmax.f32 %v1276, 0.0
  %v2431 = vmax.f32 %v1281, 0.0
  %v2432 = vmax.f32 %v1286, 0.0
  %v2433 = vmax.f32 %v1291, 0.0
  %v2434 = vmax.f32 %v1296, 0.0
  %v2435 = vmax.f32 %v1301, 0.0
  %v2436 = vmax.f32 %v1306, 0.0
  %v2437 = vmax.f32 %v1311, 0.0
  %v2438 = vmax.f32 %v1316, 0.0
  %v2439 = vmax.f32 %v1321, 0.0
  %v2440 = vmax.f32 %v1326, 0.0
  %v2441 = vmax.f32 %v1331, 0.0
  %v2442 = vmax.f32 %v1336, 0.0
  %v2443 = vmax.f32 %v1341, 0.0
  %v2444 = vmax.f32 %v1346, 0.0
  %v2445 = vmax.f32 %v1351, 0.0
  %v2446 = vmax.f32 %v1356, 0.0
  %v2447 = vmax.f32 %v1361, 0.0
  %v2448 = vmax.f32 %v1366, 0.0
  %v2449 = vmax.f32 %v1371, 0.0
  %v2450 = vmax.f32 %v1376, 0.0
  %v2451 = vmax.f32 %v1381, 0.0
  %v2452 = vmax.f32 %v1386, 0.0
  %v2453 = vmax.f32 %v1391, 0.0
  %v2454 = vmax.f32 %v1396, 0.0
  %v2455 = vmax.f32 %v1401, 0.0
  %v2456 = vmax.f32 %v1406, 0.0
  %v2457 = vmax.f32 %v1411, 0.0
  %v2458 = vmax.f32 %v1416, 0.0
  %v2459 = vmax.f32 %v1421, 0.0
  %v2460 = vmax.f32 %v1426, 0.0
  %v2461 = vmax.f32 %v1431, 0.0
  %v2462 = vmax.f32 %v1436, 0.0
  %v2463 = vmax.f32 %v1441, 0.0
  %v2464 = vmax.f32 %v1446, 0.0
  %v2465 = vmax.f32 %v1451, 0.0
  %v2466 = vmax.f32 %v1456, 0.0
  %v2467 = vmax.f32 %v1461, 0.0
  %v2468 = vmax.f32 %v1466, 0.0
  %v2469 = vmax.f32 %v1471, 0.0
  %v2470 = vmax.f32 %v1476, 0.0
  %v2471 = vmax.f32 %v1481, 0.0
  %v2472 = vmax.f32 %v1486, 0.0
  %v2473 = vmax.f32 %v1491, 0.0
  %v2474 = vmax.f32 %v1496, 0.0
  %v2475 = vmax.f32 %v1501, 0.0
  %v2476 = vmax.f32 %v1506, 0.0
  %v2477 = vmax.f32 %v1511, 0.0
  %v2478 = vmax.f32 %v1516, 0.0
  %v2479 = vmax.f32 %v1521, 0.0
  %v2480 = vmax.f32 %v1526, 0.0
  %v2481 = vmax.f32 %v1531, 0.0
  %v2482 = vmax.f32 %v1536, 0.0
  %v2483 = vmax.f32 %v1541, 0.0
  %v2484 = vmax.f32 %v1546, 0.0
  %v2485 = vmax.f32 %v1551, 0.0
  %v2486 = vmax.f32 %v1556, 0.0
  %v2487 = vmax.f32 %v1561, 0.0
  %v2488 = vmax.f32 %v1566, 0.0
  %v2489 = vmax.f32 %v1571, 0.0
  %v2490 = vmax.f32 %v1576, 0.0
  %v2491 = vmax.f32 %v1581, 0.0
  %v2492 = vmax.f32 %v1586, 0.0
  %v2493 = vmax.f32 %v1591, 0.0
  %v2494 = vmax.f32 %v1596, 0.0
  %v2495 = vmax.f32 %v1601, 0.0
  %v2496 = vmax.f32 %v1606, 0.0
  %v2497 = vmax.f32 %v1611, 0.0
  %v2498 = vmax.f32 %v1616, 0.0
  %v2499 = vmax.f32 %v1621, 0.0
  %v2500 = vmax.f32 %v1626, 0.0
  %v2501 = vmax.f32 %v1631, 0.0
  %v2502 = vmax.f32 %v1636, 0.0
  %v2503 = vmax.f32 %v1641, 0.0
  %v2504 = vmax.f32 %v1646, 0.0
  %v2505 = vmax.f32 %v1651, 0.0
  %v2506 = vmax.f32 %v1656, 0.0
  %v2507 = vmax.f32 %v1661, 0.0
  %v2508 = vmax.f32 %v1666, 0.0
  %v2509 = vmax.f32 %v1671, 0.0
  %v2510 = vmax.f32 %v1676, 0.0
  %v2511 = vmax.f32 %v1681, 0.0
  %v2512 = vmax.f32 %v1686, 0.0
  %v2513 = vmax.f32 %v1691, 0.0
  %v2514 = vmax.f32 %v1696, 0.0
  %v2515 = vmax.f32 %v1701, 0.0
  %v2516 = vmax.f32 %v1706, 0.0
  %v2517 = vmax.f32 %v1711, 0.0
  %v2518 = vmax.f32 %v1716, 0.0
  %v2519 = vmax.f32 %v1721, 0.0
  %v2520 = vmax.f32 %v1726, 0.0
  %v2521 = vmax.f32 %v1731, 0.0
  %v2522 = vmax.f32 %v1736, 0.0
  %v2523 = vmax.f32 %v1741, 0.0
  %v2524 = vmax.f32 %v1746, 0.0
  %v2525 = vmax.f32 %v1751, 0.0
  %v2526 = vmax.f32 %v1756, 0.0
  %v2527 = vmax.f32 %v1761, 0.0
  %v2528 = vmax.f32 %v1766, 0.0
  %v2529 = vmax.f32 %v1771, 0.0
  %v2530 = vmax.f32 %v1776, 0.0
  %v2531 = vmax.f32 %v1781, 0.0
  %v2532 = vmax.f32 %v1786, 0.0
  %v2533 = vmax.f32 %v1791, 0.0
  %v2534 = vmax.f32 %v1796, 0.0
  %v2535 = vmax.f32 %v1801, 0.0
  %v2536 = vmax.f32 %v1806, 0.0
  %v2537 = vmax.f32 %v1811, 0.0
  %v2538 = vmax.f32 %v1816, 0.0
  %v2539 = vmax.f32 %v1821, 0.0
  %v2540 = vmax.f32 %v1826, 0.0
  %v2541 = vmax.f32 %v1831, 0.0
  %v2542 = vmax.f32 %v1836, 0.0
  %v2543 = vmax.f32 %v1841, 0.0
  %v2544 = vmax.f32 %v1846, 0.0
  %v2545 = vmax.f32 %v1851, 0.0
  %v2546 = vmax.f32 %v1856, 0.0
  %v2547 = vmax.f32 %v1861, 0.0
  %v2548 = vmax.f32 %v1866, 0.0
  %v2549 = vmax.f32 %v1871, 0.0
  %v2550 = vmax.f32 %v1876, 0.0
  %v2551 = vmax.f32 %v1881, 0.0
  %v2552 = vmax.f32 %v1886, 0.0
  %v2553 = vmax.f32 %v1891, 0.0
  %v2554 = vmax.f32 %v1896, 0.0
  %v2555 = vmax.f32 %v1901, 0.0
  %v2556 = vmax.f32 %v1906, 0.0
  %v2557 = vmax.f32 %v1911, 0.0
  %v2558 = vmax.f32 %v1916, 0.0
  %v2559 = vmax.f32 %v1921, 0.0
  %v2560 = vmax.f32 %v1926, 0.0
  %v2561 = vmax.f32 %v1931, 0.0
  %v2562 = vmax.f32 %v1936, 0.0
  %v2563 = vmax.f32 %v1941, 0.0
  %v2564 = vmax.f32 %v1946, 0.0
  %v2565 = vmax.f32 %v1951, 0.0
  %v2566 = vmax.f32 %v1956, 0.0
  %v2567 = vmax.f32 %v1961, 0.0
  %v2568 = vmax.f32 %v1966, 0.0
  %v2569 = vmax.f32 %v1971, 0.0
  %v2570 = vmax.f32 %v1976, 0.0
  %v2571 = vmax.f32 %v1981, 0.0
  %v2572 = vmax.f32 %v1986, 0.0
  %v2573 = vmax.f32 %v1991, 0.0
  %v2574 = vmax.f32 %v1996, 0.0
  %v2575 = vmax.f32 %v2001, 0.0
  %v2576 = vmax.f32 %v2006, 0.0
  %v2577 = vmax.f32 %v2011, 0.0
  %v2578 = vmax.f32 %v2016, 0.0
  %v2579 = vmax.f32 %v2021, 0.0
  %v2580 = vmax.f32 %v2026, 0.0
  %v2581 = vmax.f32 %v2031, 0.0
  %v2582 = vmax.f32 %v2036, 0.0
  %v2583 = vmax.f32 %v2041, 0.0
  %v2584 = vmax.f32 %v2046, 0.0
  %v2585 = vmax.f32 %v2051, 0.0
  %v2586 = vmax.f32 %v2056, 0.0
  %v2587 = vmax.f32 %v2061, 0.0
  %v2588 = vmax.f32 %v2066, 0.0
  %v2589 = vmax.f32 %v2071, 0.0
  %v2590 = vmax.f32 %v2076, 0.0
  %v2591 = vmax.f32 %v2081, 0.0
  %v2592 = vmax.f32 %v2086, 0.0
  %v2593 = vmax.f32 %v2091, 0.0
  %v2594 = vmax.f32 %v2096, 0.0
  %v2595 = vmax.f32 %v2101, 0.0
  %v2596 = vmax.f32 %v2106, 0.0
  %v2597 = vmax.f32 %v2111, 0.0
  %v2598 = vmax.f32 %v2116, 0.0
  %v2599 = vmax.f32 %v2121, 0.0
  %v2600 = vmax.f32 %v2126, 0.0
  %v2601 = vmax.f32 %v2131, 0.0
  %v2602 = vmax.f32 %v2136, 0.0
  %v2603 = vmax.f32 %v2141, 0.0
  %v2604 = vmax.f32 %v2146, 0.0
  %v2605 = vmax.f32 %v2151, 0.0
  %v2606 = vmax.f32 %v2156, 0.0
  %v2607 = vmax.f32 %v2161, 0.0
  %v2608 = vmax.f32 %v2166, 0.0
  %v2609 = vmax.f32 %v2171, 0.0
  %v2610 = vmax.f32 %v2176, 0.0
  %v2611 = vmax.f32 %v2181, 0.0
  %v2612 = vmax.f32 %v2186, 0.0
  %v2613 = vmax.f32 %v2191, 0.0
  %v2614 = vmax.f32 %v2196, 0.0
  %v2615 = vmax.f32 %v2201, 0.0
  %v2616 = vmax.f32 %v2206, 0.0
  %v2617 = vmax.f32 %v2211, 0.0
  %v2618 = vmax.f32 %v2216, 0.0
  %v2619 = vmax.f32 %v2221, 0.0
  %v2620 = vmax.f32 %v2226, 0.0
  %v2621 = vmax.f32 %v2231, 0.0
  %v2622 = vmax.f32 %v2236, 0.0
  %v2623 = vmax.f32 %v2241, 0.0
  %v2624 = vmax.f32 %v2246, 0.0
  %v2625 = vmax.f32 %v2251, 0.0
  %v2626 = vmax.f32 %v2256, 0.0
  %v2627 = vmax.f32 %v2261, 0.0
  %v2628 = vmax.f32 %v2266, 0.0
  %v2629 = vmax.f32 %v2271, 0.0
  %v2630 = vmax.f32 %v2276, 0.0
  %v2631 = vmax.f32 %v2281, 0.0
  %v2632 = vmax.f32 %v2286, 0.0
  %v2633 = vmax.f32 %v2291, 0.0
  %v2634 = vmax.f32 %v2296, 0.0
  %v2635 = vmax.f32 %v2301, 0.0
  %v2636 = vmax.f32 %v2306, 0.0
  %v2637 = vmax.f32 %v2311, 0.0
  %v2638 = vmax.f32 %v2316, 0.0
  %v2639 = vmax.f32 %v2321, 0.0
  %v2640 = vmax.f32 %v2326, 0.0
  %v2641 = vmax.f32 %v2331, 0.0
  %v2642 = vmax.f32 %v2336, 0.0
  %v2643 = vmax.f32 %v2341, 0.0
  %v2644 = vmax.f32 %v2346, 0.0
  %v2645 = vmax.f32 %v2351, 0.0
  %v2646 = vmax.f32 %v2356, 0.0
  %v2647 = vmax.f32 %v2361, 0.0
  %v2648 = vmax.f32 %v2366, 0.0
  %v2649 = vmax.f32 %v2371, 0.0
  %v2650 = vmax.f32 %v2376, 0.0
  %v2651 = vmax.f32 %v2381, 0.0
  %v2652 = vmax.f32 %v2386, 0.0
  %v2653 = vmax.f32 %v2391, 0.0
  %v2654 = vmax.f32 %v2396, 0.0
  %vm2655 = vcmask 130048
  %2656 = vst.msk [vmem:[%s3] sm:$0xff] %vm2655, %v2399
  %2657 = vst.msk [vmem:[%s3 + $0x8] sm:$0xff] %vm2655, %v2400
  %2658 = vst.msk [vmem:[%s3 + $0x10] sm:$0xff] %vm2655, %v2401
  %2659 = vst.msk [vmem:[%s3 + $0x18] sm:$0xff] %vm2655, %v2402
  %2660 = vst.msk [vmem:[%s3 + $0x20] sm:$0xff] %vm2655, %v2403
  %2661 = vst.msk [vmem:[%s3 + $0x28] sm:$0xff] %vm2655, %v2404
  %2662 = vst.msk [vmem:[%s3 + $0x30] sm:$0xff] %vm2655, %v2405
  %2663 = vst.msk [vmem:[%s3 + $0x38] sm:$0xff] %vm2655, %v2406
  %2664 = vst.msk [vmem:[%s3 + $0x40] sm:$0xff] %vm2655, %v2407
  %2665 = vst.msk [vmem:[%s3 + $0x48] sm:$0xff] %vm2655, %v2408
  %2666 = vst.msk [vmem:[%s3 + $0x50] sm:$0xff] %vm2655, %v2409
  %2667 = vst.msk [vmem:[%s3 + $0x58] sm:$0xff] %vm2655, %v2410
  %2668 = vst.msk [vmem:[%s3 + $0x60] sm:$0xff] %vm2655, %v2411
  %2669 = vst.msk [vmem:[%s3 + $0x68] sm:$0xff] %vm2655, %v2412
  %2670 = vst.msk [vmem:[%s3 + $0x70] sm:$0xff] %vm2655, %v2413
  %2671 = vst.msk [vmem:[%s3 + $0x78] sm:$0xff] %vm2655, %v2414
  %2672 = vst.msk [vmem:[%s3 + $0x80] sm:$0xff] %vm2655, %v2415
  %2673 = vst.msk [vmem:[%s3 + $0x88] sm:$0xff] %vm2655, %v2416
  %2674 = vst.msk [vmem:[%s3 + $0x90] sm:$0xff] %vm2655, %v2417
  %2675 = vst.msk [vmem:[%s3 + $0x98] sm:$0xff] %vm2655, %v2418
  %2676 = vst.msk [vmem:[%s3 + $0xa0] sm:$0xff] %vm2655, %v2419
  %2677 = vst.msk [vmem:[%s3 + $0xa8] sm:$0xff] %vm2655, %v2420
  %2678 = vst.msk [vmem:[%s3 + $0xb0] sm:$0xff] %vm2655, %v2421
  %2679 = vst.msk [vmem:[%s3 + $0xb8] sm:$0xff] %vm2655, %v2422
  %2680 = vst.msk [vmem:[%s3 + $0xc0] sm:$0xff] %vm2655, %v2423
  %2681 = vst.msk [vmem:[%s3 + $0xc8] sm:$0xff] %vm2655, %v2424
  %2682 = vst.msk [vmem:[%s3 + $0xd0] sm:$0xff] %vm2655, %v2425
  %2683 = vst.msk [vmem:[%s3 + $0xd8] sm:$0xff] %vm2655, %v2426
  %2684 = vst.msk [vmem:[%s3 + $0xe0] sm:$0xff] %vm2655, %v2427
  %2685 = vst.msk [vmem:[%s3 + $0xe8] sm:$0xff] %vm2655, %v2428
  %2686 = vst.msk [vmem:[%s3 + $0xf0] sm:$0xff] %vm2655, %v2429
  %2687 = vst.msk [vmem:[%s3 + $0xf8] sm:$0xff] %vm2655, %v2430
  %2688 = vst.msk [vmem:[%s3 + $0x100] sm:$0xff] %vm2655, %v2431
  %2689 = vst.msk [vmem:[%s3 + $0x108] sm:$0xff] %vm2655, %v2432
  %2690 = vst.msk [vmem:[%s3 + $0x110] sm:$0xff] %vm2655, %v2433
  %2691 = vst.msk [vmem:[%s3 + $0x118] sm:$0xff] %vm2655, %v2434
  %2692 = vst.msk [vmem:[%s3 + $0x120] sm:$0xff] %vm2655, %v2435
  %2693 = vst.msk [vmem:[%s3 + $0x128] sm:$0xff] %vm2655, %v2436
  %2694 = vst.msk [vmem:[%s3 + $0x130] sm:$0xff] %vm2655, %v2437
  %2695 = vst.msk [vmem:[%s3 + $0x138] sm:$0xff] %vm2655, %v2438
  %2696 = vst.msk [vmem:[%s3 + $0x140] sm:$0xff] %vm2655, %v2439
  %2697 = vst.msk [vmem:[%s3 + $0x148] sm:$0xff] %vm2655, %v2440
  %2698 = vst.msk [vmem:[%s3 + $0x150] sm:$0xff] %vm2655, %v2441
  %2699 = vst.msk [vmem:[%s3 + $0x158] sm:$0xff] %vm2655, %v2442
  %2700 = vst.msk [vmem:[%s3 + $0x160] sm:$0xff] %vm2655, %v2443
  %2701 = vst.msk [vmem:[%s3 + $0x168] sm:$0xff] %vm2655, %v2444
  %2702 = vst.msk [vmem:[%s3 + $0x170] sm:$0xff] %vm2655, %v2445
  %2703 = vst.msk [vmem:[%s3 + $0x178] sm:$0xff] %vm2655, %v2446
  %2704 = vst.msk [vmem:[%s3 + $0x180] sm:$0xff] %vm2655, %v2447
  %2705 = vst.msk [vmem:[%s3 + $0x188] sm:$0xff] %vm2655, %v2448
  %2706 = vst.msk [vmem:[%s3 + $0x190] sm:$0xff] %vm2655, %v2449
  %2707 = vst.msk [vmem:[%s3 + $0x198] sm:$0xff] %vm2655, %v2450
  %2708 = vst.msk [vmem:[%s3 + $0x1a0] sm:$0xff] %vm2655, %v2451
  %2709 = vst.msk [vmem:[%s3 + $0x1a8] sm:$0xff] %vm2655, %v2452
  %2710 = vst.msk [vmem:[%s3 + $0x1b0] sm:$0xff] %vm2655, %v2453
  %2711 = vst.msk [vmem:[%s3 + $0x1b8] sm:$0xff] %vm2655, %v2454
  %2712 = vst.msk [vmem:[%s3 + $0x1c0] sm:$0xff] %vm2655, %v2455
  %2713 = vst.msk [vmem:[%s3 + $0x1c8] sm:$0xff] %vm2655, %v2456
  %2714 = vst.msk [vmem:[%s3 + $0x1d0] sm:$0xff] %vm2655, %v2457
  %2715 = vst.msk [vmem:[%s3 + $0x1d8] sm:$0xff] %vm2655, %v2458
  %2716 = vst.msk [vmem:[%s3 + $0x1e0] sm:$0xff] %vm2655, %v2459
  %2717 = vst.msk [vmem:[%s3 + $0x1e8] sm:$0xff] %vm2655, %v2460
  %2718 = vst.msk [vmem:[%s3 + $0x1f0] sm:$0xff] %vm2655, %v2461
  %2719 = vst.msk [vmem:[%s3 + $0x1f8] sm:$0xff] %vm2655, %v2462
  %2720 = vst.msk [vmem:[%s3 + $0x200] sm:$0xff] %vm2655, %v2463
  %2721 = vst.msk [vmem:[%s3 + $0x208] sm:$0xff] %vm2655, %v2464
  %2722 = vst.msk [vmem:[%s3 + $0x210] sm:$0xff] %vm2655, %v2465
  %2723 = vst.msk [vmem:[%s3 + $0x218] sm:$0xff] %vm2655, %v2466
  %2724 = vst.msk [vmem:[%s3 + $0x220] sm:$0xff] %vm2655, %v2467
  %2725 = vst.msk [vmem:[%s3 + $0x228] sm:$0xff] %vm2655, %v2468
  %2726 = vst.msk [vmem:[%s3 + $0x230] sm:$0xff] %vm2655, %v2469
  %2727 = vst.msk [vmem:[%s3 + $0x238] sm:$0xff] %vm2655, %v2470
  %2728 = vst.msk [vmem:[%s3 + $0x240] sm:$0xff] %vm2655, %v2471
  %2729 = vst.msk [vmem:[%s3 + $0x248] sm:$0xff] %vm2655, %v2472
  %2730 = vst.msk [vmem:[%s3 + $0x250] sm:$0xff] %vm2655, %v2473
  %2731 = vst.msk [vmem:[%s3 + $0x258] sm:$0xff] %vm2655, %v2474
  %2732 = vst.msk [vmem:[%s3 + $0x260] sm:$0xff] %vm2655, %v2475
  %2733 = vst.msk [vmem:[%s3 + $0x268] sm:$0xff] %vm2655, %v2476
  %2734 = vst.msk [vmem:[%s3 + $0x270] sm:$0xff] %vm2655, %v2477
  %2735 = vst.msk [vmem:[%s3 + $0x278] sm:$0xff] %vm2655, %v2478
  %2736 = vst.msk [vmem:[%s3 + $0x280] sm:$0xff] %vm2655, %v2479
  %2737 = vst.msk [vmem:[%s3 + $0x288] sm:$0xff] %vm2655, %v2480
  %2738 = vst.msk [vmem:[%s3 + $0x290] sm:$0xff] %vm2655, %v2481
  %2739 = vst.msk [vmem:[%s3 + $0x298] sm:$0xff] %vm2655, %v2482
  %2740 = vst.msk [vmem:[%s3 + $0x2a0] sm:$0xff] %vm2655, %v2483
  %2741 = vst.msk [vmem:[%s3 + $0x2a8] sm:$0xff] %vm2655, %v2484
  %2742 = vst.msk [vmem:[%s3 + $0x2b0] sm:$0xff] %vm2655, %v2485
  %2743 = vst.msk [vmem:[%s3 + $0x2b8] sm:$0xff] %vm2655, %v2486
  %2744 = vst.msk [vmem:[%s3 + $0x2c0] sm:$0xff] %vm2655, %v2487
  %2745 = vst.msk [vmem:[%s3 + $0x2c8] sm:$0xff] %vm2655, %v2488
  %2746 = vst.msk [vmem:[%s3 + $0x2d0] sm:$0xff] %vm2655, %v2489
  %2747 = vst.msk [vmem:[%s3 + $0x2d8] sm:$0xff] %vm2655, %v2490
  %2748 = vst.msk [vmem:[%s3 + $0x2e0] sm:$0xff] %vm2655, %v2491
  %2749 = vst.msk [vmem:[%s3 + $0x2e8] sm:$0xff] %vm2655, %v2492
  %2750 = vst.msk [vmem:[%s3 + $0x2f0] sm:$0xff] %vm2655, %v2493
  %2751 = vst.msk [vmem:[%s3 + $0x2f8] sm:$0xff] %vm2655, %v2494
  %2752 = vst.msk [vmem:[%s3 + $0x300] sm:$0xff] %vm2655, %v2495
  %2753 = vst.msk [vmem:[%s3 + $0x308] sm:$0xff] %vm2655, %v2496
  %2754 = vst.msk [vmem:[%s3 + $0x310] sm:$0xff] %vm2655, %v2497
  %2755 = vst.msk [vmem:[%s3 + $0x318] sm:$0xff] %vm2655, %v2498
  %2756 = vst.msk [vmem:[%s3 + $0x320] sm:$0xff] %vm2655, %v2499
  %2757 = vst.msk [vmem:[%s3 + $0x328] sm:$0xff] %vm2655, %v2500
  %2758 = vst.msk [vmem:[%s3 + $0x330] sm:$0xff] %vm2655, %v2501
  %2759 = vst.msk [vmem:[%s3 + $0x338] sm:$0xff] %vm2655, %v2502
  %2760 = vst.msk [vmem:[%s3 + $0x340] sm:$0xff] %vm2655, %v2503
  %2761 = vst.msk [vmem:[%s3 + $0x348] sm:$0xff] %vm2655, %v2504
  %2762 = vst.msk [vmem:[%s3 + $0x350] sm:$0xff] %vm2655, %v2505
  %2763 = vst.msk [vmem:[%s3 + $0x358] sm:$0xff] %vm2655, %v2506
  %2764 = vst.msk [vmem:[%s3 + $0x360] sm:$0xff] %vm2655, %v2507
  %2765 = vst.msk [vmem:[%s3 + $0x368] sm:$0xff] %vm2655, %v2508
  %2766 = vst.msk [vmem:[%s3 + $0x370] sm:$0xff] %vm2655, %v2509
  %2767 = vst.msk [vmem:[%s3 + $0x378] sm:$0xff] %vm2655, %v2510
  %2768 = vst.msk [vmem:[%s3 + $0x380] sm:$0xff] %vm2655, %v2511
  %2769 = vst.msk [vmem:[%s3 + $0x388] sm:$0xff] %vm2655, %v2512
  %2770 = vst.msk [vmem:[%s3 + $0x390] sm:$0xff] %vm2655, %v2513
  %2771 = vst.msk [vmem:[%s3 + $0x398] sm:$0xff] %vm2655, %v2514
  %2772 = vst.msk [vmem:[%s3 + $0x3a0] sm:$0xff] %vm2655, %v2515
  %2773 = vst.msk [vmem:[%s3 + $0x3a8] sm:$0xff] %vm2655, %v2516
  %2774 = vst.msk [vmem:[%s3 + $0x3b0] sm:$0xff] %vm2655, %v2517
  %2775 = vst.msk [vmem:[%s3 + $0x3b8] sm:$0xff] %vm2655, %v2518
  %2776 = vst.msk [vmem:[%s3 + $0x3c0] sm:$0xff] %vm2655, %v2519
  %2777 = vst.msk [vmem:[%s3 + $0x3c8] sm:$0xff] %vm2655, %v2520
  %2778 = vst.msk [vmem:[%s3 + $0x3d0] sm:$0xff] %vm2655, %v2521
  %2779 = vst.msk [vmem:[%s3 + $0x3d8] sm:$0xff] %vm2655, %v2522
  %2780 = vst.msk [vmem:[%s3 + $0x3e0] sm:$0xff] %vm2655, %v2523
  %2781 = vst.msk [vmem:[%s3 + $0x3e8] sm:$0xff] %vm2655, %v2524
  %2782 = vst.msk [vmem:[%s3 + $0x3f0] sm:$0xff] %vm2655, %v2525
  %2783 = vst.msk [vmem:[%s3 + $0x3f8] sm:$0xff] %vm2655, %v2526
  %2784 = vst.msk [vmem:[%s3 + $0x400] sm:$0xff] %vm2655, %v2527
  %2785 = vst.msk [vmem:[%s3 + $0x408] sm:$0xff] %vm2655, %v2528
  %2786 = vst.msk [vmem:[%s3 + $0x410] sm:$0xff] %vm2655, %v2529
  %2787 = vst.msk [vmem:[%s3 + $0x418] sm:$0xff] %vm2655, %v2530
  %2788 = vst.msk [vmem:[%s3 + $0x420] sm:$0xff] %vm2655, %v2531
  %2789 = vst.msk [vmem:[%s3 + $0x428] sm:$0xff] %vm2655, %v2532
  %2790 = vst.msk [vmem:[%s3 + $0x430] sm:$0xff] %vm2655, %v2533
  %2791 = vst.msk [vmem:[%s3 + $0x438] sm:$0xff] %vm2655, %v2534
  %2792 = vst.msk [vmem:[%s3 + $0x440] sm:$0xff] %vm2655, %v2535
  %2793 = vst.msk [vmem:[%s3 + $0x448] sm:$0xff] %vm2655, %v2536
  %2794 = vst.msk [vmem:[%s3 + $0x450] sm:$0xff] %vm2655, %v2537
  %2795 = vst.msk [vmem:[%s3 + $0x458] sm:$0xff] %vm2655, %v2538
  %2796 = vst.msk [vmem:[%s3 + $0x460] sm:$0xff] %vm2655, %v2539
  %2797 = vst.msk [vmem:[%s3 + $0x468] sm:$0xff] %vm2655, %v2540
  %2798 = vst.msk [vmem:[%s3 + $0x470] sm:$0xff] %vm2655, %v2541
  %2799 = vst.msk [vmem:[%s3 + $0x478] sm:$0xff] %vm2655, %v2542
  %2800 = vst.msk [vmem:[%s3 + $0x480] sm:$0xff] %vm2655, %v2543
  %2801 = vst.msk [vmem:[%s3 + $0x488] sm:$0xff] %vm2655, %v2544
  %2802 = vst.msk [vmem:[%s3 + $0x490] sm:$0xff] %vm2655, %v2545
  %2803 = vst.msk [vmem:[%s3 + $0x498] sm:$0xff] %vm2655, %v2546
  %2804 = vst.msk [vmem:[%s3 + $0x4a0] sm:$0xff] %vm2655, %v2547
  %2805 = vst.msk [vmem:[%s3 + $0x4a8] sm:$0xff] %vm2655, %v2548
  %2806 = vst.msk [vmem:[%s3 + $0x4b0] sm:$0xff] %vm2655, %v2549
  %2807 = vst.msk [vmem:[%s3 + $0x4b8] sm:$0xff] %vm2655, %v2550
  %2808 = vst.msk [vmem:[%s3 + $0x4c0] sm:$0xff] %vm2655, %v2551
  %2809 = vst.msk [vmem:[%s3 + $0x4c8] sm:$0xff] %vm2655, %v2552
  %2810 = vst.msk [vmem:[%s3 + $0x4d0] sm:$0xff] %vm2655, %v2553
  %2811 = vst.msk [vmem:[%s3 + $0x4d8] sm:$0xff] %vm2655, %v2554
  %2812 = vst.msk [vmem:[%s3 + $0x4e0] sm:$0xff] %vm2655, %v2555
  %2813 = vst.msk [vmem:[%s3 + $0x4e8] sm:$0xff] %vm2655, %v2556
  %2814 = vst.msk [vmem:[%s3 + $0x4f0] sm:$0xff] %vm2655, %v2557
  %2815 = vst.msk [vmem:[%s3 + $0x4f8] sm:$0xff] %vm2655, %v2558
  %2816 = vst.msk [vmem:[%s3 + $0x500] sm:$0xff] %vm2655, %v2559
  %2817 = vst.msk [vmem:[%s3 + $0x508] sm:$0xff] %vm2655, %v2560
  %2818 = vst.msk [vmem:[%s3 + $0x510] sm:$0xff] %vm2655, %v2561
  %2819 = vst.msk [vmem:[%s3 + $0x518] sm:$0xff] %vm2655, %v2562
  %2820 = vst.msk [vmem:[%s3 + $0x520] sm:$0xff] %vm2655, %v2563
  %2821 = vst.msk [vmem:[%s3 + $0x528] sm:$0xff] %vm2655, %v2564
  %2822 = vst.msk [vmem:[%s3 + $0x530] sm:$0xff] %vm2655, %v2565
  %2823 = vst.msk [vmem:[%s3 + $0x538] sm:$0xff] %vm2655, %v2566
  %2824 = vst.msk [vmem:[%s3 + $0x540] sm:$0xff] %vm2655, %v2567
  %2825 = vst.msk [vmem:[%s3 + $0x548] sm:$0xff] %vm2655, %v2568
  %2826 = vst.msk [vmem:[%s3 + $0x550] sm:$0xff] %vm2655, %v2569
  %2827 = vst.msk [vmem:[%s3 + $0x558] sm:$0xff] %vm2655, %v2570
  %2828 = vst.msk [vmem:[%s3 + $0x560] sm:$0xff] %vm2655, %v2571
  %2829 = vst.msk [vmem:[%s3 + $0x568] sm:$0xff] %vm2655, %v2572
  %2830 = vst.msk [vmem:[%s3 + $0x570] sm:$0xff] %vm2655, %v2573
  %2831 = vst.msk [vmem:[%s3 + $0x578] sm:$0xff] %vm2655, %v2574
  %2832 = vst.msk [vmem:[%s3 + $0x580] sm:$0xff] %vm2655, %v2575
  %2833 = vst.msk [vmem:[%s3 + $0x588] sm:$0xff] %vm2655, %v2576
  %2834 = vst.msk [vmem:[%s3 + $0x590] sm:$0xff] %vm2655, %v2577
  %2835 = vst.msk [vmem:[%s3 + $0x598] sm:$0xff] %vm2655, %v2578
  %2836 = vst.msk [vmem:[%s3 + $0x5a0] sm:$0xff] %vm2655, %v2579
  %2837 = vst.msk [vmem:[%s3 + $0x5a8] sm:$0xff] %vm2655, %v2580
  %2838 = vst.msk [vmem:[%s3 + $0x5b0] sm:$0xff] %vm2655, %v2581
  %2839 = vst.msk [vmem:[%s3 + $0x5b8] sm:$0xff] %vm2655, %v2582
  %2840 = vst.msk [vmem:[%s3 + $0x5c0] sm:$0xff] %vm2655, %v2583
  %2841 = vst.msk [vmem:[%s3 + $0x5c8] sm:$0xff] %vm2655, %v2584
  %2842 = vst.msk [vmem:[%s3 + $0x5d0] sm:$0xff] %vm2655, %v2585
  %2843 = vst.msk [vmem:[%s3 + $0x5d8] sm:$0xff] %vm2655, %v2586
  %2844 = vst.msk [vmem:[%s3 + $0x5e0] sm:$0xff] %vm2655, %v2587
  %2845 = vst.msk [vmem:[%s3 + $0x5e8] sm:$0xff] %vm2655, %v2588
  %2846 = vst.msk [vmem:[%s3 + $0x5f0] sm:$0xff] %vm2655, %v2589
  %2847 = vst.msk [vmem:[%s3 + $0x5f8] sm:$0xff] %vm2655, %v2590
  %2848 = vst.msk [vmem:[%s3 + $0x600] sm:$0xff] %vm2655, %v2591
  %2849 = vst.msk [vmem:[%s3 + $0x608] sm:$0xff] %vm2655, %v2592
  %2850 = vst.msk [vmem:[%s3 + $0x610] sm:$0xff] %vm2655, %v2593
  %2851 = vst.msk [vmem:[%s3 + $0x618] sm:$0xff] %vm2655, %v2594
  %2852 = vst.msk [vmem:[%s3 + $0x620] sm:$0xff] %vm2655, %v2595
  %2853 = vst.msk [vmem:[%s3 + $0x628] sm:$0xff] %vm2655, %v2596
  %2854 = vst.msk [vmem:[%s3 + $0x630] sm:$0xff] %vm2655, %v2597
  %2855 = vst.msk [vmem:[%s3 + $0x638] sm:$0xff] %vm2655, %v2598
  %2856 = vst.msk [vmem:[%s3 + $0x640] sm:$0xff] %vm2655, %v2599
  %2857 = vst.msk [vmem:[%s3 + $0x648] sm:$0xff] %vm2655, %v2600
  %2858 = vst.msk [vmem:[%s3 + $0x650] sm:$0xff] %vm2655, %v2601
  %2859 = vst.msk [vmem:[%s3 + $0x658] sm:$0xff] %vm2655, %v2602
  %2860 = vst.msk [vmem:[%s3 + $0x660] sm:$0xff] %vm2655, %v2603
  %2861 = vst.msk [vmem:[%s3 + $0x668] sm:$0xff] %vm2655, %v2604
  %2862 = vst.msk [vmem:[%s3 + $0x670] sm:$0xff] %vm2655, %v2605
  %2863 = vst.msk [vmem:[%s3 + $0x678] sm:$0xff] %vm2655, %v2606
  %2864 = vst.msk [vmem:[%s3 + $0x680] sm:$0xff] %vm2655, %v2607
  %2865 = vst.msk [vmem:[%s3 + $0x688] sm:$0xff] %vm2655, %v2608
  %2866 = vst.msk [vmem:[%s3 + $0x690] sm:$0xff] %vm2655, %v2609
  %2867 = vst.msk [vmem:[%s3 + $0x698] sm:$0xff] %vm2655, %v2610
  %2868 = vst.msk [vmem:[%s3 + $0x6a0] sm:$0xff] %vm2655, %v2611
  %2869 = vst.msk [vmem:[%s3 + $0x6a8] sm:$0xff] %vm2655, %v2612
  %2870 = vst.msk [vmem:[%s3 + $0x6b0] sm:$0xff] %vm2655, %v2613
  %2871 = vst.msk [vmem:[%s3 + $0x6b8] sm:$0xff] %vm2655, %v2614
  %2872 = vst.msk [vmem:[%s3 + $0x6c0] sm:$0xff] %vm2655, %v2615
  %2873 = vst.msk [vmem:[%s3 + $0x6c8] sm:$0xff] %vm2655, %v2616
  %2874 = vst.msk [vmem:[%s3 + $0x6d0] sm:$0xff] %vm2655, %v2617
  %2875 = vst.msk [vmem:[%s3 + $0x6d8] sm:$0xff] %vm2655, %v2618
  %2876 = vst.msk [vmem:[%s3 + $0x6e0] sm:$0xff] %vm2655, %v2619
  %2877 = vst.msk [vmem:[%s3 + $0x6e8] sm:$0xff] %vm2655, %v2620
  %2878 = vst.msk [vmem:[%s3 + $0x6f0] sm:$0xff] %vm2655, %v2621
  %2879 = vst.msk [vmem:[%s3 + $0x6f8] sm:$0xff] %vm2655, %v2622
  %2880 = vst.msk [vmem:[%s3 + $0x700] sm:$0xff] %vm2655, %v2623
  %2881 = vst.msk [vmem:[%s3 + $0x708] sm:$0xff] %vm2655, %v2624
  %2882 = vst.msk [vmem:[%s3 + $0x710] sm:$0xff] %vm2655, %v2625
  %2883 = vst.msk [vmem:[%s3 + $0x718] sm:$0xff] %vm2655, %v2626
  %2884 = vst.msk [vmem:[%s3 + $0x720] sm:$0xff] %vm2655, %v2627
  %2885 = vst.msk [vmem:[%s3 + $0x728] sm:$0xff] %vm2655, %v2628
  %2886 = vst.msk [vmem:[%s3 + $0x730] sm:$0xff] %vm2655, %v2629
  %2887 = vst.msk [vmem:[%s3 + $0x738] sm:$0xff] %vm2655, %v2630
  %2888 = vst.msk [vmem:[%s3 + $0x740] sm:$0xff] %vm2655, %v2631
  %2889 = vst.msk [vmem:[%s3 + $0x748] sm:$0xff] %vm2655, %v2632
  %2890 = vst.msk [vmem:[%s3 + $0x750] sm:$0xff] %vm2655, %v2633
  %2891 = vst.msk [vmem:[%s3 + $0x758] sm:$0xff] %vm2655, %v2634
  %2892 = vst.msk [vmem:[%s3 + $0x760] sm:$0xff] %vm2655, %v2635
  %2893 = vst.msk [vmem:[%s3 + $0x768] sm:$0xff] %vm2655, %v2636
  %2894 = vst.msk [vmem:[%s3 + $0x770] sm:$0xff] %vm2655, %v2637
  %2895 = vst.msk [vmem:[%s3 + $0x778] sm:$0xff] %vm2655, %v2638
  %2896 = vst.msk [vmem:[%s3 + $0x780] sm:$0xff] %vm2655, %v2639
  %2897 = vst.msk [vmem:[%s3 + $0x788] sm:$0xff] %vm2655, %v2640
  %2898 = vst.msk [vmem:[%s3 + $0x790] sm:$0xff] %vm2655, %v2641
  %2899 = vst.msk [vmem:[%s3 + $0x798] sm:$0xff] %vm2655, %v2642
  %2900 = vst.msk [vmem:[%s3 + $0x7a0] sm:$0xff] %vm2655, %v2643
  %2901 = vst.msk [vmem:[%s3 + $0x7a8] sm:$0xff] %vm2655, %v2644
  %2902 = vst.msk [vmem:[%s3 + $0x7b0] sm:$0xff] %vm2655, %v2645
  %2903 = vst.msk [vmem:[%s3 + $0x7b8] sm:$0xff] %vm2655, %v2646
  %2904 = vst.msk [vmem:[%s3 + $0x7c0] sm:$0xff] %vm2655, %v2647
  %2905 = vst.msk [vmem:[%s3 + $0x7c8] sm:$0xff] %vm2655, %v2648
  %2906 = vst.msk [vmem:[%s3 + $0x7d0] sm:$0xff] %vm2655, %v2649
  %2907 = vst.msk [vmem:[%s3 + $0x7d8] sm:$0xff] %vm2655, %v2650
  %2908 = vst.msk [vmem:[%s3 + $0x7e0] sm:$0xff] %vm2655, %v2651
  %2909 = vst.msk [vmem:[%s3 + $0x7e8] sm:$0xff] %vm2655, %v2652
  %2910 = vst.msk [vmem:[%s3 + $0x7f0] sm:$0xff] %vm2655, %v2653
  %2911 = vst.msk [vmem:[%s3 + $0x7f8] sm:$0xff] %vm2655, %v2654
  // Predicated region
  $region14: #{policy_act.4} parent=0 // pred_check
    _
  $region15: #{policy_act.4} parent=0 // pred_check_branch
    %2913 = sbr.rel (0) target = $region17
  $region16: #{policy_act.4} parent=0 // pred_region
    _
  $region17: #{policy_act.4} parent=0 // pred_fallthru
    _
  // Predicated region
  $region18: #{policy_act.4} parent=0 // pred_check
    _
  $region19: #{policy_act.4} parent=0 // pred_check_branch
    %2915 = sbr.rel (0) target = $region21
  $region20: #{policy_act.4} parent=0 // pred_region
    _
  $region21: #{policy_act.4} parent=0 // pred_fallthru
    _

// kernel: policy_act.5
$region0: #{policy_act.5}
  #allocation0 [shape = 'u32[]', space=smem, size = 0x4, offset = 0x4, fixed_abs, tag = 'smem constant byte address 0x4 - core index']
  #allocation1 [shape = 'u32[144,128]{1,0:T(1,128)}', space=vmem, size = 0x12000, scoped, tag = 'internal scratch']
  %s0 = inlined_call_operand.vmem [shape: f32[512,144], index: 0, kind: input, shape index: {}]
  %s1 = inlined_call_operand.vmem [shape: f32[144,32], index: 1, kind: input, shape index: {}]
  %s2 = inlined_call_operand.vmem [shape: f32[1,32], index: 2, kind: input, shape index: {}]
  %s3 = inlined_call_operand.vmem [shape: f32[512,32], index: 3, kind: output, shape index: {}]
  %s4 = sld [smem:[#allocation0]]
  $region22: #{policy_act.5} parent=0
    _
  %s6 = ssub.s32 1, %s4
  %s7 = scalar_select 0, %s6, %s4
  // Predicated region
  $region2: #{policy_act.5} parent=0 // pred_check
    _
  $region3: #{policy_act.5} parent=0 // pred_check_branch
    %9 = sbr.rel (0) target = $region5
  $region4: #{policy_act.5} parent=0 // pred_region
    _
  $region5: #{policy_act.5} parent=0 // pred_fallthru
    _
  // Predicated region
  $region6: #{policy_act.5} parent=0 // pred_check
    _
  $region7: #{policy_act.5} parent=0 // pred_check_branch
    %11 = sbr.rel (0) target = $region9
  $region8: #{policy_act.5} parent=0 // pred_region
    _
  $region9: #{policy_act.5} parent=0 // pred_fallthru
    _
  // Predicated region
  $region10: #{policy_act.5} parent=0 // pred_check
    _
  $region11: #{policy_act.5} parent=0 // pred_check_branch
    %13 = sbr.rel (0) target = $region13
  $region12: #{policy_act.5} parent=0 // pred_region
    _
  $region13: #{policy_act.5} parent=0 // pred_fallthru
    _
  %v14 = vld [vmem:[%s0] sm:$0xff]
  %v15 = vld [vmem:[%s0 + $0x8] sm:$0xff]
  %v16 = vld [vmem:[%s0 + $0x10] sm:$0xff]
  %v17 = vld [vmem:[%s0 + $0x18] sm:$0xff]
  %v18 = vld [vmem:[%s0 + $0x20] sm:$0xff]
  %v19 = vld [vmem:[%s0 + $0x28] sm:$0xff]
  %v20 = vld [vmem:[%s0 + $0x30] sm:$0xff]
  %v21 = vld [vmem:[%s0 + $0x38] sm:$0xff]
  %v22 = vld [vmem:[%s0 + $0x40] sm:$0xff]
  %v23 = vld [vmem:[%s0 + $0x48] sm:$0xff]
  %v24 = vld [vmem:[%s0 + $0x50] sm:$0xff]
  %v25 = vld [vmem:[%s0 + $0x58] sm:$0xff]
  %v26 = vld [vmem:[%s0 + $0x60] sm:$0xff]
  %v27 = vld [vmem:[%s0 + $0x68] sm:$0xff]
  %v28 = vld [vmem:[%s0 + $0x70] sm:$0xff]
  %v29 = vld [vmem:[%s0 + $0x78] sm:$0xff]
  %v30 = vld [vmem:[%s0 + $0x80] sm:$0xff]
  %v31 = vld [vmem:[%s0 + $0x88] sm:$0xff]
  %v32 = vld [vmem:[%s0 + $0x90] sm:$0xff]
  %v33 = vld [vmem:[%s0 + $0x98] sm:$0xff]
  %v34 = vld [vmem:[%s0 + $0xa0] sm:$0xff]
  %v35 = vld [vmem:[%s0 + $0xa8] sm:$0xff]
  %v36 = vld [vmem:[%s0 + $0xb0] sm:$0xff]
  %v37 = vld [vmem:[%s0 + $0xb8] sm:$0xff]
  %v38 = vld [vmem:[%s0 + $0xc0] sm:$0xff]
  %v39 = vld [vmem:[%s0 + $0xc8] sm:$0xff]
  %v40 = vld [vmem:[%s0 + $0xd0] sm:$0xff]
  %v41 = vld [vmem:[%s0 + $0xd8] sm:$0xff]
  %v42 = vld [vmem:[%s0 + $0xe0] sm:$0xff]
  %v43 = vld [vmem:[%s0 + $0xe8] sm:$0xff]
  %v44 = vld [vmem:[%s0 + $0xf0] sm:$0xff]
  %v45 = vld [vmem:[%s0 + $0xf8] sm:$0xff]
  %v46 = vld [vmem:[%s0 + $0x100] sm:$0xff]
  %v47 = vld [vmem:[%s0 + $0x108] sm:$0xff]
  %v48 = vld [vmem:[%s0 + $0x110] sm:$0xff]
  %v49 = vld [vmem:[%s0 + $0x118] sm:$0xff]
  %v50 = vld [vmem:[%s0 + $0x120] sm:$0xff]
  %v51 = vld [vmem:[%s0 + $0x128] sm:$0xff]
  %v52 = vld [vmem:[%s0 + $0x130] sm:$0xff]
  %v53 = vld [vmem:[%s0 + $0x138] sm:$0xff]
  %v54 = vld [vmem:[%s0 + $0x140] sm:$0xff]
  %v55 = vld [vmem:[%s0 + $0x148] sm:$0xff]
  %v56 = vld [vmem:[%s0 + $0x150] sm:$0xff]
  %v57 = vld [vmem:[%s0 + $0x158] sm:$0xff]
  %v58 = vld [vmem:[%s0 + $0x160] sm:$0xff]
  %v59 = vld [vmem:[%s0 + $0x168] sm:$0xff]
  %v60 = vld [vmem:[%s0 + $0x170] sm:$0xff]
  %v61 = vld [vmem:[%s0 + $0x178] sm:$0xff]
  %v62 = vld [vmem:[%s0 + $0x180] sm:$0xff]
  %v63 = vld [vmem:[%s0 + $0x188] sm:$0xff]
  %v64 = vld [vmem:[%s0 + $0x190] sm:$0xff]
  %v65 = vld [vmem:[%s0 + $0x198] sm:$0xff]
  %v66 = vld [vmem:[%s0 + $0x1a0] sm:$0xff]
  %v67 = vld [vmem:[%s0 + $0x1a8] sm:$0xff]
  %v68 = vld [vmem:[%s0 + $0x1b0] sm:$0xff]
  %v69 = vld [vmem:[%s0 + $0x1b8] sm:$0xff]
  %v70 = vld [vmem:[%s0 + $0x1c0] sm:$0xff]
  %v71 = vld [vmem:[%s0 + $0x1c8] sm:$0xff]
  %v72 = vld [vmem:[%s0 + $0x1d0] sm:$0xff]
  %v73 = vld [vmem:[%s0 + $0x1d8] sm:$0xff]
  %v74 = vld [vmem:[%s0 + $0x1e0] sm:$0xff]
  %v75 = vld [vmem:[%s0 + $0x1e8] sm:$0xff]
  %v76 = vld [vmem:[%s0 + $0x1f0] sm:$0xff]
  %v77 = vld [vmem:[%s0 + $0x1f8] sm:$0xff]
  %v78 = vld [vmem:[%s0 + $0x200] sm:$0xff]
  %v79 = vld [vmem:[%s0 + $0x208] sm:$0xff]
  %v80 = vld [vmem:[%s0 + $0x210] sm:$0xff]
  %v81 = vld [vmem:[%s0 + $0x218] sm:$0xff]
  %v82 = vld [vmem:[%s0 + $0x220] sm:$0xff]
  %v83 = vld [vmem:[%s0 + $0x228] sm:$0xff]
  %v84 = vld [vmem:[%s0 + $0x230] sm:$0xff]
  %v85 = vld [vmem:[%s0 + $0x238] sm:$0xff]
  %v86 = vld [vmem:[%s0 + $0x240] sm:$0xff]
  %v87 = vld [vmem:[%s0 + $0x248] sm:$0xff]
  %v88 = vld [vmem:[%s0 + $0x250] sm:$0xff]
  %v89 = vld [vmem:[%s0 + $0x258] sm:$0xff]
  %v90 = vld [vmem:[%s0 + $0x260] sm:$0xff]
  %v91 = vld [vmem:[%s0 + $0x268] sm:$0xff]
  %v92 = vld [vmem:[%s0 + $0x270] sm:$0xff]
  %v93 = vld [vmem:[%s0 + $0x278] sm:$0xff]
  %v94 = vld [vmem:[%s0 + $0x280] sm:$0xff]
  %v95 = vld [vmem:[%s0 + $0x288] sm:$0xff]
  %v96 = vld [vmem:[%s0 + $0x290] sm:$0xff]
  %v97 = vld [vmem:[%s0 + $0x298] sm:$0xff]
  %v98 = vld [vmem:[%s0 + $0x2a0] sm:$0xff]
  %v99 = vld [vmem:[%s0 + $0x2a8] sm:$0xff]
  %v100 = vld [vmem:[%s0 + $0x2b0] sm:$0xff]
  %v101 = vld [vmem:[%s0 + $0x2b8] sm:$0xff]
  %v102 = vld [vmem:[%s0 + $0x2c0] sm:$0xff]
  %v103 = vld [vmem:[%s0 + $0x2c8] sm:$0xff]
  %v104 = vld [vmem:[%s0 + $0x2d0] sm:$0xff]
  %v105 = vld [vmem:[%s0 + $0x2d8] sm:$0xff]
  %v106 = vld [vmem:[%s0 + $0x2e0] sm:$0xff]
  %v107 = vld [vmem:[%s0 + $0x2e8] sm:$0xff]
  %v108 = vld [vmem:[%s0 + $0x2f0] sm:$0xff]
  %v109 = vld [vmem:[%s0 + $0x2f8] sm:$0xff]
  %v110 = vld [vmem:[%s0 + $0x300] sm:$0xff]
  %v111 = vld [vmem:[%s0 + $0x308] sm:$0xff]
  %v112 = vld [vmem:[%s0 + $0x310] sm:$0xff]
  %v113 = vld [vmem:[%s0 + $0x318] sm:$0xff]
  %v114 = vld [vmem:[%s0 + $0x320] sm:$0xff]
  %v115 = vld [vmem:[%s0 + $0x328] sm:$0xff]
  %v116 = vld [vmem:[%s0 + $0x330] sm:$0xff]
  %v117 = vld [vmem:[%s0 + $0x338] sm:$0xff]
  %v118 = vld [vmem:[%s0 + $0x340] sm:$0xff]
  %v119 = vld [vmem:[%s0 + $0x348] sm:$0xff]
  %v120 = vld [vmem:[%s0 + $0x350] sm:$0xff]
  %v121 = vld [vmem:[%s0 + $0x358] sm:$0xff]
  %v122 = vld [vmem:[%s0 + $0x360] sm:$0xff]
  %v123 = vld [vmem:[%s0 + $0x368] sm:$0xff]
  %v124 = vld [vmem:[%s0 + $0x370] sm:$0xff]
  %v125 = vld [vmem:[%s0 + $0x378] sm:$0xff]
  %v126 = vld [vmem:[%s0 + $0x380] sm:$0xff]
  %v127 = vld [vmem:[%s0 + $0x388] sm:$0xff]
  %v128 = vld [vmem:[%s0 + $0x390] sm:$0xff]
  %v129 = vld [vmem:[%s0 + $0x398] sm:$0xff]
  %v130 = vld [vmem:[%s0 + $0x3a0] sm:$0xff]
  %v131 = vld [vmem:[%s0 + $0x3a8] sm:$0xff]
  %v132 = vld [vmem:[%s0 + $0x3b0] sm:$0xff]
  %v133 = vld [vmem:[%s0 + $0x3b8] sm:$0xff]
  %v134 = vld [vmem:[%s0 + $0x3c0] sm:$0xff]
  %v135 = vld [vmem:[%s0 + $0x3c8] sm:$0xff]
  %v136 = vld [vmem:[%s0 + $0x3d0] sm:$0xff]
  %v137 = vld [vmem:[%s0 + $0x3d8] sm:$0xff]
  %v138 = vld [vmem:[%s0 + $0x3e0] sm:$0xff]
  %v139 = vld [vmem:[%s0 + $0x3e8] sm:$0xff]
  %v140 = vld [vmem:[%s0 + $0x3f0] sm:$0xff]
  %v141 = vld [vmem:[%s0 + $0x3f8] sm:$0xff]
  %v142 = vld [vmem:[%s1] sm:$0xff]
  %v143 = vld [vmem:[%s1 + $0x8] sm:$0xff]
  %v144 = vld [vmem:[%s1 + $0x10] sm:$0xff]
  %v145 = vld [vmem:[%s1 + $0x18] sm:$0xff]
  %v146 = vld [vmem:[%s1 + $0x20] sm:$0xff]
  %v147 = vld [vmem:[%s1 + $0x28] sm:$0xff]
  %v148 = vld [vmem:[%s1 + $0x30] sm:$0xff]
  %v149 = vld [vmem:[%s1 + $0x38] sm:$0xff]
  %v150 = vld [vmem:[%s1 + $0x40] sm:$0xff]
  %v151 = vld [vmem:[%s1 + $0x48] sm:$0xff]
  %v152 = vld [vmem:[%s1 + $0x50] sm:$0xff]
  %v153 = vld [vmem:[%s1 + $0x58] sm:$0xff]
  %v154 = vld [vmem:[%s1 + $0x60] sm:$0xff]
  %v155 = vld [vmem:[%s1 + $0x68] sm:$0xff]
  %v156 = vld [vmem:[%s1 + $0x70] sm:$0xff]
  %v157 = vld [vmem:[%s1 + $0x78] sm:$0xff]
  %v158 = vld [vmem:[%s1 + $0x80] sm:$0xff]
  %v159 = vld [vmem:[%s1 + $0x88] sm:$0xff]
  %v160 = vld [vmem:[%s2] sm:$0x1]
  %v162 = vlaneseq
  %v163 = vshrl.u32 %v162, 7
  %v164 = vsub.s32 0, %v163
  %v165 = vrot.slane %v160, %v164
  %vm167 = vcmask 130048
  %v169 = vsel %vm167, %v15, 0
  %v172 = vsel %vm167, %v17, 0
  %v175 = vsel %vm167, %v19, 0
  %v178 = vsel %vm167, %v21, 0
  %v181 = vsel %vm167, %v23, 0
  %v184 = vsel %vm167, %v25, 0
  %v187 = vsel %vm167, %v27, 0
  %v190 = vsel %vm167, %v29, 0
  %v193 = vsel %vm167, %v31, 0
  %v196 = vsel %vm167, %v33, 0
  %v199 = vsel %vm167, %v35, 0
  %v202 = vsel %vm167, %v37, 0
  %v205 = vsel %vm167, %v39, 0
  %v208 = vsel %vm167, %v41, 0
  %v211 = vsel %vm167, %v43, 0
  %v214 = vsel %vm167, %v45, 0
  %v217 = vsel %vm167, %v47, 0
  %v220 = vsel %vm167, %v49, 0
  %v223 = vsel %vm167, %v51, 0
  %v226 = vsel %vm167, %v53, 0
  %v229 = vsel %vm167, %v55, 0
  %v232 = vsel %vm167, %v57, 0
  %v235 = vsel %vm167, %v59, 0
  %v238 = vsel %vm167, %v61, 0
  %v241 = vsel %vm167, %v63, 0
  %v244 = vsel %vm167, %v65, 0
  %v247 = vsel %vm167, %v67, 0
  %v250 = vsel %vm167, %v69, 0
  %v253 = vsel %vm167, %v71, 0
  %v256 = vsel %vm167, %v73, 0
  %v259 = vsel %vm167, %v75, 0
  %v262 = vsel %vm167, %v77, 0
  %v265 = vsel %vm167, %v79, 0
  %v268 = vsel %vm167, %v81, 0
  %v271 = vsel %vm167, %v83, 0
  %v274 = vsel %vm167, %v85, 0
  %v277 = vsel %vm167, %v87, 0
  %v280 = vsel %vm167, %v89, 0
  %v283 = vsel %vm167, %v91, 0
  %v286 = vsel %vm167, %v93, 0
  %v289 = vsel %vm167, %v95, 0
  %v292 = vsel %vm167, %v97, 0
  %v295 = vsel %vm167, %v99, 0
  %v298 = vsel %vm167, %v101, 0
  %v301 = vsel %vm167, %v103, 0
  %v304 = vsel %vm167, %v105, 0
  %v307 = vsel %vm167, %v107, 0
  %v310 = vsel %vm167, %v109, 0
  %v313 = vsel %vm167, %v111, 0
  %v316 = vsel %vm167, %v113, 0
  %v319 = vsel %vm167, %v115, 0
  %v322 = vsel %vm167, %v117, 0
  %v325 = vsel %vm167, %v119, 0
  %v328 = vsel %vm167, %v121, 0
  %v331 = vsel %vm167, %v123, 0
  %v334 = vsel %vm167, %v125, 0
  %v337 = vsel %vm167, %v127, 0
  %v340 = vsel %vm167, %v129, 0
  %v343 = vsel %vm167, %v131, 0
  %v346 = vsel %vm167, %v133, 0
  %v349 = vsel %vm167, %v135, 0
  %v352 = vsel %vm167, %v137, 0
  %v355 = vsel %vm167, %v139, 0
  %v358 = vsel %vm167, %v141, 0
  %360 = vmatprep.subr.mxu0 0.0
  %361 = vmatpush1.msra.mxu0 %v142
  %362 = vmatprep.subr.mxu0 0.0
  %363 = vmatpush1.msra.mxu0 %v143
  %364 = vmatprep.subr.mxu0 0.0
  %365 = vmatpush1.msra.mxu0 %v144
  %366 = vmatprep.subr.mxu0 0.0
  %367 = vmatpush1.msra.mxu0 %v145
  %368 = vmatprep.subr.mxu0 0.0
  %369 = vmatpush1.msra.mxu0 %v146
  %370 = vmatprep.subr.mxu0 0.0
  %371 = vmatpush1.msra.mxu0 %v147
  %372 = vmatprep.subr.mxu0 0.0
  %373 = vmatpush1.msra.mxu0 %v148
  %374 = vmatprep.subr.mxu0 0.0
  %375 = vmatpush1.msra.mxu0 %v149
  %376 = vmatprep.subr.mxu0 0.0
  %377 = vmatpush1.msra.mxu0 %v150
  %378 = vmatprep.subr.mxu0 0.0
  %379 = vmatpush1.msra.mxu0 %v151
  %380 = vmatprep.subr.mxu0 0.0
  %381 = vmatpush1.msra.mxu0 %v152
  %382 = vmatprep.subr.mxu0 0.0
  %383 = vmatpush1.msra.mxu0 %v153
  %384 = vmatprep.subr.mxu0 0.0
  %385 = vmatpush1.msra.mxu0 %v154
  %386 = vmatprep.subr.mxu0 0.0
  %387 = vmatpush1.msra.mxu0 %v155
  %388 = vmatprep.subr.mxu0 0.0
  %389 = vmatpush1.msra.mxu0 %v156
  %390 = vmatprep.subr.mxu0 0.0
  %391 = vmatpush1.msra.mxu0 %v157
  %392 = vmatprep.subr.mxu0 0.0
  %393 = vmatpush1.msra.mxu0 %v158
  %394 = vmatprep.subr.mxu0 0.0
  %395 = vmatpush1.msra.mxu0 %v159
  %396 = vmatprep.subr.mxu0 0.0
  %397 = vmatpush1.msra.mxu0 0.0
  %398 = vmatprep.subr.mxu0 0.0
  %399 = vmatpush1.msra.mxu0 0.0
  %400 = vmatprep.subr.mxu0 0.0
  %401 = vmatpush1.msra.mxu0 0.0
  %402 = vmatprep.subr.mxu0 0.0
  %403 = vmatpush1.msra.mxu0 0.0
  %404 = vmatprep.subr.mxu0 0.0
  %405 = vmatpush1.msra.mxu0 0.0
  %406 = vmatprep.subr.mxu0 0.0
  %407 = vmatpush1.msra.mxu0 0.0
  %408 = vmatprep.subr.mxu0 0.0
  %409 = vmatpush1.msra.mxu0 0.0
  %410 = vmatprep.subr.mxu0 0.0
  %411 = vmatpush1.msra.mxu0 0.0
  %412 = vmatprep.subr.mxu0 0.0
  %413 = vmatpush1.msra.mxu0 0.0
  %414 = vmatprep.subr.mxu0 0.0
  %415 = vmatpush1.msra.mxu0 0.0
  %416 = vmatprep.subr.mxu0 0.0
  %417 = vmatpush1.msra.mxu0 0.0
  %418 = vmatprep.subr.mxu0 0.0
  %419 = vmatpush1.msra.mxu0 0.0
  %420 = vmatprep.subr.mxu0 0.0
  %421 = vmatpush1.msra.mxu0 0.0
  %422 = vmatprep.subr.mxu0 0.0
  %423 = vmatpush1.msra.mxu0 0.0
  %424 = vmatprep.mubr.f32.mxu0 %v169
  %425 = vmatmul.mubr.f32.gmra.mrb[0].mxu0 %v14
  %v426 = vpop.f32.mrb[0].mxu0
  %v427 = vadd.f32 %v165, %v426
  %v428 = vpop.f32.mrb[0].mxu0
  %429 = vmatprep.mubr.f32.mxu0 %v172
  %430 = vmatmul.mubr.f32.gmra.mrb[0].mxu0 %v16
  %v431 = vpop.f32.mrb[0].mxu0
  %v432 = vadd.f32 %v165, %v431
  %v433 = vpop.f32.mrb[0].mxu0
  %434 = vmatprep.mubr.f32.mxu0 %v175
  %435 = vmatmul.mubr.f32.gmra.mrb[0].mxu0 %v18
  %v436 = vpop.f32.mrb[0].mxu0
  %v437 = vadd.f32 %v165, %v436
  %v438 = vpop.f32.mrb[0].mxu0
  %439 = vmatprep.mubr.f32.mxu0 %v178
  %440 = vmatmul.mubr.f32.gmra.mrb[0].mxu0 %v20
  %v441 = vpop.f32.mrb[0].mxu0
  %v442 = vadd.f32 %v165, %v441
  %v443 = vpop.f32.mrb[0].mxu0
  %444 = vmatprep.mubr.f32.mxu0 %v181
  %445 = vmatmul.mubr.f32.gmra.mrb[0].mxu0 %v22
  %v446 = vpop.f32.mrb[0].mxu0
  %v447 = vadd.f32 %v165, %v446
  %v448 = vpop.f32.mrb[0].mxu0
  %449 = vmatprep.mubr.f32.mxu0 %v184
  %450 = vmatmul.mubr.f32.gmra.mrb[0].mxu0 %v24
  %v451 = vpop.f32.mrb[0].mxu0
  %v452 = vadd.f32 %v165, %v451
  %v453 = vpop.f32.mrb[0].mxu0
  %454 = vmatprep.mubr.f32.mxu0 %v187
  %455 = vmatmul.mubr.f32.gmra.mrb[0].mxu0 %v26
  %v456 = vpop.f32.mrb[0].mxu0
  %v457 = vadd.f32 %v165, %v456
  %v458 = vpop.f32.mrb[0].mxu0
  %459 = vmatprep.mubr.f32.mxu0 %v190
  %460 = vmatmul.mubr.f32.gmra.mrb[0].mxu0 %v28
  %v461 = vpop.f32.mrb[0].mxu0
  %v462 = vadd.f32 %v165, %v461
  %v463 = vpop.f32.mrb[0].mxu0
  %464 = vmatprep.mubr.f32.mxu0 %v193
  %465 = vmatmul.mubr.f32.gmra.mrb[0].mxu0 %v30
  %v466 = vpop.f32.mrb[0].mxu0
  %v467 = vadd.f32 %v165, %v466
  %v468 = vpop.f32.mrb[0].mxu0
  %469 = vmatprep.mubr.f32.mxu0 %v196
  %470 = vmatmul.mubr.f32.gmra.mrb[0].mxu0 %v32
  %v471 = vpop.f32.mrb[0].mxu0
  %v472 = vadd.f32 %v165, %v471
  %v473 = vpop.f32.mrb[0].mxu0
  %474 = vmatprep.mubr.f32.mxu0 %v199
  %475 = vmatmul.mubr.f32.gmra.mrb[0].mxu0 %v34
  %v476 = vpop.f32.mrb[0].mxu0
  %v477 = vadd.f32 %v165, %v476
  %v478 = vpop.f32.mrb[0].mxu0
  %479 = vmatprep.mubr.f32.mxu0 %v202
  %480 = vmatmul.mubr.f32.gmra.mrb[0].mxu0 %v36
  %v481 = vpop.f32.mrb[0].mxu0
  %v482 = vadd.f32 %v165, %v481
  %v483 = vpop.f32.mrb[0].mxu0
  %484 = vmatprep.mubr.f32.mxu0 %v205
  %485 = vmatmul.mubr.f32.gmra.mrb[0].mxu0 %v38
  %v486 = vpop.f32.mrb[0].mxu0
  %v487 = vadd.f32 %v165, %v486
  %v488 = vpop.f32.mrb[0].mxu0
  %489 = vmatprep.mubr.f32.mxu0 %v208
  %490 = vmatmul.mubr.f32.gmra.mrb[0].mxu0 %v40
  %v491 = vpop.f32.mrb[0].mxu0
  %v492 = vadd.f32 %v165, %v491
  %v493 = vpop.f32.mrb[0].mxu0
  %494 = vmatprep.mubr.f32.mxu0 %v211
  %495 = vmatmul.mubr.f32.gmra.mrb[0].mxu0 %v42
  %v496 = vpop.f32.mrb[0].mxu0
  %v497 = vadd.f32 %v165, %v496
  %v498 = vpop.f32.mrb[0].mxu0
  %499 = vmatprep.mubr.f32.mxu0 %v214
  %500 = vmatmul.mubr.f32.gmra.mrb[0].mxu0 %v44
  %v501 = vpop.f32.mrb[0].mxu0
  %v502 = vadd.f32 %v165, %v501
  %v503 = vpop.f32.mrb[0].mxu0
  %504 = vmatprep.mubr.f32.mxu0 %v217
  %505 = vmatmul.mubr.f32.gmra.mrb[0].mxu0 %v46
  %v506 = vpop.f32.mrb[0].mxu0
  %v507 = vadd.f32 %v165, %v506
  %v508 = vpop.f32.mrb[0].mxu0
  %509 = vmatprep.mubr.f32.mxu0 %v220
  %510 = vmatmul.mubr.f32.gmra.mrb[0].mxu0 %v48
  %v511 = vpop.f32.mrb[0].mxu0
  %v512 = vadd.f32 %v165, %v511
  %v513 = vpop.f32.mrb[0].mxu0
  %514 = vmatprep.mubr.f32.mxu0 %v223
  %515 = vmatmul.mubr.f32.gmra.mrb[0].mxu0 %v50
  %v516 = vpop.f32.mrb[0].mxu0
  %v517 = vadd.f32 %v165, %v516
  %v518 = vpop.f32.mrb[0].mxu0
  %519 = vmatprep.mubr.f32.mxu0 %v226
  %520 = vmatmul.mubr.f32.gmra.mrb[0].mxu0 %v52
  %v521 = vpop.f32.mrb[0].mxu0
  %v522 = vadd.f32 %v165, %v521
  %v523 = vpop.f32.mrb[0].mxu0
  %524 = vmatprep.mubr.f32.mxu0 %v229
  %525 = vmatmul.mubr.f32.gmra.mrb[0].mxu0 %v54
  %v526 = vpop.f32.mrb[0].mxu0
  %v527 = vadd.f32 %v165, %v526
  %v528 = vpop.f32.mrb[0].mxu0
  %529 = vmatprep.mubr.f32.mxu0 %v232
  %530 = vmatmul.mubr.f32.gmra.mrb[0].mxu0 %v56
  %v531 = vpop.f32.mrb[0].mxu0
  %v532 = vadd.f32 %v165, %v531
  %v533 = vpop.f32.mrb[0].mxu0
  %534 = vmatprep.mubr.f32.mxu0 %v235
  %535 = vmatmul.mubr.f32.gmra.mrb[0].mxu0 %v58
  %v536 = vpop.f32.mrb[0].mxu0
  %v537 = vadd.f32 %v165, %v536
  %v538 = vpop.f32.mrb[0].mxu0
  %539 = vmatprep.mubr.f32.mxu0 %v238
  %540 = vmatmul.mubr.f32.gmra.mrb[0].mxu0 %v60
  %v541 = vpop.f32.mrb[0].mxu0
  %v542 = vadd.f32 %v165, %v541
  %v543 = vpop.f32.mrb[0].mxu0
  %544 = vmatprep.mubr.f32.mxu0 %v241
  %545 = vmatmul.mubr.f32.gmra.mrb[0].mxu0 %v62
  %v546 = vpop.f32.mrb[0].mxu0
  %v547 = vadd.f32 %v165, %v546
  %v548 = vpop.f32.mrb[0].mxu0
  %549 = vmatprep.mubr.f32.mxu0 %v244
  %550 = vmatmul.mubr.f32.gmra.mrb[0].mxu0 %v64
  %v551 = vpop.f32.mrb[0].mxu0
  %v552 = vadd.f32 %v165, %v551
  %v553 = vpop.f32.mrb[0].mxu0
  %554 = vmatprep.mubr.f32.mxu0 %v247
  %555 = vmatmul.mubr.f32.gmra.mrb[0].mxu0 %v66
  %v556 = vpop.f32.mrb[0].mxu0
  %v557 = vadd.f32 %v165, %v556
  %v558 = vpop.f32.mrb[0].mxu0
  %559 = vmatprep.mubr.f32.mxu0 %v250
  %560 = vmatmul.mubr.f32.gmra.mrb[0].mxu0 %v68
  %v561 = vpop.f32.mrb[0].mxu0
  %v562 = vadd.f32 %v165, %v561
  %v563 = vpop.f32.mrb[0].mxu0
  %564 = vmatprep.mubr.f32.mxu0 %v253
  %565 = vmatmul.mubr.f32.gmra.mrb[0].mxu0 %v70
  %v566 = vpop.f32.mrb[0].mxu0
  %v567 = vadd.f32 %v165, %v566
  %v568 = vpop.f32.mrb[0].mxu0
  %569 = vmatprep.mubr.f32.mxu0 %v256
  %570 = vmatmul.mubr.f32.gmra.mrb[0].mxu0 %v72
  %v571 = vpop.f32.mrb[0].mxu0
  %v572 = vadd.f32 %v165, %v571
  %v573 = vpop.f32.mrb[0].mxu0
  %574 = vmatprep.mubr.f32.mxu0 %v259
  %575 = vmatmul.mubr.f32.gmra.mrb[0].mxu0 %v74
  %v576 = vpop.f32.mrb[0].mxu0
  %v577 = vadd.f32 %v165, %v576
  %v578 = vpop.f32.mrb[0].mxu0
  %579 = vmatprep.mubr.f32.mxu0 %v262
  %580 = vmatmul.mubr.f32.gmra.mrb[0].mxu0 %v76
  %v581 = vpop.f32.mrb[0].mxu0
  %v582 = vadd.f32 %v165, %v581
  %v583 = vpop.f32.mrb[0].mxu0
  %584 = vmatprep.mubr.f32.mxu0 %v265
  %585 = vmatmul.mubr.f32.gmra.mrb[0].mxu0 %v78
  %v586 = vpop.f32.mrb[0].mxu0
  %v587 = vadd.f32 %v165, %v586
  %v588 = vpop.f32.mrb[0].mxu0
  %589 = vmatprep.mubr.f32.mxu0 %v268
  %590 = vmatmul.mubr.f32.gmra.mrb[0].mxu0 %v80
  %v591 = vpop.f32.mrb[0].mxu0
  %v592 = vadd.f32 %v165, %v591
  %v593 = vpop.f32.mrb[0].mxu0
  %594 = vmatprep.mubr.f32.mxu0 %v271
  %595 = vmatmul.mubr.f32.gmra.mrb[0].mxu0 %v82
  %v596 = vpop.f32.mrb[0].mxu0
  %v597 = vadd.f32 %v165, %v596
  %v598 = vpop.f32.mrb[0].mxu0
  %599 = vmatprep.mubr.f32.mxu0 %v274
  %600 = vmatmul.mubr.f32.gmra.mrb[0].mxu0 %v84
  %v601 = vpop.f32.mrb[0].mxu0
  %v602 = vadd.f32 %v165, %v601
  %v603 = vpop.f32.mrb[0].mxu0
  %604 = vmatprep.mubr.f32.mxu0 %v277
  %605 = vmatmul.mubr.f32.gmra.mrb[0].mxu0 %v86
  %v606 = vpop.f32.mrb[0].mxu0
  %v607 = vadd.f32 %v165, %v606
  %v608 = vpop.f32.mrb[0].mxu0
  %609 = vmatprep.mubr.f32.mxu0 %v280
  %610 = vmatmul.mubr.f32.gmra.mrb[0].mxu0 %v88
  %v611 = vpop.f32.mrb[0].mxu0
  %v612 = vadd.f32 %v165, %v611
  %v613 = vpop.f32.mrb[0].mxu0
  %614 = vmatprep.mubr.f32.mxu0 %v283
  %615 = vmatmul.mubr.f32.gmra.mrb[0].mxu0 %v90
  %v616 = vpop.f32.mrb[0].mxu0
  %v617 = vadd.f32 %v165, %v616
  %v618 = vpop.f32.mrb[0].mxu0
  %619 = vmatprep.mubr.f32.mxu0 %v286
  %620 = vmatmul.mubr.f32.gmra.mrb[0].mxu0 %v92
  %v621 = vpop.f32.mrb[0].mxu0
  %v622 = vadd.f32 %v165, %v621
  %v623 = vpop.f32.mrb[0].mxu0
  %624 = vmatprep.mubr.f32.mxu0 %v289
  %625 = vmatmul.mubr.f32.gmra.mrb[0].mxu0 %v94
  %v626 = vpop.f32.mrb[0].mxu0
  %v627 = vadd.f32 %v165, %v626
  %v628 = vpop.f32.mrb[0].mxu0
  %629 = vmatprep.mubr.f32.mxu0 %v292
  %630 = vmatmul.mubr.f32.gmra.mrb[0].mxu0 %v96
  %v631 = vpop.f32.mrb[0].mxu0
  %v632 = vadd.f32 %v165, %v631
  %v633 = vpop.f32.mrb[0].mxu0
  %634 = vmatprep.mubr.f32.mxu0 %v295
  %635 = vmatmul.mubr.f32.gmra.mrb[0].mxu0 %v98
  %v636 = vpop.f32.mrb[0].mxu0
  %v637 = vadd.f32 %v165, %v636
  %v638 = vpop.f32.mrb[0].mxu0
  %639 = vmatprep.mubr.f32.mxu0 %v298
  %640 = vmatmul.mubr.f32.gmra.mrb[0].mxu0 %v100
  %v641 = vpop.f32.mrb[0].mxu0
  %v642 = vadd.f32 %v165, %v641
  %v643 = vpop.f32.mrb[0].mxu0
  %644 = vmatprep.mubr.f32.mxu0 %v301
  %645 = vmatmul.mubr.f32.gmra.mrb[0].mxu0 %v102
  %v646 = vpop.f32.mrb[0].mxu0
  %v647 = vadd.f32 %v165, %v646
  %v648 = vpop.f32.mrb[0].mxu0
  %649 = vmatprep.mubr.f32.mxu0 %v304
  %650 = vmatmul.mubr.f32.gmra.mrb[0].mxu0 %v104
  %v651 = vpop.f32.mrb[0].mxu0
  %v652 = vadd.f32 %v165, %v651
  %v653 = vpop.f32.mrb[0].mxu0
  %654 = vmatprep.mubr.f32.mxu0 %v307
  %655 = vmatmul.mubr.f32.gmra.mrb[0].mxu0 %v106
  %v656 = vpop.f32.mrb[0].mxu0
  %v657 = vadd.f32 %v165, %v656
  %v658 = vpop.f32.mrb[0].mxu0
  %659 = vmatprep.mubr.f32.mxu0 %v310
  %660 = vmatmul.mubr.f32.gmra.mrb[0].mxu0 %v108
  %v661 = vpop.f32.mrb[0].mxu0
  %v662 = vadd.f32 %v165, %v661
  %v663 = vpop.f32.mrb[0].mxu0
  %664 = vmatprep.mubr.f32.mxu0 %v313
  %665 = vmatmul.mubr.f32.gmra.mrb[0].mxu0 %v110
  %v666 = vpop.f32.mrb[0].mxu0
  %v667 = vadd.f32 %v165, %v666
  %v668 = vpop.f32.mrb[0].mxu0
  %669 = vmatprep.mubr.f32.mxu0 %v316
  %670 = vmatmul.mubr.f32.gmra.mrb[0].mxu0 %v112
  %v671 = vpop.f32.mrb[0].mxu0
  %v672 = vadd.f32 %v165, %v671
  %v673 = vpop.f32.mrb[0].mxu0
  %674 = vmatprep.mubr.f32.mxu0 %v319
  %675 = vmatmul.mubr.f32.gmra.mrb[0].mxu0 %v114
  %v676 = vpop.f32.mrb[0].mxu0
  %v677 = vadd.f32 %v165, %v676
  %v678 = vpop.f32.mrb[0].mxu0
  %679 = vmatprep.mubr.f32.mxu0 %v322
  %680 = vmatmul.mubr.f32.gmra.mrb[0].mxu0 %v116
  %v681 = vpop.f32.mrb[0].mxu0
  %v682 = vadd.f32 %v165, %v681
  %v683 = vpop.f32.mrb[0].mxu0
  %684 = vmatprep.mubr.f32.mxu0 %v325
  %685 = vmatmul.mubr.f32.gmra.mrb[0].mxu0 %v118
  %v686 = vpop.f32.mrb[0].mxu0
  %v687 = vadd.f32 %v165, %v686
  %v688 = vpop.f32.mrb[0].mxu0
  %689 = vmatprep.mubr.f32.mxu0 %v328
  %690 = vmatmul.mubr.f32.gmra.mrb[0].mxu0 %v120
  %v691 = vpop.f32.mrb[0].mxu0
  %v692 = vadd.f32 %v165, %v691
  %v693 = vpop.f32.mrb[0].mxu0
  %694 = vmatprep.mubr.f32.mxu0 %v331
  %695 = vmatmul.mubr.f32.gmra.mrb[0].mxu0 %v122
  %v696 = vpop.f32.mrb[0].mxu0
  %v697 = vadd.f32 %v165, %v696
  %v698 = vpop.f32.mrb[0].mxu0
  %699 = vmatprep.mubr.f32.mxu0 %v334
  %700 = vmatmul.mubr.f32.gmra.mrb[0].mxu0 %v124
  %v701 = vpop.f32.mrb[0].mxu0
  %v702 = vadd.f32 %v165, %v701
  %v703 = vpop.f32.mrb[0].mxu0
  %704 = vmatprep.mubr.f32.mxu0 %v337
  %705 = vmatmul.mubr.f32.gmra.mrb[0].mxu0 %v126
  %v706 = vpop.f32.mrb[0].mxu0
  %v707 = vadd.f32 %v165, %v706
  %v708 = vpop.f32.mrb[0].mxu0
  %709 = vmatprep.mubr.f32.mxu0 %v340
  %710 = vmatmul.mubr.f32.gmra.mrb[0].mxu0 %v128
  %v711 = vpop.f32.mrb[0].mxu0
  %v712 = vadd.f32 %v165, %v711
  %v713 = vpop.f32.mrb[0].mxu0
  %714 = vmatprep.mubr.f32.mxu0 %v343
  %715 = vmatmul.mubr.f32.gmra.mrb[0].mxu0 %v130
  %v716 = vpop.f32.mrb[0].mxu0
  %v717 = vadd.f32 %v165, %v716
  %v718 = vpop.f32.mrb[0].mxu0
  %719 = vmatprep.mubr.f32.mxu0 %v346
  %720 = vmatmul.mubr.f32.gmra.mrb[0].mxu0 %v132
  %v721 = vpop.f32.mrb[0].mxu0
  %v722 = vadd.f32 %v165, %v721
  %v723 = vpop.f32.mrb[0].mxu0
  %724 = vmatprep.mubr.f32.mxu0 %v349
  %725 = vmatmul.mubr.f32.gmra.mrb[0].mxu0 %v134
  %v726 = vpop.f32.mrb[0].mxu0
  %v727 = vadd.f32 %v165, %v726
  %v728 = vpop.f32.mrb[0].mxu0
  %729 = vmatprep.mubr.f32.mxu0 %v352
  %730 = vmatmul.mubr.f32.gmra.mrb[0].mxu0 %v136
  %v731 = vpop.f32.mrb[0].mxu0
  %v732 = vadd.f32 %v165, %v731
  %v733 = vpop.f32.mrb[0].mxu0
  %734 = vmatprep.mubr.f32.mxu0 %v355
  %735 = vmatmul.mubr.f32.gmra.mrb[0].mxu0 %v138
  %v736 = vpop.f32.mrb[0].mxu0
  %v737 = vadd.f32 %v165, %v736
  %v738 = vpop.f32.mrb[0].mxu0
  %739 = vmatprep.mubr.f32.mxu0 %v358
  %740 = vmatmul.mubr.f32.gmra.mrb[0].mxu0 %v140
  %v741 = vpop.f32.mrb[0].mxu0
  %v742 = vadd.f32 %v165, %v741
  %v743 = vpop.f32.mrb[0].mxu0
  %744 = vdwg.mxu0
  %v745 = vmax.f32 %v427, 0.0
  %v746 = vmax.f32 %v432, 0.0
  %v747 = vmax.f32 %v437, 0.0
  %v748 = vmax.f32 %v442, 0.0
  %v749 = vmax.f32 %v447, 0.0
  %v750 = vmax.f32 %v452, 0.0
  %v751 = vmax.f32 %v457, 0.0
  %v752 = vmax.f32 %v462, 0.0
  %v753 = vmax.f32 %v467, 0.0
  %v754 = vmax.f32 %v472, 0.0
  %v755 = vmax.f32 %v477, 0.0
  %v756 = vmax.f32 %v482, 0.0
  %v757 = vmax.f32 %v487, 0.0
  %v758 = vmax.f32 %v492, 0.0
  %v759 = vmax.f32 %v497, 0.0
  %v760 = vmax.f32 %v502, 0.0
  %v761 = vmax.f32 %v507, 0.0
  %v762 = vmax.f32 %v512, 0.0
  %v763 = vmax.f32 %v517, 0.0
  %v764 = vmax.f32 %v522, 0.0
  %v765 = vmax.f32 %v527, 0.0
  %v766 = vmax.f32 %v532, 0.0
  %v767 = vmax.f32 %v537, 0.0
  %v768 = vmax.f32 %v542, 0.0
  %v769 = vmax.f32 %v547, 0.0
  %v770 = vmax.f32 %v552, 0.0
  %v771 = vmax.f32 %v557, 0.0
  %v772 = vmax.f32 %v562, 0.0
  %v773 = vmax.f32 %v567, 0.0
  %v774 = vmax.f32 %v572, 0.0
  %v775 = vmax.f32 %v577, 0.0
  %v776 = vmax.f32 %v582, 0.0
  %v777 = vmax.f32 %v587, 0.0
  %v778 = vmax.f32 %v592, 0.0
  %v779 = vmax.f32 %v597, 0.0
  %v780 = vmax.f32 %v602, 0.0
  %v781 = vmax.f32 %v607, 0.0
  %v782 = vmax.f32 %v612, 0.0
  %v783 = vmax.f32 %v617, 0.0
  %v784 = vmax.f32 %v622, 0.0
  %v785 = vmax.f32 %v627, 0.0
  %v786 = vmax.f32 %v632, 0.0
  %v787 = vmax.f32 %v637, 0.0
  %v788 = vmax.f32 %v642, 0.0
  %v789 = vmax.f32 %v647, 0.0
  %v790 = vmax.f32 %v652, 0.0
  %v791 = vmax.f32 %v657, 0.0
  %v792 = vmax.f32 %v662, 0.0
  %v793 = vmax.f32 %v667, 0.0
  %v794 = vmax.f32 %v672, 0.0
  %v795 = vmax.f32 %v677, 0.0
  %v796 = vmax.f32 %v682, 0.0
  %v797 = vmax.f32 %v687, 0.0
  %v798 = vmax.f32 %v692, 0.0
  %v799 = vmax.f32 %v697, 0.0
  %v800 = vmax.f32 %v702, 0.0
  %v801 = vmax.f32 %v707, 0.0
  %v802 = vmax.f32 %v712, 0.0
  %v803 = vmax.f32 %v717, 0.0
  %v804 = vmax.f32 %v722, 0.0
  %v805 = vmax.f32 %v727, 0.0
  %v806 = vmax.f32 %v732, 0.0
  %v807 = vmax.f32 %v737, 0.0
  %v808 = vmax.f32 %v742, 0.0
  %vm809 = vcmask 261120
  %810 = vst.msk [vmem:[%s3] sm:$0xff] %vm809, %v745
  %811 = vst.msk [vmem:[%s3 + $0x8] sm:$0xff] %vm809, %v746
  %812 = vst.msk [vmem:[%s3 + $0x10] sm:$0xff] %vm809, %v747
  %813 = vst.msk [vmem:[%s3 + $0x18] sm:$0xff] %vm809, %v748
  %814 = vst.msk [vmem:[%s3 + $0x20] sm:$0xff] %vm809, %v749
  %815 = vst.msk [vmem:[%s3 + $0x28] sm:$0xff] %vm809, %v750
  %816 = vst.msk [vmem:[%s3 + $0x30] sm:$0xff] %vm809, %v751
  %817 = vst.msk [vmem:[%s3 + $0x38] sm:$0xff] %vm809, %v752
  %818 = vst.msk [vmem:[%s3 + $0x40] sm:$0xff] %vm809, %v753
  %819 = vst.msk [vmem:[%s3 + $0x48] sm:$0xff] %vm809, %v754
  %820 = vst.msk [vmem:[%s3 + $0x50] sm:$0xff] %vm809, %v755
  %821 = vst.msk [vmem:[%s3 + $0x58] sm:$0xff] %vm809, %v756
  %822 = vst.msk [vmem:[%s3 + $0x60] sm:$0xff] %vm809, %v757
  %823 = vst.msk [vmem:[%s3 + $0x68] sm:$0xff] %vm809, %v758
  %824 = vst.msk [vmem:[%s3 + $0x70] sm:$0xff] %vm809, %v759
  %825 = vst.msk [vmem:[%s3 + $0x78] sm:$0xff] %vm809, %v760
  %826 = vst.msk [vmem:[%s3 + $0x80] sm:$0xff] %vm809, %v761
  %827 = vst.msk [vmem:[%s3 + $0x88] sm:$0xff] %vm809, %v762
  %828 = vst.msk [vmem:[%s3 + $0x90] sm:$0xff] %vm809, %v763
  %829 = vst.msk [vmem:[%s3 + $0x98] sm:$0xff] %vm809, %v764
  %830 = vst.msk [vmem:[%s3 + $0xa0] sm:$0xff] %vm809, %v765
  %831 = vst.msk [vmem:[%s3 + $0xa8] sm:$0xff] %vm809, %v766
  %832 = vst.msk [vmem:[%s3 + $0xb0] sm:$0xff] %vm809, %v767
  %833 = vst.msk [vmem:[%s3 + $0xb8] sm:$0xff] %vm809, %v768
  %834 = vst.msk [vmem:[%s3 + $0xc0] sm:$0xff] %vm809, %v769
  %835 = vst.msk [vmem:[%s3 + $0xc8] sm:$0xff] %vm809, %v770
  %836 = vst.msk [vmem:[%s3 + $0xd0] sm:$0xff] %vm809, %v771
  %837 = vst.msk [vmem:[%s3 + $0xd8] sm:$0xff] %vm809, %v772
  %838 = vst.msk [vmem:[%s3 + $0xe0] sm:$0xff] %vm809, %v773
  %839 = vst.msk [vmem:[%s3 + $0xe8] sm:$0xff] %vm809, %v774
  %840 = vst.msk [vmem:[%s3 + $0xf0] sm:$0xff] %vm809, %v775
  %841 = vst.msk [vmem:[%s3 + $0xf8] sm:$0xff] %vm809, %v776
  %842 = vst.msk [vmem:[%s3 + $0x100] sm:$0xff] %vm809, %v777
  %843 = vst.msk [vmem:[%s3 + $0x108] sm:$0xff] %vm809, %v778
  %844 = vst.msk [vmem:[%s3 + $0x110] sm:$0xff] %vm809, %v779
  %845 = vst.msk [vmem:[%s3 + $0x118] sm:$0xff] %vm809, %v780
  %846 = vst.msk [vmem:[%s3 + $0x120] sm:$0xff] %vm809, %v781
  %847 = vst.msk [vmem:[%s3 + $0x128] sm:$0xff] %vm809, %v782
  %848 = vst.msk [vmem:[%s3 + $0x130] sm:$0xff] %vm809, %v783
  %849 = vst.msk [vmem:[%s3 + $0x138] sm:$0xff] %vm809, %v784
  %850 = vst.msk [vmem:[%s3 + $0x140] sm:$0xff] %vm809, %v785
  %851 = vst.msk [vmem:[%s3 + $0x148] sm:$0xff] %vm809, %v786
  %852 = vst.msk [vmem:[%s3 + $0x150] sm:$0xff] %vm809, %v787
  %853 = vst.msk [vmem:[%s3 + $0x158] sm:$0xff] %vm809, %v788
  %854 = vst.msk [vmem:[%s3 + $0x160] sm:$0xff] %vm809, %v789
  %855 = vst.msk [vmem:[%s3 + $0x168] sm:$0xff] %vm809, %v790
  %856 = vst.msk [vmem:[%s3 + $0x170] sm:$0xff] %vm809, %v791
  %857 = vst.msk [vmem:[%s3 + $0x178] sm:$0xff] %vm809, %v792
  %858 = vst.msk [vmem:[%s3 + $0x180] sm:$0xff] %vm809, %v793
  %859 = vst.msk [vmem:[%s3 + $0x188] sm:$0xff] %vm809, %v794
  %860 = vst.msk [vmem:[%s3 + $0x190] sm:$0xff] %vm809, %v795
  %861 = vst.msk [vmem:[%s3 + $0x198] sm:$0xff] %vm809, %v796
  %862 = vst.msk [vmem:[%s3 + $0x1a0] sm:$0xff] %vm809, %v797
  %863 = vst.msk [vmem:[%s3 + $0x1a8] sm:$0xff] %vm809, %v798
  %864 = vst.msk [vmem:[%s3 + $0x1b0] sm:$0xff] %vm809, %v799
  %865 = vst.msk [vmem:[%s3 + $0x1b8] sm:$0xff] %vm809, %v800
  %866 = vst.msk [vmem:[%s3 + $0x1c0] sm:$0xff] %vm809, %v801
  %867 = vst.msk [vmem:[%s3 + $0x1c8] sm:$0xff] %vm809, %v802
  %868 = vst.msk [vmem:[%s3 + $0x1d0] sm:$0xff] %vm809, %v803
  %869 = vst.msk [vmem:[%s3 + $0x1d8] sm:$0xff] %vm809, %v804
  %870 = vst.msk [vmem:[%s3 + $0x1e0] sm:$0xff] %vm809, %v805
  %871 = vst.msk [vmem:[%s3 + $0x1e8] sm:$0xff] %vm809, %v806
  %872 = vst.msk [vmem:[%s3 + $0x1f0] sm:$0xff] %vm809, %v807
  %873 = vst.msk [vmem:[%s3 + $0x1f8] sm:$0xff] %vm809, %v808
  // Predicated region
  $region14: #{policy_act.5} parent=0 // pred_check
    _
  $region15: #{policy_act.5} parent=0 // pred_check_branch
    %875 = sbr.rel (0) target = $region17
  $region16: #{policy_act.5} parent=0 // pred_region
    _
  $region17: #{policy_act.5} parent=0 // pred_fallthru
    _
  // Predicated region
  $region18: #{policy_act.5} parent=0 // pred_check
    _
  $region19: #{policy_act.5} parent=0 // pred_check_branch
    %877 = sbr.rel (0) target = $region21
  $region20: #{policy_act.5} parent=0 // pred_region
    _
  $region21: #{policy_act.5} parent=0 // pred_fallthru
    _

// kernel: policy_act.6
$region0: #{policy_act.6}
  #allocation0 [shape = 'u32[]', space=smem, size = 0x4, offset = 0x4, fixed_abs, tag = 'smem constant byte address 0x4 - core index']
  #allocation1 [shape = 'u32[144,128]{1,0:T(1,128)}', space=vmem, size = 0x12000, scoped, tag = 'internal scratch']
  %s0 = inlined_call_operand.vmem [shape: f32[128,288], index: 0, kind: input, shape index: {}]
  %s1 = inlined_call_operand.vmem [shape: f32[288,64], index: 1, kind: input, shape index: {}]
  %s2 = inlined_call_operand.vmem [shape: f32[1,64], index: 2, kind: input, shape index: {}]
  %s3 = inlined_call_operand.vmem [shape: f32[128,64], index: 3, kind: output, shape index: {}]
  %s4 = sld [smem:[#allocation0]]
  $region22: #{policy_act.6} parent=0
    _
  %s6 = ssub.s32 1, %s4
  %s7 = scalar_select 0, %s6, %s4
  // Predicated region
  $region2: #{policy_act.6} parent=0 // pred_check
    _
  $region3: #{policy_act.6} parent=0 // pred_check_branch
    %9 = sbr.rel (0) target = $region5
  $region4: #{policy_act.6} parent=0 // pred_region
    _
  $region5: #{policy_act.6} parent=0 // pred_fallthru
    _
  // Predicated region
  $region6: #{policy_act.6} parent=0 // pred_check
    _
  $region7: #{policy_act.6} parent=0 // pred_check_branch
    %11 = sbr.rel (0) target = $region9
  $region8: #{policy_act.6} parent=0 // pred_region
    _
  $region9: #{policy_act.6} parent=0 // pred_fallthru
    _
  // Predicated region
  $region10: #{policy_act.6} parent=0 // pred_check
    _
  $region11: #{policy_act.6} parent=0 // pred_check_branch
    %13 = sbr.rel (0) target = $region13
  $region12: #{policy_act.6} parent=0 // pred_region
    _
  $region13: #{policy_act.6} parent=0 // pred_fallthru
    _
  %v14 = vld [vmem:[%s0] sm:$0xff]
  %v15 = vld [vmem:[%s0 + $0x8] sm:$0xff]
  %v16 = vld [vmem:[%s0 + $0x10] sm:$0xff]
  %v17 = vld [vmem:[%s0 + $0x18] sm:$0xff]
  %v18 = vld [vmem:[%s0 + $0x20] sm:$0xff]
  %v19 = vld [vmem:[%s0 + $0x28] sm:$0xff]
  %v20 = vld [vmem:[%s0 + $0x30] sm:$0xff]
  %v21 = vld [vmem:[%s0 + $0x38] sm:$0xff]
  %v22 = vld [vmem:[%s0 + $0x40] sm:$0xff]
  %v23 = vld [vmem:[%s0 + $0x48] sm:$0xff]
  %v24 = vld [vmem:[%s0 + $0x50] sm:$0xff]
  %v25 = vld [vmem:[%s0 + $0x58] sm:$0xff]
  %v26 = vld [vmem:[%s0 + $0x60] sm:$0xff]
  %v27 = vld [vmem:[%s0 + $0x68] sm:$0xff]
  %v28 = vld [vmem:[%s0 + $0x70] sm:$0xff]
  %v29 = vld [vmem:[%s0 + $0x78] sm:$0xff]
  %v30 = vld [vmem:[%s0 + $0x80] sm:$0xff]
  %v31 = vld [vmem:[%s0 + $0x88] sm:$0xff]
  %v32 = vld [vmem:[%s0 + $0x90] sm:$0xff]
  %v33 = vld [vmem:[%s0 + $0x98] sm:$0xff]
  %v34 = vld [vmem:[%s0 + $0xa0] sm:$0xff]
  %v35 = vld [vmem:[%s0 + $0xa8] sm:$0xff]
  %v36 = vld [vmem:[%s0 + $0xb0] sm:$0xff]
  %v37 = vld [vmem:[%s0 + $0xb8] sm:$0xff]
  %v38 = vld [vmem:[%s0 + $0xc0] sm:$0xff]
  %v39 = vld [vmem:[%s0 + $0xc8] sm:$0xff]
  %v40 = vld [vmem:[%s0 + $0xd0] sm:$0xff]
  %v41 = vld [vmem:[%s0 + $0xd8] sm:$0xff]
  %v42 = vld [vmem:[%s0 + $0xe0] sm:$0xff]
  %v43 = vld [vmem:[%s0 + $0xe8] sm:$0xff]
  %v44 = vld [vmem:[%s0 + $0xf0] sm:$0xff]
  %v45 = vld [vmem:[%s0 + $0xf8] sm:$0xff]
  %v46 = vld [vmem:[%s0 + $0x100] sm:$0xff]
  %v47 = vld [vmem:[%s0 + $0x108] sm:$0xff]
  %v48 = vld [vmem:[%s0 + $0x110] sm:$0xff]
  %v49 = vld [vmem:[%s0 + $0x118] sm:$0xff]
  %v50 = vld [vmem:[%s0 + $0x120] sm:$0xff]
  %v51 = vld [vmem:[%s0 + $0x128] sm:$0xff]
  %v52 = vld [vmem:[%s0 + $0x130] sm:$0xff]
  %v53 = vld [vmem:[%s0 + $0x138] sm:$0xff]
  %v54 = vld [vmem:[%s0 + $0x140] sm:$0xff]
  %v55 = vld [vmem:[%s0 + $0x148] sm:$0xff]
  %v56 = vld [vmem:[%s0 + $0x150] sm:$0xff]
  %v57 = vld [vmem:[%s0 + $0x158] sm:$0xff]
  %v58 = vld [vmem:[%s0 + $0x160] sm:$0xff]
  %v59 = vld [vmem:[%s0 + $0x168] sm:$0xff]
  %v60 = vld [vmem:[%s0 + $0x170] sm:$0xff]
  %v61 = vld [vmem:[%s0 + $0x178] sm:$0xff]
  %v62 = vld [vmem:[%s1] sm:$0xff]
  %v63 = vld [vmem:[%s1 + $0x8] sm:$0xff]
  %v64 = vld [vmem:[%s1 + $0x10] sm:$0xff]
  %v65 = vld [vmem:[%s1 + $0x18] sm:$0xff]
  %v66 = vld [vmem:[%s1 + $0x20] sm:$0xff]
  %v67 = vld [vmem:[%s1 + $0x28] sm:$0xff]
  %v68 = vld [vmem:[%s1 + $0x30] sm:$0xff]
  %v69 = vld [vmem:[%s1 + $0x38] sm:$0xff]
  %v70 = vld [vmem:[%s1 + $0x40] sm:$0xff]
  %v71 = vld [vmem:[%s1 + $0x48] sm:$0xff]
  %v72 = vld [vmem:[%s1 + $0x50] sm:$0xff]
  %v73 = vld [vmem:[%s1 + $0x58] sm:$0xff]
  %v74 = vld [vmem:[%s1 + $0x60] sm:$0xff]
  %v75 = vld [vmem:[%s1 + $0x68] sm:$0xff]
  %v76 = vld [vmem:[%s1 + $0x70] sm:$0xff]
  %v77 = vld [vmem:[%s1 + $0x78] sm:$0xff]
  %v78 = vld [vmem:[%s1 + $0x80] sm:$0xff]
  %v79 = vld [vmem:[%s1 + $0x88] sm:$0xff]
  %v80 = vld [vmem:[%s1 + $0x90] sm:$0xff]
  %v81 = vld [vmem:[%s1 + $0x98] sm:$0xff]
  %v82 = vld [vmem:[%s1 + $0xa0] sm:$0xff]
  %v83 = vld [vmem:[%s1 + $0xa8] sm:$0xff]
  %v84 = vld [vmem:[%s1 + $0xb0] sm:$0xff]
  %v85 = vld [vmem:[%s1 + $0xb8] sm:$0xff]
  %v86 = vld [vmem:[%s1 + $0xc0] sm:$0xff]
  %v87 = vld [vmem:[%s1 + $0xc8] sm:$0xff]
  %v88 = vld [vmem:[%s1 + $0xd0] sm:$0xff]
  %v89 = vld [vmem:[%s1 + $0xd8] sm:$0xff]
  %v90 = vld [vmem:[%s1 + $0xe0] sm:$0xff]
  %v91 = vld [vmem:[%s1 + $0xe8] sm:$0xff]
  %v92 = vld [vmem:[%s1 + $0xf0] sm:$0xff]
  %v93 = vld [vmem:[%s1 + $0xf8] sm:$0xff]
  %v94 = vld [vmem:[%s1 + $0x100] sm:$0xff]
  %v95 = vld [vmem:[%s1 + $0x108] sm:$0xff]
  %v96 = vld [vmem:[%s1 + $0x110] sm:$0xff]
  %v97 = vld [vmem:[%s1 + $0x118] sm:$0xff]
  %v98 = vld [vmem:[%s2] sm:$0x1]
  %v100 = vlaneseq
  %v101 = vshrl.u32 %v100, 7
  %v102 = vsub.s32 0, %v101
  %v103 = vrot.slane %v98, %v102
  %vm105 = vcmask 261120
  %v107 = vsel %vm105, %v16, 0
  %v110 = vsel %vm105, %v19, 0
  %v113 = vsel %vm105, %v22, 0
  %v116 = vsel %vm105, %v25, 0
  %v119 = vsel %vm105, %v28, 0
  %v122 = vsel %vm105, %v31, 0
  %v125 = vsel %vm105, %v34, 0
  %v128 = vsel %vm105, %v37, 0
  %v131 = vsel %vm105, %v40, 0
  %v134 = vsel %vm105, %v43, 0
  %v137 = vsel %vm105, %v46, 0
  %v140 = vsel %vm105, %v49, 0
  %v143 = vsel %vm105, %v52, 0
  %v146 = vsel %vm105, %v55, 0
  %v149 = vsel %vm105, %v58, 0
  %v152 = vsel %vm105, %v61, 0
  %154 = vmatprep.subr.mxu0 0.0
  %155 = vmatpush1.msra.mxu0 %v62
  %156 = vmatprep.subr.mxu0 0.0
  %157 = vmatpush1.msra.mxu0 %v63
  %158 = vmatprep.subr.mxu0 0.0
  %159 = vmatpush1.msra.mxu0 %v64
  %160 = vmatprep.subr.mxu0 0.0
  %161 = vmatpush1.msra.mxu0 %v65
  %162 = vmatprep.subr.mxu0 0.0
  %163 = vmatpush1.msra.mxu0 %v66
  %164 = vmatprep.subr.mxu0 0.0
  %165 = vmatpush1.msra.mxu0 %v67
  %166 = vmatprep.subr.mxu0 0.0
  %167 = vmatpush1.msra.mxu0 %v68
  %168 = vmatprep.subr.mxu0 0.0
  %169 = vmatpush1.msra.mxu0 %v69
  %170 = vmatprep.subr.mxu0 0.0
  %171 = vmatpush1.msra.mxu0 %v70
  %172 = vmatprep.subr.mxu0 0.0
  %173 = vmatpush1.msra.mxu0 %v71
  %174 = vmatprep.subr.mxu0 0.0
  %175 = vmatpush1.msra.mxu0 %v72
  %176 = vmatprep.subr.mxu0 0.0
  %177 = vmatpush1.msra.mxu0 %v73
  %178 = vmatprep.subr.mxu0 0.0
  %179 = vmatpush1.msra.mxu0 %v74
  %180 = vmatprep.subr.mxu0 0.0
  %181 = vmatpush1.msra.mxu0 %v75
  %182 = vmatprep.subr.mxu0 0.0
  %183 = vmatpush1.msra.mxu0 %v76
  %184 = vmatprep.subr.mxu0 0.0
  %185 = vmatpush1.msra.mxu0 %v77
  %186 = vmatprep.subr.mxu0 0.0
  %187 = vmatpush1.msra.mxu0 %v78
  %188 = vmatprep.subr.mxu0 0.0
  %189 = vmatpush1.msra.mxu0 %v79
  %190 = vmatprep.subr.mxu0 0.0
  %191 = vmatpush1.msra.mxu0 %v80
  %192 = vmatprep.subr.mxu0 0.0
  %193 = vmatpush1.msra.mxu0 %v81
  %194 = vmatprep.subr.mxu0 0.0
  %195 = vmatpush1.msra.mxu0 %v82
  %196 = vmatprep.subr.mxu0 0.0
  %197 = vmatpush1.msra.mxu0 %v83
  %198 = vmatprep.subr.mxu0 0.0
  %199 = vmatpush1.msra.mxu0 %v84
  %200 = vmatprep.subr.mxu0 0.0
  %201 = vmatpush1.msra.mxu0 %v85
  %202 = vmatprep.subr.mxu0 0.0
  %203 = vmatpush1.msra.mxu0 %v86
  %204 = vmatprep.subr.mxu0 0.0
  %205 = vmatpush1.msra.mxu0 %v87
  %206 = vmatprep.subr.mxu0 0.0
  %207 = vmatpush1.msra.mxu0 %v88
  %208 = vmatprep.subr.mxu0 0.0
  %209 = vmatpush1.msra.mxu0 %v89
  %210 = vmatprep.subr.mxu0 0.0
  %211 = vmatpush1.msra.mxu0 %v90
  %212 = vmatprep.subr.mxu0 0.0
  %213 = vmatpush1.msra.mxu0 %v91
  %214 = vmatprep.subr.mxu0 0.0
  %215 = vmatpush1.msra.mxu0 %v92
  %216 = vmatprep.subr.mxu0 0.0
  %217 = vmatpush1.msra.mxu0 %v93
  %218 = vmatprep.mubr.f32.mxu0 %v15
  %219 = vmatmul.mubr.f32.gmra.mrb[0].mxu0 %v14
  %v220 = vpop.f32.mrb[0].mxu0
  %v221 = vadd.f32 %v103, %v220
  %v222 = vpop.f32.mrb[0].mxu0
  %223 = vmatprep.mubr.f32.mxu0 %v18
  %224 = vmatmul.mubr.f32.gmra.mrb[0].mxu0 %v17
  %v225 = vpop.f32.mrb[0].mxu0
  %v226 = vadd.f32 %v103, %v225
  %v227 = vpop.f32.mrb[0].mxu0
  %228 = vmatprep.mubr.f32.mxu0 %v21
  %229 = vmatmul.mubr.f32.gmra.mrb[0].mxu0 %v20
  %v230 = vpop.f32.mrb[0].mxu0
  %v231 = vadd.f32 %v103, %v230
  %v232 = vpop.f32.mrb[0].mxu0
  %233 = vmatprep.mubr.f32.mxu0 %v24
  %234 = vmatmul.mubr.f32.gmra.mrb[0].mxu0 %v23
  %v235 = vpop.f32.mrb[0].mxu0
  %v236 = vadd.f32 %v103, %v235
  %v237 = vpop.f32.mrb[0].mxu0
  %238 = vmatprep.mubr.f32.mxu0 %v27
  %239 = vmatmul.mubr.f32.gmra.mrb[0].mxu0 %v26
  %v240 = vpop.f32.mrb[0].mxu0
  %v241 = vadd.f32 %v103, %v240
  %v242 = vpop.f32.mrb[0].mxu0
  %243 = vmatprep.mubr.f32.mxu0 %v30
  %244 = vmatmul.mubr.f32.gmra.mrb[0].mxu0 %v29
  %v245 = vpop.f32.mrb[0].mxu0
  %v246 = vadd.f32 %v103, %v245
  %v247 = vpop.f32.mrb[0].mxu0
  %248 = vmatprep.mubr.f32.mxu0 %v33
  %249 = vmatmul.mubr.f32.gmra.mrb[0].mxu0 %v32
  %v250 = vpop.f32.mrb[0].mxu0
  %v251 = vadd.f32 %v103, %v250
  %v252 = vpop.f32.mrb[0].mxu0
  %253 = vmatprep.mubr.f32.mxu0 %v36
  %254 = vmatmul.mubr.f32.gmra.mrb[0].mxu0 %v35
  %v255 = vpop.f32.mrb[0].mxu0
  %v256 = vadd.f32 %v103, %v255
  %v257 = vpop.f32.mrb[0].mxu0
  %258 = vmatprep.mubr.f32.mxu0 %v39
  %259 = vmatmul.mubr.f32.gmra.mrb[0].mxu0 %v38
  %v260 = vpop.f32.mrb[0].mxu0
  %v261 = vadd.f32 %v103, %v260
  %v262 = vpop.f32.mrb[0].mxu0
  %263 = vmatprep.mubr.f32.mxu0 %v42
  %264 = vmatmul.mubr.f32.gmra.mrb[0].mxu0 %v41
  %v265 = vpop.f32.mrb[0].mxu0
  %v266 = vadd.f32 %v103, %v265
  %v267 = vpop.f32.mrb[0].mxu0
  %268 = vmatprep.mubr.f32.mxu0 %v45
  %269 = vmatmul.mubr.f32.gmra.mrb[0].mxu0 %v44
  %v270 = vpop.f32.mrb[0].mxu0
  %v271 = vadd.f32 %v103, %v270
  %v272 = vpop.f32.mrb[0].mxu0
  %273 = vmatprep.mubr.f32.mxu0 %v48
  %274 = vmatmul.mubr.f32.gmra.mrb[0].mxu0 %v47
  %v275 = vpop.f32.mrb[0].mxu0
  %v276 = vadd.f32 %v103, %v275
  %v277 = vpop.f32.mrb[0].mxu0
  %278 = vmatprep.mubr.f32.mxu0 %v51
  %279 = vmatmul.mubr.f32.gmra.mrb[0].mxu0 %v50
  %v280 = vpop.f32.mrb[0].mxu0
  %v281 = vadd.f32 %v103, %v280
  %v282 = vpop.f32.mrb[0].mxu0
  %283 = vmatprep.mubr.f32.mxu0 %v54
  %284 = vmatmul.mubr.f32.gmra.mrb[0].mxu0 %v53
  %v285 = vpop.f32.mrb[0].mxu0
  %v286 = vadd.f32 %v103, %v285
  %v287 = vpop.f32.mrb[0].mxu0
  %288 = vmatprep.mubr.f32.mxu0 %v57
  %289 = vmatmul.mubr.f32.gmra.mrb[0].mxu0 %v56
  %v290 = vpop.f32.mrb[0].mxu0
  %v291 = vadd.f32 %v103, %v290
  %v292 = vpop.f32.mrb[0].mxu0
  %293 = vmatprep.mubr.f32.mxu0 %v60
  %294 = vmatmul.mubr.f32.gmra.mrb[0].mxu0 %v59
  %v295 = vpop.f32.mrb[0].mxu0
  %v296 = vadd.f32 %v103, %v295
  %v297 = vpop.f32.mrb[0].mxu0
  %298 = vdwg.mxu0
  %299 = vmatprep.subr.mxu0 0.0
  %300 = vmatpush1.msra.mxu0 %v94
  %301 = vmatprep.subr.mxu0 0.0
  %302 = vmatpush1.msra.mxu0 %v95
  %303 = vmatprep.subr.mxu0 0.0
  %304 = vmatpush1.msra.mxu0 %v96
  %305 = vmatprep.subr.mxu0 0.0
  %306 = vmatpush1.msra.mxu0 %v97
  %307 = vmatprep.subr.mxu0 0.0
  %308 = vmatpush1.msra.mxu0 0.0
  %309 = vmatprep.subr.mxu0 0.0
  %310 = vmatpush1.msra.mxu0 0.0
  %311 = vmatprep.subr.mxu0 0.0
  %312 = vmatpush1.msra.mxu0 0.0
  %313 = vmatprep.subr.mxu0 0.0
  %314 = vmatpush1.msra.mxu0 0.0
  %315 = vmatprep.subr.mxu0 0.0
  %316 = vmatpush1.msra.mxu0 0.0
  %317 = vmatprep.subr.mxu0 0.0
  %318 = vmatpush1.msra.mxu0 0.0
  %319 = vmatprep.subr.mxu0 0.0
  %320 = vmatpush1.msra.mxu0 0.0
  %321 = vmatprep.subr.mxu0 0.0
  %322 = vmatpush1.msra.mxu0 0.0
  %323 = vmatprep.subr.mxu0 0.0
  %324 = vmatpush1.msra.mxu0 0.0
  %325 = vmatprep.subr.mxu0 0.0
  %326 = vmatpush1.msra.mxu0 0.0
  %327 = vmatprep.subr.mxu0 0.0
  %328 = vmatpush1.msra.mxu0 0.0
  %329 = vmatprep.subr.mxu0 0.0
  %330 = vmatpush1.msra.mxu0 0.0
  %331 = vmatprep.subr.mxu0 0.0
  %332 = vmatpush1.msra.mxu0 0.0
  %333 = vmatprep.subr.mxu0 0.0
  %334 = vmatpush1.msra.mxu0 0.0
  %335 = vmatprep.subr.mxu0 0.0
  %336 = vmatpush1.msra.mxu0 0.0
  %337 = vmatprep.subr.mxu0 0.0
  %338 = vmatpush1.msra.mxu0 0.0
  %339 = vmatprep.subr.mxu0 0.0
  %340 = vmatpush1.msra.mxu0 0.0
  %341 = vmatprep.subr.mxu0 0.0
  %342 = vmatpush1.msra.mxu0 0.0
  %343 = vmatprep.subr.mxu0 0.0
  %344 = vmatpush1.msra.mxu0 0.0
  %345 = vmatprep.subr.mxu0 0.0
  %346 = vmatpush1.msra.mxu0 0.0
  %347 = vmatprep.subr.mxu0 0.0
  %348 = vmatpush1.msra.mxu0 0.0
  %349 = vmatprep.subr.mxu0 0.0
  %350 = vmatpush1.msra.mxu0 0.0
  %351 = vmatprep.subr.mxu0 0.0
  %352 = vmatpush1.msra.mxu0 0.0
  %353 = vmatprep.subr.mxu0 0.0
  %354 = vmatpush1.msra.mxu0 0.0
  %355 = vmatprep.subr.mxu0 0.0
  %356 = vmatpush1.msra.mxu0 0.0
  %357 = vmatprep.subr.mxu0 0.0
  %358 = vmatpush1.msra.mxu0 0.0
  %359 = vmatprep.subr.mxu0 0.0
  %360 = vmatpush1.msra.mxu0 0.0
  %361 = vmatprep.subr.mxu0 0.0
  %362 = vmatpush1.msra.mxu0 0.0
  %363 = vmatprep.mubr.f32.mxu0 0.0
  %364 = vmatmul.mubr.f32.gmra.mrb[0].mxu0 %v107
  %v365 = vpop.f32.mrb[0].mxu0
  %v366 = vadd.f32 %v221, %v365
  %v367 = vpop.f32.mrb[0].mxu0
  %368 = vmatprep.mubr.f32.mxu0 0.0
  %369 = vmatmul.mubr.f32.gmra.mrb[0].mxu0 %v110
  %v370 = vpop.f32.mrb[0].mxu0
  %v371 = vadd.f32 %v226, %v370
  %v372 = vpop.f32.mrb[0].mxu0
  %373 = vmatprep.mubr.f32.mxu0 0.0
  %374 = vmatmul.mubr.f32.gmra.mrb[0].mxu0 %v113
  %v375 = vpop.f32.mrb[0].mxu0
  %v376 = vadd.f32 %v231, %v375
  %v377 = vpop.f32.mrb[0].mxu0
  %378 = vmatprep.mubr.f32.mxu0 0.0
  %379 = vmatmul.mubr.f32.gmra.mrb[0].mxu0 %v116
  %v380 = vpop.f32.mrb[0].mxu0
  %v381 = vadd.f32 %v236, %v380
  %v382 = vpop.f32.mrb[0].mxu0
  %383 = vmatprep.mubr.f32.mxu0 0.0
  %384 = vmatmul.mubr.f32.gmra.mrb[0].mxu0 %v119
  %v385 = vpop.f32.mrb[0].mxu0
  %v386 = vadd.f32 %v241, %v385
  %v387 = vpop.f32.mrb[0].mxu0
  %388 = vmatprep.mubr.f32.mxu0 0.0
  %389 = vmatmul.mubr.f32.gmra.mrb[0].mxu0 %v122
  %v390 = vpop.f32.mrb[0].mxu0
  %v391 = vadd.f32 %v246, %v390
  %v392 = vpop.f32.mrb[0].mxu0
  %393 = vmatprep.mubr.f32.mxu0 0.0
  %394 = vmatmul.mubr.f32.gmra.mrb[0].mxu0 %v125
  %v395 = vpop.f32.mrb[0].mxu0
  %v396 = vadd.f32 %v251, %v395
  %v397 = vpop.f32.mrb[0].mxu0
  %398 = vmatprep.mubr.f32.mxu0 0.0
  %399 = vmatmul.mubr.f32.gmra.mrb[0].mxu0 %v128
  %v400 = vpop.f32.mrb[0].mxu0
  %v401 = vadd.f32 %v256, %v400
  %v402 = vpop.f32.mrb[0].mxu0
  %403 = vmatprep.mubr.f32.mxu0 0.0
  %404 = vmatmul.mubr.f32.gmra.mrb[0].mxu0 %v131
  %v405 = vpop.f32.mrb[0].mxu0
  %v406 = vadd.f32 %v261, %v405
  %v407 = vpop.f32.mrb[0].mxu0
  %408 = vmatprep.mubr.f32.mxu0 0.0
  %409 = vmatmul.mubr.f32.gmra.mrb[0].mxu0 %v134
  %v410 = vpop.f32.mrb[0].mxu0
  %v411 = vadd.f32 %v266, %v410
  %v412 = vpop.f32.mrb[0].mxu0
  %413 = vmatprep.mubr.f32.mxu0 0.0
  %414 = vmatmul.mubr.f32.gmra.mrb[0].mxu0 %v137
  %v415 = vpop.f32.mrb[0].mxu0
  %v416 = vadd.f32 %v271, %v415
  %v417 = vpop.f32.mrb[0].mxu0
  %418 = vmatprep.mubr.f32.mxu0 0.0
  %419 = vmatmul.mubr.f32.gmra.mrb[0].mxu0 %v140
  %v420 = vpop.f32.mrb[0].mxu0
  %v421 = vadd.f32 %v276, %v420
  %v422 = vpop.f32.mrb[0].mxu0
  %423 = vmatprep.mubr.f32.mxu0 0.0
  %424 = vmatmul.mubr.f32.gmra.mrb[0].mxu0 %v143
  %v425 = vpop.f32.mrb[0].mxu0
  %v426 = vadd.f32 %v281, %v425
  %v427 = vpop.f32.mrb[0].mxu0
  %428 = vmatprep.mubr.f32.mxu0 0.0
  %429 = vmatmul.mubr.f32.gmra.mrb[0].mxu0 %v146
  %v430 = vpop.f32.mrb[0].mxu0
  %v431 = vadd.f32 %v286, %v430
  %v432 = vpop.f32.mrb[0].mxu0
  %433 = vmatprep.mubr.f32.mxu0 0.0
  %434 = vmatmul.mubr.f32.gmra.mrb[0].mxu0 %v149
  %v435 = vpop.f32.mrb[0].mxu0
  %v436 = vadd.f32 %v291, %v435
  %v437 = vpop.f32.mrb[0].mxu0
  %438 = vmatprep.mubr.f32.mxu0 0.0
  %439 = vmatmul.mubr.f32.gmra.mrb[0].mxu0 %v152
  %v440 = vpop.f32.mrb[0].mxu0
  %v441 = vadd.f32 %v296, %v440
  %v442 = vpop.f32.mrb[0].mxu0
  %443 = vdwg.mxu0
  %v444 = vmax.f32 %v366, 0.0
  %v445 = vmax.f32 %v371, 0.0
  %v446 = vmax.f32 %v376, 0.0
  %v447 = vmax.f32 %v381, 0.0
  %v448 = vmax.f32 %v386, 0.0
  %v449 = vmax.f32 %v391, 0.0
  %v450 = vmax.f32 %v396, 0.0
  %v451 = vmax.f32 %v401, 0.0
  %v452 = vmax.f32 %v406, 0.0
  %v453 = vmax.f32 %v411, 0.0
  %v454 = vmax.f32 %v416, 0.0
  %v455 = vmax.f32 %v421, 0.0
  %v456 = vmax.f32 %v426, 0.0
  %v457 = vmax.f32 %v431, 0.0
  %v458 = vmax.f32 %v436, 0.0
  %v459 = vmax.f32 %v441, 0.0
  %vm460 = vcmask 523264
  %461 = vst.msk [vmem:[%s3] sm:$0xff] %vm460, %v444
  %462 = vst.msk [vmem:[%s3 + $0x8] sm:$0xff] %vm460, %v445
  %463 = vst.msk [vmem:[%s3 + $0x10] sm:$0xff] %vm460, %v446
  %464 = vst.msk [vmem:[%s3 + $0x18] sm:$0xff] %vm460, %v447
  %465 = vst.msk [vmem:[%s3 + $0x20] sm:$0xff] %vm460, %v448
  %466 = vst.msk [vmem:[%s3 + $0x28] sm:$0xff] %vm460, %v449
  %467 = vst.msk [vmem:[%s3 + $0x30] sm:$0xff] %vm460, %v450
  %468 = vst.msk [vmem:[%s3 + $0x38] sm:$0xff] %vm460, %v451
  %469 = vst.msk [vmem:[%s3 + $0x40] sm:$0xff] %vm460, %v452
  %470 = vst.msk [vmem:[%s3 + $0x48] sm:$0xff] %vm460, %v453
  %471 = vst.msk [vmem:[%s3 + $0x50] sm:$0xff] %vm460, %v454
  %472 = vst.msk [vmem:[%s3 + $0x58] sm:$0xff] %vm460, %v455
  %473 = vst.msk [vmem:[%s3 + $0x60] sm:$0xff] %vm460, %v456
  %474 = vst.msk [vmem:[%s3 + $0x68] sm:$0xff] %vm460, %v457
  %475 = vst.msk [vmem:[%s3 + $0x70] sm:$0xff] %vm460, %v458
  %476 = vst.msk [vmem:[%s3 + $0x78] sm:$0xff] %vm460, %v459
  // Predicated region
  $region14: #{policy_act.6} parent=0 // pred_check
    _
  $region15: #{policy_act.6} parent=0 // pred_check_branch
    %478 = sbr.rel (0) target = $region17
  $region16: #{policy_act.6} parent=0 // pred_region
    _
  $region17: #{policy_act.6} parent=0 // pred_fallthru
    _
  // Predicated region
  $region18: #{policy_act.6} parent=0 // pred_check
    _
  $region19: #{policy_act.6} parent=0 // pred_check_branch
    %480 = sbr.rel (0) target = $region21
  $region20: #{policy_act.6} parent=0 // pred_region
    _
  $region21: #{policy_act.6} parent=0 // pred_fallthru
    _

// kernel: policy_act.7
$region0: #{policy_act.7}
  #allocation0 [shape = 'u32[]', space=smem, size = 0x4, offset = 0x4, fixed_abs, tag = 'smem constant byte address 0x4 - core index']
  #allocation1 [shape = 'u32[144,128]{1,0:T(1,128)}', space=vmem, size = 0x12000, scoped, tag = 'internal scratch']
  %s0 = inlined_call_operand.vmem [shape: f32[2,4096], index: 0, kind: input, shape index: {}]
  %s1 = inlined_call_operand.vmem [shape: f32[4096,64], index: 1, kind: input, shape index: {}]
  %s2 = inlined_call_operand.vmem [shape: f32[1,64], index: 2, kind: input, shape index: {}]
  %s3 = inlined_call_operand.vmem [shape: f32[2,32], index: 3, kind: input, shape index: {}]
  %s4 = inlined_call_operand.vmem [shape: f32[32,4], index: 4, kind: input, shape index: {}]
  %s5 = inlined_call_operand.vmem [shape: f32[1,4], index: 5, kind: input, shape index: {}]
  %s6 = inlined_call_operand.hbm [shape: f32[2,4], index: 6, kind: output, shape index: {0}]
  %s7 = inlined_call_operand.hbm [shape: f32[2,32], index: 7, kind: output, shape index: {1}]
  %s8 = inlined_call_operand.hbm [shape: f32[2,32], index: 8, kind: output, shape index: {2}]
  %9 = xla_tuple %s6, %s7, %s8
  %s10 = sld [smem:[#allocation0]]
  $region50: #{policy_act.7} parent=0
    _
  %s12 = ssub.s32 1, %s10
  %s13 = scalar_select 0, %s12, %s10
  $region1: #{policy_act.7} parent=0
    #allocation2 [shape = 'u8[1024]{0}', space=vmem, size = 0x400, scoped, tag = 'output window, operand 0, single buffered']
    #allocation3 [shape = 's32[1]{0}', space=sflag, size = 0x4, scoped, tag = 'scoped memory for policy_act.7']
    #allocation4 [shape = 'u8[1024]{0}', space=vmem, size = 0x400, scoped, tag = 'output window, operand 1, single buffered']
    #allocation5 [shape = 's32[1]{0}', space=sflag, size = 0x4, scoped, tag = 'scoped memory for policy_act.7']
    #allocation6 [shape = 'u8[1024]{0}', space=vmem, size = 0x400, scoped, tag = 'output window, operand 2, single buffered']
    %14 = vsyncpa [#allocation3], 0
    %15 = vsyncpa [#allocation5], 0
    // Predicated region
    $region2: #{policy_act.7} parent=1 // pred_check
      _
    $region3: #{policy_act.7} parent=1 // pred_check_branch
      %17 = sbr.rel (0) target = $region5
    $region4: #{policy_act.7} parent=1 // pred_region
      _
    $region5: #{policy_act.7} parent=1 // pred_fallthru
      _
    // Predicated region
    $region6: #{policy_act.7} parent=1 // pred_check
      _
    $region7: #{policy_act.7} parent=1 // pred_check_branch
      %19 = sbr.rel (0) target = $region9
    $region8: #{policy_act.7} parent=1 // pred_region
      _
    $region9: #{policy_act.7} parent=1 // pred_fallthru
      _
    // Predicated region
    $region10: #{policy_act.7} parent=1 // pred_check
      _
    $region11: #{policy_act.7} parent=1 // pred_check_branch
      %21 = sbr.rel (0) target = $region13
    $region12: #{policy_act.7} parent=1 // pred_region
      _
    $region13: #{policy_act.7} parent=1 // pred_fallthru
      _
    // Predicated region
    $region14: #{policy_act.7} parent=1 // pred_check
      _
    $region15: #{policy_act.7} parent=1 // pred_check_branch
      %23 = sbr.rel (0) target = $region17
    $region16: #{policy_act.7} parent=1 // pred_region
      _
    $region17: #{policy_act.7} parent=1 // pred_fallthru
      _
    // Predicated region
    $region18: #{policy_act.7} parent=1 // pred_check
      _
    $region19: #{policy_act.7} parent=1 // pred_check_branch
      %25 = sbr.rel (0) target = $region21
    $region20: #{policy_act.7} parent=1 // pred_region
      _
    $region21: #{policy_act.7} parent=1 // pred_fallthru
      _
    // Predicated region
    $region22: #{policy_act.7} parent=1 // pred_check
      _
    $region23: #{policy_act.7} parent=1 // pred_check_branch
      %27 = sbr.rel (0) target = $region25
    $region24: #{policy_act.7} parent=1 // pred_region
      _
    $region25: #{policy_act.7} parent=1 // pred_fallthru
      _
    %v28 = vld [vmem:[%s0] sm:$0xff]
    %v29 = vld [vmem:[%s0 + $0x8] sm:$0xff]
    %v30 = vld [vmem:[%s0 + $0x10] sm:$0xff]
    %v31 = vld [vmem:[%s0 + $0x18] sm:$0xff]
    %v32 = vld [vmem:[%s0 + $0x20] sm:$0xff]
    %v33 = vld [vmem:[%s0 + $0x28] sm:$0xff]
    %v34 = vld [vmem:[%s0 + $0x30] sm:$0xff]
    %v35 = vld [vmem:[%s0 + $0x38] sm:$0xff]
    %v36 = vld [vmem:[%s1] sm:$0xff]
    %v37 = vld [vmem:[%s1 + $0x8] sm:$0xff]
    %v38 = vld [vmem:[%s1 + $0x10] sm:$0xff]
    %v39 = vld [vmem:[%s1 + $0x18] sm:$0xff]
    %v40 = vld [vmem:[%s1 + $0x20] sm:$0xff]
    %v41 = vld [vmem:[%s1 + $0x28] sm:$0xff]
    %v42 = vld [vmem:[%s1 + $0x30] sm:$0xff]
    %v43 = vld [vmem:[%s1 + $0x38] sm:$0xff]
    %v44 = vld [vmem:[%s1 + $0x40] sm:$0xff]
    %v45 = vld [vmem:[%s1 + $0x48] sm:$0xff]
    %v46 = vld [vmem:[%s1 + $0x50] sm:$0xff]
    %v47 = vld [vmem:[%s1 + $0x58] sm:$0xff]
    %v48 = vld [vmem:[%s1 + $0x60] sm:$0xff]
    %v49 = vld [vmem:[%s1 + $0x68] sm:$0xff]
    %v50 = vld [vmem:[%s1 + $0x70] sm:$0xff]
    %v51 = vld [vmem:[%s1 + $0x78] sm:$0xff]
    %v52 = vld [vmem:[%s1 + $0x80] sm:$0xff]
    %v53 = vld [vmem:[%s1 + $0x88] sm:$0xff]
    %v54 = vld [vmem:[%s1 + $0x90] sm:$0xff]
    %v55 = vld [vmem:[%s1 + $0x98] sm:$0xff]
    %v56 = vld [vmem:[%s1 + $0xa0] sm:$0xff]
    %v57 = vld [vmem:[%s1 + $0xa8] sm:$0xff]
    %v58 = vld [vmem:[%s1 + $0xb0] sm:$0xff]
    %v59 = vld [vmem:[%s1 + $0xb8] sm:$0xff]
    %v60 = vld [vmem:[%s1 + $0xc0] sm:$0xff]
    %v61 = vld [vmem:[%s1 + $0xc8] sm:$0xff]
    %v62 = vld [vmem:[%s1 + $0xd0] sm:$0xff]
    %v63 = vld [vmem:[%s1 + $0xd8] sm:$0xff]
    %v64 = vld [vmem:[%s1 + $0xe0] sm:$0xff]
    %v65 = vld [vmem:[%s1 + $0xe8] sm:$0xff]
    %v66 = vld [vmem:[%s1 + $0xf0] sm:$0xff]
    %v67 = vld [vmem:[%s1 + $0xf8] sm:$0xff]
    %v68 = vld [vmem:[%s1 + $0x100] sm:$0xff]
    %v69 = vld [vmem:[%s1 + $0x108] sm:$0xff]
    %v70 = vld [vmem:[%s1 + $0x110] sm:$0xff]
    %v71 = vld [vmem:[%s1 + $0x118] sm:$0xff]
    %v72 = vld [vmem:[%s1 + $0x120] sm:$0xff]
    %v73 = vld [vmem:[%s1 + $0x128] sm:$0xff]
    %v74 = vld [vmem:[%s1 + $0x130] sm:$0xff]
    %v75 = vld [vmem:[%s1 + $0x138] sm:$0xff]
    %v76 = vld [vmem:[%s1 + $0x140] sm:$0xff]
    %v77 = vld [vmem:[%s1 + $0x148] sm:$0xff]
    %v78 = vld [vmem:[%s1 + $0x150] sm:$0xff]
    %v79 = vld [vmem:[%s1 + $0x158] sm:$0xff]
    %v80 = vld [vmem:[%s1 + $0x160] sm:$0xff]
    %v81 = vld [vmem:[%s1 + $0x168] sm:$0xff]
    %v82 = vld [vmem:[%s1 + $0x170] sm:$0xff]
    %v83 = vld [vmem:[%s1 + $0x178] sm:$0xff]
    %v84 = vld [vmem:[%s1 + $0x180] sm:$0xff]
    %v85 = vld [vmem:[%s1 + $0x188] sm:$0xff]
    %v86 = vld [vmem:[%s1 + $0x190] sm:$0xff]
    %v87 = vld [vmem:[%s1 + $0x198] sm:$0xff]
    %v88 = vld [vmem:[%s1 + $0x1a0] sm:$0xff]
    %v89 = vld [vmem:[%s1 + $0x1a8] sm:$0xff]
    %v90 = vld [vmem:[%s1 + $0x1b0] sm:$0xff]
    %v91 = vld [vmem:[%s1 + $0x1b8] sm:$0xff]
    %v92 = vld [vmem:[%s1 + $0x1c0] sm:$0xff]
    %v93 = vld [vmem:[%s1 + $0x1c8] sm:$0xff]
    %v94 = vld [vmem:[%s1 + $0x1d0] sm:$0xff]
    %v95 = vld [vmem:[%s1 + $0x1d8] sm:$0xff]
    %v96 = vld [vmem:[%s1 + $0x1e0] sm:$0xff]
    %v97 = vld [vmem:[%s1 + $0x1e8] sm:$0xff]
    %v98 = vld [vmem:[%s1 + $0x1f0] sm:$0xff]
    %v99 = vld [vmem:[%s1 + $0x1f8] sm:$0xff]
    %v100 = vld [vmem:[%s1 + $0x200] sm:$0xff]
    %v101 = vld [vmem:[%s1 + $0x208] sm:$0xff]
    %v102 = vld [vmem:[%s1 + $0x210] sm:$0xff]
    %v103 = vld [vmem:[%s1 + $0x218] sm:$0xff]
    %v104 = vld [vmem:[%s1 + $0x220] sm:$0xff]
    %v105 = vld [vmem:[%s1 + $0x228] sm:$0xff]
    %v106 = vld [vmem:[%s1 + $0x230] sm:$0xff]
    %v107 = vld [vmem:[%s1 + $0x238] sm:$0xff]
    %v108 = vld [vmem:[%s1 + $0x240] sm:$0xff]
    %v109 = vld [vmem:[%s1 + $0x248] sm:$0xff]
    %v110 = vld [vmem:[%s1 + $0x250] sm:$0xff]
    %v111 = vld [vmem:[%s1 + $0x258] sm:$0xff]
    %v112 = vld [vmem:[%s1 + $0x260] sm:$0xff]
    %v113 = vld [vmem:[%s1 + $0x268] sm:$0xff]
    %v114 = vld [vmem:[%s1 + $0x270] sm:$0xff]
    %v115 = vld [vmem:[%s1 + $0x278] sm:$0xff]
    %v116 = vld [vmem:[%s1 + $0x280] sm:$0xff]
    %v117 = vld [vmem:[%s1 + $0x288] sm:$0xff]
    %v118 = vld [vmem:[%s1 + $0x290] sm:$0xff]
    %v119 = vld [vmem:[%s1 + $0x298] sm:$0xff]
    %v120 = vld [vmem:[%s1 + $0x2a0] sm:$0xff]
    %v121 = vld [vmem:[%s1 + $0x2a8] sm:$0xff]
    %v122 = vld [vmem:[%s1 + $0x2b0] sm:$0xff]
    %v123 = vld [vmem:[%s1 + $0x2b8] sm:$0xff]
    %v124 = vld [vmem:[%s1 + $0x2c0] sm:$0xff]
    %v125 = vld [vmem:[%s1 + $0x2c8] sm:$0xff]
    %v126 = vld [vmem:[%s1 + $0x2d0] sm:$0xff]
    %v127 = vld [vmem:[%s1 + $0x2d8] sm:$0xff]
    %v128 = vld [vmem:[%s1 + $0x2e0] sm:$0xff]
    %v129 = vld [vmem:[%s1 + $0x2e8] sm:$0xff]
    %v130 = vld [vmem:[%s1 + $0x2f0] sm:$0xff]
    %v131 = vld [vmem:[%s1 + $0x2f8] sm:$0xff]
    %v132 = vld [vmem:[%s1 + $0x300] sm:$0xff]
    %v133 = vld [vmem:[%s1 + $0x308] sm:$0xff]
    %v134 = vld [vmem:[%s1 + $0x310] sm:$0xff]
    %v135 = vld [vmem:[%s1 + $0x318] sm:$0xff]
    %v136 = vld [vmem:[%s1 + $0x320] sm:$0xff]
    %v137 = vld [vmem:[%s1 + $0x328] sm:$0xff]
    %v138 = vld [vmem:[%s1 + $0x330] sm:$0xff]
    %v139 = vld [vmem:[%s1 + $0x338] sm:$0xff]
    %v140 = vld [vmem:[%s1 + $0x340] sm:$0xff]
    %v141 = vld [vmem:[%s1 + $0x348] sm:$0xff]
    %v142 = vld [vmem:[%s1 + $0x350] sm:$0xff]
    %v143 = vld [vmem:[%s1 + $0x358] sm:$0xff]
    %v144 = vld [vmem:[%s1 + $0x360] sm:$0xff]
    %v145 = vld [vmem:[%s1 + $0x368] sm:$0xff]
    %v146 = vld [vmem:[%s1 + $0x370] sm:$0xff]
    %v147 = vld [vmem:[%s1 + $0x378] sm:$0xff]
    %v148 = vld [vmem:[%s1 + $0x380] sm:$0xff]
    %v149 = vld [vmem:[%s1 + $0x388] sm:$0xff]
    %v150 = vld [vmem:[%s1 + $0x390] sm:$0xff]
    %v151 = vld [vmem:[%s1 + $0x398] sm:$0xff]
    %v152 = vld [vmem:[%s1 + $0x3a0] sm:$0xff]
    %v153 = vld [vmem:[%s1 + $0x3a8] sm:$0xff]
    %v154 = vld [vmem:[%s1 + $0x3b0] sm:$0xff]
    %v155 = vld [vmem:[%s1 + $0x3b8] sm:$0xff]
    %v156 = vld [vmem:[%s1 + $0x3c0] sm:$0xff]
    %v157 = vld [vmem:[%s1 + $0x3c8] sm:$0xff]
    %v158 = vld [vmem:[%s1 + $0x3d0] sm:$0xff]
    %v159 = vld [vmem:[%s1 + $0x3d8] sm:$0xff]
    %v160 = vld [vmem:[%s1 + $0x3e0] sm:$0xff]
    %v161 = vld [vmem:[%s1 + $0x3e8] sm:$0xff]
    %v162 = vld [vmem:[%s1 + $0x3f0] sm:$0xff]
    %v163 = vld [vmem:[%s1 + $0x3f8] sm:$0xff]
    %v164 = vld [vmem:[%s1 + $0x400] sm:$0xff]
    %v165 = vld [vmem:[%s1 + $0x408] sm:$0xff]
    %v166 = vld [vmem:[%s1 + $0x410] sm:$0xff]
    %v167 = vld [vmem:[%s1 + $0x418] sm:$0xff]
    %v168 = vld [vmem:[%s1 + $0x420] sm:$0xff]
    %v169 = vld [vmem:[%s1 + $0x428] sm:$0xff]
    %v170 = vld [vmem:[%s1 + $0x430] sm:$0xff]
    %v171 = vld [vmem:[%s1 + $0x438] sm:$0xff]
    %v172 = vld [vmem:[%s1 + $0x440] sm:$0xff]
    %v173 = vld [vmem:[%s1 + $0x448] sm:$0xff]
    %v174 = vld [vmem:[%s1 + $0x450] sm:$0xff]
    %v175 = vld [vmem:[%s1 + $0x458] sm:$0xff]
    %v176 = vld [vmem:[%s1 + $0x460] sm:$0xff]
    %v177 = vld [vmem:[%s1 + $0x468] sm:$0xff]
    %v178 = vld [vmem:[%s1 + $0x470] sm:$0xff]
    %v179 = vld [vmem:[%s1 + $0x478] sm:$0xff]
    %v180 = vld [vmem:[%s1 + $0x480] sm:$0xff]
    %v181 = vld [vmem:[%s1 + $0x488] sm:$0xff]
    %v182 = vld [vmem:[%s1 + $0x490] sm:$0xff]
    %v183 = vld [vmem:[%s1 + $0x498] sm:$0xff]
    %v184 = vld [vmem:[%s1 + $0x4a0] sm:$0xff]
    %v185 = vld [vmem:[%s1 + $0x4a8] sm:$0xff]
    %v186 = vld [vmem:[%s1 + $0x4b0] sm:$0xff]
    %v187 = vld [vmem:[%s1 + $0x4b8] sm:$0xff]
    %v188 = vld [vmem:[%s1 + $0x4c0] sm:$0xff]
    %v189 = vld [vmem:[%s1 + $0x4c8] sm:$0xff]
    %v190 = vld [vmem:[%s1 + $0x4d0] sm:$0xff]
    %v191 = vld [vmem:[%s1 + $0x4d8] sm:$0xff]
    %v192 = vld [vmem:[%s1 + $0x4e0] sm:$0xff]
    %v193 = vld [vmem:[%s1 + $0x4e8] sm:$0xff]
    %v194 = vld [vmem:[%s1 + $0x4f0] sm:$0xff]
    %v195 = vld [vmem:[%s1 + $0x4f8] sm:$0xff]
    %v196 = vld [vmem:[%s1 + $0x500] sm:$0xff]
    %v197 = vld [vmem:[%s1 + $0x508] sm:$0xff]
    %v198 = vld [vmem:[%s1 + $0x510] sm:$0xff]
    %v199 = vld [vmem:[%s1 + $0x518] sm:$0xff]
    %v200 = vld [vmem:[%s1 + $0x520] sm:$0xff]
    %v201 = vld [vmem:[%s1 + $0x528] sm:$0xff]
    %v202 = vld [vmem:[%s1 + $0x530] sm:$0xff]
    %v203 = vld [vmem:[%s1 + $0x538] sm:$0xff]
    %v204 = vld [vmem:[%s1 + $0x540] sm:$0xff]
    %v205 = vld [vmem:[%s1 + $0x548] sm:$0xff]
    %v206 = vld [vmem:[%s1 + $0x550] sm:$0xff]
    %v207 = vld [vmem:[%s1 + $0x558] sm:$0xff]
    %v208 = vld [vmem:[%s1 + $0x560] sm:$0xff]
    %v209 = vld [vmem:[%s1 + $0x568] sm:$0xff]
    %v210 = vld [vmem:[%s1 + $0x570] sm:$0xff]
    %v211 = vld [vmem:[%s1 + $0x578] sm:$0xff]
    %v212 = vld [vmem:[%s1 + $0x580] sm:$0xff]
    %v213 = vld [vmem:[%s1 + $0x588] sm:$0xff]
    %v214 = vld [vmem:[%s1 + $0x590] sm:$0xff]
    %v215 = vld [vmem:[%s1 + $0x598] sm:$0xff]
    %v216 = vld [vmem:[%s1 + $0x5a0] sm:$0xff]
    %v217 = vld [vmem:[%s1 + $0x5a8] sm:$0xff]
    %v218 = vld [vmem:[%s1 + $0x5b0] sm:$0xff]
    %v219 = vld [vmem:[%s1 + $0x5b8] sm:$0xff]
    %v220 = vld [vmem:[%s1 + $0x5c0] sm:$0xff]
    %v221 = vld [vmem:[%s1 + $0x5c8] sm:$0xff]
    %v222 = vld [vmem:[%s1 + $0x5d0] sm:$0xff]
    %v223 = vld [vmem:[%s1 + $0x5d8] sm:$0xff]
    %v224 = vld [vmem:[%s1 + $0x5e0] sm:$0xff]
    %v225 = vld [vmem:[%s1 + $0x5e8] sm:$0xff]
    %v226 = vld [vmem:[%s1 + $0x5f0] sm:$0xff]
    %v227 = vld [vmem:[%s1 + $0x5f8] sm:$0xff]
    %v228 = vld [vmem:[%s1 + $0x600] sm:$0xff]
    %v229 = vld [vmem:[%s1 + $0x608] sm:$0xff]
    %v230 = vld [vmem:[%s1 + $0x610] sm:$0xff]
    %v231 = vld [vmem:[%s1 + $0x618] sm:$0xff]
    %v232 = vld [vmem:[%s1 + $0x620] sm:$0xff]
    %v233 = vld [vmem:[%s1 + $0x628] sm:$0xff]
    %v234 = vld [vmem:[%s1 + $0x630] sm:$0xff]
    %v235 = vld [vmem:[%s1 + $0x638] sm:$0xff]
    %v236 = vld [vmem:[%s1 + $0x640] sm:$0xff]
    %v237 = vld [vmem:[%s1 + $0x648] sm:$0xff]
    %v238 = vld [vmem:[%s1 + $0x650] sm:$0xff]
    %v239 = vld [vmem:[%s1 + $0x658] sm:$0xff]
    %v240 = vld [vmem:[%s1 + $0x660] sm:$0xff]
    %v241 = vld [vmem:[%s1 + $0x668] sm:$0xff]
    %v242 = vld [vmem:[%s1 + $0x670] sm:$0xff]
    %v243 = vld [vmem:[%s1 + $0x678] sm:$0xff]
    %v244 = vld [vmem:[%s1 + $0x680] sm:$0xff]
    %v245 = vld [vmem:[%s1 + $0x688] sm:$0xff]
    %v246 = vld [vmem:[%s1 + $0x690] sm:$0xff]
    %v247 = vld [vmem:[%s1 + $0x698] sm:$0xff]
    %v248 = vld [vmem:[%s1 + $0x6a0] sm:$0xff]
    %v249 = vld [vmem:[%s1 + $0x6a8] sm:$0xff]
    %v250 = vld [vmem:[%s1 + $0x6b0] sm:$0xff]
    %v251 = vld [vmem:[%s1 + $0x6b8] sm:$0xff]
    %v252 = vld [vmem:[%s1 + $0x6c0] sm:$0xff]
    %v253 = vld [vmem:[%s1 + $0x6c8] sm:$0xff]
    %v254 = vld [vmem:[%s1 + $0x6d0] sm:$0xff]
    %v255 = vld [vmem:[%s1 + $0x6d8] sm:$0xff]
    %v256 = vld [vmem:[%s1 + $0x6e0] sm:$0xff]
    %v257 = vld [vmem:[%s1 + $0x6e8] sm:$0xff]
    %v258 = vld [vmem:[%s1 + $0x6f0] sm:$0xff]
    %v259 = vld [vmem:[%s1 + $0x6f8] sm:$0xff]
    %v260 = vld [vmem:[%s1 + $0x700] sm:$0xff]
    %v261 = vld [vmem:[%s1 + $0x708] sm:$0xff]
    %v262 = vld [vmem:[%s1 + $0x710] sm:$0xff]
    %v263 = vld [vmem:[%s1 + $0x718] sm:$0xff]
    %v264 = vld [vmem:[%s1 + $0x720] sm:$0xff]
    %v265 = vld [vmem:[%s1 + $0x728] sm:$0xff]
    %v266 = vld [vmem:[%s1 + $0x730] sm:$0xff]
    %v267 = vld [vmem:[%s1 + $0x738] sm:$0xff]
    %v268 = vld [vmem:[%s1 + $0x740] sm:$0xff]
    %v269 = vld [vmem:[%s1 + $0x748] sm:$0xff]
    %v270 = vld [vmem:[%s1 + $0x750] sm:$0xff]
    %v271 = vld [vmem:[%s1 + $0x758] sm:$0xff]
    %v272 = vld [vmem:[%s1 + $0x760] sm:$0xff]
    %v273 = vld [vmem:[%s1 + $0x768] sm:$0xff]
    %v274 = vld [vmem:[%s1 + $0x770] sm:$0xff]
    %v275 = vld [vmem:[%s1 + $0x778] sm:$0xff]
    %v276 = vld [vmem:[%s1 + $0x780] sm:$0xff]
    %v277 = vld [vmem:[%s1 + $0x788] sm:$0xff]
    %v278 = vld [vmem:[%s1 + $0x790] sm:$0xff]
    %v279 = vld [vmem:[%s1 + $0x798] sm:$0xff]
    %v280 = vld [vmem:[%s1 + $0x7a0] sm:$0xff]
    %v281 = vld [vmem:[%s1 + $0x7a8] sm:$0xff]
    %v282 = vld [vmem:[%s1 + $0x7b0] sm:$0xff]
    %v283 = vld [vmem:[%s1 + $0x7b8] sm:$0xff]
    %v284 = vld [vmem:[%s1 + $0x7c0] sm:$0xff]
    %v285 = vld [vmem:[%s1 + $0x7c8] sm:$0xff]
    %v286 = vld [vmem:[%s1 + $0x7d0] sm:$0xff]
    %v287 = vld [vmem:[%s1 + $0x7d8] sm:$0xff]
    %v288 = vld [vmem:[%s1 + $0x7e0] sm:$0xff]
    %v289 = vld [vmem:[%s1 + $0x7e8] sm:$0xff]
    %v290 = vld [vmem:[%s1 + $0x7f0] sm:$0xff]
    %v291 = vld [vmem:[%s1 + $0x7f8] sm:$0xff]
    %v292 = vld [vmem:[%s1 + $0x800] sm:$0xff]
    %v293 = vld [vmem:[%s1 + $0x808] sm:$0xff]
    %v294 = vld [vmem:[%s1 + $0x810] sm:$0xff]
    %v295 = vld [vmem:[%s1 + $0x818] sm:$0xff]
    %v296 = vld [vmem:[%s1 + $0x820] sm:$0xff]
    %v297 = vld [vmem:[%s1 + $0x828] sm:$0xff]
    %v298 = vld [vmem:[%s1 + $0x830] sm:$0xff]
    %v299 = vld [vmem:[%s1 + $0x838] sm:$0xff]
    %v300 = vld [vmem:[%s1 + $0x840] sm:$0xff]
    %v301 = vld [vmem:[%s1 + $0x848] sm:$0xff]
    %v302 = vld [vmem:[%s1 + $0x850] sm:$0xff]
    %v303 = vld [vmem:[%s1 + $0x858] sm:$0xff]
    %v304 = vld [vmem:[%s1 + $0x860] sm:$0xff]
    %v305 = vld [vmem:[%s1 + $0x868] sm:$0xff]
    %v306 = vld [vmem:[%s1 + $0x870] sm:$0xff]
    %v307 = vld [vmem:[%s1 + $0x878] sm:$0xff]
    %v308 = vld [vmem:[%s1 + $0x880] sm:$0xff]
    %v309 = vld [vmem:[%s1 + $0x888] sm:$0xff]
    %v310 = vld [vmem:[%s1 + $0x890] sm:$0xff]
    %v311 = vld [vmem:[%s1 + $0x898] sm:$0xff]
    %v312 = vld [vmem:[%s1 + $0x8a0] sm:$0xff]
    %v313 = vld [vmem:[%s1 + $0x8a8] sm:$0xff]
    %v314 = vld [vmem:[%s1 + $0x8b0] sm:$0xff]
    %v315 = vld [vmem:[%s1 + $0x8b8] sm:$0xff]
    %v316 = vld [vmem:[%s1 + $0x8c0] sm:$0xff]
    %v317 = vld [vmem:[%s1 + $0x8c8] sm:$0xff]
    %v318 = vld [vmem:[%s1 + $0x8d0] sm:$0xff]
    %v319 = vld [vmem:[%s1 + $0x8d8] sm:$0xff]
    %v320 = vld [vmem:[%s1 + $0x8e0] sm:$0xff]
    %v321 = vld [vmem:[%s1 + $0x8e8] sm:$0xff]
    %v322 = vld [vmem:[%s1 + $0x8f0] sm:$0xff]
    %v323 = vld [vmem:[%s1 + $0x8f8] sm:$0xff]
    %v324 = vld [vmem:[%s1 + $0x900] sm:$0xff]
    %v325 = vld [vmem:[%s1 + $0x908] sm:$0xff]
    %v326 = vld [vmem:[%s1 + $0x910] sm:$0xff]
    %v327 = vld [vmem:[%s1 + $0x918] sm:$0xff]
    %v328 = vld [vmem:[%s1 + $0x920] sm:$0xff]
    %v329 = vld [vmem:[%s1 + $0x928] sm:$0xff]
    %v330 = vld [vmem:[%s1 + $0x930] sm:$0xff]
    %v331 = vld [vmem:[%s1 + $0x938] sm:$0xff]
    %v332 = vld [vmem:[%s1 + $0x940] sm:$0xff]
    %v333 = vld [vmem:[%s1 + $0x948] sm:$0xff]
    %v334 = vld [vmem:[%s1 + $0x950] sm:$0xff]
    %v335 = vld [vmem:[%s1 + $0x958] sm:$0xff]
    %v336 = vld [vmem:[%s1 + $0x960] sm:$0xff]
    %v337 = vld [vmem:[%s1 + $0x968] sm:$0xff]
    %v338 = vld [vmem:[%s1 + $0x970] sm:$0xff]
    %v339 = vld [vmem:[%s1 + $0x978] sm:$0xff]
    %v340 = vld [vmem:[%s1 + $0x980] sm:$0xff]
    %v341 = vld [vmem:[%s1 + $0x988] sm:$0xff]
    %v342 = vld [vmem:[%s1 + $0x990] sm:$0xff]
    %v343 = vld [vmem:[%s1 + $0x998] sm:$0xff]
    %v344 = vld [vmem:[%s1 + $0x9a0] sm:$0xff]
    %v345 = vld [vmem:[%s1 + $0x9a8] sm:$0xff]
    %v346 = vld [vmem:[%s1 + $0x9b0] sm:$0xff]
    %v347 = vld [vmem:[%s1 + $0x9b8] sm:$0xff]
    %v348 = vld [vmem:[%s1 + $0x9c0] sm:$0xff]
    %v349 = vld [vmem:[%s1 + $0x9c8] sm:$0xff]
    %v350 = vld [vmem:[%s1 + $0x9d0] sm:$0xff]
    %v351 = vld [vmem:[%s1 + $0x9d8] sm:$0xff]
    %v352 = vld [vmem:[%s1 + $0x9e0] sm:$0xff]
    %v353 = vld [vmem:[%s1 + $0x9e8] sm:$0xff]
    %v354 = vld [vmem:[%s1 + $0x9f0] sm:$0xff]
    %v355 = vld [vmem:[%s1 + $0x9f8] sm:$0xff]
    %v356 = vld [vmem:[%s1 + $0xa00] sm:$0xff]
    %v357 = vld [vmem:[%s1 + $0xa08] sm:$0xff]
    %v358 = vld [vmem:[%s1 + $0xa10] sm:$0xff]
    %v359 = vld [vmem:[%s1 + $0xa18] sm:$0xff]
    %v360 = vld [vmem:[%s1 + $0xa20] sm:$0xff]
    %v361 = vld [vmem:[%s1 + $0xa28] sm:$0xff]
    %v362 = vld [vmem:[%s1 + $0xa30] sm:$0xff]
    %v363 = vld [vmem:[%s1 + $0xa38] sm:$0xff]
    %v364 = vld [vmem:[%s1 + $0xa40] sm:$0xff]
    %v365 = vld [vmem:[%s1 + $0xa48] sm:$0xff]
    %v366 = vld [vmem:[%s1 + $0xa50] sm:$0xff]
    %v367 = vld [vmem:[%s1 + $0xa58] sm:$0xff]
    %v368 = vld [vmem:[%s1 + $0xa60] sm:$0xff]
    %v369 = vld [vmem:[%s1 + $0xa68] sm:$0xff]
    %v370 = vld [vmem:[%s1 + $0xa70] sm:$0xff]
    %v371 = vld [vmem:[%s1 + $0xa78] sm:$0xff]
    %v372 = vld [vmem:[%s1 + $0xa80] sm:$0xff]
    %v373 = vld [vmem:[%s1 + $0xa88] sm:$0xff]
    %v374 = vld [vmem:[%s1 + $0xa90] sm:$0xff]
    %v375 = vld [vmem:[%s1 + $0xa98] sm:$0xff]
    %v376 = vld [vmem:[%s1 + $0xaa0] sm:$0xff]
    %v377 = vld [vmem:[%s1 + $0xaa8] sm:$0xff]
    %v378 = vld [vmem:[%s1 + $0xab0] sm:$0xff]
    %v379 = vld [vmem:[%s1 + $0xab8] sm:$0xff]
    %v380 = vld [vmem:[%s1 + $0xac0] sm:$0xff]
    %v381 = vld [vmem:[%s1 + $0xac8] sm:$0xff]
    %v382 = vld [vmem:[%s1 + $0xad0] sm:$0xff]
    %v383 = vld [vmem:[%s1 + $0xad8] sm:$0xff]
    %v384 = vld [vmem:[%s1 + $0xae0] sm:$0xff]
    %v385 = vld [vmem:[%s1 + $0xae8] sm:$0xff]
    %v386 = vld [vmem:[%s1 + $0xaf0] sm:$0xff]
    %v387 = vld [vmem:[%s1 + $0xaf8] sm:$0xff]
    %v388 = vld [vmem:[%s1 + $0xb00] sm:$0xff]
    %v389 = vld [vmem:[%s1 + $0xb08] sm:$0xff]
    %v390 = vld [vmem:[%s1 + $0xb10] sm:$0xff]
    %v391 = vld [vmem:[%s1 + $0xb18] sm:$0xff]
    %v392 = vld [vmem:[%s1 + $0xb20] sm:$0xff]
    %v393 = vld [vmem:[%s1 + $0xb28] sm:$0xff]
    %v394 = vld [vmem:[%s1 + $0xb30] sm:$0xff]
    %v395 = vld [vmem:[%s1 + $0xb38] sm:$0xff]
    %v396 = vld [vmem:[%s1 + $0xb40] sm:$0xff]
    %v397 = vld [vmem:[%s1 + $0xb48] sm:$0xff]
    %v398 = vld [vmem:[%s1 + $0xb50] sm:$0xff]
    %v399 = vld [vmem:[%s1 + $0xb58] sm:$0xff]
    %v400 = vld [vmem:[%s1 + $0xb60] sm:$0xff]
    %v401 = vld [vmem:[%s1 + $0xb68] sm:$0xff]
    %v402 = vld [vmem:[%s1 + $0xb70] sm:$0xff]
    %v403 = vld [vmem:[%s1 + $0xb78] sm:$0xff]
    %v404 = vld [vmem:[%s1 + $0xb80] sm:$0xff]
    %v405 = vld [vmem:[%s1 + $0xb88] sm:$0xff]
    %v406 = vld [vmem:[%s1 + $0xb90] sm:$0xff]
    %v407 = vld [vmem:[%s1 + $0xb98] sm:$0xff]
    %v408 = vld [vmem:[%s1 + $0xba0] sm:$0xff]
    %v409 = vld [vmem:[%s1 + $0xba8] sm:$0xff]
    %v410 = vld [vmem:[%s1 + $0xbb0] sm:$0xff]
    %v411 = vld [vmem:[%s1 + $0xbb8] sm:$0xff]
    %v412 = vld [vmem:[%s1 + $0xbc0] sm:$0xff]
    %v413 = vld [vmem:[%s1 + $0xbc8] sm:$0xff]
    %v414 = vld [vmem:[%s1 + $0xbd0] sm:$0xff]
    %v415 = vld [vmem:[%s1 + $0xbd8] sm:$0xff]
    %v416 = vld [vmem:[%s1 + $0xbe0] sm:$0xff]
    %v417 = vld [vmem:[%s1 + $0xbe8] sm:$0xff]
    %v418 = vld [vmem:[%s1 + $0xbf0] sm:$0xff]
    %v419 = vld [vmem:[%s1 + $0xbf8] sm:$0xff]
    %v420 = vld [vmem:[%s1 + $0xc00] sm:$0xff]
    %v421 = vld [vmem:[%s1 + $0xc08] sm:$0xff]
    %v422 = vld [vmem:[%s1 + $0xc10] sm:$0xff]
    %v423 = vld [vmem:[%s1 + $0xc18] sm:$0xff]
    %v424 = vld [vmem:[%s1 + $0xc20] sm:$0xff]
    %v425 = vld [vmem:[%s1 + $0xc28] sm:$0xff]
    %v426 = vld [vmem:[%s1 + $0xc30] sm:$0xff]
    %v427 = vld [vmem:[%s1 + $0xc38] sm:$0xff]
    %v428 = vld [vmem:[%s1 + $0xc40] sm:$0xff]
    %v429 = vld [vmem:[%s1 + $0xc48] sm:$0xff]
    %v430 = vld [vmem:[%s1 + $0xc50] sm:$0xff]
    %v431 = vld [vmem:[%s1 + $0xc58] sm:$0xff]
    %v432 = vld [vmem:[%s1 + $0xc60] sm:$0xff]
    %v433 = vld [vmem:[%s1 + $0xc68] sm:$0xff]
    %v434 = vld [vmem:[%s1 + $0xc70] sm:$0xff]
    %v435 = vld [vmem:[%s1 + $0xc78] sm:$0xff]
    %v436 = vld [vmem:[%s1 + $0xc80] sm:$0xff]
    %v437 = vld [vmem:[%s1 + $0xc88] sm:$0xff]
    %v438 = vld [vmem:[%s1 + $0xc90] sm:$0xff]
    %v439 = vld [vmem:[%s1 + $0xc98] sm:$0xff]
    %v440 = vld [vmem:[%s1 + $0xca0] sm:$0xff]
    %v441 = vld [vmem:[%s1 + $0xca8] sm:$0xff]
    %v442 = vld [vmem:[%s1 + $0xcb0] sm:$0xff]
    %v443 = vld [vmem:[%s1 + $0xcb8] sm:$0xff]
    %v444 = vld [vmem:[%s1 + $0xcc0] sm:$0xff]
    %v445 = vld [vmem:[%s1 + $0xcc8] sm:$0xff]
    %v446 = vld [vmem:[%s1 + $0xcd0] sm:$0xff]
    %v447 = vld [vmem:[%s1 + $0xcd8] sm:$0xff]
    %v448 = vld [vmem:[%s1 + $0xce0] sm:$0xff]
    %v449 = vld [vmem:[%s1 + $0xce8] sm:$0xff]
    %v450 = vld [vmem:[%s1 + $0xcf0] sm:$0xff]
    %v451 = vld [vmem:[%s1 + $0xcf8] sm:$0xff]
    %v452 = vld [vmem:[%s1 + $0xd00] sm:$0xff]
    %v453 = vld [vmem:[%s1 + $0xd08] sm:$0xff]
    %v454 = vld [vmem:[%s1 + $0xd10] sm:$0xff]
    %v455 = vld [vmem:[%s1 + $0xd18] sm:$0xff]
    %v456 = vld [vmem:[%s1 + $0xd20] sm:$0xff]
    %v457 = vld [vmem:[%s1 + $0xd28] sm:$0xff]
    %v458 = vld [vmem:[%s1 + $0xd30] sm:$0xff]
    %v459 = vld [vmem:[%s1 + $0xd38] sm:$0xff]
    %v460 = vld [vmem:[%s1 + $0xd40] sm:$0xff]
    %v461 = vld [vmem:[%s1 + $0xd48] sm:$0xff]
    %v462 = vld [vmem:[%s1 + $0xd50] sm:$0xff]
    %v463 = vld [vmem:[%s1 + $0xd58] sm:$0xff]
    %v464 = vld [vmem:[%s1 + $0xd60] sm:$0xff]
    %v465 = vld [vmem:[%s1 + $0xd68] sm:$0xff]
    %v466 = vld [vmem:[%s1 + $0xd70] sm:$0xff]
    %v467 = vld [vmem:[%s1 + $0xd78] sm:$0xff]
    %v468 = vld [vmem:[%s1 + $0xd80] sm:$0xff]
    %v469 = vld [vmem:[%s1 + $0xd88] sm:$0xff]
    %v470 = vld [vmem:[%s1 + $0xd90] sm:$0xff]
    %v471 = vld [vmem:[%s1 + $0xd98] sm:$0xff]
    %v472 = vld [vmem:[%s1 + $0xda0] sm:$0xff]
    %v473 = vld [vmem:[%s1 + $0xda8] sm:$0xff]
    %v474 = vld [vmem:[%s1 + $0xdb0] sm:$0xff]
    %v475 = vld [vmem:[%s1 + $0xdb8] sm:$0xff]
    %v476 = vld [vmem:[%s1 + $0xdc0] sm:$0xff]
    %v477 = vld [vmem:[%s1 + $0xdc8] sm:$0xff]
    %v478 = vld [vmem:[%s1 + $0xdd0] sm:$0xff]
    %v479 = vld [vmem:[%s1 + $0xdd8] sm:$0xff]
    %v480 = vld [vmem:[%s1 + $0xde0] sm:$0xff]
    %v481 = vld [vmem:[%s1 + $0xde8] sm:$0xff]
    %v482 = vld [vmem:[%s1 + $0xdf0] sm:$0xff]
    %v483 = vld [vmem:[%s1 + $0xdf8] sm:$0xff]
    %v484 = vld [vmem:[%s1 + $0xe00] sm:$0xff]
    %v485 = vld [vmem:[%s1 + $0xe08] sm:$0xff]
    %v486 = vld [vmem:[%s1 + $0xe10] sm:$0xff]
    %v487 = vld [vmem:[%s1 + $0xe18] sm:$0xff]
    %v488 = vld [vmem:[%s1 + $0xe20] sm:$0xff]
    %v489 = vld [vmem:[%s1 + $0xe28] sm:$0xff]
    %v490 = vld [vmem:[%s1 + $0xe30] sm:$0xff]
    %v491 = vld [vmem:[%s1 + $0xe38] sm:$0xff]
    %v492 = vld [vmem:[%s1 + $0xe40] sm:$0xff]
    %v493 = vld [vmem:[%s1 + $0xe48] sm:$0xff]
    %v494 = vld [vmem:[%s1 + $0xe50] sm:$0xff]
    %v495 = vld [vmem:[%s1 + $0xe58] sm:$0xff]
    %v496 = vld [vmem:[%s1 + $0xe60] sm:$0xff]
    %v497 = vld [vmem:[%s1 + $0xe68] sm:$0xff]
    %v498 = vld [vmem:[%s1 + $0xe70] sm:$0xff]
    %v499 = vld [vmem:[%s1 + $0xe78] sm:$0xff]
    %v500 = vld [vmem:[%s1 + $0xe80] sm:$0xff]
    %v501 = vld [vmem:[%s1 + $0xe88] sm:$0xff]
    %v502 = vld [vmem:[%s1 + $0xe90] sm:$0xff]
    %v503 = vld [vmem:[%s1 + $0xe98] sm:$0xff]
    %v504 = vld [vmem:[%s1 + $0xea0] sm:$0xff]
    %v505 = vld [vmem:[%s1 + $0xea8] sm:$0xff]
    %v506 = vld [vmem:[%s1 + $0xeb0] sm:$0xff]
    %v507 = vld [vmem:[%s1 + $0xeb8] sm:$0xff]
    %v508 = vld [vmem:[%s1 + $0xec0] sm:$0xff]
    %v509 = vld [vmem:[%s1 + $0xec8] sm:$0xff]
    %v510 = vld [vmem:[%s1 + $0xed0] sm:$0xff]
    %v511 = vld [vmem:[%s1 + $0xed8] sm:$0xff]
    %v512 = vld [vmem:[%s1 + $0xee0] sm:$0xff]
    %v513 = vld [vmem:[%s1 + $0xee8] sm:$0xff]
    %v514 = vld [vmem:[%s1 + $0xef0] sm:$0xff]
    %v515 = vld [vmem:[%s1 + $0xef8] sm:$0xff]
    %v516 = vld [vmem:[%s1 + $0xf00] sm:$0xff]
    %v517 = vld [vmem:[%s1 + $0xf08] sm:$0xff]
    %v518 = vld [vmem:[%s1 + $0xf10] sm:$0xff]
    %v519 = vld [vmem:[%s1 + $0xf18] sm:$0xff]
    %v520 = vld [vmem:[%s1 + $0xf20] sm:$0xff]
    %v521 = vld [vmem:[%s1 + $0xf28] sm:$0xff]
    %v522 = vld [vmem:[%s1 + $0xf30] sm:$0xff]
    %v523 = vld [vmem:[%s1 + $0xf38] sm:$0xff]
    %v524 = vld [vmem:[%s1 + $0xf40] sm:$0xff]
    %v525 = vld [vmem:[%s1 + $0xf48] sm:$0xff]
    %v526 = vld [vmem:[%s1 + $0xf50] sm:$0xff]
    %v527 = vld [vmem:[%s1 + $0xf58] sm:$0xff]
    %v528 = vld [vmem:[%s1 + $0xf60] sm:$0xff]
    %v529 = vld [vmem:[%s1 + $0xf68] sm:$0xff]
    %v530 = vld [vmem:[%s1 + $0xf70] sm:$0xff]
    %v531 = vld [vmem:[%s1 + $0xf78] sm:$0xff]
    %v532 = vld [vmem:[%s1 + $0xf80] sm:$0xff]
    %v533 = vld [vmem:[%s1 + $0xf88] sm:$0xff]
    %v534 = vld [vmem:[%s1 + $0xf90] sm:$0xff]
    %v535 = vld [vmem:[%s1 + $0xf98] sm:$0xff]
    %v536 = vld [vmem:[%s1 + $0xfa0] sm:$0xff]
    %v537 = vld [vmem:[%s1 + $0xfa8] sm:$0xff]
    %v538 = vld [vmem:[%s1 + $0xfb0] sm:$0xff]
    %v539 = vld [vmem:[%s1 + $0xfb8] sm:$0xff]
    %v540 = vld [vmem:[%s1 + $0xfc0] sm:$0xff]
    %v541 = vld [vmem:[%s1 + $0xfc8] sm:$0xff]
    %v542 = vld [vmem:[%s1 + $0xfd0] sm:$0xff]
    %v543 = vld [vmem:[%s1 + $0xfd8] sm:$0xff]
    %v544 = vld [vmem:[%s1 + $0xfe0] sm:$0xff]
    %v545 = vld [vmem:[%s1 + $0xfe8] sm:$0xff]
    %v546 = vld [vmem:[%s1 + $0xff0] sm:$0xff]
    %v547 = vld [vmem:[%s1 + $0xff8] sm:$0xff]
    %v548 = vld [vmem:[%s2] sm:$0x1]
    %v550 = vlaneseq
    %v551 = vshrl.u32 %v550, 7
    %v552 = vsub.s32 0, %v551
    %v553 = vrot.slane %v548, %v552
    %v563 = vcombine.high %v28, %v28
    %v565 = vunpack.c.l.s4 1983009808
    %v566 = vunpack.c.0.s8 %v565
    %v567 = vlaneseq
    %v568 = vshrl.u32 %v567, 7
    %v569 = vsub.s32 %v566, %v568
    %v570 = vrot.slane %v28, %v569
    %v572 = vunpack.c.l.s4 1983009808
    %v573 = vunpack.c.0.s8 %v572
    %v574 = vlaneseq
    %v575 = vshrl.u32 %v574, 7
    %v576 = vsub.s32 %v573, %v575
    %v577 = vrot.slane %v563, %v576
    %v578 = vcombine.high %v570, %v570
    %v579 = vcombine.high %v577, %v577
    %v580 = vcombine.high %v29, %v29
    %v582 = vunpack.c.l.s4 1983009808
    %v583 = vunpack.c.0.s8 %v582
    %v584 = vlaneseq
    %v585 = vshrl.u32 %v584, 7
    %v586 = vsub.s32 %v583, %v585
    %v587 = vrot.slane %v29, %v586
    %v589 = vunpack.c.l.s4 1983009808
    %v590 = vunpack.c.0.s8 %v589
    %v591 = vlaneseq
    %v592 = vshrl.u32 %v591, 7
    %v593 = vsub.s32 %v590, %v592
    %v594 = vrot.slane %v580, %v593
    %v595 = vcombine.high %v587, %v587
    %v596 = vcombine.high %v594, %v594
    %v597 = vcombine.high %v30, %v30
    %v599 = vunpack.c.l.s4 1983009808
    %v600 = vunpack.c.0.s8 %v599
    %v601 = vlaneseq
    %v602 = vshrl.u32 %v601, 7
    %v603 = vsub.s32 %v600, %v602
    %v604 = vrot.slane %v30, %v603
    %v606 = vunpack.c.l.s4 1983009808
    %v607 = vunpack.c.0.s8 %v606
    %v608 = vlaneseq
    %v609 = vshrl.u32 %v608, 7
    %v610 = vsub.s32 %v607, %v609
    %v611 = vrot.slane %v597, %v610
    %v612 = vcombine.high %v604, %v604
    %v613 = vcombine.high %v611, %v611
    %v614 = vcombine.high %v31, %v31
    %v616 = vunpack.c.l.s4 1983009808
    %v617 = vunpack.c.0.s8 %v616
    %v618 = vlaneseq
    %v619 = vshrl.u32 %v618, 7
    %v620 = vsub.s32 %v617, %v619
    %v621 = vrot.slane %v31, %v620
    %v623 = vunpack.c.l.s4 1983009808
    %v624 = vunpack.c.0.s8 %v623
    %v625 = vlaneseq
    %v626 = vshrl.u32 %v625, 7
    %v627 = vsub.s32 %v624, %v626
    %v628 = vrot.slane %v614, %v627
    %v629 = vcombine.high %v621, %v621
    %v630 = vcombine.high %v628, %v628
    %v631 = vcombine.high %v32, %v32
    %v633 = vunpack.c.l.s4 1983009808
    %v634 = vunpack.c.0.s8 %v633
    %v635 = vlaneseq
    %v636 = vshrl.u32 %v635, 7
    %v637 = vsub.s32 %v634, %v636
    %v638 = vrot.slane %v32, %v637
    %v640 = vunpack.c.l.s4 1983009808
    %v641 = vunpack.c.0.s8 %v640
    %v642 = vlaneseq
    %v643 = vshrl.u32 %v642, 7
    %v644 = vsub.s32 %v641, %v643
    %v645 = vrot.slane %v631, %v644
    %v646 = vcombine.high %v638, %v638
    %v647 = vcombine.high %v645, %v645
    %v648 = vcombine.high %v33, %v33
    %v650 = vunpack.c.l.s4 1983009808
    %v651 = vunpack.c.0.s8 %v650
    %v652 = vlaneseq
    %v653 = vshrl.u32 %v652, 7
    %v654 = vsub.s32 %v651, %v653
    %v655 = vrot.slane %v33, %v654
    %v657 = vunpack.c.l.s4 1983009808
    %v658 = vunpack.c.0.s8 %v657
    %v659 = vlaneseq
    %v660 = vshrl.u32 %v659, 7
    %v661 = vsub.s32 %v658, %v660
    %v662 = vrot.slane %v648, %v661
    %v663 = vcombine.high %v655, %v655
    %v664 = vcombine.high %v662, %v662
    %v665 = vcombine.high %v34, %v34
    %v667 = vunpack.c.l.s4 1983009808
    %v668 = vunpack.c.0.s8 %v667
    %v669 = vlaneseq
    %v670 = vshrl.u32 %v669, 7
    %v671 = vsub.s32 %v668, %v670
    %v672 = vrot.slane %v34, %v671
    %v674 = vunpack.c.l.s4 1983009808
    %v675 = vunpack.c.0.s8 %v674
    %v676 = vlaneseq
    %v677 = vshrl.u32 %v676, 7
    %v678 = vsub.s32 %v675, %v677
    %v679 = vrot.slane %v665, %v678
    %v680 = vcombine.high %v672, %v672
    %v681 = vcombine.high %v679, %v679
    %v682 = vcombine.high %v35, %v35
    %v684 = vunpack.c.l.s4 1983009808
    %v685 = vunpack.c.0.s8 %v684
    %v686 = vlaneseq
    %v687 = vshrl.u32 %v686, 7
    %v688 = vsub.s32 %v685, %v687
    %v689 = vrot.slane %v35, %v688
    %v691 = vunpack.c.l.s4 1983009808
    %v692 = vunpack.c.0.s8 %v691
    %v693 = vlaneseq
    %v694 = vshrl.u32 %v693, 7
    %v695 = vsub.s32 %v692, %v694
    %v696 = vrot.slane %v682, %v695
    %v697 = vcombine.high %v689, %v689
    %v698 = vcombine.high %v696, %v696
    %731 = vmatprep.subr.mxu0 0.0
    %732 = vmatpush1.msra.mxu0 %v36
    %733 = vmatprep.subr.mxu0 0.0
    %734 = vmatpush1.msra.mxu0 %v37
    %735 = vmatprep.subr.mxu0 0.0
    %736 = vmatpush1.msra.mxu0 %v38
    %737 = vmatprep.subr.mxu0 0.0
    %738 = vmatpush1.msra.mxu0 %v39
    %739 = vmatprep.subr.mxu0 0.0
    %740 = vmatpush1.msra.mxu0 %v40
    %741 = vmatprep.subr.mxu0 0.0
    %742 = vmatpush1.msra.mxu0 %v41
    %743 = vmatprep.subr.mxu0 0.0
    %744 = vmatpush1.msra.mxu0 %v42
    %745 = vmatprep.subr.mxu0 0.0
    %746 = vmatpush1.msra.mxu0 %v43
    %747 = vmatprep.subr.mxu0 0.0
    %748 = vmatpush1.msra.mxu0 %v44
    %749 = vmatprep.subr.mxu0 0.0
    %750 = vmatpush1.msra.mxu0 %v45
    %751 = vmatprep.subr.mxu0 0.0
    %752 = vmatpush1.msra.mxu0 %v46
    %753 = vmatprep.subr.mxu0 0.0
    %754 = vmatpush1.msra.mxu0 %v47
    %755 = vmatprep.subr.mxu0 0.0
    %756 = vmatpush1.msra.mxu0 %v48
    %757 = vmatprep.subr.mxu0 0.0
    %758 = vmatpush1.msra.mxu0 %v49
    %759 = vmatprep.subr.mxu0 0.0
    %760 = vmatpush1.msra.mxu0 %v50
    %761 = vmatprep.subr.mxu0 0.0
    %762 = vmatpush1.msra.mxu0 %v51
    %763 = vmatprep.subr.mxu0 0.0
    %764 = vmatpush1.msra.mxu0 %v52
    %765 = vmatprep.subr.mxu0 0.0
    %766 = vmatpush1.msra.mxu0 %v53
    %767 = vmatprep.subr.mxu0 0.0
    %768 = vmatpush1.msra.mxu0 %v54
    %769 = vmatprep.subr.mxu0 0.0
    %770 = vmatpush1.msra.mxu0 %v55
    %771 = vmatprep.subr.mxu0 0.0
    %772 = vmatpush1.msra.mxu0 %v56
    %773 = vmatprep.subr.mxu0 0.0
    %774 = vmatpush1.msra.mxu0 %v57
    %775 = vmatprep.subr.mxu0 0.0
    %776 = vmatpush1.msra.mxu0 %v58
    %777 = vmatprep.subr.mxu0 0.0
    %778 = vmatpush1.msra.mxu0 %v59
    %779 = vmatprep.subr.mxu0 0.0
    %780 = vmatpush1.msra.mxu0 %v60
    %781 = vmatprep.subr.mxu0 0.0
    %782 = vmatpush1.msra.mxu0 %v61
    %783 = vmatprep.subr.mxu0 0.0
    %784 = vmatpush1.msra.mxu0 %v62
    %785 = vmatprep.subr.mxu0 0.0
    %786 = vmatpush1.msra.mxu0 %v63
    %787 = vmatprep.subr.mxu0 0.0
    %788 = vmatpush1.msra.mxu0 %v64
    %789 = vmatprep.subr.mxu0 0.0
    %790 = vmatpush1.msra.mxu0 %v65
    %791 = vmatprep.subr.mxu0 0.0
    %792 = vmatpush1.msra.mxu0 %v66
    %793 = vmatprep.subr.mxu0 0.0
    %794 = vmatpush1.msra.mxu0 %v67
    %795 = vmatprep.mubr.f32.mxu0 %v578
    %796 = vmatmul.mubr.f32.gmra.mrb[0].mxu0 %v570
    %v797 = vpop.f32.mrb[0].mxu0
    %v798 = vadd.f32 %v553, %v797
    %v799 = vpop.f32.mrb[0].mxu0
    %800 = vdwg.mxu0
    %801 = vmatprep.subr.mxu0 0.0
    %802 = vmatpush1.msra.mxu0 %v68
    %803 = vmatprep.subr.mxu0 0.0
    %804 = vmatpush1.msra.mxu0 %v69
    %805 = vmatprep.subr.mxu0 0.0
    %806 = vmatpush1.msra.mxu0 %v70
    %807 = vmatprep.subr.mxu0 0.0
    %808 = vmatpush1.msra.mxu0 %v71
    %809 = vmatprep.subr.mxu0 0.0
    %810 = vmatpush1.msra.mxu0 %v72
    %811 = vmatprep.subr.mxu0 0.0
    %812 = vmatpush1.msra.mxu0 %v73
    %813 = vmatprep.subr.mxu0 0.0
    %814 = vmatpush1.msra.mxu0 %v74
    %815 = vmatprep.subr.mxu0 0.0
    %816 = vmatpush1.msra.mxu0 %v75
    %817 = vmatprep.subr.mxu0 0.0
    %818 = vmatpush1.msra.mxu0 %v76
    %819 = vmatprep.subr.mxu0 0.0
    %820 = vmatpush1.msra.mxu0 %v77
    %821 = vmatprep.subr.mxu0 0.0
    %822 = vmatpush1.msra.mxu0 %v78
    %823 = vmatprep.subr.mxu0 0.0
    %824 = vmatpush1.msra.mxu0 %v79
    %825 = vmatprep.subr.mxu0 0.0
    %826 = vmatpush1.msra.mxu0 %v80
    %827 = vmatprep.subr.mxu0 0.0
    %828 = vmatpush1.msra.mxu0 %v81
    %829 = vmatprep.subr.mxu0 0.0
    %830 = vmatpush1.msra.mxu0 %v82
    %831 = vmatprep.subr.mxu0 0.0
    %832 = vmatpush1.msra.mxu0 %v83
    %833 = vmatprep.subr.mxu0 0.0
    %834 = vmatpush1.msra.mxu0 %v84
    %835 = vmatprep.subr.mxu0 0.0
    %836 = vmatpush1.msra.mxu0 %v85
    %837 = vmatprep.subr.mxu0 0.0
    %838 = vmatpush1.msra.mxu0 %v86
    %839 = vmatprep.subr.mxu0 0.0
    %840 = vmatpush1.msra.mxu0 %v87
    %841 = vmatprep.subr.mxu0 0.0
    %842 = vmatpush1.msra.mxu0 %v88
    %843 = vmatprep.subr.mxu0 0.0
    %844 = vmatpush1.msra.mxu0 %v89
    %845 = vmatprep.subr.mxu0 0.0
    %846 = vmatpush1.msra.mxu0 %v90
    %847 = vmatprep.subr.mxu0 0.0
    %848 = vmatpush1.msra.mxu0 %v91
    %849 = vmatprep.subr.mxu0 0.0
    %850 = vmatpush1.msra.mxu0 %v92
    %851 = vmatprep.subr.mxu0 0.0
    %852 = vmatpush1.msra.mxu0 %v93
    %853 = vmatprep.subr.mxu0 0.0
    %854 = vmatpush1.msra.mxu0 %v94
    %855 = vmatprep.subr.mxu0 0.0
    %856 = vmatpush1.msra.mxu0 %v95
    %857 = vmatprep.subr.mxu0 0.0
    %858 = vmatpush1.msra.mxu0 %v96
    %859 = vmatprep.subr.mxu0 0.0
    %860 = vmatpush1.msra.mxu0 %v97
    %861 = vmatprep.subr.mxu0 0.0
    %862 = vmatpush1.msra.mxu0 %v98
    %863 = vmatprep.subr.mxu0 0.0
    %864 = vmatpush1.msra.mxu0 %v99
    %865 = vmatprep.mubr.f32.mxu0 %v579
    %866 = vmatmul.mubr.f32.gmra.mrb[0].mxu0 %v577
    %v867 = vpop.f32.mrb[0].mxu0
    %v868 = vadd.f32 %v798, %v867
    %v869 = vpop.f32.mrb[0].mxu0
    %870 = vdwg.mxu0
    %871 = vmatprep.subr.mxu0 0.0
    %872 = vmatpush1.msra.mxu0 %v100
    %873 = vmatprep.subr.mxu0 0.0
    %874 = vmatpush1.msra.mxu0 %v101
    %875 = vmatprep.subr.mxu0 0.0
    %876 = vmatpush1.msra.mxu0 %v102
    %877 = vmatprep.subr.mxu0 0.0
    %878 = vmatpush1.msra.mxu0 %v103
    %879 = vmatprep.subr.mxu0 0.0
    %880 = vmatpush1.msra.mxu0 %v104
    %881 = vmatprep.subr.mxu0 0.0
    %882 = vmatpush1.msra.mxu0 %v105
    %883 = vmatprep.subr.mxu0 0.0
    %884 = vmatpush1.msra.mxu0 %v106
    %885 = vmatprep.subr.mxu0 0.0
    %886 = vmatpush1.msra.mxu0 %v107
    %887 = vmatprep.subr.mxu0 0.0
    %888 = vmatpush1.msra.mxu0 %v108
    %889 = vmatprep.subr.mxu0 0.0
    %890 = vmatpush1.msra.mxu0 %v109
    %891 = vmatprep.subr.mxu0 0.0
    %892 = vmatpush1.msra.mxu0 %v110
    %893 = vmatprep.subr.mxu0 0.0
    %894 = vmatpush1.msra.mxu0 %v111
    %895 = vmatprep.subr.mxu0 0.0
    %896 = vmatpush1.msra.mxu0 %v112
    %897 = vmatprep.subr.mxu0 0.0
    %898 = vmatpush1.msra.mxu0 %v113
    %899 = vmatprep.subr.mxu0 0.0
    %900 = vmatpush1.msra.mxu0 %v114
    %901 = vmatprep.subr.mxu0 0.0
    %902 = vmatpush1.msra.mxu0 %v115
    %903 = vmatprep.subr.mxu0 0.0
    %904 = vmatpush1.msra.mxu0 %v116
    %905 = vmatprep.subr.mxu0 0.0
    %906 = vmatpush1.msra.mxu0 %v117
    %907 = vmatprep.subr.mxu0 0.0
    %908 = vmatpush1.msra.mxu0 %v118
    %909 = vmatprep.subr.mxu0 0.0
    %910 = vmatpush1.msra.mxu0 %v119
    %911 = vmatprep.subr.mxu0 0.0
    %912 = vmatpush1.msra.mxu0 %v120
    %913 = vmatprep.subr.mxu0 0.0
    %914 = vmatpush1.msra.mxu0 %v121
    %915 = vmatprep.subr.mxu0 0.0
    %916 = vmatpush1.msra.mxu0 %v122
    %917 = vmatprep.subr.mxu0 0.0
    %918 = vmatpush1.msra.mxu0 %v123
    %919 = vmatprep.subr.mxu0 0.0
    %920 = vmatpush1.msra.mxu0 %v124
    %921 = vmatprep.subr.mxu0 0.0
    %922 = vmatpush1.msra.mxu0 %v125
    %923 = vmatprep.subr.mxu0 0.0
    %924 = vmatpush1.msra.mxu0 %v126
    %925 = vmatprep.subr.mxu0 0.0
    %926 = vmatpush1.msra.mxu0 %v127
    %927 = vmatprep.subr.mxu0 0.0
    %928 = vmatpush1.msra.mxu0 %v128
    %929 = vmatprep.subr.mxu0 0.0
    %930 = vmatpush1.msra.mxu0 %v129
    %931 = vmatprep.subr.mxu0 0.0
    %932 = vmatpush1.msra.mxu0 %v130
    %933 = vmatprep.subr.mxu0 0.0
    %934 = vmatpush1.msra.mxu0 %v131
    %935 = vmatprep.mubr.f32.mxu0 %v595
    %936 = vmatmul.mubr.f32.gmra.mrb[0].mxu0 %v587
    %v937 = vpop.f32.mrb[0].mxu0
    %v938 = vadd.f32 %v868, %v937
    %v939 = vpop.f32.mrb[0].mxu0
    %940 = vdwg.mxu0
    %941 = vmatprep.subr.mxu0 0.0
    %942 = vmatpush1.msra.mxu0 %v132
    %943 = vmatprep.subr.mxu0 0.0
    %944 = vmatpush1.msra.mxu0 %v133
    %945 = vmatprep.subr.mxu0 0.0
    %946 = vmatpush1.msra.mxu0 %v134
    %947 = vmatprep.subr.mxu0 0.0
    %948 = vmatpush1.msra.mxu0 %v135
    %949 = vmatprep.subr.mxu0 0.0
    %950 = vmatpush1.msra.mxu0 %v136
    %951 = vmatprep.subr.mxu0 0.0
    %952 = vmatpush1.msra.mxu0 %v137
    %953 = vmatprep.subr.mxu0 0.0
    %954 = vmatpush1.msra.mxu0 %v138
    %955 = vmatprep.subr.mxu0 0.0
    %956 = vmatpush1.msra.mxu0 %v139
    %957 = vmatprep.subr.mxu0 0.0
    %958 = vmatpush1.msra.mxu0 %v140
    %959 = vmatprep.subr.mxu0 0.0
    %960 = vmatpush1.msra.mxu0 %v141
    %961 = vmatprep.subr.mxu0 0.0
    %962 = vmatpush1.msra.mxu0 %v142
    %963 = vmatprep.subr.mxu0 0.0
    %964 = vmatpush1.msra.mxu0 %v143
    %965 = vmatprep.subr.mxu0 0.0
    %966 = vmatpush1.msra.mxu0 %v144
    %967 = vmatprep.subr.mxu0 0.0
    %968 = vmatpush1.msra.mxu0 %v145
    %969 = vmatprep.subr.mxu0 0.0
    %970 = vmatpush1.msra.mxu0 %v146
    %971 = vmatprep.subr.mxu0 0.0
    %972 = vmatpush1.msra.mxu0 %v147
    %973 = vmatprep.subr.mxu0 0.0
    %974 = vmatpush1.msra.mxu0 %v148
    %975 = vmatprep.subr.mxu0 0.0
    %976 = vmatpush1.msra.mxu0 %v149
    %977 = vmatprep.subr.mxu0 0.0
    %978 = vmatpush1.msra.mxu0 %v150
    %979 = vmatprep.subr.mxu0 0.0
    %980 = vmatpush1.msra.mxu0 %v151
    %981 = vmatprep.subr.mxu0 0.0
    %982 = vmatpush1.msra.mxu0 %v152
    %983 = vmatprep.subr.mxu0 0.0
    %984 = vmatpush1.msra.mxu0 %v153
    %985 = vmatprep.subr.mxu0 0.0
    %986 = vmatpush1.msra.mxu0 %v154
    %987 = vmatprep.subr.mxu0 0.0
    %988 = vmatpush1.msra.mxu0 %v155
    %989 = vmatprep.subr.mxu0 0.0
    %990 = vmatpush1.msra.mxu0 %v156
    %991 = vmatprep.subr.mxu0 0.0
    %992 = vmatpush1.msra.mxu0 %v157
    %993 = vmatprep.subr.mxu0 0.0
    %994 = vmatpush1.msra.mxu0 %v158
    %995 = vmatprep.subr.mxu0 0.0
    %996 = vmatpush1.msra.mxu0 %v159
    %997 = vmatprep.subr.mxu0 0.0
    %998 = vmatpush1.msra.mxu0 %v160
    %999 = vmatprep.subr.mxu0 0.0
    %1000 = vmatpush1.msra.mxu0 %v161
    %1001 = vmatprep.subr.mxu0 0.0
    %1002 = vmatpush1.msra.mxu0 %v162
    %1003 = vmatprep.subr.mxu0 0.0
    %1004 = vmatpush1.msra.mxu0 %v163
    %1005 = vmatprep.mubr.f32.mxu0 %v596
    %1006 = vmatmul.mubr.f32.gmra.mrb[0].mxu0 %v594
    %v1007 = vpop.f32.mrb[0].mxu0
    %v1008 = vadd.f32 %v938, %v1007
    %v1009 = vpop.f32.mrb[0].mxu0
    %1010 = vdwg.mxu0
    %1011 = vmatprep.subr.mxu0 0.0
    %1012 = vmatpush1.msra.mxu0 %v164
    %1013 = vmatprep.subr.mxu0 0.0
    %1014 = vmatpush1.msra.mxu0 %v165
    %1015 = vmatprep.subr.mxu0 0.0
    %1016 = vmatpush1.msra.mxu0 %v166
    %1017 = vmatprep.subr.mxu0 0.0
    %1018 = vmatpush1.msra.mxu0 %v167
    %1019 = vmatprep.subr.mxu0 0.0
    %1020 = vmatpush1.msra.mxu0 %v168
    %1021 = vmatprep.subr.mxu0 0.0
    %1022 = vmatpush1.msra.mxu0 %v169
    %1023 = vmatprep.subr.mxu0 0.0
    %1024 = vmatpush1.msra.mxu0 %v170
    %1025 = vmatprep.subr.mxu0 0.0
    %1026 = vmatpush1.msra.mxu0 %v171
    %1027 = vmatprep.subr.mxu0 0.0
    %1028 = vmatpush1.msra.mxu0 %v172
    %1029 = vmatprep.subr.mxu0 0.0
    %1030 = vmatpush1.msra.mxu0 %v173
    %1031 = vmatprep.subr.mxu0 0.0
    %1032 = vmatpush1.msra.mxu0 %v174
    %1033 = vmatprep.subr.mxu0 0.0
    %1034 = vmatpush1.msra.mxu0 %v175
    %1035 = vmatprep.subr.mxu0 0.0
    %1036 = vmatpush1.msra.mxu0 %v176
    %1037 = vmatprep.subr.mxu0 0.0
    %1038 = vmatpush1.msra.mxu0 %v177
    %1039 = vmatprep.subr.mxu0 0.0
    %1040 = vmatpush1.msra.mxu0 %v178
    %1041 = vmatprep.subr.mxu0 0.0
    %1042 = vmatpush1.msra.mxu0 %v179
    %1043 = vmatprep.subr.mxu0 0.0
    %1044 = vmatpush1.msra.mxu0 %v180
    %1045 = vmatprep.subr.mxu0 0.0
    %1046 = vmatpush1.msra.mxu0 %v181
    %1047 = vmatprep.subr.mxu0 0.0
    %1048 = vmatpush1.msra.mxu0 %v182
    %1049 = vmatprep.subr.mxu0 0.0
    %1050 = vmatpush1.msra.mxu0 %v183
    %1051 = vmatprep.subr.mxu0 0.0
    %1052 = vmatpush1.msra.mxu0 %v184
    %1053 = vmatprep.subr.mxu0 0.0
    %1054 = vmatpush1.msra.mxu0 %v185
    %1055 = vmatprep.subr.mxu0 0.0
    %1056 = vmatpush1.msra.mxu0 %v186
    %1057 = vmatprep.subr.mxu0 0.0
    %1058 = vmatpush1.msra.mxu0 %v187
    %1059 = vmatprep.subr.mxu0 0.0
    %1060 = vmatpush1.msra.mxu0 %v188
    %1061 = vmatprep.subr.mxu0 0.0
    %1062 = vmatpush1.msra.mxu0 %v189
    %1063 = vmatprep.subr.mxu0 0.0
    %1064 = vmatpush1.msra.mxu0 %v190
    %1065 = vmatprep.subr.mxu0 0.0
    %1066 = vmatpush1.msra.mxu0 %v191
    %1067 = vmatprep.subr.mxu0 0.0
    %1068 = vmatpush1.msra.mxu0 %v192
    %1069 = vmatprep.subr.mxu0 0.0
    %1070 = vmatpush1.msra.mxu0 %v193
    %1071 = vmatprep.subr.mxu0 0.0
    %1072 = vmatpush1.msra.mxu0 %v194
    %1073 = vmatprep.subr.mxu0 0.0
    %1074 = vmatpush1.msra.mxu0 %v195
    %1075 = vmatprep.mubr.f32.mxu0 %v612
    %1076 = vmatmul.mubr.f32.gmra.mrb[0].mxu0 %v604
    %v1077 = vpop.f32.mrb[0].mxu0
    %v1078 = vadd.f32 %v1008, %v1077
    %v1079 = vpop.f32.mrb[0].mxu0
    %1080 = vdwg.mxu0
    %1081 = vmatprep.subr.mxu0 0.0
    %1082 = vmatpush1.msra.mxu0 %v196
    %1083 = vmatprep.subr.mxu0 0.0
    %1084 = vmatpush1.msra.mxu0 %v197
    %1085 = vmatprep.subr.mxu0 0.0
    %1086 = vmatpush1.msra.mxu0 %v198
    %1087 = vmatprep.subr.mxu0 0.0
    %1088 = vmatpush1.msra.mxu0 %v199
    %1089 = vmatprep.subr.mxu0 0.0
    %1090 = vmatpush1.msra.mxu0 %v200
    %1091 = vmatprep.subr.mxu0 0.0
    %1092 = vmatpush1.msra.mxu0 %v201
    %1093 = vmatprep.subr.mxu0 0.0
    %1094 = vmatpush1.msra.mxu0 %v202
    %1095 = vmatprep.subr.mxu0 0.0
    %1096 = vmatpush1.msra.mxu0 %v203
    %1097 = vmatprep.subr.mxu0 0.0
    %1098 = vmatpush1.msra.mxu0 %v204
    %1099 = vmatprep.subr.mxu0 0.0
    %1100 = vmatpush1.msra.mxu0 %v205
    %1101 = vmatprep.subr.mxu0 0.0
    %1102 = vmatpush1.msra.mxu0 %v206
    %1103 = vmatprep.subr.mxu0 0.0
    %1104 = vmatpush1.msra.mxu0 %v207
    %1105 = vmatprep.subr.mxu0 0.0
    %1106 = vmatpush1.msra.mxu0 %v208
    %1107 = vmatprep.subr.mxu0 0.0
    %1108 = vmatpush1.msra.mxu0 %v209
    %1109 = vmatprep.subr.mxu0 0.0
    %1110 = vmatpush1.msra.mxu0 %v210
    %1111 = vmatprep.subr.mxu0 0.0
    %1112 = vmatpush1.msra.mxu0 %v211
    %1113 = vmatprep.subr.mxu0 0.0
    %1114 = vmatpush1.msra.mxu0 %v212
    %1115 = vmatprep.subr.mxu0 0.0
    %1116 = vmatpush1.msra.mxu0 %v213
    %1117 = vmatprep.subr.mxu0 0.0
    %1118 = vmatpush1.msra.mxu0 %v214
    %1119 = vmatprep.subr.mxu0 0.0
    %1120 = vmatpush1.msra.mxu0 %v215
    %1121 = vmatprep.subr.mxu0 0.0
    %1122 = vmatpush1.msra.mxu0 %v216
    %1123 = vmatprep.subr.mxu0 0.0
    %1124 = vmatpush1.msra.mxu0 %v217
    %1125 = vmatprep.subr.mxu0 0.0
    %1126 = vmatpush1.msra.mxu0 %v218
    %1127 = vmatprep.subr.mxu0 0.0
    %1128 = vmatpush1.msra.mxu0 %v219
    %1129 = vmatprep.subr.mxu0 0.0
    %1130 = vmatpush1.msra.mxu0 %v220
    %1131 = vmatprep.subr.mxu0 0.0
    %1132 = vmatpush1.msra.mxu0 %v221
    %1133 = vmatprep.subr.mxu0 0.0
    %1134 = vmatpush1.msra.mxu0 %v222
    %1135 = vmatprep.subr.mxu0 0.0
    %1136 = vmatpush1.msra.mxu0 %v223
    %1137 = vmatprep.subr.mxu0 0.0
    %1138 = vmatpush1.msra.mxu0 %v224
    %1139 = vmatprep.subr.mxu0 0.0
    %1140 = vmatpush1.msra.mxu0 %v225
    %1141 = vmatprep.subr.mxu0 0.0
    %1142 = vmatpush1.msra.mxu0 %v226
    %1143 = vmatprep.subr.mxu0 0.0
    %1144 = vmatpush1.msra.mxu0 %v227
    %1145 = vmatprep.mubr.f32.mxu0 %v613
    %1146 = vmatmul.mubr.f32.gmra.mrb[0].mxu0 %v611
    %v1147 = vpop.f32.mrb[0].mxu0
    %v1148 = vadd.f32 %v1078, %v1147
    %v1149 = vpop.f32.mrb[0].mxu0
    %1150 = vdwg.mxu0
    %1151 = vmatprep.subr.mxu0 0.0
    %1152 = vmatpush1.msra.mxu0 %v228
    %1153 = vmatprep.subr.mxu0 0.0
    %1154 = vmatpush1.msra.mxu0 %v229
    %1155 = vmatprep.subr.mxu0 0.0
    %1156 = vmatpush1.msra.mxu0 %v230
    %1157 = vmatprep.subr.mxu0 0.0
    %1158 = vmatpush1.msra.mxu0 %v231
    %1159 = vmatprep.subr.mxu0 0.0
    %1160 = vmatpush1.msra.mxu0 %v232
    %1161 = vmatprep.subr.mxu0 0.0
    %1162 = vmatpush1.msra.mxu0 %v233
    %1163 = vmatprep.subr.mxu0 0.0
    %1164 = vmatpush1.msra.mxu0 %v234
    %1165 = vmatprep.subr.mxu0 0.0
    %1166 = vmatpush1.msra.mxu0 %v235
    %1167 = vmatprep.subr.mxu0 0.0
    %1168 = vmatpush1.msra.mxu0 %v236
    %1169 = vmatprep.subr.mxu0 0.0
    %1170 = vmatpush1.msra.mxu0 %v237
    %1171 = vmatprep.subr.mxu0 0.0
    %1172 = vmatpush1.msra.mxu0 %v238
    %1173 = vmatprep.subr.mxu0 0.0
    %1174 = vmatpush1.msra.mxu0 %v239
    %1175 = vmatprep.subr.mxu0 0.0
    %1176 = vmatpush1.msra.mxu0 %v240
    %1177 = vmatprep.subr.mxu0 0.0
    %1178 = vmatpush1.msra.mxu0 %v241
    %1179 = vmatprep.subr.mxu0 0.0
    %1180 = vmatpush1.msra.mxu0 %v242
    %1181 = vmatprep.subr.mxu0 0.0
    %1182 = vmatpush1.msra.mxu0 %v243
    %1183 = vmatprep.subr.mxu0 0.0
    %1184 = vmatpush1.msra.mxu0 %v244
    %1185 = vmatprep.subr.mxu0 0.0
    %1186 = vmatpush1.msra.mxu0 %v245
    %1187 = vmatprep.subr.mxu0 0.0
    %1188 = vmatpush1.msra.mxu0 %v246
    %1189 = vmatprep.subr.mxu0 0.0
    %1190 = vmatpush1.msra.mxu0 %v247
    %1191 = vmatprep.subr.mxu0 0.0
    %1192 = vmatpush1.msra.mxu0 %v248
    %1193 = vmatprep.subr.mxu0 0.0
    %1194 = vmatpush1.msra.mxu0 %v249
    %1195 = vmatprep.subr.mxu0 0.0
    %1196 = vmatpush1.msra.mxu0 %v250
    %1197 = vmatprep.subr.mxu0 0.0
    %1198 = vmatpush1.msra.mxu0 %v251
    %1199 = vmatprep.subr.mxu0 0.0
    %1200 = vmatpush1.msra.mxu0 %v252
    %1201 = vmatprep.subr.mxu0 0.0
    %1202 = vmatpush1.msra.mxu0 %v253
    %1203 = vmatprep.subr.mxu0 0.0
    %1204 = vmatpush1.msra.mxu0 %v254
    %1205 = vmatprep.subr.mxu0 0.0
    %1206 = vmatpush1.msra.mxu0 %v255
    %1207 = vmatprep.subr.mxu0 0.0
    %1208 = vmatpush1.msra.mxu0 %v256
    %1209 = vmatprep.subr.mxu0 0.0
    %1210 = vmatpush1.msra.mxu0 %v257
    %1211 = vmatprep.subr.mxu0 0.0
    %1212 = vmatpush1.msra.mxu0 %v258
    %1213 = vmatprep.subr.mxu0 0.0
    %1214 = vmatpush1.msra.mxu0 %v259
    %1215 = vmatprep.mubr.f32.mxu0 %v629
    %1216 = vmatmul.mubr.f32.gmra.mrb[0].mxu0 %v621
    %v1217 = vpop.f32.mrb[0].mxu0
    %v1218 = vadd.f32 %v1148, %v1217
    %v1219 = vpop.f32.mrb[0].mxu0
    %1220 = vdwg.mxu0
    %1221 = vmatprep.subr.mxu0 0.0
    %1222 = vmatpush1.msra.mxu0 %v260
    %1223 = vmatprep.subr.mxu0 0.0
    %1224 = vmatpush1.msra.mxu0 %v261
    %1225 = vmatprep.subr.mxu0 0.0
    %1226 = vmatpush1.msra.mxu0 %v262
    %1227 = vmatprep.subr.mxu0 0.0
    %1228 = vmatpush1.msra.mxu0 %v263
    %1229 = vmatprep.subr.mxu0 0.0
    %1230 = vmatpush1.msra.mxu0 %v264
    %1231 = vmatprep.subr.mxu0 0.0
    %1232 = vmatpush1.msra.mxu0 %v265
    %1233 = vmatprep.subr.mxu0 0.0
    %1234 = vmatpush1.msra.mxu0 %v266
    %1235 = vmatprep.subr.mxu0 0.0
    %1236 = vmatpush1.msra.mxu0 %v267
    %1237 = vmatprep.subr.mxu0 0.0
    %1238 = vmatpush1.msra.mxu0 %v268
    %1239 = vmatprep.subr.mxu0 0.0
    %1240 = vmatpush1.msra.mxu0 %v269
    %1241 = vmatprep.subr.mxu0 0.0
    %1242 = vmatpush1.msra.mxu0 %v270
    %1243 = vmatprep.subr.mxu0 0.0
    %1244 = vmatpush1.msra.mxu0 %v271
    %1245 = vmatprep.subr.mxu0 0.0
    %1246 = vmatpush1.msra.mxu0 %v272
    %1247 = vmatprep.subr.mxu0 0.0
    %1248 = vmatpush1.msra.mxu0 %v273
    %1249 = vmatprep.subr.mxu0 0.0
    %1250 = vmatpush1.msra.mxu0 %v274
    %1251 = vmatprep.subr.mxu0 0.0
    %1252 = vmatpush1.msra.mxu0 %v275
    %1253 = vmatprep.subr.mxu0 0.0
    %1254 = vmatpush1.msra.mxu0 %v276
    %1255 = vmatprep.subr.mxu0 0.0
    %1256 = vmatpush1.msra.mxu0 %v277
    %1257 = vmatprep.subr.mxu0 0.0
    %1258 = vmatpush1.msra.mxu0 %v278
    %1259 = vmatprep.subr.mxu0 0.0
    %1260 = vmatpush1.msra.mxu0 %v279
    %1261 = vmatprep.subr.mxu0 0.0
    %1262 = vmatpush1.msra.mxu0 %v280
    %1263 = vmatprep.subr.mxu0 0.0
    %1264 = vmatpush1.msra.mxu0 %v281
    %1265 = vmatprep.subr.mxu0 0.0
    %1266 = vmatpush1.msra.mxu0 %v282
    %1267 = vmatprep.subr.mxu0 0.0
    %1268 = vmatpush1.msra.mxu0 %v283
    %1269 = vmatprep.subr.mxu0 0.0
    %1270 = vmatpush1.msra.mxu0 %v284
    %1271 = vmatprep.subr.mxu0 0.0
    %1272 = vmatpush1.msra.mxu0 %v285
    %1273 = vmatprep.subr.mxu0 0.0
    %1274 = vmatpush1.msra.mxu0 %v286
    %1275 = vmatprep.subr.mxu0 0.0
    %1276 = vmatpush1.msra.mxu0 %v287
    %1277 = vmatprep.subr.mxu0 0.0
    %1278 = vmatpush1.msra.mxu0 %v288
    %1279 = vmatprep.subr.mxu0 0.0
    %1280 = vmatpush1.msra.mxu0 %v289
    %1281 = vmatprep.subr.mxu0 0.0
    %1282 = vmatpush1.msra.mxu0 %v290
    %1283 = vmatprep.subr.mxu0 0.0
    %1284 = vmatpush1.msra.mxu0 %v291
    %1285 = vmatprep.mubr.f32.mxu0 %v630
    %1286 = vmatmul.mubr.f32.gmra.mrb[0].mxu0 %v628
    %v1287 = vpop.f32.mrb[0].mxu0
    %v1288 = vadd.f32 %v1218, %v1287
    %v1289 = vpop.f32.mrb[0].mxu0
    %1290 = vdwg.mxu0
    %1291 = vmatprep.subr.mxu0 0.0
    %1292 = vmatpush1.msra.mxu0 %v292
    %1293 = vmatprep.subr.mxu0 0.0
    %1294 = vmatpush1.msra.mxu0 %v293
    %1295 = vmatprep.subr.mxu0 0.0
    %1296 = vmatpush1.msra.mxu0 %v294
    %1297 = vmatprep.subr.mxu0 0.0
    %1298 = vmatpush1.msra.mxu0 %v295
    %1299 = vmatprep.subr.mxu0 0.0
    %1300 = vmatpush1.msra.mxu0 %v296
    %1301 = vmatprep.subr.mxu0 0.0
    %1302 = vmatpush1.msra.mxu0 %v297
    %1303 = vmatprep.subr.mxu0 0.0
    %1304 = vmatpush1.msra.mxu0 %v298
    %1305 = vmatprep.subr.mxu0 0.0
    %1306 = vmatpush1.msra.mxu0 %v299
    %1307 = vmatprep.subr.mxu0 0.0
    %1308 = vmatpush1.msra.mxu0 %v300
    %1309 = vmatprep.subr.mxu0 0.0
    %1310 = vmatpush1.msra.mxu0 %v301
    %1311 = vmatprep.subr.mxu0 0.0
    %1312 = vmatpush1.msra.mxu0 %v302
    %1313 = vmatprep.subr.mxu0 0.0
    %1314 = vmatpush1.msra.mxu0 %v303
    %1315 = vmatprep.subr.mxu0 0.0
    %1316 = vmatpush1.msra.mxu0 %v304
    %1317 = vmatprep.subr.mxu0 0.0
    %1318 = vmatpush1.msra.mxu0 %v305
    %1319 = vmatprep.subr.mxu0 0.0
    %1320 = vmatpush1.msra.mxu0 %v306
    %1321 = vmatprep.subr.mxu0 0.0
    %1322 = vmatpush1.msra.mxu0 %v307
    %1323 = vmatprep.subr.mxu0 0.0
    %1324 = vmatpush1.msra.mxu0 %v308
    %1325 = vmatprep.subr.mxu0 0.0
    %1326 = vmatpush1.msra.mxu0 %v309
    %1327 = vmatprep.subr.mxu0 0.0
    %1328 = vmatpush1.msra.mxu0 %v310
    %1329 = vmatprep.subr.mxu0 0.0
    %1330 = vmatpush1.msra.mxu0 %v311
    %1331 = vmatprep.subr.mxu0 0.0
    %1332 = vmatpush1.msra.mxu0 %v312
    %1333 = vmatprep.subr.mxu0 0.0
    %1334 = vmatpush1.msra.mxu0 %v313
    %1335 = vmatprep.subr.mxu0 0.0
    %1336 = vmatpush1.msra.mxu0 %v314
    %1337 = vmatprep.subr.mxu0 0.0
    %1338 = vmatpush1.msra.mxu0 %v315
    %1339 = vmatprep.subr.mxu0 0.0
    %1340 = vmatpush1.msra.mxu0 %v316
    %1341 = vmatprep.subr.mxu0 0.0
    %1342 = vmatpush1.msra.mxu0 %v317
    %1343 = vmatprep.subr.mxu0 0.0
    %1344 = vmatpush1.msra.mxu0 %v318
    %1345 = vmatprep.subr.mxu0 0.0
    %1346 = vmatpush1.msra.mxu0 %v319
    %1347 = vmatprep.subr.mxu0 0.0
    %1348 = vmatpush1.msra.mxu0 %v320
    %1349 = vmatprep.subr.mxu0 0.0
    %1350 = vmatpush1.msra.mxu0 %v321
    %1351 = vmatprep.subr.mxu0 0.0
    %1352 = vmatpush1.msra.mxu0 %v322
    %1353 = vmatprep.subr.mxu0 0.0
    %1354 = vmatpush1.msra.mxu0 %v323
    %1355 = vmatprep.mubr.f32.mxu0 %v646
    %1356 = vmatmul.mubr.f32.gmra.mrb[0].mxu0 %v638
    %v1357 = vpop.f32.mrb[0].mxu0
    %v1358 = vadd.f32 %v1288, %v1357
    %v1359 = vpop.f32.mrb[0].mxu0
    %1360 = vdwg.mxu0
    %1361 = vmatprep.subr.mxu0 0.0
    %1362 = vmatpush1.msra.mxu0 %v324
    %1363 = vmatprep.subr.mxu0 0.0
    %1364 = vmatpush1.msra.mxu0 %v325
    %1365 = vmatprep.subr.mxu0 0.0
    %1366 = vmatpush1.msra.mxu0 %v326
    %1367 = vmatprep.subr.mxu0 0.0
    %1368 = vmatpush1.msra.mxu0 %v327
    %1369 = vmatprep.subr.mxu0 0.0
    %1370 = vmatpush1.msra.mxu0 %v328
    %1371 = vmatprep.subr.mxu0 0.0
    %1372 = vmatpush1.msra.mxu0 %v329
    %1373 = vmatprep.subr.mxu0 0.0
    %1374 = vmatpush1.msra.mxu0 %v330
    %1375 = vmatprep.subr.mxu0 0.0
    %1376 = vmatpush1.msra.mxu0 %v331
    %1377 = vmatprep.subr.mxu0 0.0
    %1378 = vmatpush1.msra.mxu0 %v332
    %1379 = vmatprep.subr.mxu0 0.0
    %1380 = vmatpush1.msra.mxu0 %v333
    %1381 = vmatprep.subr.mxu0 0.0
    %1382 = vmatpush1.msra.mxu0 %v334
    %1383 = vmatprep.subr.mxu0 0.0
    %1384 = vmatpush1.msra.mxu0 %v335
    %1385 = vmatprep.subr.mxu0 0.0
    %1386 = vmatpush1.msra.mxu0 %v336
    %1387 = vmatprep.subr.mxu0 0.0
    %1388 = vmatpush1.msra.mxu0 %v337
    %1389 = vmatprep.subr.mxu0 0.0
    %1390 = vmatpush1.msra.mxu0 %v338
    %1391 = vmatprep.subr.mxu0 0.0
    %1392 = vmatpush1.msra.mxu0 %v339
    %1393 = vmatprep.subr.mxu0 0.0
    %1394 = vmatpush1.msra.mxu0 %v340
    %1395 = vmatprep.subr.mxu0 0.0
    %1396 = vmatpush1.msra.mxu0 %v341
    %1397 = vmatprep.subr.mxu0 0.0
    %1398 = vmatpush1.msra.mxu0 %v342
    %1399 = vmatprep.subr.mxu0 0.0
    %1400 = vmatpush1.msra.mxu0 %v343
    %1401 = vmatprep.subr.mxu0 0.0
    %1402 = vmatpush1.msra.mxu0 %v344
    %1403 = vmatprep.subr.mxu0 0.0
    %1404 = vmatpush1.msra.mxu0 %v345
    %1405 = vmatprep.subr.mxu0 0.0
    %1406 = vmatpush1.msra.mxu0 %v346
    %1407 = vmatprep.subr.mxu0 0.0
    %1408 = vmatpush1.msra.mxu0 %v347
    %1409 = vmatprep.subr.mxu0 0.0
    %1410 = vmatpush1.msra.mxu0 %v348
    %1411 = vmatprep.subr.mxu0 0.0
    %1412 = vmatpush1.msra.mxu0 %v349
    %1413 = vmatprep.subr.mxu0 0.0
    %1414 = vmatpush1.msra.mxu0 %v350
    %1415 = vmatprep.subr.mxu0 0.0
    %1416 = vmatpush1.msra.mxu0 %v351
    %1417 = vmatprep.subr.mxu0 0.0
    %1418 = vmatpush1.msra.mxu0 %v352
    %1419 = vmatprep.subr.mxu0 0.0
    %1420 = vmatpush1.msra.mxu0 %v353
    %1421 = vmatprep.subr.mxu0 0.0
    %1422 = vmatpush1.msra.mxu0 %v354
    %1423 = vmatprep.subr.mxu0 0.0
    %1424 = vmatpush1.msra.mxu0 %v355
    %1425 = vmatprep.mubr.f32.mxu0 %v647
    %1426 = vmatmul.mubr.f32.gmra.mrb[0].mxu0 %v645
    %v1427 = vpop.f32.mrb[0].mxu0
    %v1428 = vadd.f32 %v1358, %v1427
    %v1429 = vpop.f32.mrb[0].mxu0
    %1430 = vdwg.mxu0
    %1431 = vmatprep.subr.mxu0 0.0
    %1432 = vmatpush1.msra.mxu0 %v356
    %1433 = vmatprep.subr.mxu0 0.0
    %1434 = vmatpush1.msra.mxu0 %v357
    %1435 = vmatprep.subr.mxu0 0.0
    %1436 = vmatpush1.msra.mxu0 %v358
    %1437 = vmatprep.subr.mxu0 0.0
    %1438 = vmatpush1.msra.mxu0 %v359
    %1439 = vmatprep.subr.mxu0 0.0
    %1440 = vmatpush1.msra.mxu0 %v360
    %1441 = vmatprep.subr.mxu0 0.0
    %1442 = vmatpush1.msra.mxu0 %v361
    %1443 = vmatprep.subr.mxu0 0.0
    %1444 = vmatpush1.msra.mxu0 %v362
    %1445 = vmatprep.subr.mxu0 0.0
    %1446 = vmatpush1.msra.mxu0 %v363
    %1447 = vmatprep.subr.mxu0 0.0
    %1448 = vmatpush1.msra.mxu0 %v364
    %1449 = vmatprep.subr.mxu0 0.0
    %1450 = vmatpush1.msra.mxu0 %v365
    %1451 = vmatprep.subr.mxu0 0.0
    %1452 = vmatpush1.msra.mxu0 %v366
    %1453 = vmatprep.subr.mxu0 0.0
    %1454 = vmatpush1.msra.mxu0 %v367
    %1455 = vmatprep.subr.mxu0 0.0
    %1456 = vmatpush1.msra.mxu0 %v368
    %1457 = vmatprep.subr.mxu0 0.0
    %1458 = vmatpush1.msra.mxu0 %v369
    %1459 = vmatprep.subr.mxu0 0.0
    %1460 = vmatpush1.msra.mxu0 %v370
    %1461 = vmatprep.subr.mxu0 0.0
    %1462 = vmatpush1.msra.mxu0 %v371
    %1463 = vmatprep.subr.mxu0 0.0
    %1464 = vmatpush1.msra.mxu0 %v372
    %1465 = vmatprep.subr.mxu0 0.0
    %1466 = vmatpush1.msra.mxu0 %v373
    %1467 = vmatprep.subr.mxu0 0.0
    %1468 = vmatpush1.msra.mxu0 %v374
    %1469 = vmatprep.subr.mxu0 0.0
    %1470 = vmatpush1.msra.mxu0 %v375
    %1471 = vmatprep.subr.mxu0 0.0
    %1472 = vmatpush1.msra.mxu0 %v376
    %1473 = vmatprep.subr.mxu0 0.0
    %1474 = vmatpush1.msra.mxu0 %v377
    %1475 = vmatprep.subr.mxu0 0.0
    %1476 = vmatpush1.msra.mxu0 %v378
    %1477 = vmatprep.subr.mxu0 0.0
    %1478 = vmatpush1.msra.mxu0 %v379
    %1479 = vmatprep.subr.mxu0 0.0
    %1480 = vmatpush1.msra.mxu0 %v380
    %1481 = vmatprep.subr.mxu0 0.0
    %1482 = vmatpush1.msra.mxu0 %v381
    %1483 = vmatprep.subr.mxu0 0.0
    %1484 = vmatpush1.msra.mxu0 %v382
    %1485 = vmatprep.subr.mxu0 0.0
    %1486 = vmatpush1.msra.mxu0 %v383
    %1487 = vmatprep.subr.mxu0 0.0
    %1488 = vmatpush1.msra.mxu0 %v384
    %1489 = vmatprep.subr.mxu0 0.0
    %1490 = vmatpush1.msra.mxu0 %v385
    %1491 = vmatprep.subr.mxu0 0.0
    %1492 = vmatpush1.msra.mxu0 %v386
    %1493 = vmatprep.subr.mxu0 0.0
    %1494 = vmatpush1.msra.mxu0 %v387
    %1495 = vmatprep.mubr.f32.mxu0 %v663
    %1496 = vmatmul.mubr.f32.gmra.mrb[0].mxu0 %v655
    %v1497 = vpop.f32.mrb[0].mxu0
    %v1498 = vadd.f32 %v1428, %v1497
    %v1499 = vpop.f32.mrb[0].mxu0
    %1500 = vdwg.mxu0
    %1501 = vmatprep.subr.mxu0 0.0
    %1502 = vmatpush1.msra.mxu0 %v388
    %1503 = vmatprep.subr.mxu0 0.0
    %1504 = vmatpush1.msra.mxu0 %v389
    %1505 = vmatprep.subr.mxu0 0.0
    %1506 = vmatpush1.msra.mxu0 %v390
    %1507 = vmatprep.subr.mxu0 0.0
    %1508 = vmatpush1.msra.mxu0 %v391
    %1509 = vmatprep.subr.mxu0 0.0
    %1510 = vmatpush1.msra.mxu0 %v392
    %1511 = vmatprep.subr.mxu0 0.0
    %1512 = vmatpush1.msra.mxu0 %v393
    %1513 = vmatprep.subr.mxu0 0.0
    %1514 = vmatpush1.msra.mxu0 %v394
    %1515 = vmatprep.subr.mxu0 0.0
    %1516 = vmatpush1.msra.mxu0 %v395
    %1517 = vmatprep.subr.mxu0 0.0
    %1518 = vmatpush1.msra.mxu0 %v396
    %1519 = vmatprep.subr.mxu0 0.0
    %1520 = vmatpush1.msra.mxu0 %v397
    %1521 = vmatprep.subr.mxu0 0.0
    %1522 = vmatpush1.msra.mxu0 %v398
    %1523 = vmatprep.subr.mxu0 0.0
    %1524 = vmatpush1.msra.mxu0 %v399
    %1525 = vmatprep.subr.mxu0 0.0
    %1526 = vmatpush1.msra.mxu0 %v400
    %1527 = vmatprep.subr.mxu0 0.0
    %1528 = vmatpush1.msra.mxu0 %v401
    %1529 = vmatprep.subr.mxu0 0.0
    %1530 = vmatpush1.msra.mxu0 %v402
    %1531 = vmatprep.subr.mxu0 0.0
    %1532 = vmatpush1.msra.mxu0 %v403
    %1533 = vmatprep.subr.mxu0 0.0
    %1534 = vmatpush1.msra.mxu0 %v404
    %1535 = vmatprep.subr.mxu0 0.0
    %1536 = vmatpush1.msra.mxu0 %v405
    %1537 = vmatprep.subr.mxu0 0.0
    %1538 = vmatpush1.msra.mxu0 %v406
    %1539 = vmatprep.subr.mxu0 0.0
    %1540 = vmatpush1.msra.mxu0 %v407
    %1541 = vmatprep.subr.mxu0 0.0
    %1542 = vmatpush1.msra.mxu0 %v408
    %1543 = vmatprep.subr.mxu0 0.0
    %1544 = vmatpush1.msra.mxu0 %v409
    %1545 = vmatprep.subr.mxu0 0.0
    %1546 = vmatpush1.msra.mxu0 %v410
    %1547 = vmatprep.subr.mxu0 0.0
    %1548 = vmatpush1.msra.mxu0 %v411
    %1549 = vmatprep.subr.mxu0 0.0
    %1550 = vmatpush1.msra.mxu0 %v412
    %1551 = vmatprep.subr.mxu0 0.0
    %1552 = vmatpush1.msra.mxu0 %v413
    %1553 = vmatprep.subr.mxu0 0.0
    %1554 = vmatpush1.msra.mxu0 %v414
    %1555 = vmatprep.subr.mxu0 0.0
    %1556 = vmatpush1.msra.mxu0 %v415
    %1557 = vmatprep.subr.mxu0 0.0
    %1558 = vmatpush1.msra.mxu0 %v416
    %1559 = vmatprep.subr.mxu0 0.0
    %1560 = vmatpush1.msra.mxu0 %v417
    %1561 = vmatprep.subr.mxu0 0.0
    %1562 = vmatpush1.msra.mxu0 %v418
    %1563 = vmatprep.subr.mxu0 0.0
    %1564 = vmatpush1.msra.mxu0 %v419
    %1565 = vmatprep.mubr.f32.mxu0 %v664
    %1566 = vmatmul.mubr.f32.gmra.mrb[0].mxu0 %v662
    %v1567 = vpop.f32.mrb[0].mxu0
    %v1568 = vadd.f32 %v1498, %v1567
    %v1569 = vpop.f32.mrb[0].mxu0
    %1570 = vdwg.mxu0
    %1571 = vmatprep.subr.mxu0 0.0
    %1572 = vmatpush1.msra.mxu0 %v420
    %1573 = vmatprep.subr.mxu0 0.0
    %1574 = vmatpush1.msra.mxu0 %v421
    %1575 = vmatprep.subr.mxu0 0.0
    %1576 = vmatpush1.msra.mxu0 %v422
    %1577 = vmatprep.subr.mxu0 0.0
    %1578 = vmatpush1.msra.mxu0 %v423
    %1579 = vmatprep.subr.mxu0 0.0
    %1580 = vmatpush1.msra.mxu0 %v424
    %1581 = vmatprep.subr.mxu0 0.0
    %1582 = vmatpush1.msra.mxu0 %v425
    %1583 = vmatprep.subr.mxu0 0.0
    %1584 = vmatpush1.msra.mxu0 %v426
    %1585 = vmatprep.subr.mxu0 0.0
    %1586 = vmatpush1.msra.mxu0 %v427
    %1587 = vmatprep.subr.mxu0 0.0
    %1588 = vmatpush1.msra.mxu0 %v428
    %1589 = vmatprep.subr.mxu0 0.0
    %1590 = vmatpush1.msra.mxu0 %v429
    %1591 = vmatprep.subr.mxu0 0.0
    %1592 = vmatpush1.msra.mxu0 %v430
    %1593 = vmatprep.subr.mxu0 0.0
    %1594 = vmatpush1.msra.mxu0 %v431
    %1595 = vmatprep.subr.mxu0 0.0
    %1596 = vmatpush1.msra.mxu0 %v432
    %1597 = vmatprep.subr.mxu0 0.0
    %1598 = vmatpush1.msra.mxu0 %v433
    %1599 = vmatprep.subr.mxu0 0.0
    %1600 = vmatpush1.msra.mxu0 %v434
    %1601 = vmatprep.subr.mxu0 0.0
    %1602 = vmatpush1.msra.mxu0 %v435
    %1603 = vmatprep.subr.mxu0 0.0
    %1604 = vmatpush1.msra.mxu0 %v436
    %1605 = vmatprep.subr.mxu0 0.0
    %1606 = vmatpush1.msra.mxu0 %v437
    %1607 = vmatprep.subr.mxu0 0.0
    %1608 = vmatpush1.msra.mxu0 %v438
    %1609 = vmatprep.subr.mxu0 0.0
    %1610 = vmatpush1.msra.mxu0 %v439
    %1611 = vmatprep.subr.mxu0 0.0
    %1612 = vmatpush1.msra.mxu0 %v440
    %1613 = vmatprep.subr.mxu0 0.0
    %1614 = vmatpush1.msra.mxu0 %v441
    %1615 = vmatprep.subr.mxu0 0.0
    %1616 = vmatpush1.msra.mxu0 %v442
    %1617 = vmatprep.subr.mxu0 0.0
    %1618 = vmatpush1.msra.mxu0 %v443
    %1619 = vmatprep.subr.mxu0 0.0
    %1620 = vmatpush1.msra.mxu0 %v444
    %1621 = vmatprep.subr.mxu0 0.0
    %1622 = vmatpush1.msra.mxu0 %v445
    %1623 = vmatprep.subr.mxu0 0.0
    %1624 = vmatpush1.msra.mxu0 %v446
    %1625 = vmatprep.subr.mxu0 0.0
    %1626 = vmatpush1.msra.mxu0 %v447
    %1627 = vmatprep.subr.mxu0 0.0
    %1628 = vmatpush1.msra.mxu0 %v448
    %1629 = vmatprep.subr.mxu0 0.0
    %1630 = vmatpush1.msra.mxu0 %v449
    %1631 = vmatprep.subr.mxu0 0.0
    %1632 = vmatpush1.msra.mxu0 %v450
    %1633 = vmatprep.subr.mxu0 0.0
    %1634 = vmatpush1.msra.mxu0 %v451
    %1635 = vmatprep.mubr.f32.mxu0 %v680
    %1636 = vmatmul.mubr.f32.gmra.mrb[0].mxu0 %v672
    %v1637 = vpop.f32.mrb[0].mxu0
    %v1638 = vadd.f32 %v1568, %v1637
    %v1639 = vpop.f32.mrb[0].mxu0
    %1640 = vdwg.mxu0
    %1641 = vmatprep.subr.mxu0 0.0
    %1642 = vmatpush1.msra.mxu0 %v452
    %1643 = vmatprep.subr.mxu0 0.0
    %1644 = vmatpush1.msra.mxu0 %v453
    %1645 = vmatprep.subr.mxu0 0.0
    %1646 = vmatpush1.msra.mxu0 %v454
    %1647 = vmatprep.subr.mxu0 0.0
    %1648 = vmatpush1.msra.mxu0 %v455
    %1649 = vmatprep.subr.mxu0 0.0
    %1650 = vmatpush1.msra.mxu0 %v456
    %1651 = vmatprep.subr.mxu0 0.0
    %1652 = vmatpush1.msra.mxu0 %v457
    %1653 = vmatprep.subr.mxu0 0.0
    %1654 = vmatpush1.msra.mxu0 %v458
    %1655 = vmatprep.subr.mxu0 0.0
    %1656 = vmatpush1.msra.mxu0 %v459
    %1657 = vmatprep.subr.mxu0 0.0
    %1658 = vmatpush1.msra.mxu0 %v460
    %1659 = vmatprep.subr.mxu0 0.0
    %1660 = vmatpush1.msra.mxu0 %v461
    %1661 = vmatprep.subr.mxu0 0.0
    %1662 = vmatpush1.msra.mxu0 %v462
    %1663 = vmatprep.subr.mxu0 0.0
    %1664 = vmatpush1.msra.mxu0 %v463
    %1665 = vmatprep.subr.mxu0 0.0
    %1666 = vmatpush1.msra.mxu0 %v464
    %1667 = vmatprep.subr.mxu0 0.0
    %1668 = vmatpush1.msra.mxu0 %v465
    %1669 = vmatprep.subr.mxu0 0.0
    %1670 = vmatpush1.msra.mxu0 %v466
    %1671 = vmatprep.subr.mxu0 0.0
    %1672 = vmatpush1.msra.mxu0 %v467
    %1673 = vmatprep.subr.mxu0 0.0
    %1674 = vmatpush1.msra.mxu0 %v468
    %1675 = vmatprep.subr.mxu0 0.0
    %1676 = vmatpush1.msra.mxu0 %v469
    %1677 = vmatprep.subr.mxu0 0.0
    %1678 = vmatpush1.msra.mxu0 %v470
    %1679 = vmatprep.subr.mxu0 0.0
    %1680 = vmatpush1.msra.mxu0 %v471
    %1681 = vmatprep.subr.mxu0 0.0
    %1682 = vmatpush1.msra.mxu0 %v472
    %1683 = vmatprep.subr.mxu0 0.0
    %1684 = vmatpush1.msra.mxu0 %v473
    %1685 = vmatprep.subr.mxu0 0.0
    %1686 = vmatpush1.msra.mxu0 %v474
    %1687 = vmatprep.subr.mxu0 0.0
    %1688 = vmatpush1.msra.mxu0 %v475
    %1689 = vmatprep.subr.mxu0 0.0
    %1690 = vmatpush1.msra.mxu0 %v476
    %1691 = vmatprep.subr.mxu0 0.0
    %1692 = vmatpush1.msra.mxu0 %v477
    %1693 = vmatprep.subr.mxu0 0.0
    %1694 = vmatpush1.msra.mxu0 %v478
    %1695 = vmatprep.subr.mxu0 0.0
    %1696 = vmatpush1.msra.mxu0 %v479
    %1697 = vmatprep.subr.mxu0 0.0
    %1698 = vmatpush1.msra.mxu0 %v480
    %1699 = vmatprep.subr.mxu0 0.0
    %1700 = vmatpush1.msra.mxu0 %v481
    %1701 = vmatprep.subr.mxu0 0.0
    %1702 = vmatpush1.msra.mxu0 %v482
    %1703 = vmatprep.subr.mxu0 0.0
    %1704 = vmatpush1.msra.mxu0 %v483
    %1705 = vmatprep.mubr.f32.mxu0 %v681
    %1706 = vmatmul.mubr.f32.gmra.mrb[0].mxu0 %v679
    %v1707 = vpop.f32.mrb[0].mxu0
    %v1708 = vadd.f32 %v1638, %v1707
    %v1709 = vpop.f32.mrb[0].mxu0
    %1710 = vdwg.mxu0
    %1711 = vmatprep.subr.mxu0 0.0
    %1712 = vmatpush1.msra.mxu0 %v484
    %1713 = vmatprep.subr.mxu0 0.0
    %1714 = vmatpush1.msra.mxu0 %v485
    %1715 = vmatprep.subr.mxu0 0.0
    %1716 = vmatpush1.msra.mxu0 %v486
    %1717 = vmatprep.subr.mxu0 0.0
    %1718 = vmatpush1.msra.mxu0 %v487
    %1719 = vmatprep.subr.mxu0 0.0
    %1720 = vmatpush1.msra.mxu0 %v488
    %1721 = vmatprep.subr.mxu0 0.0
    %1722 = vmatpush1.msra.mxu0 %v489
    %1723 = vmatprep.subr.mxu0 0.0
    %1724 = vmatpush1.msra.mxu0 %v490
    %1725 = vmatprep.subr.mxu0 0.0
    %1726 = vmatpush1.msra.mxu0 %v491
    %1727 = vmatprep.subr.mxu0 0.0
    %1728 = vmatpush1.msra.mxu0 %v492
    %1729 = vmatprep.subr.mxu0 0.0
    %1730 = vmatpush1.msra.mxu0 %v493
    %1731 = vmatprep.subr.mxu0 0.0
    %1732 = vmatpush1.msra.mxu0 %v494
    %1733 = vmatprep.subr.mxu0 0.0
    %1734 = vmatpush1.msra.mxu0 %v495
    %1735 = vmatprep.subr.mxu0 0.0
    %1736 = vmatpush1.msra.mxu0 %v496
    %1737 = vmatprep.subr.mxu0 0.0
    %1738 = vmatpush1.msra.mxu0 %v497
    %1739 = vmatprep.subr.mxu0 0.0
    %1740 = vmatpush1.msra.mxu0 %v498
    %1741 = vmatprep.subr.mxu0 0.0
    %1742 = vmatpush1.msra.mxu0 %v499
    %1743 = vmatprep.subr.mxu0 0.0
    %1744 = vmatpush1.msra.mxu0 %v500
    %1745 = vmatprep.subr.mxu0 0.0
    %1746 = vmatpush1.msra.mxu0 %v501
    %1747 = vmatprep.subr.mxu0 0.0
    %1748 = vmatpush1.msra.mxu0 %v502
    %1749 = vmatprep.subr.mxu0 0.0
    %1750 = vmatpush1.msra.mxu0 %v503
    %1751 = vmatprep.subr.mxu0 0.0
    %1752 = vmatpush1.msra.mxu0 %v504
    %1753 = vmatprep.subr.mxu0 0.0
    %1754 = vmatpush1.msra.mxu0 %v505
    %1755 = vmatprep.subr.mxu0 0.0
    %1756 = vmatpush1.msra.mxu0 %v506
    %1757 = vmatprep.subr.mxu0 0.0
    %1758 = vmatpush1.msra.mxu0 %v507
    %1759 = vmatprep.subr.mxu0 0.0
    %1760 = vmatpush1.msra.mxu0 %v508
    %1761 = vmatprep.subr.mxu0 0.0
    %1762 = vmatpush1.msra.mxu0 %v509
    %1763 = vmatprep.subr.mxu0 0.0
    %1764 = vmatpush1.msra.mxu0 %v510
    %1765 = vmatprep.subr.mxu0 0.0
    %1766 = vmatpush1.msra.mxu0 %v511
    %1767 = vmatprep.subr.mxu0 0.0
    %1768 = vmatpush1.msra.mxu0 %v512
    %1769 = vmatprep.subr.mxu0 0.0
    %1770 = vmatpush1.msra.mxu0 %v513
    %1771 = vmatprep.subr.mxu0 0.0
    %1772 = vmatpush1.msra.mxu0 %v514
    %1773 = vmatprep.subr.mxu0 0.0
    %1774 = vmatpush1.msra.mxu0 %v515
    %1775 = vmatprep.mubr.f32.mxu0 %v697
    %1776 = vmatmul.mubr.f32.gmra.mrb[0].mxu0 %v689
    %v1777 = vpop.f32.mrb[0].mxu0
    %v1778 = vadd.f32 %v1708, %v1777
    %v1779 = vpop.f32.mrb[0].mxu0
    %1780 = vdwg.mxu0
    %1781 = vmatprep.subr.mxu0 0.0
    %1782 = vmatpush1.msra.mxu0 %v516
    %1783 = vmatprep.subr.mxu0 0.0
    %1784 = vmatpush1.msra.mxu0 %v517
    %1785 = vmatprep.subr.mxu0 0.0
    %1786 = vmatpush1.msra.mxu0 %v518
    %1787 = vmatprep.subr.mxu0 0.0
    %1788 = vmatpush1.msra.mxu0 %v519
    %1789 = vmatprep.subr.mxu0 0.0
    %1790 = vmatpush1.msra.mxu0 %v520
    %1791 = vmatprep.subr.mxu0 0.0
    %1792 = vmatpush1.msra.mxu0 %v521
    %1793 = vmatprep.subr.mxu0 0.0
    %1794 = vmatpush1.msra.mxu0 %v522
    %1795 = vmatprep.subr.mxu0 0.0
    %1796 = vmatpush1.msra.mxu0 %v523
    %1797 = vmatprep.subr.mxu0 0.0
    %1798 = vmatpush1.msra.mxu0 %v524
    %1799 = vmatprep.subr.mxu0 0.0
    %1800 = vmatpush1.msra.mxu0 %v525
    %1801 = vmatprep.subr.mxu0 0.0
    %1802 = vmatpush1.msra.mxu0 %v526
    %1803 = vmatprep.subr.mxu0 0.0
    %1804 = vmatpush1.msra.mxu0 %v527
    %1805 = vmatprep.subr.mxu0 0.0
    %1806 = vmatpush1.msra.mxu0 %v528
    %1807 = vmatprep.subr.mxu0 0.0
    %1808 = vmatpush1.msra.mxu0 %v529
    %1809 = vmatprep.subr.mxu0 0.0
    %1810 = vmatpush1.msra.mxu0 %v530
    %1811 = vmatprep.subr.mxu0 0.0
    %1812 = vmatpush1.msra.mxu0 %v531
    %1813 = vmatprep.subr.mxu0 0.0
    %1814 = vmatpush1.msra.mxu0 %v532
    %1815 = vmatprep.subr.mxu0 0.0
    %1816 = vmatpush1.msra.mxu0 %v533
    %1817 = vmatprep.subr.mxu0 0.0
    %1818 = vmatpush1.msra.mxu0 %v534
    %1819 = vmatprep.subr.mxu0 0.0
    %1820 = vmatpush1.msra.mxu0 %v535
    %1821 = vmatprep.subr.mxu0 0.0
    %1822 = vmatpush1.msra.mxu0 %v536
    %1823 = vmatprep.subr.mxu0 0.0
    %1824 = vmatpush1.msra.mxu0 %v537
    %1825 = vmatprep.subr.mxu0 0.0
    %1826 = vmatpush1.msra.mxu0 %v538
    %1827 = vmatprep.subr.mxu0 0.0
    %1828 = vmatpush1.msra.mxu0 %v539
    %1829 = vmatprep.subr.mxu0 0.0
    %1830 = vmatpush1.msra.mxu0 %v540
    %1831 = vmatprep.subr.mxu0 0.0
    %1832 = vmatpush1.msra.mxu0 %v541
    %1833 = vmatprep.subr.mxu0 0.0
    %1834 = vmatpush1.msra.mxu0 %v542
    %1835 = vmatprep.subr.mxu0 0.0
    %1836 = vmatpush1.msra.mxu0 %v543
    %1837 = vmatprep.subr.mxu0 0.0
    %1838 = vmatpush1.msra.mxu0 %v544
    %1839 = vmatprep.subr.mxu0 0.0
    %1840 = vmatpush1.msra.mxu0 %v545
    %1841 = vmatprep.subr.mxu0 0.0
    %1842 = vmatpush1.msra.mxu0 %v546
    %1843 = vmatprep.subr.mxu0 0.0
    %1844 = vmatpush1.msra.mxu0 %v547
    %1845 = vmatprep.mubr.f32.mxu0 %v698
    %1846 = vmatmul.mubr.f32.gmra.mrb[0].mxu0 %v696
    %v1847 = vpop.f32.mrb[0].mxu0
    %v1848 = vadd.f32 %v1778, %v1847
    %v1849 = vpop.f32.mrb[0].mxu0
    %1850 = vdwg.mxu0
    %v1851 = vld [vmem:[%s3] sm:$0x3]
    %v1852 = vmul.f32 %v1848, 0.5
    %v1853 = vmul.f32 %v1852, 1.442695
    %v1854 = vpow.pop %v1853
    %1856 = vrot.lane.b32.xlu0 %v1854, 96
    %v1857 = vpop.permute.xlu0 %1856
    %v1859 = vmul.f32 %v1851, %v1857
    %v1860 = vadd.f32 %v1848, %v1859
    %v1861 = vld [vmem:[%s4] sm:$0xff]
    %v1862 = vld [vmem:[%s4 + $0x8] sm:$0xff]
    %v1863 = vld [vmem:[%s4 + $0x10] sm:$0xff]
    %v1864 = vld [vmem:[%s4 + $0x18] sm:$0xff]
    %v1865 = vld [vmem:[%s5] sm:$0x1]
    %v1867 = vlaneseq
    %v1868 = vshrl.u32 %v1867, 7
    %v1869 = vsub.s32 0, %v1868
    %v1870 = vrot.slane %v1865, %v1869
    %vm1872 = vcmask 261120
    %v1874 = vsel %vm1872, %v1860, 0
    %1876 = vmatprep.subr.mxu0 0.0
    %1877 = vmatpush1.msra.mxu0 %v1861
    %1878 = vmatprep.subr.mxu0 0.0
    %1879 = vmatpush1.msra.mxu0 %v1862
    %1880 = vmatprep.subr.mxu0 0.0
    %1881 = vmatpush1.msra.mxu0 %v1863
    %1882 = vmatprep.subr.mxu0 0.0
    %1883 = vmatpush1.msra.mxu0 %v1864
    %1884 = vmatprep.subr.mxu0 0.0
    %1885 = vmatpush1.msra.mxu0 0.0
    %1886 = vmatprep.subr.mxu0 0.0
    %1887 = vmatpush1.msra.mxu0 0.0
    %1888 = vmatprep.subr.mxu0 0.0
    %1889 = vmatpush1.msra.mxu0 0.0
    %1890 = vmatprep.subr.mxu0 0.0
    %1891 = vmatpush1.msra.mxu0 0.0
    %1892 = vmatprep.subr.mxu0 0.0
    %1893 = vmatpush1.msra.mxu0 0.0
    %1894 = vmatprep.subr.mxu0 0.0
    %1895 = vmatpush1.msra.mxu0 0.0
    %1896 = vmatprep.subr.mxu0 0.0
    %1897 = vmatpush1.msra.mxu0 0.0
    %1898 = vmatprep.subr.mxu0 0.0
    %1899 = vmatpush1.msra.mxu0 0.0
    %1900 = vmatprep.subr.mxu0 0.0
    %1901 = vmatpush1.msra.mxu0 0.0
    %1902 = vmatprep.subr.mxu0 0.0
    %1903 = vmatpush1.msra.mxu0 0.0
    %1904 = vmatprep.subr.mxu0 0.0
    %1905 = vmatpush1.msra.mxu0 0.0
    %1906 = vmatprep.subr.mxu0 0.0
    %1907 = vmatpush1.msra.mxu0 0.0
    %1908 = vmatprep.subr.mxu0 0.0
    %1909 = vmatpush1.msra.mxu0 0.0
    %1910 = vmatprep.subr.mxu0 0.0
    %1911 = vmatpush1.msra.mxu0 0.0
    %1912 = vmatprep.subr.mxu0 0.0
    %1913 = vmatpush1.msra.mxu0 0.0
    %1914 = vmatprep.subr.mxu0 0.0
    %1915 = vmatpush1.msra.mxu0 0.0
    %1916 = vmatprep.subr.mxu0 0.0
    %1917 = vmatpush1.msra.mxu0 0.0
    %1918 = vmatprep.subr.mxu0 0.0
    %1919 = vmatpush1.msra.mxu0 0.0
    %1920 = vmatprep.subr.mxu0 0.0
    %1921 = vmatpush1.msra.mxu0 0.0
    %1922 = vmatprep.subr.mxu0 0.0
    %1923 = vmatpush1.msra.mxu0 0.0
    %1924 = vmatprep.subr.mxu0 0.0
    %1925 = vmatpush1.msra.mxu0 0.0
    %1926 = vmatprep.subr.mxu0 0.0
    %1927 = vmatpush1.msra.mxu0 0.0
    %1928 = vmatprep.subr.mxu0 0.0
    %1929 = vmatpush1.msra.mxu0 0.0
    %1930 = vmatprep.subr.mxu0 0.0
    %1931 = vmatpush1.msra.mxu0 0.0
    %1932 = vmatprep.subr.mxu0 0.0
    %1933 = vmatpush1.msra.mxu0 0.0
    %1934 = vmatprep.subr.mxu0 0.0
    %1935 = vmatpush1.msra.mxu0 0.0
    %1936 = vmatprep.subr.mxu0 0.0
    %1937 = vmatpush1.msra.mxu0 0.0
    %1938 = vmatprep.subr.mxu0 0.0
    %1939 = vmatpush1.msra.mxu0 0.0
    %1940 = vmatprep.mubr.f32.mxu0 0.0
    %1941 = vmatmul.mubr.f32.gmra.mrb[0].mxu0 %v1874
    %v1942 = vpop.f32.mrb[0].mxu0
    %v1943 = vadd.f32 %v1870, %v1942
    %v1944 = vpop.f32.mrb[0].mxu0
    %1945 = vdwg.mxu0
    %vm1946 = vcmask 254976
    %1947 = vst.msk [vmem:[#allocation4] sm:$0x3] %vm1946, %v1848
    %1949 = vrot.lane.b32.xlu0 %v1848, 96
    %v1950 = vpop.permute.xlu0 %1949
    %1952 = vst.msk [vmem:[#allocation6] sm:$0x3] %vm1946, %v1950
    %vm1953 = vcmask 25600
    %1954 = vst.msk [vmem:[#allocation2] sm:$0x3] %vm1953, %v1943
    // Predicated region
    $region26: #{policy_act.7} parent=1 // pred_check
      _
    $region27: #{policy_act.7} parent=1 // pred_check_branch
      %1956 = sbr.rel (0) target = $region29
    $region28: #{policy_act.7} parent=1 // pred_region
      %s1958 = ssub.s32 32, 32
      %1959 = vsyncadd [#allocation3], %s1958
      %s1961 = sshll.u32 [#allocation2], 4
      %s1962 = int_to_ptr.vmem [resolvable:$true] %s1961
      %1964 = dma.vmem_to_hbm [thread:$0]  %s1962, 32, %s6, [#allocation3]
    $region29: #{policy_act.7} parent=1 // pred_fallthru
      _
    // Predicated region
    $region30: #{policy_act.7} parent=1 // pred_check
      _
    $region31: #{policy_act.7} parent=1 // pred_check_branch
      %1966 = sbr.rel (0) target = $region33
    $region32: #{policy_act.7} parent=1 // pred_region
      %s1968 = ssub.s32 32, 32
      %1969 = vsyncadd [#allocation5], %s1968
      %s1971 = sshll.u32 [#allocation4], 4
      %s1972 = int_to_ptr.vmem [resolvable:$true] %s1971
      %1974 = dma.vmem_to_hbm [thread:$0]  %s1972, 32, %s7, [#allocation5]
    $region33: #{policy_act.7} parent=1 // pred_fallthru
      _
    // Predicated region
    $region34: #{policy_act.7} parent=1 // pred_check
      _
    $region35: #{policy_act.7} parent=1 // pred_check_branch
      %1976 = sbr.rel (0) target = $region37
    $region36: #{policy_act.7} parent=1 // pred_region
      %s1978 = ssub.s32 32, 32
      %1979 = vsyncadd [#allocation5], %s1978
      %s1981 = sshll.u32 [#allocation6], 4
      %s1982 = int_to_ptr.vmem [resolvable:$true] %s1981
      %1984 = dma.vmem_to_hbm [thread:$0]  %s1982, 32, %s8, [#allocation5]
    $region37: #{policy_act.7} parent=1 // pred_fallthru
      _
    // Predicated region
    $region38: #{policy_act.7} parent=1 // pred_check
      _
    $region39: #{policy_act.7} parent=1 // pred_check_branch
      %1986 = sbr.rel (0) target = $region41
    $region40: #{policy_act.7} parent=1 // pred_region
      %1987 = dma.done [#allocation3], 32
    $region41: #{policy_act.7} parent=1 // pred_fallthru
      _
    // Predicated region
    $region42: #{policy_act.7} parent=1 // pred_check
      _
    $region43: #{policy_act.7} parent=1 // pred_check_branch
      %1989 = sbr.rel (0) target = $region45
    $region44: #{policy_act.7} parent=1 // pred_region
      %1990 = dma.done [#allocation5], 32
    $region45: #{policy_act.7} parent=1 // pred_fallthru
      _
    // Predicated region
    $region46: #{policy_act.7} parent=1 // pred_check
      _
    $region47: #{policy_act.7} parent=1 // pred_check_branch
      %1992 = sbr.rel (0) target = $region49
    $region48: #{policy_act.7} parent=1 // pred_region
      %1993 = dma.done [#allocation5], 32
    $region49: #{policy_act.7} parent=1 // pred_fallthru
      _
    %1994 = vsyncpa [#allocation3], 1
    %1995 = vsyncpa [#allocation5], 1

</llo_original>
